<compile_context>
chip_gen: v6e
topology: v6e:2x2x1
jax: 0.10.0
libtpu: 0.0.40
codegen_flags: <defaults>
</compile_context>

<pallas_src>
import jax
import jax.numpy as jnp
from jax.experimental import pallas as pl
from jax.experimental.pallas import tpu as pltpu

L_IN = 128          # sequence length (fixed by Linear(3968) = 64 * 62)
L1 = L_IN - 2       # 126 after Conv1d(k=3)
L2 = L1 - 2         # 124 after second Conv1d(k=3)
LP = L2 // 2        # 62 after MaxPool1d(2)
C_HID = 64
FLAT = C_HID * LP   # 3968
H1, H2 = 512, 128
OUT = 6

KT = 2              # K tiles for the first Linear
TK = 2048           # K tile width (FLAT padded 3968 -> 4096)
FLAT_PAD = KT * TK  # 4096
GROUPS = L2 // 4    # 31: 128-lane groups of flattened features per sample


# ---------------------------------------------------------------------------
# Fused kernel: grid=(KT,) is a reduction over K tiles of the first Linear.
# Step 0 additionally runs conv1+ReLU+conv2+ReLU+maxpool+flatten for the whole
# batch into a VMEM scratch; the last step runs the rest of the MLP + softmax.
# ---------------------------------------------------------------------------
def _fused_kernel(x_ref, w1_ref, b1_ref, w2r_ref, b2_ref,
                  wf1_ref, bf1_ref, wf2_ref, bf2_ref,
                  wo1_ref, bo1_ref, wo2_ref, bo2_ref,
                  o1_ref, o2_ref,
                  y2_scr, pair_scr, flat_scr, acc_scr):
    t = pl.program_id(0)
    n = x_ref.shape[1]

    @pl.when(t == 0)
    def _conv_pool_flatten():
        # zero: padded feature columns (3968..4095) must not poison the matmul
        flat_scr[...] = jnp.zeros_like(flat_scr)
        acc_scr[...] = jnp.zeros_like(acc_scr)

        # Conv1d(1 -> 64, k=3) + ReLU: 3 rank-1 VPU updates per sample (c_in=1),
        # then im2col rows for conv2, stacked for the whole batch along sublanes.
        cats = []
        for i in range(n):
            xcol = x_ref[:, i:i + 1]                      # (128, 1)
            y1 = (xcol[0:L1, :] * w1_ref[0:1, :]
                  + xcol[1:L1 + 1, :] * w1_ref[1:2, :]
                  + xcol[2:L1 + 2, :] * w1_ref[2:3, :]
                  + b1_ref[...])
            y1 = jnp.maximum(y1, 0.0)                     # (126, 64)
            cats.append(jnp.concatenate(
                [y1[0:L2, :], y1[1:L2 + 1, :], y1[2:L2 + 2, :]], axis=-1))
        cat_all = jnp.concatenate(cats, axis=0)           # (n*124, 192)

        # Conv1d(64 -> 64, k=3) + ReLU: ONE MXU matmul for the whole batch.
        y2 = jnp.dot(cat_all, w2r_ref[...],
                     preferred_element_type=jnp.float32) + b2_ref[...]
        y2_scr[...] = jnp.maximum(y2, 0.0)                # (n*124, 64)
        # TODO(synk): nn.Dropout(0.5) treated as identity (inference).

        # MaxPool1d(2) + flatten, vectorized across the whole batch.
        # y2_scr row = s*124 + l; since 124 % 4 == 0, rows with l % 4 == q are
        # exactly rows with index % 4 == q, so 4 stride-4 loads fetch
        # y2[s, 4g+q, :] for every (sample s, group g) at once.
        a0 = y2_scr[pl.ds(0, n * GROUPS, stride=4), :]    # (n*31, 64)
        a1 = y2_scr[pl.ds(1, n * GROUPS, stride=4), :]
        a2 = y2_scr[pl.ds(2, n * GROUPS, stride=4), :]
        a3 = y2_scr[pl.ds(3, n * GROUPS, stride=4), :]
        # row m = s*31 + g holds flat[s, 128g : 128(g+1)]  (feature = l*64 + c)
        pair_scr[...] = jnp.concatenate(
            [jnp.maximum(a0, a1), jnp.maximum(a2, a3)], axis=-1)   # (n*31, 128)
        for g in range(GROUPS):
            rows = pair_scr[pl.ds(g, n, stride=GROUPS), :]         # (n, 128)
            kt, off = divmod(128 * g, TK)
            flat_scr[kt, :, off:off + 128] = rows.astype(jnp.bfloat16)

    # Linear(3968 -> 512): accumulate one bf16 K tile per grid step
    # (weight DMA pipelined by the BlockSpec over the grid axis).
    acc_scr[...] += jnp.dot(flat_scr[t], wf1_ref[...],
                            preferred_element_type=jnp.float32)

    @pl.when(t == KT - 1)
    def _head():
        h = jnp.maximum(acc_scr[...] + bf1_ref[...], 0.0)            # (N, 512)
        h = jnp.dot(h.astype(jnp.bfloat16), wf2_ref[...],
                    preferred_element_type=jnp.float32) + bf2_ref[...]
        h = jnp.maximum(h, 0.0)                                      # (N, 128)
        l1 = jnp.dot(h, wo1_ref[...],
                     preferred_element_type=jnp.float32) + bo1_ref[...]
        l2 = jnp.dot(h, wo2_ref[...],
                     preferred_element_type=jnp.float32) + bo2_ref[...]

        def _softmax(z):
            m = jnp.max(z, axis=-1, keepdims=True)
            e = jnp.exp(z - m)
            return e / jnp.sum(e, axis=-1, keepdims=True)

        o1_ref[...] = _softmax(l1)
        o2_ref[...] = _softmax(l2)


def cnn_fused(xs, kp):
    n = xs.shape[1]

    def const2d(shape):
        return pl.BlockSpec(shape, lambda t: (0, 0))

    return pl.pallas_call(
        _fused_kernel,
        out_shape=(jax.ShapeDtypeStruct((n, OUT), jnp.float32),
                   jax.ShapeDtypeStruct((n, OUT), jnp.float32)),
        grid_spec=pltpu.PrefetchScalarGridSpec(
            num_scalar_prefetch=0,
            grid=(KT,),
            in_specs=[
                const2d((L_IN, n)),                           # x (L, N)
                const2d((3, C_HID)),                          # conv1 weight
                const2d((1, C_HID)),                          # conv1 bias
                const2d((3 * C_HID, C_HID)),                  # conv2 weight (192, 64)
                const2d((1, C_HID)),                          # conv2 bias
                pl.BlockSpec((TK, H1), lambda t: (t, 0)),     # wf1 bf16, K-tiled
                const2d((1, H1)),                             # b_f1
                const2d((H1, H2)),                            # w_f2 (bf16)
                const2d((1, H2)),                             # b_f2
                const2d((H2, OUT)),                           # w_o1
                const2d((1, OUT)),                            # b_o1
                const2d((H2, OUT)),                           # w_o2
                const2d((1, OUT)),                            # b_o2
            ],
            out_specs=(const2d((n, OUT)), const2d((n, OUT))),
            scratch_shapes=[
                pltpu.VMEM((n * L2, C_HID), jnp.float32),         # conv2 output, all samples
                pltpu.VMEM((n * GROUPS, 2 * C_HID), jnp.float32),  # paired pooled rows
                pltpu.VMEM((KT, n, TK), jnp.bfloat16),            # flattened acts (bf16)
                pltpu.VMEM((n, H1), jnp.float32),                 # Linear1 accumulator
            ]),
        compiler_params=pltpu.CompilerParams(
            dimension_semantics=("arbitrary",)),              # reduction axis
    )(xs, kp["w1"], kp["b1"], kp["w2r"], kp["b2"],
      kp["wf1"], kp["bf1"], kp["wf2"], kp["bf2"],
      kp["wo1"], kp["bo1"], kp["wo2"], kp["bo2"])


# ---------------------------------------------------------------------------
# Parameters (deterministic, PyTorch-default-style uniform(-1/sqrt(fan_in),.))
# ---------------------------------------------------------------------------
def init_params(key):
    ks = jax.random.split(key, 12)

    def uni(k, shape, fan_in):
        bound = 1.0 / (fan_in ** 0.5)
        return jax.random.uniform(k, shape, jnp.float32, -bound, bound)

    return dict(
        w_c1=uni(ks[0], (3, C_HID), 1 * 3),            # Conv1d(1, 64, 3): (k, c_out)
        b_c1=uni(ks[1], (1, C_HID), 1 * 3),
        w_c2=uni(ks[2], (3, C_HID, C_HID), 64 * 3),    # Conv1d(64, 64, 3): (k, c_in, c_out)
        b_c2=uni(ks[3], (1, C_HID), 64 * 3),
        w_f1=uni(ks[4], (FLAT, H1), FLAT),             # Linear(3968, 512), PyTorch (C,L)-flat order
        b_f1=uni(ks[5], (1, H1), FLAT),
        w_f2=uni(ks[6], (H1, H2), H1),
        b_f2=uni(ks[7], (1, H2), H1),
        w_o1=uni(ks[8], (H2, OUT), H2),
        b_o1=uni(ks[9], (1, OUT), H2),
        w_o2=uni(ks[10], (H2, OUT), H2),
        b_o2=uni(ks[11], (1, OUT), H2),
    )


def prepare_params(p):
    """One-time host-side weight repacking for the fused kernel."""
    # conv2 weight as a single (192, 64) matrix, row = k*64 + c_in
    w2r = p["w_c2"].reshape(3 * C_HID, C_HID)
    # w_f1 rows permuted from PyTorch order (c*62 + l) to L-major (l*64 + c),
    # zero-padded 3968 -> 4096 and cast to bf16 (halves the dominant DMA).
    wf1_lmajor = (p["w_f1"].reshape(C_HID, LP, H1)
                  .transpose(1, 0, 2).reshape(FLAT, H1))
    wf1_pad = jnp.zeros((FLAT_PAD, H1), jnp.float32).at[:FLAT].set(wf1_lmajor)
    return dict(
        w1=p["w_c1"], b1=p["b_c1"],
        w2r=w2r, b2=p["b_c2"],
        wf1=wf1_pad.astype(jnp.bfloat16), bf1=p["b_f1"],
        wf2=p["w_f2"].astype(jnp.bfloat16), bf2=p["b_f2"],
        wo1=p["w_o1"], bo1=p["b_o1"],
        wo2=p["w_o2"], bo2=p["b_o2"],
    )


# ---------------------------------------------------------------------------
# Forward pass (glue is just the input squeeze; everything else in the kernel)
# ---------------------------------------------------------------------------
@jax.jit
def cnn_forward(x, kparams):
    # x: (L, N, 1) like the PyTorch input. Kernel consumes it as (L, N).
    xs = x[:, :, 0]
    return cnn_fused(xs, kparams)


def cnn_reference(x, p):
    hp = jax.lax.Precision.HIGHEST
    xs = jnp.transpose(x, (1, 2, 0))[:, 0, :]
    n = xs.shape[0]
    patches = jnp.stack([xs[:, k:k + L1] for k in range(3)], axis=-1)
    y1 = jnp.maximum(jnp.einsum("nlk,kc->nlc", patches, p["w_c1"], precision=hp)
                     + p["b_c1"], 0.0)
    y2 = sum(jnp.einsum("nlc,co->nlo", y1[:, k:k + L2, :], p["w_c2"][k], precision=hp)
             for k in range(3)) + p["b_c2"]
    y2 = jnp.maximum(y2, 0.0)
    pooled = jnp.maximum(y2[:, 0::2, :], y2[:, 1::2, :])
    flat = jnp.transpose(pooled, (0, 2, 1)).reshape(n, FLAT)
    h = jnp.maximum(jnp.dot(flat, p["w_f1"], precision=hp) + p["b_f1"], 0.0)
    h = jnp.maximum(jnp.dot(h, p["w_f2"], precision=hp) + p["b_f2"], 0.0)
    o1 = jax.nn.softmax(jnp.dot(h, p["w_o1"], precision=hp) + p["b_o1"], axis=-1)
    o2 = jax.nn.softmax(jnp.dot(h, p["w_o2"], precision=hp) + p["b_o2"], axis=-1)
    return o1, o2


if __name__ == "__main__":
    key = jax.random.PRNGKey(0)
    pkey, xkey = jax.random.split(key)
    params = init_params(pkey)
    kparams = prepare_params(params)          # one-time host repack
    batch = 4
    # PyTorch-layout input: (seq_len=128, batch=4, in_channels=1)
    x = jax.random.normal(xkey, (L_IN, batch, 1), jnp.float32)

    o1, o2 = cnn_forward(x, kparams)
    jax.block_until_ready((o1, o2))

    r1, r2 = cnn_reference(x, params)
    assert o1.shape == (batch, OUT) and o2.shape == (batch, OUT)
    assert bool(jnp.all(jnp.isfinite(o1))) and bool(jnp.all(jnp.isfinite(o2)))
    assert bool(jnp.allclose(o1, r1, atol=3e-3, rtol=2e-2))
    assert bool(jnp.allclose(o2, r2, atol=3e-3, rtol=2e-2))
    print("KERNEL_OK")
</pallas_src>

<mosaic_0001>
module attributes {stable_mosaic.version = 11 : i64} {
  func.func @_fused_kernel(%arg0: i32, %arg1: memref<128x4xf32, #tpu.memory_space<vmem>>, %arg2: memref<3x64xf32, #tpu.memory_space<vmem>>, %arg3: memref<1x64xf32, #tpu.memory_space<vmem>>, %arg4: memref<192x64xf32, #tpu.memory_space<vmem>>, %arg5: memref<1x64xf32, #tpu.memory_space<vmem>>, %arg6: memref<2048x512xbf16, #tpu.memory_space<vmem>>, %arg7: memref<1x512xf32, #tpu.memory_space<vmem>>, %arg8: memref<512x128xbf16, #tpu.memory_space<vmem>>, %arg9: memref<1x128xf32, #tpu.memory_space<vmem>>, %arg10: memref<128x6xf32, #tpu.memory_space<vmem>>, %arg11: memref<1x6xf32, #tpu.memory_space<vmem>>, %arg12: memref<128x6xf32, #tpu.memory_space<vmem>>, %arg13: memref<1x6xf32, #tpu.memory_space<vmem>>, %arg14: memref<4x6xf32, #tpu.memory_space<vmem>>, %arg15: memref<4x6xf32, #tpu.memory_space<vmem>>, %arg16: memref<496x64xf32, #tpu.memory_space<vmem>>, %arg17: memref<124x128xf32, #tpu.memory_space<vmem>>, %arg18: memref<2x4x2048xbf16, #tpu.memory_space<vmem>>, %arg19: memref<4x512xf32, #tpu.memory_space<vmem>>) attributes {dimension_semantics = [#tpu.dimension_semantics<arbitrary>], iteration_bounds = array<i64: 2>, scalar_prefetch = 0 : i64, scratch_operands = 4 : i64, tpu.core_type = #tpu.core_type<tc>, window_params = [{pipeline_mode = #tpu.pipeline_mode<synchronous>, transform_indices = @transform_0, window_bounds = array<i64: 128, 4>}, {pipeline_mode = #tpu.pipeline_mode<synchronous>, transform_indices = @transform_1, window_bounds = array<i64: 3, 64>}, {pipeline_mode = #tpu.pipeline_mode<synchronous>, transform_indices = @transform_2, window_bounds = array<i64: 1, 64>}, {pipeline_mode = #tpu.pipeline_mode<synchronous>, transform_indices = @transform_3, window_bounds = array<i64: 192, 64>}, {pipeline_mode = #tpu.pipeline_mode<synchronous>, transform_indices = @transform_4, window_bounds = array<i64: 1, 64>}, {transform_indices = @transform_5, window_bounds = array<i64: 2048, 512>}, {pipeline_mode = #tpu.pipeline_mode<synchronous>, transform_indices = @transform_6, window_bounds = array<i64: 1, 512>}, {pipeline_mode = #tpu.pipeline_mode<synchronous>, transform_indices = @transform_7, window_bounds = array<i64: 512, 128>}, {pipeline_mode = #tpu.pipeline_mode<synchronous>, transform_indices = @transform_8, window_bounds = array<i64: 1, 128>}, {pipeline_mode = #tpu.pipeline_mode<synchronous>, transform_indices = @transform_9, window_bounds = array<i64: 128, 6>}, {pipeline_mode = #tpu.pipeline_mode<synchronous>, transform_indices = @transform_10, window_bounds = array<i64: 1, 6>}, {pipeline_mode = #tpu.pipeline_mode<synchronous>, transform_indices = @transform_11, window_bounds = array<i64: 128, 6>}, {pipeline_mode = #tpu.pipeline_mode<synchronous>, transform_indices = @transform_12, window_bounds = array<i64: 1, 6>}, {pipeline_mode = #tpu.pipeline_mode<synchronous>, transform_indices = @transform_13, window_bounds = array<i64: 4, 6>}, {pipeline_mode = #tpu.pipeline_mode<synchronous>, transform_indices = @transform_14, window_bounds = array<i64: 4, 6>}]} {
    %c0_i32 = arith.constant 0 : i32
    %0 = arith.cmpi eq, %arg0, %c0_i32 : i32
    %1 = arith.extui %0 : i1 to i32
    %c0_i32_0 = arith.constant 0 : i32
    %2 = arith.cmpi ne, %1, %c0_i32_0 : i32
    scf.if %2 {
      %cst_9 = arith.constant 0.000000e+00 : bf16
      %14 = vector.broadcast %cst_9 : bf16 to vector<2x4x2048xbf16>
      %c0_10 = arith.constant 0 : index
      %c0_11 = arith.constant 0 : index
      %c0_12 = arith.constant 0 : index
      %15 = vector.load %arg18[%c0_10, %c0_11, %c0_12] : memref<2x4x2048xbf16, #tpu.memory_space<vmem>>, vector<2x4x2048xbf16>
      tpu.vector_store %arg18[%c0_10, %c0_11, %c0_12], %14 {strides = array<i32>} : memref<2x4x2048xbf16, #tpu.memory_space<vmem>>, vector<2x4x2048xbf16>,
      %cst_13 = arith.constant 0.000000e+00 : f32
      %16 = vector.broadcast %cst_13 : f32 to vector<4x512xf32>
      %c0_14 = arith.constant 0 : index
      %c0_15 = arith.constant 0 : index
      %17 = vector.load %arg19[%c0_14, %c0_15] : memref<4x512xf32, #tpu.memory_space<vmem>>, vector<4x512xf32>
      tpu.vector_store %arg19[%c0_14, %c0_15], %16 {strides = array<i32>} : memref<4x512xf32, #tpu.memory_space<vmem>>, vector<4x512xf32>,
      %c0_16 = arith.constant 0 : index
      %c0_17 = arith.constant 0 : index
      %18 = vector.load %arg1[%c0_16, %c0_17] : memref<128x4xf32, #tpu.memory_space<vmem>>, vector<128x1xf32>
      %19 = vector.extract_strided_slice %18 {offsets = [0, 0], sizes = [126, 1], strides = [1, 1]} : vector<128x1xf32> to vector<126x1xf32>
      %c0_18 = arith.constant 0 : index
      %c0_19 = arith.constant 0 : index
      %20 = vector.load %arg2[%c0_18, %c0_19] : memref<3x64xf32, #tpu.memory_space<vmem>>, vector<1x64xf32>
      %21 = vector.broadcast %19 : vector<126x1xf32> to vector<126x64xf32>
      %22 = vector.broadcast %20 : vector<1x64xf32> to vector<126x64xf32>
      %23 = arith.mulf %21, %22 : vector<126x64xf32>
      %24 = vector.extract_strided_slice %18 {offsets = [1, 0], sizes = [126, 1], strides = [1, 1]} : vector<128x1xf32> to vector<126x1xf32>
      %c1 = arith.constant 1 : index
      %c0_20 = arith.constant 0 : index
      %25 = vector.load %arg2[%c1, %c0_20] : memref<3x64xf32, #tpu.memory_space<vmem>>, vector<1x64xf32>
      %26 = vector.broadcast %24 : vector<126x1xf32> to vector<126x64xf32>
      %27 = vector.broadcast %25 : vector<1x64xf32> to vector<126x64xf32>
      %28 = arith.mulf %26, %27 : vector<126x64xf32>
      %29 = arith.addf %23, %28 : vector<126x64xf32>
      %30 = vector.extract_strided_slice %18 {offsets = [2, 0], sizes = [126, 1], strides = [1, 1]} : vector<128x1xf32> to vector<126x1xf32>
      %c2 = arith.constant 2 : index
      %c0_21 = arith.constant 0 : index
      %31 = vector.load %arg2[%c2, %c0_21] : memref<3x64xf32, #tpu.memory_space<vmem>>, vector<1x64xf32>
      %32 = vector.broadcast %30 : vector<126x1xf32> to vector<126x64xf32>
      %33 = vector.broadcast %31 : vector<1x64xf32> to vector<126x64xf32>
      %34 = arith.mulf %32, %33 : vector<126x64xf32>
      %35 = arith.addf %29, %34 : vector<126x64xf32>
      %c0_22 = arith.constant 0 : index
      %c0_23 = arith.constant 0 : index
      %36 = vector.load %arg3[%c0_22, %c0_23] : memref<1x64xf32, #tpu.memory_space<vmem>>, vector<1x64xf32>
      %37 = vector.broadcast %36 : vector<1x64xf32> to vector<126x64xf32>
      %38 = arith.addf %35, %37 : vector<126x64xf32>
      %cst_24 = arith.constant 0.000000e+00 : f32
      %39 = vector.broadcast %cst_24 : f32 to vector<126x64xf32>
      %40 = arith.maximumf %38, %39 : vector<126x64xf32>
      %41 = vector.extract_strided_slice %40 {offsets = [0, 0], sizes = [124, 64], strides = [1, 1]} : vector<126x64xf32> to vector<124x64xf32>
      %42 = vector.extract_strided_slice %40 {offsets = [1, 0], sizes = [124, 64], strides = [1, 1]} : vector<126x64xf32> to vector<124x64xf32>
      %43 = vector.extract_strided_slice %40 {offsets = [2, 0], sizes = [124, 64], strides = [1, 1]} : vector<126x64xf32> to vector<124x64xf32>
      %44 = tpu.concatenate %41, %42, %43 in 1 : vector<124x64xf32>, vector<124x64xf32>, vector<124x64xf32> -> vector<124x192xf32>
      %c0_25 = arith.constant 0 : index
      %c1_26 = arith.constant 1 : index
      %45 = vector.load %arg1[%c0_25, %c1_26] : memref<128x4xf32, #tpu.memory_space<vmem>>, vector<128x1xf32>
      %46 = vector.extract_strided_slice %45 {offsets = [0, 0], sizes = [126, 1], strides = [1, 1]} : vector<128x1xf32> to vector<126x1xf32>
      %c0_27 = arith.constant 0 : index
      %c0_28 = arith.constant 0 : index
      %47 = vector.load %arg2[%c0_27, %c0_28] : memref<3x64xf32, #tpu.memory_space<vmem>>, vector<1x64xf32>
      %48 = vector.broadcast %46 : vector<126x1xf32> to vector<126x64xf32>
      %49 = vector.broadcast %47 : vector<1x64xf32> to vector<126x64xf32>
      %50 = arith.mulf %48, %49 : vector<126x64xf32>
      %51 = vector.extract_strided_slice %45 {offsets = [1, 0], sizes = [126, 1], strides = [1, 1]} : vector<128x1xf32> to vector<126x1xf32>
      %c1_29 = arith.constant 1 : index
      %c0_30 = arith.constant 0 : index
      %52 = vector.load %arg2[%c1_29, %c0_30] : memref<3x64xf32, #tpu.memory_space<vmem>>, vector<1x64xf32>
      %53 = vector.broadcast %51 : vector<126x1xf32> to vector<126x64xf32>
      %54 = vector.broadcast %52 : vector<1x64xf32> to vector<126x64xf32>
      %55 = arith.mulf %53, %54 : vector<126x64xf32>
      %56 = arith.addf %50, %55 : vector<126x64xf32>
      %57 = vector.extract_strided_slice %45 {offsets = [2, 0], sizes = [126, 1], strides = [1, 1]} : vector<128x1xf32> to vector<126x1xf32>
      %c2_31 = arith.constant 2 : index
      %c0_32 = arith.constant 0 : index
      %58 = vector.load %arg2[%c2_31, %c0_32] : memref<3x64xf32, #tpu.memory_space<vmem>>, vector<1x64xf32>
      %59 = vector.broadcast %57 : vector<126x1xf32> to vector<126x64xf32>
      %60 = vector.broadcast %58 : vector<1x64xf32> to vector<126x64xf32>
      %61 = arith.mulf %59, %60 : vector<126x64xf32>
      %62 = arith.addf %56, %61 : vector<126x64xf32>
      %c0_33 = arith.constant 0 : index
      %c0_34 = arith.constant 0 : index
      %63 = vector.load %arg3[%c0_33, %c0_34] : memref<1x64xf32, #tpu.memory_space<vmem>>, vector<1x64xf32>
      %64 = vector.broadcast %63 : vector<1x64xf32> to vector<126x64xf32>
      %65 = arith.addf %62, %64 : vector<126x64xf32>
      %cst_35 = arith.constant 0.000000e+00 : f32
      %66 = vector.broadcast %cst_35 : f32 to vector<126x64xf32>
      %67 = arith.maximumf %65, %66 : vector<126x64xf32>
      %68 = vector.extract_strided_slice %67 {offsets = [0, 0], sizes = [124, 64], strides = [1, 1]} : vector<126x64xf32> to vector<124x64xf32>
      %69 = vector.extract_strided_slice %67 {offsets = [1, 0], sizes = [124, 64], strides = [1, 1]} : vector<126x64xf32> to vector<124x64xf32>
      %70 = vector.extract_strided_slice %67 {offsets = [2, 0], sizes = [124, 64], strides = [1, 1]} : vector<126x64xf32> to vector<124x64xf32>
      %71 = tpu.concatenate %68, %69, %70 in 1 : vector<124x64xf32>, vector<124x64xf32>, vector<124x64xf32> -> vector<124x192xf32>
      %c0_36 = arith.constant 0 : index
      %c2_37 = arith.constant 2 : index
      %72 = vector.load %arg1[%c0_36, %c2_37] : memref<128x4xf32, #tpu.memory_space<vmem>>, vector<128x1xf32>
      %73 = vector.extract_strided_slice %72 {offsets = [0, 0], sizes = [126, 1], strides = [1, 1]} : vector<128x1xf32> to vector<126x1xf32>
      %c0_38 = arith.constant 0 : index
      %c0_39 = arith.constant 0 : index
      %74 = vector.load %arg2[%c0_38, %c0_39] : memref<3x64xf32, #tpu.memory_space<vmem>>, vector<1x64xf32>
      %75 = vector.broadcast %73 : vector<126x1xf32> to vector<126x64xf32>
      %76 = vector.broadcast %74 : vector<1x64xf32> to vector<126x64xf32>
      %77 = arith.mulf %75, %76 : vector<126x64xf32>
      %78 = vector.extract_strided_slice %72 {offsets = [1, 0], sizes = [126, 1], strides = [1, 1]} : vector<128x1xf32> to vector<126x1xf32>
      %c1_40 = arith.constant 1 : index
      %c0_41 = arith.constant 0 : index
      %79 = vector.load %arg2[%c1_40, %c0_41] : memref<3x64xf32, #tpu.memory_space<vmem>>, vector<1x64xf32>
      %80 = vector.broadcast %78 : vector<126x1xf32> to vector<126x64xf32>
      %81 = vector.broadcast %79 : vector<1x64xf32> to vector<126x64xf32>
      %82 = arith.mulf %80, %81 : vector<126x64xf32>
      %83 = arith.addf %77, %82 : vector<126x64xf32>
      %84 = vector.extract_strided_slice %72 {offsets = [2, 0], sizes = [126, 1], strides = [1, 1]} : vector<128x1xf32> to vector<126x1xf32>
      %c2_42 = arith.constant 2 : index
      %c0_43 = arith.constant 0 : index
      %85 = vector.load %arg2[%c2_42, %c0_43] : memref<3x64xf32, #tpu.memory_space<vmem>>, vector<1x64xf32>
      %86 = vector.broadcast %84 : vector<126x1xf32> to vector<126x64xf32>
      %87 = vector.broadcast %85 : vector<1x64xf32> to vector<126x64xf32>
      %88 = arith.mulf %86, %87 : vector<126x64xf32>
      %89 = arith.addf %83, %88 : vector<126x64xf32>
      %c0_44 = arith.constant 0 : index
      %c0_45 = arith.constant 0 : index
      %90 = vector.load %arg3[%c0_44, %c0_45] : memref<1x64xf32, #tpu.memory_space<vmem>>, vector<1x64xf32>
      %91 = vector.broadcast %90 : vector<1x64xf32> to vector<126x64xf32>
      %92 = arith.addf %89, %91 : vector<126x64xf32>
      %cst_46 = arith.constant 0.000000e+00 : f32
      %93 = vector.broadcast %cst_46 : f32 to vector<126x64xf32>
      %94 = arith.maximumf %92, %93 : vector<126x64xf32>
      %95 = vector.extract_strided_slice %94 {offsets = [0, 0], sizes = [124, 64], strides = [1, 1]} : vector<126x64xf32> to vector<124x64xf32>
      %96 = vector.extract_strided_slice %94 {offsets = [1, 0], sizes = [124, 64], strides = [1, 1]} : vector<126x64xf32> to vector<124x64xf32>
      %97 = vector.extract_strided_slice %94 {offsets = [2, 0], sizes = [124, 64], strides = [1, 1]} : vector<126x64xf32> to vector<124x64xf32>
      %98 = tpu.concatenate %95, %96, %97 in 1 : vector<124x64xf32>, vector<124x64xf32>, vector<124x64xf32> -> vector<124x192xf32>
      %c0_47 = arith.constant 0 : index
      %c3 = arith.constant 3 : index
      %99 = vector.load %arg1[%c0_47, %c3] : memref<128x4xf32, #tpu.memory_space<vmem>>, vector<128x1xf32>
      %100 = vector.extract_strided_slice %99 {offsets = [0, 0], sizes = [126, 1], strides = [1, 1]} : vector<128x1xf32> to vector<126x1xf32>
      %c0_48 = arith.constant 0 : index
      %c0_49 = arith.constant 0 : index
      %101 = vector.load %arg2[%c0_48, %c0_49] : memref<3x64xf32, #tpu.memory_space<vmem>>, vector<1x64xf32>
      %102 = vector.broadcast %100 : vector<126x1xf32> to vector<126x64xf32>
      %103 = vector.broadcast %101 : vector<1x64xf32> to vector<126x64xf32>
      %104 = arith.mulf %102, %103 : vector<126x64xf32>
      %105 = vector.extract_strided_slice %99 {offsets = [1, 0], sizes = [126, 1], strides = [1, 1]} : vector<128x1xf32> to vector<126x1xf32>
      %c1_50 = arith.constant 1 : index
      %c0_51 = arith.constant 0 : index
      %106 = vector.load %arg2[%c1_50, %c0_51] : memref<3x64xf32, #tpu.memory_space<vmem>>, vector<1x64xf32>
      %107 = vector.broadcast %105 : vector<126x1xf32> to vector<126x64xf32>
      %108 = vector.broadcast %106 : vector<1x64xf32> to vector<126x64xf32>
      %109 = arith.mulf %107, %108 : vector<126x64xf32>
      %110 = arith.addf %104, %109 : vector<126x64xf32>
      %111 = vector.extract_strided_slice %99 {offsets = [2, 0], sizes = [126, 1], strides = [1, 1]} : vector<128x1xf32> to vector<126x1xf32>
      %c2_52 = arith.constant 2 : index
      %c0_53 = arith.constant 0 : index
      %112 = vector.load %arg2[%c2_52, %c0_53] : memref<3x64xf32, #tpu.memory_space<vmem>>, vector<1x64xf32>
      %113 = vector.broadcast %111 : vector<126x1xf32> to vector<126x64xf32>
      %114 = vector.broadcast %112 : vector<1x64xf32> to vector<126x64xf32>
      %115 = arith.mulf %113, %114 : vector<126x64xf32>
      %116 = arith.addf %110, %115 : vector<126x64xf32>
      %c0_54 = arith.constant 0 : index
      %c0_55 = arith.constant 0 : index
      %117 = vector.load %arg3[%c0_54, %c0_55] : memref<1x64xf32, #tpu.memory_space<vmem>>, vector<1x64xf32>
      %118 = vector.broadcast %117 : vector<1x64xf32> to vector<126x64xf32>
      %119 = arith.addf %116, %118 : vector<126x64xf32>
      %cst_56 = arith.constant 0.000000e+00 : f32
      %120 = vector.broadcast %cst_56 : f32 to vector<126x64xf32>
      %121 = arith.maximumf %119, %120 : vector<126x64xf32>
      %122 = vector.extract_strided_slice %121 {offsets = [0, 0], sizes = [124, 64], strides = [1, 1]} : vector<126x64xf32> to vector<124x64xf32>
      %123 = vector.extract_strided_slice %121 {offsets = [1, 0], sizes = [124, 64], strides = [1, 1]} : vector<126x64xf32> to vector<124x64xf32>
      %124 = vector.extract_strided_slice %121 {offsets = [2, 0], sizes = [124, 64], strides = [1, 1]} : vector<126x64xf32> to vector<124x64xf32>
      %125 = tpu.concatenate %122, %123, %124 in 1 : vector<124x64xf32>, vector<124x64xf32>, vector<124x64xf32> -> vector<124x192xf32>
      %126 = tpu.concatenate %44, %71, %98, %125 in 0 : vector<124x192xf32>, vector<124x192xf32>, vector<124x192xf32>, vector<124x192xf32> -> vector<496x192xf32>
      %c0_57 = arith.constant 0 : index
      %c0_58 = arith.constant 0 : index
      %127 = vector.load %arg4[%c0_57, %c0_58] : memref<192x64xf32, #tpu.memory_space<vmem>>, vector<192x64xf32>
      %cst_59 = arith.constant dense<0.000000e+00> : vector<496x64xf32>
      %128 = tpu.matmul %126, %127, %cst_59 {dimension_numbers = #tpu.dot_dimension_numbers<[1], [0], [0], [1], [0, 0, 1, 1], [], []>} : vector<496x192xf32>, vector<192x64xf32>, vector<496x64xf32> -> vector<496x64xf32>
      %c0_60 = arith.constant 0 : index
      %c0_61 = arith.constant 0 : index
      %129 = vector.load %arg5[%c0_60, %c0_61] : memref<1x64xf32, #tpu.memory_space<vmem>>, vector<1x64xf32>
      %130 = vector.broadcast %129 : vector<1x64xf32> to vector<496x64xf32>
      %131 = arith.addf %128, %130 : vector<496x64xf32>
      %cst_62 = arith.constant 0.000000e+00 : f32
      %132 = vector.broadcast %cst_62 : f32 to vector<496x64xf32>
      %133 = arith.maximumf %131, %132 : vector<496x64xf32>
      %c0_63 = arith.constant 0 : index
      %c0_64 = arith.constant 0 : index
      %134 = vector.load %arg16[%c0_63, %c0_64] : memref<496x64xf32, #tpu.memory_space<vmem>>, vector<496x64xf32>
      tpu.vector_store %arg16[%c0_63, %c0_64], %133 {strides = array<i32>} : memref<496x64xf32, #tpu.memory_space<vmem>>, vector<496x64xf32>,
      %c0_65 = arith.constant 0 : index
      %c0_66 = arith.constant 0 : index
      %135 = tpu.strided_load %arg16[%c0_65, %c0_66] {strides = array<i32: 4, 1>} : memref<496x64xf32, #tpu.memory_space<vmem>>, vector<124x64xf32>
      %c1_67 = arith.constant 1 : index
      %c0_68 = arith.constant 0 : index
      %136 = tpu.strided_load %arg16[%c1_67, %c0_68] {strides = array<i32: 4, 1>} : memref<496x64xf32, #tpu.memory_space<vmem>>, vector<124x64xf32>
      %c2_69 = arith.constant 2 : index
      %c0_70 = arith.constant 0 : index
      %137 = tpu.strided_load %arg16[%c2_69, %c0_70] {strides = array<i32: 4, 1>} : memref<496x64xf32, #tpu.memory_space<vmem>>, vector<124x64xf32>
      %c3_71 = arith.constant 3 : index
      %c0_72 = arith.constant 0 : index
      %138 = tpu.strided_load %arg16[%c3_71, %c0_72] {strides = array<i32: 4, 1>} : memref<496x64xf32, #tpu.memory_space<vmem>>, vector<124x64xf32>
      %139 = arith.maximumf %135, %136 : vector<124x64xf32>
      %140 = arith.maximumf %137, %138 : vector<124x64xf32>
      %141 = tpu.concatenate %139, %140 in 1 : vector<124x64xf32>, vector<124x64xf32> -> vector<124x128xf32>
      %c0_73 = arith.constant 0 : index
      %c0_74 = arith.constant 0 : index
      %142 = vector.load %arg17[%c0_73, %c0_74] : memref<124x128xf32, #tpu.memory_space<vmem>>, vector<124x128xf32>
      tpu.vector_store %arg17[%c0_73, %c0_74], %141 {strides = array<i32>} : memref<124x128xf32, #tpu.memory_space<vmem>>, vector<124x128xf32>,
      %c0_75 = arith.constant 0 : index
      %c0_76 = arith.constant 0 : index
      %143 = tpu.strided_load %arg17[%c0_75, %c0_76] {strides = array<i32: 31, 1>} : memref<124x128xf32, #tpu.memory_space<vmem>>, vector<4x128xf32>
      %144 = arith.truncf %143 : vector<4x128xf32> to vector<4x128xbf16>
      %c0_77 = arith.constant 0 : index
      %c0_78 = arith.constant 0 : index
      %c0_79 = arith.constant 0 : index
      %145 = vector.load %arg18[%c0_77, %c0_78, %c0_79] : memref<2x4x2048xbf16, #tpu.memory_space<vmem>>, vector<1x4x128xbf16>
      %146 = vector.shape_cast %145 : vector<1x4x128xbf16> to vector<4x128xbf16>
      %147 = vector.shape_cast %144 : vector<4x128xbf16> to vector<1x4x128xbf16>
      tpu.vector_store %arg18[%c0_77, %c0_78, %c0_79], %147 {strides = array<i32>} : memref<2x4x2048xbf16, #tpu.memory_space<vmem>>, vector<1x4x128xbf16>,
      %c1_80 = arith.constant 1 : index
      %c0_81 = arith.constant 0 : index
      %148 = tpu.strided_load %arg17[%c1_80, %c0_81] {strides = array<i32: 31, 1>} : memref<124x128xf32, #tpu.memory_space<vmem>>, vector<4x128xf32>
      %149 = arith.truncf %148 : vector<4x128xf32> to vector<4x128xbf16>
      %c0_82 = arith.constant 0 : index
      %c0_83 = arith.constant 0 : index
      %c128 = arith.constant 128 : index
      %150 = vector.load %arg18[%c0_82, %c0_83, %c128] : memref<2x4x2048xbf16, #tpu.memory_space<vmem>>, vector<1x4x128xbf16>
      %151 = vector.shape_cast %150 : vector<1x4x128xbf16> to vector<4x128xbf16>
      %152 = vector.shape_cast %149 : vector<4x128xbf16> to vector<1x4x128xbf16>
      tpu.vector_store %arg18[%c0_82, %c0_83, %c128], %152 {strides = array<i32>} : memref<2x4x2048xbf16, #tpu.memory_space<vmem>>, vector<1x4x128xbf16>,
      %c2_84 = arith.constant 2 : index
      %c0_85 = arith.constant 0 : index
      %153 = tpu.strided_load %arg17[%c2_84, %c0_85] {strides = array<i32: 31, 1>} : memref<124x128xf32, #tpu.memory_space<vmem>>, vector<4x128xf32>
      %154 = arith.truncf %153 : vector<4x128xf32> to vector<4x128xbf16>
      %c0_86 = arith.constant 0 : index
      %c0_87 = arith.constant 0 : index
      %c256 = arith.constant 256 : index
      %155 = vector.load %arg18[%c0_86, %c0_87, %c256] : memref<2x4x2048xbf16, #tpu.memory_space<vmem>>, vector<1x4x128xbf16>
      %156 = vector.shape_cast %155 : vector<1x4x128xbf16> to vector<4x128xbf16>
      %157 = vector.shape_cast %154 : vector<4x128xbf16> to vector<1x4x128xbf16>
      tpu.vector_store %arg18[%c0_86, %c0_87, %c256], %157 {strides = array<i32>} : memref<2x4x2048xbf16, #tpu.memory_space<vmem>>, vector<1x4x128xbf16>,
      %c3_88 = arith.constant 3 : index
      %c0_89 = arith.constant 0 : index
      %158 = tpu.strided_load %arg17[%c3_88, %c0_89] {strides = array<i32: 31, 1>} : memref<124x128xf32, #tpu.memory_space<vmem>>, vector<4x128xf32>
      %159 = arith.truncf %158 : vector<4x128xf32> to vector<4x128xbf16>
      %c0_90 = arith.constant 0 : index
      %c0_91 = arith.constant 0 : index
      %c384 = arith.constant 384 : index
      %160 = vector.load %arg18[%c0_90, %c0_91, %c384] : memref<2x4x2048xbf16, #tpu.memory_space<vmem>>, vector<1x4x128xbf16>
      %161 = vector.shape_cast %160 : vector<1x4x128xbf16> to vector<4x128xbf16>
      %162 = vector.shape_cast %159 : vector<4x128xbf16> to vector<1x4x128xbf16>
      tpu.vector_store %arg18[%c0_90, %c0_91, %c384], %162 {strides = array<i32>} : memref<2x4x2048xbf16, #tpu.memory_space<vmem>>, vector<1x4x128xbf16>,
      %c4 = arith.constant 4 : index
      %c0_92 = arith.constant 0 : index
      %163 = tpu.strided_load %arg17[%c4, %c0_92] {strides = array<i32: 31, 1>} : memref<124x128xf32, #tpu.memory_space<vmem>>, vector<4x128xf32>
      %164 = arith.truncf %163 : vector<4x128xf32> to vector<4x128xbf16>
      %c0_93 = arith.constant 0 : index
      %c0_94 = arith.constant 0 : index
      %c512 = arith.constant 512 : index
      %165 = vector.load %arg18[%c0_93, %c0_94, %c512] : memref<2x4x2048xbf16, #tpu.memory_space<vmem>>, vector<1x4x128xbf16>
      %166 = vector.shape_cast %165 : vector<1x4x128xbf16> to vector<4x128xbf16>
      %167 = vector.shape_cast %164 : vector<4x128xbf16> to vector<1x4x128xbf16>
      tpu.vector_store %arg18[%c0_93, %c0_94, %c512], %167 {strides = array<i32>} : memref<2x4x2048xbf16, #tpu.memory_space<vmem>>, vector<1x4x128xbf16>,
      %c5 = arith.constant 5 : index
      %c0_95 = arith.constant 0 : index
      %168 = tpu.strided_load %arg17[%c5, %c0_95] {strides = array<i32: 31, 1>} : memref<124x128xf32, #tpu.memory_space<vmem>>, vector<4x128xf32>
      %169 = arith.truncf %168 : vector<4x128xf32> to vector<4x128xbf16>
      %c0_96 = arith.constant 0 : index
      %c0_97 = arith.constant 0 : index
      %c640 = arith.constant 640 : index
      %170 = vector.load %arg18[%c0_96, %c0_97, %c640] : memref<2x4x2048xbf16, #tpu.memory_space<vmem>>, vector<1x4x128xbf16>
      %171 = vector.shape_cast %170 : vector<1x4x128xbf16> to vector<4x128xbf16>
      %172 = vector.shape_cast %169 : vector<4x128xbf16> to vector<1x4x128xbf16>
      tpu.vector_store %arg18[%c0_96, %c0_97, %c640], %172 {strides = array<i32>} : memref<2x4x2048xbf16, #tpu.memory_space<vmem>>, vector<1x4x128xbf16>,
      %c6 = arith.constant 6 : index
      %c0_98 = arith.constant 0 : index
      %173 = tpu.strided_load %arg17[%c6, %c0_98] {strides = array<i32: 31, 1>} : memref<124x128xf32, #tpu.memory_space<vmem>>, vector<4x128xf32>
      %174 = arith.truncf %173 : vector<4x128xf32> to vector<4x128xbf16>
      %c0_99 = arith.constant 0 : index
      %c0_100 = arith.constant 0 : index
      %c768 = arith.constant 768 : index
      %175 = vector.load %arg18[%c0_99, %c0_100, %c768] : memref<2x4x2048xbf16, #tpu.memory_space<vmem>>, vector<1x4x128xbf16>
      %176 = vector.shape_cast %175 : vector<1x4x128xbf16> to vector<4x128xbf16>
      %177 = vector.shape_cast %174 : vector<4x128xbf16> to vector<1x4x128xbf16>
      tpu.vector_store %arg18[%c0_99, %c0_100, %c768], %177 {strides = array<i32>} : memref<2x4x2048xbf16, #tpu.memory_space<vmem>>, vector<1x4x128xbf16>,
      %c7 = arith.constant 7 : index
      %c0_101 = arith.constant 0 : index
      %178 = tpu.strided_load %arg17[%c7, %c0_101] {strides = array<i32: 31, 1>} : memref<124x128xf32, #tpu.memory_space<vmem>>, vector<4x128xf32>
      %179 = arith.truncf %178 : vector<4x128xf32> to vector<4x128xbf16>
      %c0_102 = arith.constant 0 : index
      %c0_103 = arith.constant 0 : index
      %c896 = arith.constant 896 : index
      %180 = vector.load %arg18[%c0_102, %c0_103, %c896] : memref<2x4x2048xbf16, #tpu.memory_space<vmem>>, vector<1x4x128xbf16>
      %181 = vector.shape_cast %180 : vector<1x4x128xbf16> to vector<4x128xbf16>
      %182 = vector.shape_cast %179 : vector<4x128xbf16> to vector<1x4x128xbf16>
      tpu.vector_store %arg18[%c0_102, %c0_103, %c896], %182 {strides = array<i32>} : memref<2x4x2048xbf16, #tpu.memory_space<vmem>>, vector<1x4x128xbf16>,
      %c8 = arith.constant 8 : index
      %c0_104 = arith.constant 0 : index
      %183 = tpu.strided_load %arg17[%c8, %c0_104] {strides = array<i32: 31, 1>} : memref<124x128xf32, #tpu.memory_space<vmem>>, vector<4x128xf32>
      %184 = arith.truncf %183 : vector<4x128xf32> to vector<4x128xbf16>
      %c0_105 = arith.constant 0 : index
      %c0_106 = arith.constant 0 : index
      %c1024 = arith.constant 1024 : index
      %185 = vector.load %arg18[%c0_105, %c0_106, %c1024] : memref<2x4x2048xbf16, #tpu.memory_space<vmem>>, vector<1x4x128xbf16>
      %186 = vector.shape_cast %185 : vector<1x4x128xbf16> to vector<4x128xbf16>
      %187 = vector.shape_cast %184 : vector<4x128xbf16> to vector<1x4x128xbf16>
      tpu.vector_store %arg18[%c0_105, %c0_106, %c1024], %187 {strides = array<i32>} : memref<2x4x2048xbf16, #tpu.memory_space<vmem>>, vector<1x4x128xbf16>,
      %c9 = arith.constant 9 : index
      %c0_107 = arith.constant 0 : index
      %188 = tpu.strided_load %arg17[%c9, %c0_107] {strides = array<i32: 31, 1>} : memref<124x128xf32, #tpu.memory_space<vmem>>, vector<4x128xf32>
      %189 = arith.truncf %188 : vector<4x128xf32> to vector<4x128xbf16>
      %c0_108 = arith.constant 0 : index
      %c0_109 = arith.constant 0 : index
      %c1152 = arith.constant 1152 : index
      %190 = vector.load %arg18[%c0_108, %c0_109, %c1152] : memref<2x4x2048xbf16, #tpu.memory_space<vmem>>, vector<1x4x128xbf16>
      %191 = vector.shape_cast %190 : vector<1x4x128xbf16> to vector<4x128xbf16>
      %192 = vector.shape_cast %189 : vector<4x128xbf16> to vector<1x4x128xbf16>
      tpu.vector_store %arg18[%c0_108, %c0_109, %c1152], %192 {strides = array<i32>} : memref<2x4x2048xbf16, #tpu.memory_space<vmem>>, vector<1x4x128xbf16>,
      %c10 = arith.constant 10 : index
      %c0_110 = arith.constant 0 : index
      %193 = tpu.strided_load %arg17[%c10, %c0_110] {strides = array<i32: 31, 1>} : memref<124x128xf32, #tpu.memory_space<vmem>>, vector<4x128xf32>
      %194 = arith.truncf %193 : vector<4x128xf32> to vector<4x128xbf16>
      %c0_111 = arith.constant 0 : index
      %c0_112 = arith.constant 0 : index
      %c1280 = arith.constant 1280 : index
      %195 = vector.load %arg18[%c0_111, %c0_112, %c1280] : memref<2x4x2048xbf16, #tpu.memory_space<vmem>>, vector<1x4x128xbf16>
      %196 = vector.shape_cast %195 : vector<1x4x128xbf16> to vector<4x128xbf16>
      %197 = vector.shape_cast %194 : vector<4x128xbf16> to vector<1x4x128xbf16>
      tpu.vector_store %arg18[%c0_111, %c0_112, %c1280], %197 {strides = array<i32>} : memref<2x4x2048xbf16, #tpu.memory_space<vmem>>, vector<1x4x128xbf16>,
      %c11 = arith.constant 11 : index
      %c0_113 = arith.constant 0 : index
      %198 = tpu.strided_load %arg17[%c11, %c0_113] {strides = array<i32: 31, 1>} : memref<124x128xf32, #tpu.memory_space<vmem>>, vector<4x128xf32>
      %199 = arith.truncf %198 : vector<4x128xf32> to vector<4x128xbf16>
      %c0_114 = arith.constant 0 : index
      %c0_115 = arith.constant 0 : index
      %c1408 = arith.constant 1408 : index
      %200 = vector.load %arg18[%c0_114, %c0_115, %c1408] : memref<2x4x2048xbf16, #tpu.memory_space<vmem>>, vector<1x4x128xbf16>
      %201 = vector.shape_cast %200 : vector<1x4x128xbf16> to vector<4x128xbf16>
      %202 = vector.shape_cast %199 : vector<4x128xbf16> to vector<1x4x128xbf16>
      tpu.vector_store %arg18[%c0_114, %c0_115, %c1408], %202 {strides = array<i32>} : memref<2x4x2048xbf16, #tpu.memory_space<vmem>>, vector<1x4x128xbf16>,
      %c12 = arith.constant 12 : index
      %c0_116 = arith.constant 0 : index
      %203 = tpu.strided_load %arg17[%c12, %c0_116] {strides = array<i32: 31, 1>} : memref<124x128xf32, #tpu.memory_space<vmem>>, vector<4x128xf32>
      %204 = arith.truncf %203 : vector<4x128xf32> to vector<4x128xbf16>
      %c0_117 = arith.constant 0 : index
      %c0_118 = arith.constant 0 : index
      %c1536 = arith.constant 1536 : index
      %205 = vector.load %arg18[%c0_117, %c0_118, %c1536] : memref<2x4x2048xbf16, #tpu.memory_space<vmem>>, vector<1x4x128xbf16>
      %206 = vector.shape_cast %205 : vector<1x4x128xbf16> to vector<4x128xbf16>
      %207 = vector.shape_cast %204 : vector<4x128xbf16> to vector<1x4x128xbf16>
      tpu.vector_store %arg18[%c0_117, %c0_118, %c1536], %207 {strides = array<i32>} : memref<2x4x2048xbf16, #tpu.memory_space<vmem>>, vector<1x4x128xbf16>,
      %c13 = arith.constant 13 : index
      %c0_119 = arith.constant 0 : index
      %208 = tpu.strided_load %arg17[%c13, %c0_119] {strides = array<i32: 31, 1>} : memref<124x128xf32, #tpu.memory_space<vmem>>, vector<4x128xf32>
      %209 = arith.truncf %208 : vector<4x128xf32> to vector<4x128xbf16>
      %c0_120 = arith.constant 0 : index
      %c0_121 = arith.constant 0 : index
      %c1664 = arith.constant 1664 : index
      %210 = vector.load %arg18[%c0_120, %c0_121, %c1664] : memref<2x4x2048xbf16, #tpu.memory_space<vmem>>, vector<1x4x128xbf16>
      %211 = vector.shape_cast %210 : vector<1x4x128xbf16> to vector<4x128xbf16>
      %212 = vector.shape_cast %209 : vector<4x128xbf16> to vector<1x4x128xbf16>
      tpu.vector_store %arg18[%c0_120, %c0_121, %c1664], %212 {strides = array<i32>} : memref<2x4x2048xbf16, #tpu.memory_space<vmem>>, vector<1x4x128xbf16>,
      %c14 = arith.constant 14 : index
      %c0_122 = arith.constant 0 : index
      %213 = tpu.strided_load %arg17[%c14, %c0_122] {strides = array<i32: 31, 1>} : memref<124x128xf32, #tpu.memory_space<vmem>>, vector<4x128xf32>
      %214 = arith.truncf %213 : vector<4x128xf32> to vector<4x128xbf16>
      %c0_123 = arith.constant 0 : index
      %c0_124 = arith.constant 0 : index
      %c1792 = arith.constant 1792 : index
      %215 = vector.load %arg18[%c0_123, %c0_124, %c1792] : memref<2x4x2048xbf16, #tpu.memory_space<vmem>>, vector<1x4x128xbf16>
      %216 = vector.shape_cast %215 : vector<1x4x128xbf16> to vector<4x128xbf16>
      %217 = vector.shape_cast %214 : vector<4x128xbf16> to vector<1x4x128xbf16>
      tpu.vector_store %arg18[%c0_123, %c0_124, %c1792], %217 {strides = array<i32>} : memref<2x4x2048xbf16, #tpu.memory_space<vmem>>, vector<1x4x128xbf16>,
      %c15 = arith.constant 15 : index
      %c0_125 = arith.constant 0 : index
      %218 = tpu.strided_load %arg17[%c15, %c0_125] {strides = array<i32: 31, 1>} : memref<124x128xf32, #tpu.memory_space<vmem>>, vector<4x128xf32>
      %219 = arith.truncf %218 : vector<4x128xf32> to vector<4x128xbf16>
      %c0_126 = arith.constant 0 : index
      %c0_127 = arith.constant 0 : index
      %c1920 = arith.constant 1920 : index
      %220 = vector.load %arg18[%c0_126, %c0_127, %c1920] : memref<2x4x2048xbf16, #tpu.memory_space<vmem>>, vector<1x4x128xbf16>
      %221 = vector.shape_cast %220 : vector<1x4x128xbf16> to vector<4x128xbf16>
      %222 = vector.shape_cast %219 : vector<4x128xbf16> to vector<1x4x128xbf16>
      tpu.vector_store %arg18[%c0_126, %c0_127, %c1920], %222 {strides = array<i32>} : memref<2x4x2048xbf16, #tpu.memory_space<vmem>>, vector<1x4x128xbf16>,
      %c16 = arith.constant 16 : index
      %c0_128 = arith.constant 0 : index
      %223 = tpu.strided_load %arg17[%c16, %c0_128] {strides = array<i32: 31, 1>} : memref<124x128xf32, #tpu.memory_space<vmem>>, vector<4x128xf32>
      %224 = arith.truncf %223 : vector<4x128xf32> to vector<4x128xbf16>
      %c1_129 = arith.constant 1 : index
      %c0_130 = arith.constant 0 : index
      %c0_131 = arith.constant 0 : index
      %225 = vector.load %arg18[%c1_129, %c0_130, %c0_131] : memref<2x4x2048xbf16, #tpu.memory_space<vmem>>, vector<1x4x128xbf16>
      %226 = vector.shape_cast %225 : vector<1x4x128xbf16> to vector<4x128xbf16>
      %227 = vector.shape_cast %224 : vector<4x128xbf16> to vector<1x4x128xbf16>
      tpu.vector_store %arg18[%c1_129, %c0_130, %c0_131], %227 {strides = array<i32>} : memref<2x4x2048xbf16, #tpu.memory_space<vmem>>, vector<1x4x128xbf16>,
      %c17 = arith.constant 17 : index
      %c0_132 = arith.constant 0 : index
      %228 = tpu.strided_load %arg17[%c17, %c0_132] {strides = array<i32: 31, 1>} : memref<124x128xf32, #tpu.memory_space<vmem>>, vector<4x128xf32>
      %229 = arith.truncf %228 : vector<4x128xf32> to vector<4x128xbf16>
      %c1_133 = arith.constant 1 : index
      %c0_134 = arith.constant 0 : index
      %c128_135 = arith.constant 128 : index
      %230 = vector.load %arg18[%c1_133, %c0_134, %c128_135] : memref<2x4x2048xbf16, #tpu.memory_space<vmem>>, vector<1x4x128xbf16>
      %231 = vector.shape_cast %230 : vector<1x4x128xbf16> to vector<4x128xbf16>
      %232 = vector.shape_cast %229 : vector<4x128xbf16> to vector<1x4x128xbf16>
      tpu.vector_store %arg18[%c1_133, %c0_134, %c128_135], %232 {strides = array<i32>} : memref<2x4x2048xbf16, #tpu.memory_space<vmem>>, vector<1x4x128xbf16>,
      %c18 = arith.constant 18 : index
      %c0_136 = arith.constant 0 : index
      %233 = tpu.strided_load %arg17[%c18, %c0_136] {strides = array<i32: 31, 1>} : memref<124x128xf32, #tpu.memory_space<vmem>>, vector<4x128xf32>
      %234 = arith.truncf %233 : vector<4x128xf32> to vector<4x128xbf16>
      %c1_137 = arith.constant 1 : index
      %c0_138 = arith.constant 0 : index
      %c256_139 = arith.constant 256 : index
      %235 = vector.load %arg18[%c1_137, %c0_138, %c256_139] : memref<2x4x2048xbf16, #tpu.memory_space<vmem>>, vector<1x4x128xbf16>
      %236 = vector.shape_cast %235 : vector<1x4x128xbf16> to vector<4x128xbf16>
      %237 = vector.shape_cast %234 : vector<4x128xbf16> to vector<1x4x128xbf16>
      tpu.vector_store %arg18[%c1_137, %c0_138, %c256_139], %237 {strides = array<i32>} : memref<2x4x2048xbf16, #tpu.memory_space<vmem>>, vector<1x4x128xbf16>,
      %c19 = arith.constant 19 : index
      %c0_140 = arith.constant 0 : index
      %238 = tpu.strided_load %arg17[%c19, %c0_140] {strides = array<i32: 31, 1>} : memref<124x128xf32, #tpu.memory_space<vmem>>, vector<4x128xf32>
      %239 = arith.truncf %238 : vector<4x128xf32> to vector<4x128xbf16>
      %c1_141 = arith.constant 1 : index
      %c0_142 = arith.constant 0 : index
      %c384_143 = arith.constant 384 : index
      %240 = vector.load %arg18[%c1_141, %c0_142, %c384_143] : memref<2x4x2048xbf16, #tpu.memory_space<vmem>>, vector<1x4x128xbf16>
      %241 = vector.shape_cast %240 : vector<1x4x128xbf16> to vector<4x128xbf16>
      %242 = vector.shape_cast %239 : vector<4x128xbf16> to vector<1x4x128xbf16>
      tpu.vector_store %arg18[%c1_141, %c0_142, %c384_143], %242 {strides = array<i32>} : memref<2x4x2048xbf16, #tpu.memory_space<vmem>>, vector<1x4x128xbf16>,
      %c20 = arith.constant 20 : index
      %c0_144 = arith.constant 0 : index
      %243 = tpu.strided_load %arg17[%c20, %c0_144] {strides = array<i32: 31, 1>} : memref<124x128xf32, #tpu.memory_space<vmem>>, vector<4x128xf32>
      %244 = arith.truncf %243 : vector<4x128xf32> to vector<4x128xbf16>
      %c1_145 = arith.constant 1 : index
      %c0_146 = arith.constant 0 : index
      %c512_147 = arith.constant 512 : index
      %245 = vector.load %arg18[%c1_145, %c0_146, %c512_147] : memref<2x4x2048xbf16, #tpu.memory_space<vmem>>, vector<1x4x128xbf16>
      %246 = vector.shape_cast %245 : vector<1x4x128xbf16> to vector<4x128xbf16>
      %247 = vector.shape_cast %244 : vector<4x128xbf16> to vector<1x4x128xbf16>
      tpu.vector_store %arg18[%c1_145, %c0_146, %c512_147], %247 {strides = array<i32>} : memref<2x4x2048xbf16, #tpu.memory_space<vmem>>, vector<1x4x128xbf16>,
      %c21 = arith.constant 21 : index
      %c0_148 = arith.constant 0 : index
      %248 = tpu.strided_load %arg17[%c21, %c0_148] {strides = array<i32: 31, 1>} : memref<124x128xf32, #tpu.memory_space<vmem>>, vector<4x128xf32>
      %249 = arith.truncf %248 : vector<4x128xf32> to vector<4x128xbf16>
      %c1_149 = arith.constant 1 : index
      %c0_150 = arith.constant 0 : index
      %c640_151 = arith.constant 640 : index
      %250 = vector.load %arg18[%c1_149, %c0_150, %c640_151] : memref<2x4x2048xbf16, #tpu.memory_space<vmem>>, vector<1x4x128xbf16>
      %251 = vector.shape_cast %250 : vector<1x4x128xbf16> to vector<4x128xbf16>
      %252 = vector.shape_cast %249 : vector<4x128xbf16> to vector<1x4x128xbf16>
      tpu.vector_store %arg18[%c1_149, %c0_150, %c640_151], %252 {strides = array<i32>} : memref<2x4x2048xbf16, #tpu.memory_space<vmem>>, vector<1x4x128xbf16>,
      %c22 = arith.constant 22 : index
      %c0_152 = arith.constant 0 : index
      %253 = tpu.strided_load %arg17[%c22, %c0_152] {strides = array<i32: 31, 1>} : memref<124x128xf32, #tpu.memory_space<vmem>>, vector<4x128xf32>
      %254 = arith.truncf %253 : vector<4x128xf32> to vector<4x128xbf16>
      %c1_153 = arith.constant 1 : index
      %c0_154 = arith.constant 0 : index
      %c768_155 = arith.constant 768 : index
      %255 = vector.load %arg18[%c1_153, %c0_154, %c768_155] : memref<2x4x2048xbf16, #tpu.memory_space<vmem>>, vector<1x4x128xbf16>
      %256 = vector.shape_cast %255 : vector<1x4x128xbf16> to vector<4x128xbf16>
      %257 = vector.shape_cast %254 : vector<4x128xbf16> to vector<1x4x128xbf16>
      tpu.vector_store %arg18[%c1_153, %c0_154, %c768_155], %257 {strides = array<i32>} : memref<2x4x2048xbf16, #tpu.memory_space<vmem>>, vector<1x4x128xbf16>,
      %c23 = arith.constant 23 : index
      %c0_156 = arith.constant 0 : index
      %258 = tpu.strided_load %arg17[%c23, %c0_156] {strides = array<i32: 31, 1>} : memref<124x128xf32, #tpu.memory_space<vmem>>, vector<4x128xf32>
      %259 = arith.truncf %258 : vector<4x128xf32> to vector<4x128xbf16>
      %c1_157 = arith.constant 1 : index
      %c0_158 = arith.constant 0 : index
      %c896_159 = arith.constant 896 : index
      %260 = vector.load %arg18[%c1_157, %c0_158, %c896_159] : memref<2x4x2048xbf16, #tpu.memory_space<vmem>>, vector<1x4x128xbf16>
      %261 = vector.shape_cast %260 : vector<1x4x128xbf16> to vector<4x128xbf16>
      %262 = vector.shape_cast %259 : vector<4x128xbf16> to vector<1x4x128xbf16>
      tpu.vector_store %arg18[%c1_157, %c0_158, %c896_159], %262 {strides = array<i32>} : memref<2x4x2048xbf16, #tpu.memory_space<vmem>>, vector<1x4x128xbf16>,
      %c24 = arith.constant 24 : index
      %c0_160 = arith.constant 0 : index
      %263 = tpu.strided_load %arg17[%c24, %c0_160] {strides = array<i32: 31, 1>} : memref<124x128xf32, #tpu.memory_space<vmem>>, vector<4x128xf32>
      %264 = arith.truncf %263 : vector<4x128xf32> to vector<4x128xbf16>
      %c1_161 = arith.constant 1 : index
      %c0_162 = arith.constant 0 : index
      %c1024_163 = arith.constant 1024 : index
      %265 = vector.load %arg18[%c1_161, %c0_162, %c1024_163] : memref<2x4x2048xbf16, #tpu.memory_space<vmem>>, vector<1x4x128xbf16>
      %266 = vector.shape_cast %265 : vector<1x4x128xbf16> to vector<4x128xbf16>
      %267 = vector.shape_cast %264 : vector<4x128xbf16> to vector<1x4x128xbf16>
      tpu.vector_store %arg18[%c1_161, %c0_162, %c1024_163], %267 {strides = array<i32>} : memref<2x4x2048xbf16, #tpu.memory_space<vmem>>, vector<1x4x128xbf16>,
      %c25 = arith.constant 25 : index
      %c0_164 = arith.constant 0 : index
      %268 = tpu.strided_load %arg17[%c25, %c0_164] {strides = array<i32: 31, 1>} : memref<124x128xf32, #tpu.memory_space<vmem>>, vector<4x128xf32>
      %269 = arith.truncf %268 : vector<4x128xf32> to vector<4x128xbf16>
      %c1_165 = arith.constant 1 : index
      %c0_166 = arith.constant 0 : index
      %c1152_167 = arith.constant 1152 : index
      %270 = vector.load %arg18[%c1_165, %c0_166, %c1152_167] : memref<2x4x2048xbf16, #tpu.memory_space<vmem>>, vector<1x4x128xbf16>
      %271 = vector.shape_cast %270 : vector<1x4x128xbf16> to vector<4x128xbf16>
      %272 = vector.shape_cast %269 : vector<4x128xbf16> to vector<1x4x128xbf16>
      tpu.vector_store %arg18[%c1_165, %c0_166, %c1152_167], %272 {strides = array<i32>} : memref<2x4x2048xbf16, #tpu.memory_space<vmem>>, vector<1x4x128xbf16>,
      %c26 = arith.constant 26 : index
      %c0_168 = arith.constant 0 : index
      %273 = tpu.strided_load %arg17[%c26, %c0_168] {strides = array<i32: 31, 1>} : memref<124x128xf32, #tpu.memory_space<vmem>>, vector<4x128xf32>
      %274 = arith.truncf %273 : vector<4x128xf32> to vector<4x128xbf16>
      %c1_169 = arith.constant 1 : index
      %c0_170 = arith.constant 0 : index
      %c1280_171 = arith.constant 1280 : index
      %275 = vector.load %arg18[%c1_169, %c0_170, %c1280_171] : memref<2x4x2048xbf16, #tpu.memory_space<vmem>>, vector<1x4x128xbf16>
      %276 = vector.shape_cast %275 : vector<1x4x128xbf16> to vector<4x128xbf16>
      %277 = vector.shape_cast %274 : vector<4x128xbf16> to vector<1x4x128xbf16>
      tpu.vector_store %arg18[%c1_169, %c0_170, %c1280_171], %277 {strides = array<i32>} : memref<2x4x2048xbf16, #tpu.memory_space<vmem>>, vector<1x4x128xbf16>,
      %c27 = arith.constant 27 : index
      %c0_172 = arith.constant 0 : index
      %278 = tpu.strided_load %arg17[%c27, %c0_172] {strides = array<i32: 31, 1>} : memref<124x128xf32, #tpu.memory_space<vmem>>, vector<4x128xf32>
      %279 = arith.truncf %278 : vector<4x128xf32> to vector<4x128xbf16>
      %c1_173 = arith.constant 1 : index
      %c0_174 = arith.constant 0 : index
      %c1408_175 = arith.constant 1408 : index
      %280 = vector.load %arg18[%c1_173, %c0_174, %c1408_175] : memref<2x4x2048xbf16, #tpu.memory_space<vmem>>, vector<1x4x128xbf16>
      %281 = vector.shape_cast %280 : vector<1x4x128xbf16> to vector<4x128xbf16>
      %282 = vector.shape_cast %279 : vector<4x128xbf16> to vector<1x4x128xbf16>
      tpu.vector_store %arg18[%c1_173, %c0_174, %c1408_175], %282 {strides = array<i32>} : memref<2x4x2048xbf16, #tpu.memory_space<vmem>>, vector<1x4x128xbf16>,
      %c28 = arith.constant 28 : index
      %c0_176 = arith.constant 0 : index
      %283 = tpu.strided_load %arg17[%c28, %c0_176] {strides = array<i32: 31, 1>} : memref<124x128xf32, #tpu.memory_space<vmem>>, vector<4x128xf32>
      %284 = arith.truncf %283 : vector<4x128xf32> to vector<4x128xbf16>
      %c1_177 = arith.constant 1 : index
      %c0_178 = arith.constant 0 : index
      %c1536_179 = arith.constant 1536 : index
      %285 = vector.load %arg18[%c1_177, %c0_178, %c1536_179] : memref<2x4x2048xbf16, #tpu.memory_space<vmem>>, vector<1x4x128xbf16>
      %286 = vector.shape_cast %285 : vector<1x4x128xbf16> to vector<4x128xbf16>
      %287 = vector.shape_cast %284 : vector<4x128xbf16> to vector<1x4x128xbf16>
      tpu.vector_store %arg18[%c1_177, %c0_178, %c1536_179], %287 {strides = array<i32>} : memref<2x4x2048xbf16, #tpu.memory_space<vmem>>, vector<1x4x128xbf16>,
      %c29 = arith.constant 29 : index
      %c0_180 = arith.constant 0 : index
      %288 = tpu.strided_load %arg17[%c29, %c0_180] {strides = array<i32: 31, 1>} : memref<124x128xf32, #tpu.memory_space<vmem>>, vector<4x128xf32>
      %289 = arith.truncf %288 : vector<4x128xf32> to vector<4x128xbf16>
      %c1_181 = arith.constant 1 : index
      %c0_182 = arith.constant 0 : index
      %c1664_183 = arith.constant 1664 : index
      %290 = vector.load %arg18[%c1_181, %c0_182, %c1664_183] : memref<2x4x2048xbf16, #tpu.memory_space<vmem>>, vector<1x4x128xbf16>
      %291 = vector.shape_cast %290 : vector<1x4x128xbf16> to vector<4x128xbf16>
      %292 = vector.shape_cast %289 : vector<4x128xbf16> to vector<1x4x128xbf16>
      tpu.vector_store %arg18[%c1_181, %c0_182, %c1664_183], %292 {strides = array<i32>} : memref<2x4x2048xbf16, #tpu.memory_space<vmem>>, vector<1x4x128xbf16>,
      %c30 = arith.constant 30 : index
      %c0_184 = arith.constant 0 : index
      %293 = tpu.strided_load %arg17[%c30, %c0_184] {strides = array<i32: 31, 1>} : memref<124x128xf32, #tpu.memory_space<vmem>>, vector<4x128xf32>
      %294 = arith.truncf %293 : vector<4x128xf32> to vector<4x128xbf16>
      %c1_185 = arith.constant 1 : index
      %c0_186 = arith.constant 0 : index
      %c1792_187 = arith.constant 1792 : index
      %295 = vector.load %arg18[%c1_185, %c0_186, %c1792_187] : memref<2x4x2048xbf16, #tpu.memory_space<vmem>>, vector<1x4x128xbf16>
      %296 = vector.shape_cast %295 : vector<1x4x128xbf16> to vector<4x128xbf16>
      %297 = vector.shape_cast %294 : vector<4x128xbf16> to vector<1x4x128xbf16>
      tpu.vector_store %arg18[%c1_185, %c0_186, %c1792_187], %297 {strides = array<i32>} : memref<2x4x2048xbf16, #tpu.memory_space<vmem>>, vector<1x4x128xbf16>,
    } else {
    }
    %c0 = arith.constant 0 : index
    %c0_1 = arith.constant 0 : index
    %3 = vector.load %arg19[%c0, %c0_1] : memref<4x512xf32, #tpu.memory_space<vmem>>, vector<4x512xf32>
    %4 = arith.index_cast %arg0 : i32 to index
    %c0_2 = arith.constant 0 : index
    %c0_3 = arith.constant 0 : index
    %5 = vector.load %arg18[%4, %c0_2, %c0_3] : memref<2x4x2048xbf16, #tpu.memory_space<vmem>>, vector<1x4x2048xbf16>
    %6 = vector.shape_cast %5 : vector<1x4x2048xbf16> to vector<4x2048xbf16>
    %c0_4 = arith.constant 0 : index
    %c0_5 = arith.constant 0 : index
    %7 = vector.load %arg6[%c0_4, %c0_5] : memref<2048x512xbf16, #tpu.memory_space<vmem>>, vector<2048x512xbf16>
    %cst = arith.constant dense<0.000000e+00> : vector<4x512xf32>
    %8 = tpu.matmul %6, %7, %cst {dimension_numbers = #tpu.dot_dimension_numbers<[1], [0], [0], [1], [0, 0, 1, 1], [], []>} : vector<4x2048xbf16>, vector<2048x512xbf16>, vector<4x512xf32> -> vector<4x512xf32>
    %9 = arith.addf %3, %8 : vector<4x512xf32>
    %c0_6 = arith.constant 0 : index
    %c0_7 = arith.constant 0 : index
    %10 = vector.load %arg19[%c0_6, %c0_7] : memref<4x512xf32, #tpu.memory_space<vmem>>, vector<4x512xf32>
    tpu.vector_store %arg19[%c0_6, %c0_7], %9 {strides = array<i32>} : memref<4x512xf32, #tpu.memory_space<vmem>>, vector<4x512xf32>,
    %c1_i32 = arith.constant 1 : i32
    %11 = arith.cmpi eq, %arg0, %c1_i32 : i32
    %12 = arith.extui %11 : i1 to i32
    %c0_i32_8 = arith.constant 0 : i32
    %13 = arith.cmpi ne, %12, %c0_i32_8 : i32
    scf.if %13 {
      %c0_9 = arith.constant 0 : index
      %c0_10 = arith.constant 0 : index
      %14 = vector.load %arg19[%c0_9, %c0_10] : memref<4x512xf32, #tpu.memory_space<vmem>>, vector<4x512xf32>
      %c0_11 = arith.constant 0 : index
      %c0_12 = arith.constant 0 : index
      %15 = vector.load %arg7[%c0_11, %c0_12] : memref<1x512xf32, #tpu.memory_space<vmem>>, vector<1x512xf32>
      %16 = vector.broadcast %15 : vector<1x512xf32> to vector<4x512xf32>
      %17 = arith.addf %14, %16 : vector<4x512xf32>
      %cst_13 = arith.constant 0.000000e+00 : f32
      %18 = vector.broadcast %cst_13 : f32 to vector<4x512xf32>
      %19 = arith.maximumf %17, %18 : vector<4x512xf32>
      %20 = arith.truncf %19 : vector<4x512xf32> to vector<4x512xbf16>
      %c0_14 = arith.constant 0 : index
      %c0_15 = arith.constant 0 : index
      %21 = vector.load %arg8[%c0_14, %c0_15] : memref<512x128xbf16, #tpu.memory_space<vmem>>, vector<512x128xbf16>
      %cst_16 = arith.constant dense<0.000000e+00> : vector<4x128xf32>
      %22 = tpu.matmul %20, %21, %cst_16 {dimension_numbers = #tpu.dot_dimension_numbers<[1], [0], [0], [1], [0, 0, 1, 1], [], []>} : vector<4x512xbf16>, vector<512x128xbf16>, vector<4x128xf32> -> vector<4x128xf32>
      %c0_17 = arith.constant 0 : index
      %c0_18 = arith.constant 0 : index
      %23 = vector.load %arg9[%c0_17, %c0_18] : memref<1x128xf32, #tpu.memory_space<vmem>>, vector<1x128xf32>
      %24 = vector.broadcast %23 : vector<1x128xf32> to vector<4x128xf32>
      %25 = arith.addf %22, %24 : vector<4x128xf32>
      %cst_19 = arith.constant 0.000000e+00 : f32
      %26 = vector.broadcast %cst_19 : f32 to vector<4x128xf32>
      %27 = arith.maximumf %25, %26 : vector<4x128xf32>
      %c0_20 = arith.constant 0 : index
      %c0_21 = arith.constant 0 : index
      %28 = vector.load %arg10[%c0_20, %c0_21] : memref<128x6xf32, #tpu.memory_space<vmem>>, vector<128x6xf32>
      %cst_22 = arith.constant dense<0.000000e+00> : vector<4x6xf32>
      %29 = tpu.matmul %27, %28, %cst_22 {dimension_numbers = #tpu.dot_dimension_numbers<[1], [0], [0], [1], [0, 0, 1, 1], [], []>} : vector<4x128xf32>, vector<128x6xf32>, vector<4x6xf32> -> vector<4x6xf32>
      %c0_23 = arith.constant 0 : index
      %c0_24 = arith.constant 0 : index
      %30 = vector.load %arg11[%c0_23, %c0_24] : memref<1x6xf32, #tpu.memory_space<vmem>>, vector<1x6xf32>
      %31 = vector.broadcast %30 : vector<1x6xf32> to vector<4x6xf32>
      %32 = arith.addf %29, %31 : vector<4x6xf32>
      %c0_25 = arith.constant 0 : index
      %c0_26 = arith.constant 0 : index
      %33 = vector.load %arg12[%c0_25, %c0_26] : memref<128x6xf32, #tpu.memory_space<vmem>>, vector<128x6xf32>
      %cst_27 = arith.constant dense<0.000000e+00> : vector<4x6xf32>
      %34 = tpu.matmul %27, %33, %cst_27 {dimension_numbers = #tpu.dot_dimension_numbers<[1], [0], [0], [1], [0, 0, 1, 1], [], []>} : vector<4x128xf32>, vector<128x6xf32>, vector<4x6xf32> -> vector<4x6xf32>
      %c0_28 = arith.constant 0 : index
      %c0_29 = arith.constant 0 : index
      %35 = vector.load %arg13[%c0_28, %c0_29] : memref<1x6xf32, #tpu.memory_space<vmem>>, vector<1x6xf32>
      %36 = vector.broadcast %35 : vector<1x6xf32> to vector<4x6xf32>
      %37 = arith.addf %34, %36 : vector<4x6xf32>
      %cst_30 = arith.constant dense<0xFF800000> : vector<4xf32>
      %38 = vector.multi_reduction <maximumf>, %32, %cst_30 [1] : vector<4x6xf32> to vector<4xf32>
      %39 = vector.shape_cast %38 : vector<4xf32> to vector<4x1xf32>
      %40 = vector.broadcast %39 : vector<4x1xf32> to vector<4x6xf32>
      %41 = arith.subf %32, %40 : vector<4x6xf32>
      %42 = math.exp %41 : vector<4x6xf32>
      %cst_31 = arith.constant dense<0.000000e+00> : vector<4xf32>
      %43 = vector.multi_reduction <add>, %42, %cst_31 [1] : vector<4x6xf32> to vector<4xf32>
      %44 = vector.shape_cast %43 : vector<4xf32> to vector<4x1xf32>
      %45 = vector.broadcast %44 : vector<4x1xf32> to vector<4x6xf32>
      %46 = arith.divf %42, %45 : vector<4x6xf32>
      %c0_32 = arith.constant 0 : index
      %c0_33 = arith.constant 0 : index
      %47 = vector.load %arg14[%c0_32, %c0_33] : memref<4x6xf32, #tpu.memory_space<vmem>>, vector<4x6xf32>
      tpu.vector_store %arg14[%c0_32, %c0_33], %46 {strides = array<i32>} : memref<4x6xf32, #tpu.memory_space<vmem>>, vector<4x6xf32>,
      %cst_34 = arith.constant dense<0xFF800000> : vector<4xf32>
      %48 = vector.multi_reduction <maximumf>, %37, %cst_34 [1] : vector<4x6xf32> to vector<4xf32>
      %49 = vector.shape_cast %48 : vector<4xf32> to vector<4x1xf32>
      %50 = vector.broadcast %49 : vector<4x1xf32> to vector<4x6xf32>
      %51 = arith.subf %37, %50 : vector<4x6xf32>
      %52 = math.exp %51 : vector<4x6xf32>
      %cst_35 = arith.constant dense<0.000000e+00> : vector<4xf32>
      %53 = vector.multi_reduction <add>, %52, %cst_35 [1] : vector<4x6xf32> to vector<4xf32>
      %54 = vector.shape_cast %53 : vector<4xf32> to vector<4x1xf32>
      %55 = vector.broadcast %54 : vector<4x1xf32> to vector<4x6xf32>
      %56 = arith.divf %52, %55 : vector<4x6xf32>
      %c0_36 = arith.constant 0 : index
      %c0_37 = arith.constant 0 : index
      %57 = vector.load %arg15[%c0_36, %c0_37] : memref<4x6xf32, #tpu.memory_space<vmem>>, vector<4x6xf32>
      tpu.vector_store %arg15[%c0_36, %c0_37], %56 {strides = array<i32>} : memref<4x6xf32, #tpu.memory_space<vmem>>, vector<4x6xf32>,
    } else {
    }
    return
  }
  func.func @transform_0(%arg0: i32) -> (i32, i32) {
    %c0_i32 = arith.constant 0 : i32
    %c0_i32_0 = arith.constant 0 : i32
    %c0_i32_1 = arith.constant 0 : i32
    return %c0_i32, %c0_i32_0 : i32, i32
  }
  func.func @transform_1(%arg0: i32) -> (i32, i32) {
    %c0_i32 = arith.constant 0 : i32
    %c0_i32_0 = arith.constant 0 : i32
    %c0_i32_1 = arith.constant 0 : i32
    return %c0_i32, %c0_i32_0 : i32, i32
  }
  func.func @transform_2(%arg0: i32) -> (i32, i32) {
    %c0_i32 = arith.constant 0 : i32
    %c0_i32_0 = arith.constant 0 : i32
    %c0_i32_1 = arith.constant 0 : i32
    return %c0_i32, %c0_i32_0 : i32, i32
  }
  func.func @transform_3(%arg0: i32) -> (i32, i32) {
    %c0_i32 = arith.constant 0 : i32
    %c0_i32_0 = arith.constant 0 : i32
    %c0_i32_1 = arith.constant 0 : i32
    return %c0_i32, %c0_i32_0 : i32, i32
  }
  func.func @transform_4(%arg0: i32) -> (i32, i32) {
    %c0_i32 = arith.constant 0 : i32
    %c0_i32_0 = arith.constant 0 : i32
    %c0_i32_1 = arith.constant 0 : i32
    return %c0_i32, %c0_i32_0 : i32, i32
  }
  func.func @transform_5(%arg0: i32) -> (i32, i32) {
    %c0_i32 = arith.constant 0 : i32
    %c0_i32_0 = arith.constant 0 : i32
    return %arg0, %c0_i32 : i32, i32
  }
  func.func @transform_6(%arg0: i32) -> (i32, i32) {
    %c0_i32 = arith.constant 0 : i32
    %c0_i32_0 = arith.constant 0 : i32
    %c0_i32_1 = arith.constant 0 : i32
    return %c0_i32, %c0_i32_0 : i32, i32
  }
  func.func @transform_7(%arg0: i32) -> (i32, i32) {
    %c0_i32 = arith.constant 0 : i32
    %c0_i32_0 = arith.constant 0 : i32
    %c0_i32_1 = arith.constant 0 : i32
    return %c0_i32, %c0_i32_0 : i32, i32
  }
  func.func @transform_8(%arg0: i32) -> (i32, i32) {
    %c0_i32 = arith.constant 0 : i32
    %c0_i32_0 = arith.constant 0 : i32
    %c0_i32_1 = arith.constant 0 : i32
    return %c0_i32, %c0_i32_0 : i32, i32
  }
  func.func @transform_9(%arg0: i32) -> (i32, i32) {
    %c0_i32 = arith.constant 0 : i32
    %c0_i32_0 = arith.constant 0 : i32
    %c0_i32_1 = arith.constant 0 : i32
    return %c0_i32, %c0_i32_0 : i32, i32
  }
  func.func @transform_10(%arg0: i32) -> (i32, i32) {
    %c0_i32 = arith.constant 0 : i32
    %c0_i32_0 = arith.constant 0 : i32
    %c0_i32_1 = arith.constant 0 : i32
    return %c0_i32, %c0_i32_0 : i32, i32
  }
  func.func @transform_11(%arg0: i32) -> (i32, i32) {
    %c0_i32 = arith.constant 0 : i32
    %c0_i32_0 = arith.constant 0 : i32
    %c0_i32_1 = arith.constant 0 : i32
    return %c0_i32, %c0_i32_0 : i32, i32
  }
  func.func @transform_12(%arg0: i32) -> (i32, i32) {
    %c0_i32 = arith.constant 0 : i32
    %c0_i32_0 = arith.constant 0 : i32
    %c0_i32_1 = arith.constant 0 : i32
    return %c0_i32, %c0_i32_0 : i32, i32
  }
  func.func @transform_13(%arg0: i32) -> (i32, i32) {
    %c0_i32 = arith.constant 0 : i32
    %c0_i32_0 = arith.constant 0 : i32
    %c0_i32_1 = arith.constant 0 : i32
    return %c0_i32, %c0_i32_0 : i32, i32
  }
  func.func @transform_14(%arg0: i32) -> (i32, i32) {
    %c0_i32 = arith.constant 0 : i32
    %c0_i32_0 = arith.constant 0 : i32
    %c0_i32_1 = arith.constant 0 : i32
    return %c0_i32, %c0_i32_0 : i32, i32
  }
}

</mosaic_0001>

<llo_original>
// kernel: cnn_forward.1
$region0: #{cnn_forward.1}
  #allocation0 [shape = 'u32[]', space=smem, size = 0x4, offset = 0x4, fixed_abs, tag = 'smem constant byte address 0x4 - core index']
  #allocation1 [shape = 'u32[144,128]{1,0:T(1,128)}', space=vmem, size = 0x12000, scoped, tag = 'internal scratch']
  #allocation2 [shape = 'f32[496,64]{1,0:T(8,128)}', space=vmem, size = 0x3e000, scoped, tag = 'scratch operand']
  #allocation3 [shape = 'f32[124,128]{1,0:T(8,128)}', space=vmem, size = 0x10000, scoped, tag = 'scratch operand']
  #allocation4 [shape = 'bf16[2,4,2048]{2,1,0:T(4,128)(2,1)}', space=vmem, size = 0x8000, scoped, tag = 'scratch operand']
  #allocation5 [shape = 'f32[4,512]{1,0:T(4,128)}', space=vmem, size = 0x2000, scoped, tag = 'scratch operand']
  %s0 = inlined_call_operand.vmem [shape: f32[128,4], index: 0, kind: input, shape index: {}]
  %s1 = inlined_call_operand.hbm [shape: f32[3,64], index: 1, kind: input, shape index: {}]
  %s2 = inlined_call_operand.hbm [shape: f32[1,64], index: 2, kind: input, shape index: {}]
  %s3 = inlined_call_operand.vmem [shape: f32[192,64], index: 3, kind: input, shape index: {}]
  %s4 = inlined_call_operand.hbm [shape: f32[1,64], index: 4, kind: input, shape index: {}]
  %s5 = inlined_call_operand.hbm [shape: bf16[4096,512], index: 5, kind: input, shape index: {}]
  %s6 = inlined_call_operand.hbm [shape: f32[1,512], index: 6, kind: input, shape index: {}]
  %s7 = inlined_call_operand.hbm [shape: bf16[512,128], index: 7, kind: input, shape index: {}]
  %s8 = inlined_call_operand.hbm [shape: f32[1,128], index: 8, kind: input, shape index: {}]
  %s9 = inlined_call_operand.vmem [shape: f32[128,6], index: 9, kind: input, shape index: {}]
  %s10 = inlined_call_operand.hbm [shape: f32[1,6], index: 10, kind: input, shape index: {}]
  %s11 = inlined_call_operand.vmem [shape: f32[128,6], index: 11, kind: input, shape index: {}]
  %s12 = inlined_call_operand.hbm [shape: f32[1,6], index: 12, kind: input, shape index: {}]
  %s13 = inlined_call_operand.hbm [shape: f32[4,6], index: 13, kind: output, shape index: {0}]
  %s14 = inlined_call_operand.hbm [shape: f32[4,6], index: 14, kind: output, shape index: {1}]
  %15 = xla_tuple %s13, %s14
  %s16 = sld [smem:[#allocation0]]
  $region137: #{cnn_forward.1} parent=0
    _
  %s18 = ssub.s32 1, %s16
  %s19 = scalar_select 0, %s18, %s16
  $region1: #{cnn_forward.1} parent=0
    #allocation6 [shape = 'u8[2048]{0}', space=vmem, size = 0x800, scoped, tag = 'input window, operand 1, single buffered']
    #allocation7 [shape = 's32[2]{0}', space=sflag, size = 0x8, scoped, tag = 'scoped memory for cnn_forward.1']
    #allocation8 [shape = 's32[2]{0}', space=sflag, size = 0x8, scoped, tag = 'scoped memory for cnn_forward.1']
    #allocation9 [shape = 'u8[512]{0}', space=vmem, size = 0x400, scoped, tag = 'input window, operand 2, single buffered']
    #allocation10 [shape = 's32[1]{0}', space=sflag, size = 0x4, scoped, tag = 'scoped memory for cnn_forward.1']
    #allocation11 [shape = 'u8[512]{0}', space=vmem, size = 0x400, scoped, tag = 'input window, operand 4, single buffered']
    #allocation12 [shape = 'u8[4194304]{0}', space=vmem, size = 0x400000, scoped, tag = 'input window, operand 5']
    #allocation13 [shape = 's32[2]{0}', space=sflag, size = 0x8, scoped, tag = 'scoped memory for cnn_forward.1']
    #allocation14 [shape = 'u8[2048]{0}', space=vmem, size = 0x800, scoped, tag = 'input window, operand 6, single buffered']
    #allocation15 [shape = 'u8[131072]{0}', space=vmem, size = 0x20000, scoped, tag = 'input window, operand 7, single buffered']
    #allocation16 [shape = 's32[1]{0}', space=sflag, size = 0x4, scoped, tag = 'scoped memory for cnn_forward.1']
    #allocation17 [shape = 'u8[512]{0}', space=vmem, size = 0x400, scoped, tag = 'input window, operand 8, single buffered']
    #allocation18 [shape = 'u8[512]{0}', space=vmem, size = 0x400, scoped, tag = 'input window, operand 10, single buffered']
    #allocation19 [shape = 's32[1]{0}', space=sflag, size = 0x4, scoped, tag = 'scoped memory for cnn_forward.1']
    #allocation20 [shape = 'u8[512]{0}', space=vmem, size = 0x400, scoped, tag = 'input window, operand 12, single buffered']
    #allocation21 [shape = 'u8[2048]{0}', space=vmem, size = 0x800, scoped, tag = 'output window, operand 0, single buffered']
    #allocation22 [shape = 'u8[2048]{0}', space=vmem, size = 0x800, scoped, tag = 'output window, operand 1, single buffered']
    #allocation23 [shape = 's32[1]{0}', space=sflag, size = 0x4, scoped, tag = 'scoped memory for cnn_forward.1']
    %20 = vsyncpa [#allocation7], 0
    %21 = vsyncpa [#allocation10], 0
    %22 = vsyncpa [#allocation13], 0
    %s23 = scalar_lea.sflag [#allocation13], 1
    %24 = vsyncpa %s23, 0
    %25 = vsyncpa [#allocation16], 0
    %26 = vsyncpa [#allocation19], 0
    %27 = vsyncpa [#allocation8], 0
    %28 = vsyncpa [#allocation23], 0
    loop: start=0, step=1, limit=4
    $region2: #{cnn_forward.1} parent=1 // loop_pre_header
      _
    $region3: #{cnn_forward.1} parent=1 // loop_header
      %s30 = sphi 0, %s34
      %p31 = scmp.ge.s32.totalorder %s30, 4
      %s38 = sphi 0, %s38
      %s40 = sphi 0, %s38
      %s41 = sphi 0, %s40
      %s55 = sphi 0, %s41
      %s59 = sphi 0, %s59
      %s61 = sphi 0, %s59
      %s62 = sphi 0, %s61
      %s76 = sphi 0, %s62
      %s80 = sphi 0, %s80
      %s82 = sphi 0, %s80
      %s83 = sphi 0, %s82
      %s97 = sphi 0, %s83
      %s101 = sphi 0, %s101
      %s103 = sphi 0, %s101
      %s104 = sphi 0, %s103
      %s118 = sphi 0, %s104
      %s122 = sphi 0, %s122
      %s124 = sphi 0, %s122
      %s125 = sphi 0, %s124
      %s139 = sphi 0, %s125
      %s145 = sphi 0, %s147
      %s148 = sphi 0, %s145
      %s149 = sphi 0, %s148
      %s165 = sphi 0, %s149
      %s169 = sphi 0, %s169
      %s171 = sphi 0, %s169
      %s172 = sphi 0, %s171
      %s186 = sphi 0, %s172
      %s190 = sphi 0, %s190
      %s192 = sphi 0, %s190
      %s193 = sphi 0, %s192
      %s207 = sphi 0, %s193
      %s211 = sphi 0, %s211
      %s213 = sphi 0, %s211
      %s214 = sphi 0, %s213
      %s228 = sphi 0, %s214
      %s232 = sphi 0, %s232
      %s234 = sphi 0, %s232
      %s235 = sphi 0, %s234
      %s249 = sphi 0, %s235
      %s253 = sphi 0, %s253
      %s255 = sphi 0, %s253
      %s256 = sphi 0, %s255
      %s270 = sphi 0, %s256
      %s274 = sphi 0, %s274
      %s276 = sphi 0, %s274
      %s277 = sphi 0, %s276
      %s291 = sphi 0, %s277
      %s295 = sphi 0, %s295
      %s297 = sphi 0, %s295
      %s298 = sphi 0, %s297
      %s312 = sphi 0, %s298
      %s316 = sphi 0, %s316
      %s318 = sphi 0, %s316
      %s319 = sphi 0, %s318
      %s333 = sphi 0, %s319
      %s337 = sphi 0, %s337
      %s339 = sphi 0, %s337
      %s340 = sphi 0, %s339
      %s354 = sphi 0, %s340
    $region4: #{cnn_forward.1} parent=1 // loop_header_branch
      %33 = sbr.rel (%p31) target = $region8
    $region5: #{cnn_forward.1} parent=1 // loop_body
      %s35 = ssub.s32 %s30, 1
      %s36 = ssub.s32 %s30, 2
      %s37 = sadd.s32 %s30, 1
      %s39 = sadd.s32 %s38, 1
      %p42 = scmp.eq.s32.totalorder %s30, 1
      %p43 = scmp.ne.s32.totalorder %s38, %s40
      %p44 = scmp.eq.s32.totalorder %s30, 0
      %p45 = por %p43, %p44
      %p46 = scmp.ne.s32.totalorder %s38, %s40
      %p47 = scmp.eq.s32.totalorder %s35, 1
      %p48 = por %p46, %p47
      %p49 = scmp.ne.s32.totalorder %s40, %s41
      %p50 = scmp.eq.s32.totalorder %s35, 0
      %p51 = por %p49, %p50
      %p52 = scmp.ne.s32.totalorder %s40, %s41
      %p53 = scmp.eq.s32.totalorder %s36, 1
      %p54 = por %p52, %p53
      %p56 = scmp.ne.s32.totalorder %s41, %s55
      %p57 = scmp.eq.s32.totalorder %s36, 0
      %p58 = por %p56, %p57
      %s60 = sadd.s32 %s59, 1
      %p63 = scmp.eq.s32.totalorder %s30, 1
      %p64 = scmp.ne.s32.totalorder %s59, %s61
      %p65 = scmp.eq.s32.totalorder %s30, 0
      %p66 = por %p64, %p65
      %p67 = scmp.ne.s32.totalorder %s59, %s61
      %p68 = scmp.eq.s32.totalorder %s35, 1
      %p69 = por %p67, %p68
      %p70 = scmp.ne.s32.totalorder %s61, %s62
      %p71 = scmp.eq.s32.totalorder %s35, 0
      %p72 = por %p70, %p71
      %p73 = scmp.ne.s32.totalorder %s61, %s62
      %p74 = scmp.eq.s32.totalorder %s36, 1
      %p75 = por %p73, %p74
      %p77 = scmp.ne.s32.totalorder %s62, %s76
      %p78 = scmp.eq.s32.totalorder %s36, 0
      %p79 = por %p77, %p78
      %s81 = sadd.s32 %s80, 1
      %p84 = scmp.eq.s32.totalorder %s30, 1
      %p85 = scmp.ne.s32.totalorder %s80, %s82
      %p86 = scmp.eq.s32.totalorder %s30, 0
      %p87 = por %p85, %p86
      %p88 = scmp.ne.s32.totalorder %s80, %s82
      %p89 = scmp.eq.s32.totalorder %s35, 1
      %p90 = por %p88, %p89
      %p91 = scmp.ne.s32.totalorder %s82, %s83
      %p92 = scmp.eq.s32.totalorder %s35, 0
      %p93 = por %p91, %p92
      %p94 = scmp.ne.s32.totalorder %s82, %s83
      %p95 = scmp.eq.s32.totalorder %s36, 1
      %p96 = por %p94, %p95
      %p98 = scmp.ne.s32.totalorder %s83, %s97
      %p99 = scmp.eq.s32.totalorder %s36, 0
      %p100 = por %p98, %p99
      %s102 = sadd.s32 %s101, 1
      %p105 = scmp.eq.s32.totalorder %s30, 1
      %p106 = scmp.ne.s32.totalorder %s101, %s103
      %p107 = scmp.eq.s32.totalorder %s30, 0
      %p108 = por %p106, %p107
      %p109 = scmp.ne.s32.totalorder %s101, %s103
      %p110 = scmp.eq.s32.totalorder %s35, 1
      %p111 = por %p109, %p110
      %p112 = scmp.ne.s32.totalorder %s103, %s104
      %p113 = scmp.eq.s32.totalorder %s35, 0
      %p114 = por %p112, %p113
      %p115 = scmp.ne.s32.totalorder %s103, %s104
      %p116 = scmp.eq.s32.totalorder %s36, 1
      %p117 = por %p115, %p116
      %p119 = scmp.ne.s32.totalorder %s104, %s118
      %p120 = scmp.eq.s32.totalorder %s36, 0
      %p121 = por %p119, %p120
      %s123 = sadd.s32 %s122, 1
      %p126 = scmp.eq.s32.totalorder %s30, 1
      %p127 = scmp.ne.s32.totalorder %s122, %s124
      %p128 = scmp.eq.s32.totalorder %s30, 0
      %p129 = por %p127, %p128
      %p130 = scmp.ne.s32.totalorder %s122, %s124
      %p131 = scmp.eq.s32.totalorder %s35, 1
      %p132 = por %p130, %p131
      %p133 = scmp.ne.s32.totalorder %s124, %s125
      %p134 = scmp.eq.s32.totalorder %s35, 0
      %p135 = por %p133, %p134
      %p136 = scmp.ne.s32.totalorder %s124, %s125
      %p137 = scmp.eq.s32.totalorder %s36, 1
      %p138 = por %p136, %p137
      %p140 = scmp.ne.s32.totalorder %s125, %s139
      %p141 = scmp.eq.s32.totalorder %s36, 0
      %p142 = por %p140, %p141
      %s143 = ssub.s32 %s30, %s37
      %p144 = scmp.eq.s32.totalorder %s143, 0
      %s146 = sadd.s32 %s145, 1
      %s147 = scalar_select %p144, %s145, %s146
      %p150 = pneg %p144
      %p151 = scmp.eq.s32.totalorder %s30, 1
      %p152 = por %p150, %p151
      %p153 = scmp.ne.s32.totalorder %s145, %s148
      %p154 = scmp.eq.s32.totalorder %s30, 0
      %p155 = por %p153, %p154
      %p156 = scmp.ne.s32.totalorder %s145, %s148
      %p157 = scmp.eq.s32.totalorder %s35, 1
      %p158 = por %p156, %p157
      %p159 = scmp.ne.s32.totalorder %s148, %s149
      %p160 = scmp.eq.s32.totalorder %s35, 0
      %p161 = por %p159, %p160
      %p162 = scmp.ne.s32.totalorder %s148, %s149
      %p163 = scmp.eq.s32.totalorder %s36, 1
      %p164 = por %p162, %p163
      %p166 = scmp.ne.s32.totalorder %s149, %s165
      %p167 = scmp.eq.s32.totalorder %s36, 0
      %p168 = por %p166, %p167
      %s170 = sadd.s32 %s169, 1
      %p173 = scmp.eq.s32.totalorder %s30, 1
      %p174 = scmp.ne.s32.totalorder %s169, %s171
      %p175 = scmp.eq.s32.totalorder %s30, 0
      %p176 = por %p174, %p175
      %p177 = scmp.ne.s32.totalorder %s169, %s171
      %p178 = scmp.eq.s32.totalorder %s35, 1
      %p179 = por %p177, %p178
      %p180 = scmp.ne.s32.totalorder %s171, %s172
      %p181 = scmp.eq.s32.totalorder %s35, 0
      %p182 = por %p180, %p181
      %p183 = scmp.ne.s32.totalorder %s171, %s172
      %p184 = scmp.eq.s32.totalorder %s36, 1
      %p185 = por %p183, %p184
      %p187 = scmp.ne.s32.totalorder %s172, %s186
      %p188 = scmp.eq.s32.totalorder %s36, 0
      %p189 = por %p187, %p188
      %s191 = sadd.s32 %s190, 1
      %p194 = scmp.eq.s32.totalorder %s30, 1
      %p195 = scmp.ne.s32.totalorder %s190, %s192
      %p196 = scmp.eq.s32.totalorder %s30, 0
      %p197 = por %p195, %p196
      %p198 = scmp.ne.s32.totalorder %s190, %s192
      %p199 = scmp.eq.s32.totalorder %s35, 1
      %p200 = por %p198, %p199
      %p201 = scmp.ne.s32.totalorder %s192, %s193
      %p202 = scmp.eq.s32.totalorder %s35, 0
      %p203 = por %p201, %p202
      %p204 = scmp.ne.s32.totalorder %s192, %s193
      %p205 = scmp.eq.s32.totalorder %s36, 1
      %p206 = por %p204, %p205
      %p208 = scmp.ne.s32.totalorder %s193, %s207
      %p209 = scmp.eq.s32.totalorder %s36, 0
      %p210 = por %p208, %p209
      %s212 = sadd.s32 %s211, 1
      %p215 = scmp.eq.s32.totalorder %s30, 1
      %p216 = scmp.ne.s32.totalorder %s211, %s213
      %p217 = scmp.eq.s32.totalorder %s30, 0
      %p218 = por %p216, %p217
      %p219 = scmp.ne.s32.totalorder %s211, %s213
      %p220 = scmp.eq.s32.totalorder %s35, 1
      %p221 = por %p219, %p220
      %p222 = scmp.ne.s32.totalorder %s213, %s214
      %p223 = scmp.eq.s32.totalorder %s35, 0
      %p224 = por %p222, %p223
      %p225 = scmp.ne.s32.totalorder %s213, %s214
      %p226 = scmp.eq.s32.totalorder %s36, 1
      %p227 = por %p225, %p226
      %p229 = scmp.ne.s32.totalorder %s214, %s228
      %p230 = scmp.eq.s32.totalorder %s36, 0
      %p231 = por %p229, %p230
      %s233 = sadd.s32 %s232, 1
      %p236 = scmp.eq.s32.totalorder %s30, 1
      %p237 = scmp.ne.s32.totalorder %s232, %s234
      %p238 = scmp.eq.s32.totalorder %s30, 0
      %p239 = por %p237, %p238
      %p240 = scmp.ne.s32.totalorder %s232, %s234
      %p241 = scmp.eq.s32.totalorder %s35, 1
      %p242 = por %p240, %p241
      %p243 = scmp.ne.s32.totalorder %s234, %s235
      %p244 = scmp.eq.s32.totalorder %s35, 0
      %p245 = por %p243, %p244
      %p246 = scmp.ne.s32.totalorder %s234, %s235
      %p247 = scmp.eq.s32.totalorder %s36, 1
      %p248 = por %p246, %p247
      %p250 = scmp.ne.s32.totalorder %s235, %s249
      %p251 = scmp.eq.s32.totalorder %s36, 0
      %p252 = por %p250, %p251
      %s254 = sadd.s32 %s253, 1
      %p257 = scmp.eq.s32.totalorder %s30, 1
      %p258 = scmp.ne.s32.totalorder %s253, %s255
      %p259 = scmp.eq.s32.totalorder %s30, 0
      %p260 = por %p258, %p259
      %p261 = scmp.ne.s32.totalorder %s253, %s255
      %p262 = scmp.eq.s32.totalorder %s35, 1
      %p263 = por %p261, %p262
      %p264 = scmp.ne.s32.totalorder %s255, %s256
      %p265 = scmp.eq.s32.totalorder %s35, 0
      %p266 = por %p264, %p265
      %p267 = scmp.ne.s32.totalorder %s255, %s256
      %p268 = scmp.eq.s32.totalorder %s36, 1
      %p269 = por %p267, %p268
      %p271 = scmp.ne.s32.totalorder %s256, %s270
      %p272 = scmp.eq.s32.totalorder %s36, 0
      %p273 = por %p271, %p272
      %s275 = sadd.s32 %s274, 1
      %p278 = scmp.eq.s32.totalorder %s30, 1
      %p279 = scmp.ne.s32.totalorder %s274, %s276
      %p280 = scmp.eq.s32.totalorder %s30, 0
      %p281 = por %p279, %p280
      %p282 = scmp.ne.s32.totalorder %s274, %s276
      %p283 = scmp.eq.s32.totalorder %s35, 1
      %p284 = por %p282, %p283
      %p285 = scmp.ne.s32.totalorder %s276, %s277
      %p286 = scmp.eq.s32.totalorder %s35, 0
      %p287 = por %p285, %p286
      %p288 = scmp.ne.s32.totalorder %s276, %s277
      %p289 = scmp.eq.s32.totalorder %s36, 1
      %p290 = por %p288, %p289
      %p292 = scmp.ne.s32.totalorder %s277, %s291
      %p293 = scmp.eq.s32.totalorder %s36, 0
      %p294 = por %p292, %p293
      %s296 = sadd.s32 %s295, 1
      %p299 = scmp.eq.s32.totalorder %s30, 1
      %p300 = scmp.ne.s32.totalorder %s295, %s297
      %p301 = scmp.eq.s32.totalorder %s30, 0
      %p302 = por %p300, %p301
      %p303 = scmp.ne.s32.totalorder %s295, %s297
      %p304 = scmp.eq.s32.totalorder %s35, 1
      %p305 = por %p303, %p304
      %p306 = scmp.ne.s32.totalorder %s297, %s298
      %p307 = scmp.eq.s32.totalorder %s35, 0
      %p308 = por %p306, %p307
      %p309 = scmp.ne.s32.totalorder %s297, %s298
      %p310 = scmp.eq.s32.totalorder %s36, 1
      %p311 = por %p309, %p310
      %p313 = scmp.ne.s32.totalorder %s298, %s312
      %p314 = scmp.eq.s32.totalorder %s36, 0
      %p315 = por %p313, %p314
      %s317 = sadd.s32 %s316, 1
      %p320 = scmp.eq.s32.totalorder %s30, 1
      %p321 = scmp.ne.s32.totalorder %s316, %s318
      %p322 = scmp.eq.s32.totalorder %s30, 0
      %p323 = por %p321, %p322
      %p324 = scmp.ne.s32.totalorder %s316, %s318
      %p325 = scmp.eq.s32.totalorder %s35, 1
      %p326 = por %p324, %p325
      %p327 = scmp.ne.s32.totalorder %s318, %s319
      %p328 = scmp.eq.s32.totalorder %s35, 0
      %p329 = por %p327, %p328
      %p330 = scmp.ne.s32.totalorder %s318, %s319
      %p331 = scmp.eq.s32.totalorder %s36, 1
      %p332 = por %p330, %p331
      %p334 = scmp.ne.s32.totalorder %s319, %s333
      %p335 = scmp.eq.s32.totalorder %s36, 0
      %p336 = por %p334, %p335
      %s338 = sadd.s32 %s337, 1
      %p341 = scmp.eq.s32.totalorder %s30, 1
      %p342 = scmp.ne.s32.totalorder %s337, %s339
      %p343 = scmp.eq.s32.totalorder %s30, 0
      %p344 = por %p342, %p343
      %p345 = scmp.ne.s32.totalorder %s337, %s339
      %p346 = scmp.eq.s32.totalorder %s35, 1
      %p347 = por %p345, %p346
      %p348 = scmp.ne.s32.totalorder %s339, %s340
      %p349 = scmp.eq.s32.totalorder %s35, 0
      %p350 = por %p348, %p349
      %p351 = scmp.ne.s32.totalorder %s339, %s340
      %p352 = scmp.eq.s32.totalorder %s36, 1
      %p353 = por %p351, %p352
      %p355 = scmp.ne.s32.totalorder %s340, %s354
      %p356 = scmp.eq.s32.totalorder %s36, 0
      %p357 = por %p355, %p356
      %p358 = scmp.le.s32.totalorder 1, %s30
      %p359 = scmp.lt.s32.totalorder %s30, 3
      %p360 = pnand %p358, %p359
      %p361 = pneg %p360
      // Predicated region
      $region9: #{cnn_forward.1} parent=5 // pred_check
        _
      $region10: #{cnn_forward.1} parent=5 // pred_check_branch
        %363 = sbr.rel (%p360) target = $region12
      $region11: #{cnn_forward.1} parent=5 // pred_region
        %s364 = ssub.s32 %s30, 1
        // Predicated region
        $region13: #{cnn_forward.1} parent=11 // pred_check
          %p365 = pneg %p51
        $region14: #{cnn_forward.1} parent=11 // pred_check_branch
          %367 = sbr.rel (%p365) target = $region16
        $region15: #{cnn_forward.1} parent=11 // pred_region
          _
        $region16: #{cnn_forward.1} parent=11 // pred_fallthru
          _
        // Predicated region
        $region17: #{cnn_forward.1} parent=11 // pred_check
          %p368 = pneg %p72
        $region18: #{cnn_forward.1} parent=11 // pred_check_branch
          %370 = sbr.rel (%p368) target = $region20
        $region19: #{cnn_forward.1} parent=11 // pred_region
          %s372 = ssub.s32 64, 64
          %373 = vsyncadd [#allocation7], %s372
          %s375 = sshll.u32 [#allocation6], 4
          %s376 = int_to_ptr.vmem [resolvable:$true] %s375
          %378 = dma.hbm_to_vmem [thread:$0]  %s1, 64, %s376, [#allocation7]
        $region20: #{cnn_forward.1} parent=11 // pred_fallthru
          _
        // Predicated region
        $region21: #{cnn_forward.1} parent=11 // pred_check
          %p379 = pneg %p93
        $region22: #{cnn_forward.1} parent=11 // pred_check_branch
          %381 = sbr.rel (%p379) target = $region24
        $region23: #{cnn_forward.1} parent=11 // pred_region
          %s383 = ssub.s32 16, 16
          %384 = vsyncadd [#allocation10], %s383
          %s386 = sshll.u32 [#allocation9], 4
          %s387 = int_to_ptr.vmem [resolvable:$true] %s386
          %389 = dma.hbm_to_vmem [thread:$0]  %s2, 16, %s387, [#allocation10]
        $region24: #{cnn_forward.1} parent=11 // pred_fallthru
          _
        // Predicated region
        $region25: #{cnn_forward.1} parent=11 // pred_check
          %p390 = pneg %p114
        $region26: #{cnn_forward.1} parent=11 // pred_check_branch
          %392 = sbr.rel (%p390) target = $region28
        $region27: #{cnn_forward.1} parent=11 // pred_region
          _
        $region28: #{cnn_forward.1} parent=11 // pred_fallthru
          _
        // Predicated region
        $region29: #{cnn_forward.1} parent=11 // pred_check
          %p393 = pneg %p135
        $region30: #{cnn_forward.1} parent=11 // pred_check_branch
          %395 = sbr.rel (%p393) target = $region32
        $region31: #{cnn_forward.1} parent=11 // pred_region
          %s397 = ssub.s32 16, 16
          %398 = vsyncadd [#allocation10], %s397
          %s400 = sshll.u32 [#allocation11], 4
          %s401 = int_to_ptr.vmem [resolvable:$true] %s400
          %403 = dma.hbm_to_vmem [thread:$0]  %s4, 16, %s401, [#allocation10]
        $region32: #{cnn_forward.1} parent=11 // pred_fallthru
          _
        // Predicated region
        $region33: #{cnn_forward.1} parent=11 // pred_check
          %p404 = pneg %p182
        $region34: #{cnn_forward.1} parent=11 // pred_check_branch
          %406 = sbr.rel (%p404) target = $region36
        $region35: #{cnn_forward.1} parent=11 // pred_region
          %s408 = ssub.s32 64, 64
          %409 = vsyncadd [#allocation13], %s408
          %s411 = sshll.u32 [#allocation14], 4
          %s412 = int_to_ptr.vmem [resolvable:$true] %s411
          %414 = dma.hbm_to_vmem [thread:$0]  %s6, 64, %s412, [#allocation13]
        $region36: #{cnn_forward.1} parent=11 // pred_fallthru
          _
        // Predicated region
        $region37: #{cnn_forward.1} parent=11 // pred_check
          %p415 = pneg %p203
        $region38: #{cnn_forward.1} parent=11 // pred_check_branch
          %417 = sbr.rel (%p415) target = $region40
        $region39: #{cnn_forward.1} parent=11 // pred_region
          %s419 = ssub.s32 4096, 4096
          %420 = vsyncadd [#allocation16], %s419
          %s421 = sshll.u32 [#allocation15], 4
          %s422 = int_to_ptr.vmem [resolvable:$true] %s421
          %427 = dma.hbm_to_vmem [thread:$0]  %s7, 4096, %s422, [#allocation16], 64, 64, 4
        $region40: #{cnn_forward.1} parent=11 // pred_fallthru
          _
        // Predicated region
        $region41: #{cnn_forward.1} parent=11 // pred_check
          %p428 = pneg %p224
        $region42: #{cnn_forward.1} parent=11 // pred_check_branch
          %430 = sbr.rel (%p428) target = $region44
        $region43: #{cnn_forward.1} parent=11 // pred_region
          %s432 = ssub.s32 16, 16
          %433 = vsyncadd [#allocation16], %s432
          %s435 = sshll.u32 [#allocation17], 4
          %s436 = int_to_ptr.vmem [resolvable:$true] %s435
          %438 = dma.hbm_to_vmem [thread:$0]  %s8, 16, %s436, [#allocation16]
        $region44: #{cnn_forward.1} parent=11 // pred_fallthru
          _
        // Predicated region
        $region45: #{cnn_forward.1} parent=11 // pred_check
          %p439 = pneg %p245
        $region46: #{cnn_forward.1} parent=11 // pred_check_branch
          %441 = sbr.rel (%p439) target = $region48
        $region47: #{cnn_forward.1} parent=11 // pred_region
          _
        $region48: #{cnn_forward.1} parent=11 // pred_fallthru
          _
        // Predicated region
        $region49: #{cnn_forward.1} parent=11 // pred_check
          %p442 = pneg %p266
        $region50: #{cnn_forward.1} parent=11 // pred_check_branch
          %444 = sbr.rel (%p442) target = $region52
        $region51: #{cnn_forward.1} parent=11 // pred_region
          %s446 = ssub.s32 16, 16
          %447 = vsyncadd [#allocation19], %s446
          %s449 = sshll.u32 [#allocation18], 4
          %s450 = int_to_ptr.vmem [resolvable:$true] %s449
          %452 = dma.hbm_to_vmem [thread:$0]  %s10, 16, %s450, [#allocation19]
        $region52: #{cnn_forward.1} parent=11 // pred_fallthru
          _
        // Predicated region
        $region53: #{cnn_forward.1} parent=11 // pred_check
          %p453 = pneg %p287
        $region54: #{cnn_forward.1} parent=11 // pred_check_branch
          %455 = sbr.rel (%p453) target = $region56
        $region55: #{cnn_forward.1} parent=11 // pred_region
          _
        $region56: #{cnn_forward.1} parent=11 // pred_fallthru
          _
        // Predicated region
        $region57: #{cnn_forward.1} parent=11 // pred_check
          %p456 = pneg %p308
        $region58: #{cnn_forward.1} parent=11 // pred_check_branch
          %458 = sbr.rel (%p456) target = $region60
        $region59: #{cnn_forward.1} parent=11 // pred_region
          %s460 = ssub.s32 16, 16
          %461 = vsyncadd [#allocation19], %s460
          %s463 = sshll.u32 [#allocation20], 4
          %s464 = int_to_ptr.vmem [resolvable:$true] %s463
          %466 = dma.hbm_to_vmem [thread:$0]  %s12, 16, %s464, [#allocation19]
        $region60: #{cnn_forward.1} parent=11 // pred_fallthru
          _
      $region12: #{cnn_forward.1} parent=5 // pred_fallthru
        _
      %p467 = scmp.lt.s32.totalorder %s30, 2
      // Predicated region
      $region61: #{cnn_forward.1} parent=5 // pred_check
        %p468 = pneg %p467
      $region62: #{cnn_forward.1} parent=5 // pred_check_branch
        %470 = sbr.rel (%p468) target = $region64
      $region63: #{cnn_forward.1} parent=5 // pred_region
        // Predicated region
        $region65: #{cnn_forward.1} parent=63 // pred_check
          %p471 = pneg %p155
        $region66: #{cnn_forward.1} parent=63 // pred_check_branch
          %473 = sbr.rel (%p471) target = $region68
        $region67: #{cnn_forward.1} parent=63 // pred_region
          %s474 = sand.u32 %s30, 1
          %s475 = scalar_lea.sflag [#allocation13], %s474
          %s476 = sand.u32 %s145, 1
          %s477 = smul.addr %s476, 4096
          %s478 = scalar_lea.vmem [#allocation12], %s477
          %s479 = smul.u32 256, %s30
          %s481 = ssub.s32 65536, 65536
          %482 = vsyncadd %s475, %s481
          %s483 = smul.addr %s479, 4
          %s484 = smul.addr %s483, 64
          %s485 = scalar_lea.hbm %s5, %s484
          %s486 = sshll.u32 %s478, 4
          %s487 = int_to_ptr.vmem [resolvable:$true] %s486
          %492 = dma.hbm_to_vmem [thread:$0]  %s485, 65536, %s487, %s475, 256, 256, 16
        $region68: #{cnn_forward.1} parent=63 // pred_fallthru
          _
      $region64: #{cnn_forward.1} parent=5 // pred_fallthru
        _
      %p493 = scmp.le.s32.totalorder 1, %s30
      %p494 = scmp.lt.s32.totalorder %s30, 3
      %p495 = pnand %p493, %p494
      %p496 = pneg %p495
      // Predicated region
      $region69: #{cnn_forward.1} parent=5 // pred_check
        _
      $region70: #{cnn_forward.1} parent=5 // pred_check_branch
        %498 = sbr.rel (%p495) target = $region72
      $region71: #{cnn_forward.1} parent=5 // pred_region
        %s499 = ssub.s32 %s30, 1
        // Predicated region
        $region73: #{cnn_forward.1} parent=71 // pred_check
          %p500 = pneg %p72
        $region74: #{cnn_forward.1} parent=71 // pred_check_branch
          %502 = sbr.rel (%p500) target = $region76
        $region75: #{cnn_forward.1} parent=71 // pred_region
          %503 = dma.done [#allocation7], 64
        $region76: #{cnn_forward.1} parent=71 // pred_fallthru
          _
        // Predicated region
        $region77: #{cnn_forward.1} parent=71 // pred_check
          %p504 = pneg %p93
        $region78: #{cnn_forward.1} parent=71 // pred_check_branch
          %506 = sbr.rel (%p504) target = $region80
        $region79: #{cnn_forward.1} parent=71 // pred_region
          %507 = dma.done [#allocation10], 16
        $region80: #{cnn_forward.1} parent=71 // pred_fallthru
          _
        // Predicated region
        $region81: #{cnn_forward.1} parent=71 // pred_check
          %p508 = pneg %p135
        $region82: #{cnn_forward.1} parent=71 // pred_check_branch
          %510 = sbr.rel (%p508) target = $region84
        $region83: #{cnn_forward.1} parent=71 // pred_region
          %511 = dma.done [#allocation10], 16
        $region84: #{cnn_forward.1} parent=71 // pred_fallthru
          _
        %s512 = sand.u32 %s35, 1
        %s513 = scalar_lea.sflag [#allocation13], %s512
        %s514 = sand.u32 %s148, 1
        %s515 = smul.addr %s514, 4096
        %s516 = scalar_lea.vmem [#allocation12], %s515
        // Predicated region
        $region85: #{cnn_forward.1} parent=71 // pred_check
          %p517 = pneg %p161
        $region86: #{cnn_forward.1} parent=71 // pred_check_branch
          %519 = sbr.rel (%p517) target = $region88
        $region87: #{cnn_forward.1} parent=71 // pred_region
          %520 = dma.done %s513, 65536
        $region88: #{cnn_forward.1} parent=71 // pred_fallthru
          _
        // Predicated region
        $region89: #{cnn_forward.1} parent=71 // pred_check
          %p521 = pneg %p182
        $region90: #{cnn_forward.1} parent=71 // pred_check_branch
          %523 = sbr.rel (%p521) target = $region92
        $region91: #{cnn_forward.1} parent=71 // pred_region
          %524 = dma.done [#allocation13], 64
        $region92: #{cnn_forward.1} parent=71 // pred_fallthru
          _
        // Predicated region
        $region93: #{cnn_forward.1} parent=71 // pred_check
          %p525 = pneg %p203
        $region94: #{cnn_forward.1} parent=71 // pred_check_branch
          %527 = sbr.rel (%p525) target = $region96
        $region95: #{cnn_forward.1} parent=71 // pred_region
          %528 = dma.done [#allocation16], 4096
        $region96: #{cnn_forward.1} parent=71 // pred_fallthru
          _
        // Predicated region
        $region97: #{cnn_forward.1} parent=71 // pred_check
          %p529 = pneg %p224
        $region98: #{cnn_forward.1} parent=71 // pred_check_branch
          %531 = sbr.rel (%p529) target = $region100
        $region99: #{cnn_forward.1} parent=71 // pred_region
          %532 = dma.done [#allocation16], 16
        $region100: #{cnn_forward.1} parent=71 // pred_fallthru
          _
        // Predicated region
        $region101: #{cnn_forward.1} parent=71 // pred_check
          %p533 = pneg %p266
        $region102: #{cnn_forward.1} parent=71 // pred_check_branch
          %535 = sbr.rel (%p533) target = $region104
        $region103: #{cnn_forward.1} parent=71 // pred_region
          %536 = dma.done [#allocation19], 16
        $region104: #{cnn_forward.1} parent=71 // pred_fallthru
          _
        // Predicated region
        $region105: #{cnn_forward.1} parent=71 // pred_check
          %p537 = pneg %p308
        $region106: #{cnn_forward.1} parent=71 // pred_check_branch
          %539 = sbr.rel (%p537) target = $region108
        $region107: #{cnn_forward.1} parent=71 // pred_region
          %540 = dma.done [#allocation19], 16
        $region108: #{cnn_forward.1} parent=71 // pred_fallthru
          _
        %p541 = pneg %p51
        %p542 = pneg %p48
        %p543 = pneg %p72
        %p544 = pneg %p69
        %p545 = pneg %p93
        %p546 = pneg %p90
        %p547 = pneg %p114
        %p548 = pneg %p111
        %p549 = pneg %p135
        %p550 = pneg %p132
        %s551 = sand.u32 %s35, 1
        %s552 = scalar_lea.sflag [#allocation13], %s551
        %s553 = sand.u32 %s148, 1
        %s554 = smul.addr %s553, 4096
        %s555 = scalar_lea.vmem [#allocation12], %s554
        %p556 = pneg %p161
        %p557 = pneg %p158
        %p558 = pneg %p182
        %p559 = pneg %p179
        %p560 = pneg %p203
        %p561 = pneg %p200
        %p562 = pneg %p224
        %p563 = pneg %p221
        %p564 = pneg %p245
        %p565 = pneg %p242
        %p566 = pneg %p266
        %p567 = pneg %p263
        %p568 = pneg %p287
        %p569 = pneg %p284
        %p570 = pneg %p308
        %p571 = pneg %p305
        %p572 = pneg %p329
        %p573 = pneg %p326
        %p574 = pneg %p350
        %p575 = pneg %p347
        %s576 = smul.u32 256, %s35
        %p578 = scmp.eq.s32.totalorder %s35, 0
        // Predicated region
        $region109: #{cnn_forward.1} parent=71 // pred_check
          %p579 = pneg %p578
        $region110: #{cnn_forward.1} parent=71 // pred_check_branch
          %581 = sbr.rel (%p579) target = $region112
        $region111: #{cnn_forward.1} parent=71 // pred_region
          %582 = vst [vmem:[#allocation4] sm:$0xff] 0
          %583 = vst [vmem:[#allocation4 + $0x8] sm:$0xff] 0
          %584 = vst [vmem:[#allocation4 + $0x10] sm:$0xff] 0
          %585 = vst [vmem:[#allocation4 + $0x18] sm:$0xff] 0
          %586 = vst [vmem:[#allocation4 + $0x20] sm:$0xff] 0
          %587 = vst [vmem:[#allocation4 + $0x28] sm:$0xff] 0
          %588 = vst [vmem:[#allocation4 + $0x30] sm:$0xff] 0
          %589 = vst [vmem:[#allocation4 + $0x38] sm:$0xff] 0
          %590 = vst [vmem:[#allocation5] sm:$0xff] 0.0
          %591 = vst [vmem:[#allocation5 + $0x8] sm:$0xff] 0.0
          %v592 = vld [vmem:[%s0] sm:$0xff]
          %v593 = vld [vmem:[%s0 + $0x8] sm:$0xff]
          %v594 = vld [vmem:[%s0 + $0x10] sm:$0xff]
          %v595 = vld [vmem:[%s0 + $0x18] sm:$0xff]
          %v596 = vld [vmem:[%s0 + $0x20] sm:$0xff]
          %v597 = vld [vmem:[%s0 + $0x28] sm:$0xff]
          %v598 = vld [vmem:[%s0 + $0x30] sm:$0xff]
          %v599 = vld [vmem:[%s0 + $0x38] sm:$0xff]
          %v600 = vld [vmem:[%s0 + $0x40] sm:$0xff]
          %v601 = vld [vmem:[%s0 + $0x48] sm:$0xff]
          %v602 = vld [vmem:[%s0 + $0x50] sm:$0xff]
          %v603 = vld [vmem:[%s0 + $0x58] sm:$0xff]
          %v604 = vld [vmem:[%s0 + $0x60] sm:$0xff]
          %v605 = vld [vmem:[%s0 + $0x68] sm:$0xff]
          %v606 = vld [vmem:[%s0 + $0x70] sm:$0xff]
          %v607 = vld [vmem:[%s0 + $0x78] sm:$0xff]
          %v608 = vld [vmem:[#allocation6] sm:$0x1]
          %610 = vset.pattern.permute.xlu0 0
          %611 = vperm.xlu0 %610, %v592
          %v612 = vpop.permute.xlu0 %611
          %615 = vset.pattern.permute.xlu0 0
          %616 = vperm.xlu0 %615, %v593
          %v617 = vpop.permute.xlu0 %616
          %620 = vset.pattern.permute.xlu0 0
          %621 = vperm.xlu0 %620, %v594
          %v622 = vpop.permute.xlu0 %621
          %625 = vset.pattern.permute.xlu0 0
          %626 = vperm.xlu0 %625, %v595
          %v627 = vpop.permute.xlu0 %626
          %630 = vset.pattern.permute.xlu0 0
          %631 = vperm.xlu0 %630, %v596
          %v632 = vpop.permute.xlu0 %631
          %635 = vset.pattern.permute.xlu0 0
          %636 = vperm.xlu0 %635, %v597
          %v637 = vpop.permute.xlu0 %636
          %640 = vset.pattern.permute.xlu0 0
          %641 = vperm.xlu0 %640, %v598
          %v642 = vpop.permute.xlu0 %641
          %645 = vset.pattern.permute.xlu0 0
          %646 = vperm.xlu0 %645, %v599
          %v647 = vpop.permute.xlu0 %646
          %650 = vset.pattern.permute.xlu0 0
          %651 = vperm.xlu0 %650, %v600
          %v652 = vpop.permute.xlu0 %651
          %655 = vset.pattern.permute.xlu0 0
          %656 = vperm.xlu0 %655, %v601
          %v657 = vpop.permute.xlu0 %656
          %660 = vset.pattern.permute.xlu0 0
          %661 = vperm.xlu0 %660, %v602
          %v662 = vpop.permute.xlu0 %661
          %665 = vset.pattern.permute.xlu0 0
          %666 = vperm.xlu0 %665, %v603
          %v667 = vpop.permute.xlu0 %666
          %670 = vset.pattern.permute.xlu0 0
          %671 = vperm.xlu0 %670, %v604
          %v672 = vpop.permute.xlu0 %671
          %675 = vset.pattern.permute.xlu0 0
          %676 = vperm.xlu0 %675, %v605
          %v677 = vpop.permute.xlu0 %676
          %680 = vset.pattern.permute.xlu0 0
          %681 = vperm.xlu0 %680, %v606
          %v682 = vpop.permute.xlu0 %681
          %685 = vset.pattern.permute.xlu0 0
          %686 = vperm.xlu0 %685, %v607
          %v687 = vpop.permute.xlu0 %686
          %v689 = vlaneseq
          %v690 = vshrl.u32 %v689, 7
          %v691 = vsub.s32 0, %v690
          %v692 = vrot.slane %v608, %v691
          %v693 = vmul.f32 %v612, %v692
          %v694 = vmul.f32 %v617, %v692
          %v695 = vmul.f32 %v622, %v692
          %v696 = vmul.f32 %v627, %v692
          %v697 = vmul.f32 %v632, %v692
          %v698 = vmul.f32 %v637, %v692
          %v699 = vmul.f32 %v642, %v692
          %v700 = vmul.f32 %v647, %v692
          %v701 = vmul.f32 %v652, %v692
          %v702 = vmul.f32 %v657, %v692
          %v703 = vmul.f32 %v662, %v692
          %v704 = vmul.f32 %v667, %v692
          %v705 = vmul.f32 %v672, %v692
          %v706 = vmul.f32 %v677, %v692
          %v707 = vmul.f32 %v682, %v692
          %v708 = vmul.f32 %v687, %v692
          %v709 = vld [vmem:[#allocation6 + $0x1] sm:$0x1]
          %v710 = vlaneseq
          %v711 = vshrl.u32 %v710, 7
          %v712 = vsub.s32 0, %v711
          %v713 = vrot.slane %v709, %v712
          %v714 = vmul.f32 %v612, %v713
          %v715 = vmul.f32 %v617, %v713
          %v716 = vmul.f32 %v622, %v713
          %v717 = vmul.f32 %v627, %v713
          %v718 = vmul.f32 %v632, %v713
          %v719 = vmul.f32 %v637, %v713
          %v720 = vmul.f32 %v642, %v713
          %v721 = vmul.f32 %v647, %v713
          %v722 = vmul.f32 %v652, %v713
          %v723 = vmul.f32 %v657, %v713
          %v724 = vmul.f32 %v662, %v713
          %v725 = vmul.f32 %v667, %v713
          %v726 = vmul.f32 %v672, %v713
          %v727 = vmul.f32 %v677, %v713
          %v728 = vmul.f32 %v682, %v713
          %v729 = vmul.f32 %v687, %v713
          %vm746 = vcmask 1046528
          %v747 = vrot.slane %v714, 1
          %v748 = vrot.slane %v715, 1
          %v749 = vsel %vm746, %v747, %v748
          %v750 = vrot.slane %v716, 1
          %v751 = vsel %vm746, %v748, %v750
          %v752 = vrot.slane %v717, 1
          %v753 = vsel %vm746, %v750, %v752
          %v754 = vrot.slane %v718, 1
          %v755 = vsel %vm746, %v752, %v754
          %v756 = vrot.slane %v719, 1
          %v757 = vsel %vm746, %v754, %v756
          %v758 = vrot.slane %v720, 1
          %v759 = vsel %vm746, %v756, %v758
          %v760 = vrot.slane %v721, 1
          %v761 = vsel %vm746, %v758, %v760
          %v762 = vrot.slane %v722, 1
          %v763 = vsel %vm746, %v760, %v762
          %v764 = vrot.slane %v723, 1
          %v765 = vsel %vm746, %v762, %v764
          %v766 = vrot.slane %v724, 1
          %v767 = vsel %vm746, %v764, %v766
          %v768 = vrot.slane %v725, 1
          %v769 = vsel %vm746, %v766, %v768
          %v770 = vrot.slane %v726, 1
          %v771 = vsel %vm746, %v768, %v770
          %v772 = vrot.slane %v727, 1
          %v773 = vsel %vm746, %v770, %v772
          %v774 = vrot.slane %v728, 1
          %v775 = vsel %vm746, %v772, %v774
          %v776 = vrot.slane %v729, 1
          %v777 = vsel %vm746, %v774, %v776
          %v794 = vadd.f32 %v693, %v749
          %v795 = vadd.f32 %v694, %v751
          %v796 = vadd.f32 %v695, %v753
          %v797 = vadd.f32 %v696, %v755
          %v798 = vadd.f32 %v697, %v757
          %v799 = vadd.f32 %v698, %v759
          %v800 = vadd.f32 %v699, %v761
          %v801 = vadd.f32 %v700, %v763
          %v802 = vadd.f32 %v701, %v765
          %v803 = vadd.f32 %v702, %v767
          %v804 = vadd.f32 %v703, %v769
          %v805 = vadd.f32 %v704, %v771
          %v806 = vadd.f32 %v705, %v773
          %v807 = vadd.f32 %v706, %v775
          %v808 = vadd.f32 %v707, %v777
          %v809 = vadd.f32 %v708, %v776
          %v810 = vld [vmem:[#allocation6 + $0x2] sm:$0x1]
          %v811 = vlaneseq
          %v812 = vshrl.u32 %v811, 7
          %v813 = vsub.s32 0, %v812
          %v814 = vrot.slane %v810, %v813
          %v815 = vmul.f32 %v612, %v814
          %v816 = vmul.f32 %v617, %v814
          %v817 = vmul.f32 %v622, %v814
          %v818 = vmul.f32 %v627, %v814
          %v819 = vmul.f32 %v632, %v814
          %v820 = vmul.f32 %v637, %v814
          %v821 = vmul.f32 %v642, %v814
          %v822 = vmul.f32 %v647, %v814
          %v823 = vmul.f32 %v652, %v814
          %v824 = vmul.f32 %v657, %v814
          %v825 = vmul.f32 %v662, %v814
          %v826 = vmul.f32 %v667, %v814
          %v827 = vmul.f32 %v672, %v814
          %v828 = vmul.f32 %v677, %v814
          %v829 = vmul.f32 %v682, %v814
          %v830 = vmul.f32 %v687, %v814
          %vm847 = vcmask 1045504
          %v848 = vrot.slane %v815, 2
          %v849 = vrot.slane %v816, 2
          %v850 = vsel %vm847, %v848, %v849
          %v851 = vrot.slane %v817, 2
          %v852 = vsel %vm847, %v849, %v851
          %v853 = vrot.slane %v818, 2
          %v854 = vsel %vm847, %v851, %v853
          %v855 = vrot.slane %v819, 2
          %v856 = vsel %vm847, %v853, %v855
          %v857 = vrot.slane %v820, 2
          %v858 = vsel %vm847, %v855, %v857
          %v859 = vrot.slane %v821, 2
          %v860 = vsel %vm847, %v857, %v859
          %v861 = vrot.slane %v822, 2
          %v862 = vsel %vm847, %v859, %v861
          %v863 = vrot.slane %v823, 2
          %v864 = vsel %vm847, %v861, %v863
          %v865 = vrot.slane %v824, 2
          %v866 = vsel %vm847, %v863, %v865
          %v867 = vrot.slane %v825, 2
          %v868 = vsel %vm847, %v865, %v867
          %v869 = vrot.slane %v826, 2
          %v870 = vsel %vm847, %v867, %v869
          %v871 = vrot.slane %v827, 2
          %v872 = vsel %vm847, %v869, %v871
          %v873 = vrot.slane %v828, 2
          %v874 = vsel %vm847, %v871, %v873
          %v875 = vrot.slane %v829, 2
          %v876 = vsel %vm847, %v873, %v875
          %v877 = vrot.slane %v830, 2
          %v878 = vsel %vm847, %v875, %v877
          %v895 = vadd.f32 %v794, %v850
          %v896 = vadd.f32 %v795, %v852
          %v897 = vadd.f32 %v796, %v854
          %v898 = vadd.f32 %v797, %v856
          %v899 = vadd.f32 %v798, %v858
          %v900 = vadd.f32 %v799, %v860
          %v901 = vadd.f32 %v800, %v862
          %v902 = vadd.f32 %v801, %v864
          %v903 = vadd.f32 %v802, %v866
          %v904 = vadd.f32 %v803, %v868
          %v905 = vadd.f32 %v804, %v870
          %v906 = vadd.f32 %v805, %v872
          %v907 = vadd.f32 %v806, %v874
          %v908 = vadd.f32 %v807, %v876
          %v909 = vadd.f32 %v808, %v878
          %v910 = vadd.f32 %v809, %v877
          %v911 = vld [vmem:[#allocation9] sm:$0x1]
          %v913 = vlaneseq
          %v914 = vshrl.u32 %v913, 7
          %v915 = vsub.s32 0, %v914
          %v916 = vrot.slane %v911, %v915
          %v918 = vadd.f32 %v895, %v916
          %v919 = vadd.f32 %v896, %v916
          %v920 = vadd.f32 %v897, %v916
          %v921 = vadd.f32 %v898, %v916
          %v922 = vadd.f32 %v899, %v916
          %v923 = vadd.f32 %v900, %v916
          %v924 = vadd.f32 %v901, %v916
          %v925 = vadd.f32 %v902, %v916
          %v926 = vadd.f32 %v903, %v916
          %v927 = vadd.f32 %v904, %v916
          %v928 = vadd.f32 %v905, %v916
          %v929 = vadd.f32 %v906, %v916
          %v930 = vadd.f32 %v907, %v916
          %v931 = vadd.f32 %v908, %v916
          %v932 = vadd.f32 %v909, %v916
          %v933 = vadd.f32 %v910, %v916
          %v934 = vmax.f32 %v918, 0.0
          %v935 = vmax.f32 %v919, 0.0
          %v936 = vmax.f32 %v920, 0.0
          %v937 = vmax.f32 %v921, 0.0
          %v938 = vmax.f32 %v922, 0.0
          %v939 = vmax.f32 %v923, 0.0
          %v940 = vmax.f32 %v924, 0.0
          %v941 = vmax.f32 %v925, 0.0
          %v942 = vmax.f32 %v926, 0.0
          %v943 = vmax.f32 %v927, 0.0
          %v944 = vmax.f32 %v928, 0.0
          %v945 = vmax.f32 %v929, 0.0
          %v946 = vmax.f32 %v930, 0.0
          %v947 = vmax.f32 %v931, 0.0
          %v948 = vmax.f32 %v932, 0.0
          %v949 = vmax.f32 %v933, 0.0
          %v966 = vrot.slane %v934, 1
          %v967 = vrot.slane %v935, 1
          %v968 = vsel %vm746, %v966, %v967
          %v969 = vrot.slane %v936, 1
          %v970 = vsel %vm746, %v967, %v969
          %v971 = vrot.slane %v937, 1
          %v972 = vsel %vm746, %v969, %v971
          %v973 = vrot.slane %v938, 1
          %v974 = vsel %vm746, %v971, %v973
          %v975 = vrot.slane %v939, 1
          %v976 = vsel %vm746, %v973, %v975
          %v977 = vrot.slane %v940, 1
          %v978 = vsel %vm746, %v975, %v977
          %v979 = vrot.slane %v941, 1
          %v980 = vsel %vm746, %v977, %v979
          %v981 = vrot.slane %v942, 1
          %v982 = vsel %vm746, %v979, %v981
          %v983 = vrot.slane %v943, 1
          %v984 = vsel %vm746, %v981, %v983
          %v985 = vrot.slane %v944, 1
          %v986 = vsel %vm746, %v983, %v985
          %v987 = vrot.slane %v945, 1
          %v988 = vsel %vm746, %v985, %v987
          %v989 = vrot.slane %v946, 1
          %v990 = vsel %vm746, %v987, %v989
          %v991 = vrot.slane %v947, 1
          %v992 = vsel %vm746, %v989, %v991
          %v993 = vrot.slane %v948, 1
          %v994 = vsel %vm746, %v991, %v993
          %v995 = vrot.slane %v949, 1
          %v996 = vsel %vm746, %v993, %v995
          %997 = vrot.lane.b32.xlu0 %v968, 64
          %v998 = vpop.permute.xlu0 %997
          %999 = vrot.lane.b32.xlu0 %v970, 64
          %v1000 = vpop.permute.xlu0 %999
          %1001 = vrot.lane.b32.xlu0 %v972, 64
          %v1002 = vpop.permute.xlu0 %1001
          %1003 = vrot.lane.b32.xlu0 %v974, 64
          %v1004 = vpop.permute.xlu0 %1003
          %1005 = vrot.lane.b32.xlu0 %v976, 64
          %v1006 = vpop.permute.xlu0 %1005
          %1007 = vrot.lane.b32.xlu0 %v978, 64
          %v1008 = vpop.permute.xlu0 %1007
          %1009 = vrot.lane.b32.xlu0 %v980, 64
          %v1010 = vpop.permute.xlu0 %1009
          %1011 = vrot.lane.b32.xlu0 %v982, 64
          %v1012 = vpop.permute.xlu0 %1011
          %1013 = vrot.lane.b32.xlu0 %v984, 64
          %v1014 = vpop.permute.xlu0 %1013
          %1015 = vrot.lane.b32.xlu0 %v986, 64
          %v1016 = vpop.permute.xlu0 %1015
          %1017 = vrot.lane.b32.xlu0 %v988, 64
          %v1018 = vpop.permute.xlu0 %1017
          %1019 = vrot.lane.b32.xlu0 %v990, 64
          %v1020 = vpop.permute.xlu0 %1019
          %1021 = vrot.lane.b32.xlu0 %v992, 64
          %v1022 = vpop.permute.xlu0 %1021
          %1023 = vrot.lane.b32.xlu0 %v994, 64
          %v1024 = vpop.permute.xlu0 %1023
          %1025 = vrot.lane.b32.xlu0 %v996, 64
          %v1026 = vpop.permute.xlu0 %1025
          %1027 = vrot.lane.b32.xlu0 %v995, 64
          %v1028 = vpop.permute.xlu0 %1027
          %v1045 = vrot.slane %v934, 2
          %v1046 = vrot.slane %v935, 2
          %v1047 = vsel %vm847, %v1045, %v1046
          %v1048 = vrot.slane %v936, 2
          %v1049 = vsel %vm847, %v1046, %v1048
          %v1050 = vrot.slane %v937, 2
          %v1051 = vsel %vm847, %v1048, %v1050
          %v1052 = vrot.slane %v938, 2
          %v1053 = vsel %vm847, %v1050, %v1052
          %v1054 = vrot.slane %v939, 2
          %v1055 = vsel %vm847, %v1052, %v1054
          %v1056 = vrot.slane %v940, 2
          %v1057 = vsel %vm847, %v1054, %v1056
          %v1058 = vrot.slane %v941, 2
          %v1059 = vsel %vm847, %v1056, %v1058
          %v1060 = vrot.slane %v942, 2
          %v1061 = vsel %vm847, %v1058, %v1060
          %v1062 = vrot.slane %v943, 2
          %v1063 = vsel %vm847, %v1060, %v1062
          %v1064 = vrot.slane %v944, 2
          %v1065 = vsel %vm847, %v1062, %v1064
          %v1066 = vrot.slane %v945, 2
          %v1067 = vsel %vm847, %v1064, %v1066
          %v1068 = vrot.slane %v946, 2
          %v1069 = vsel %vm847, %v1066, %v1068
          %v1070 = vrot.slane %v947, 2
          %v1071 = vsel %vm847, %v1068, %v1070
          %v1072 = vrot.slane %v948, 2
          %v1073 = vsel %vm847, %v1070, %v1072
          %v1074 = vrot.slane %v949, 2
          %v1075 = vsel %vm847, %v1072, %v1074
          %vm1077 = vcmask 523264
          %v1078 = vsel %vm1077, %v934, %v998
          %v1079 = vsel %vm1077, %v935, %v1000
          %v1080 = vsel %vm1077, %v936, %v1002
          %v1081 = vsel %vm1077, %v937, %v1004
          %v1082 = vsel %vm1077, %v938, %v1006
          %v1083 = vsel %vm1077, %v939, %v1008
          %v1084 = vsel %vm1077, %v940, %v1010
          %v1085 = vsel %vm1077, %v941, %v1012
          %v1086 = vsel %vm1077, %v942, %v1014
          %v1087 = vsel %vm1077, %v943, %v1016
          %v1088 = vsel %vm1077, %v944, %v1018
          %v1089 = vsel %vm1077, %v945, %v1020
          %v1090 = vsel %vm1077, %v946, %v1022
          %v1091 = vsel %vm1077, %v947, %v1024
          %v1092 = vsel %vm1077, %v948, %v1026
          %v1093 = vsel %vm1077, %v949, %v1028
          %1094 = vset.pattern.permute.xlu0 1
          %1095 = vperm.xlu0 %1094, %v592
          %v1096 = vpop.permute.xlu0 %1095
          %1098 = vset.pattern.permute.xlu0 1
          %1099 = vperm.xlu0 %1098, %v593
          %v1100 = vpop.permute.xlu0 %1099
          %1102 = vset.pattern.permute.xlu0 1
          %1103 = vperm.xlu0 %1102, %v594
          %v1104 = vpop.permute.xlu0 %1103
          %1106 = vset.pattern.permute.xlu0 1
          %1107 = vperm.xlu0 %1106, %v595
          %v1108 = vpop.permute.xlu0 %1107
          %1110 = vset.pattern.permute.xlu0 1
          %1111 = vperm.xlu0 %1110, %v596
          %v1112 = vpop.permute.xlu0 %1111
          %1114 = vset.pattern.permute.xlu0 1
          %1115 = vperm.xlu0 %1114, %v597
          %v1116 = vpop.permute.xlu0 %1115
          %1118 = vset.pattern.permute.xlu0 1
          %1119 = vperm.xlu0 %1118, %v598
          %v1120 = vpop.permute.xlu0 %1119
          %1122 = vset.pattern.permute.xlu0 1
          %1123 = vperm.xlu0 %1122, %v599
          %v1124 = vpop.permute.xlu0 %1123
          %1126 = vset.pattern.permute.xlu0 1
          %1127 = vperm.xlu0 %1126, %v600
          %v1128 = vpop.permute.xlu0 %1127
          %1130 = vset.pattern.permute.xlu0 1
          %1131 = vperm.xlu0 %1130, %v601
          %v1132 = vpop.permute.xlu0 %1131
          %1134 = vset.pattern.permute.xlu0 1
          %1135 = vperm.xlu0 %1134, %v602
          %v1136 = vpop.permute.xlu0 %1135
          %1138 = vset.pattern.permute.xlu0 1
          %1139 = vperm.xlu0 %1138, %v603
          %v1140 = vpop.permute.xlu0 %1139
          %1142 = vset.pattern.permute.xlu0 1
          %1143 = vperm.xlu0 %1142, %v604
          %v1144 = vpop.permute.xlu0 %1143
          %1146 = vset.pattern.permute.xlu0 1
          %1147 = vperm.xlu0 %1146, %v605
          %v1148 = vpop.permute.xlu0 %1147
          %1150 = vset.pattern.permute.xlu0 1
          %1151 = vperm.xlu0 %1150, %v606
          %v1152 = vpop.permute.xlu0 %1151
          %1154 = vset.pattern.permute.xlu0 1
          %1155 = vperm.xlu0 %1154, %v607
          %v1156 = vpop.permute.xlu0 %1155
          %v1158 = vmul.f32 %v1096, %v692
          %v1159 = vmul.f32 %v1100, %v692
          %v1160 = vmul.f32 %v1104, %v692
          %v1161 = vmul.f32 %v1108, %v692
          %v1162 = vmul.f32 %v1112, %v692
          %v1163 = vmul.f32 %v1116, %v692
          %v1164 = vmul.f32 %v1120, %v692
          %v1165 = vmul.f32 %v1124, %v692
          %v1166 = vmul.f32 %v1128, %v692
          %v1167 = vmul.f32 %v1132, %v692
          %v1168 = vmul.f32 %v1136, %v692
          %v1169 = vmul.f32 %v1140, %v692
          %v1170 = vmul.f32 %v1144, %v692
          %v1171 = vmul.f32 %v1148, %v692
          %v1172 = vmul.f32 %v1152, %v692
          %v1173 = vmul.f32 %v1156, %v692
          %v1174 = vmul.f32 %v1096, %v713
          %v1175 = vmul.f32 %v1100, %v713
          %v1176 = vmul.f32 %v1104, %v713
          %v1177 = vmul.f32 %v1108, %v713
          %v1178 = vmul.f32 %v1112, %v713
          %v1179 = vmul.f32 %v1116, %v713
          %v1180 = vmul.f32 %v1120, %v713
          %v1181 = vmul.f32 %v1124, %v713
          %v1182 = vmul.f32 %v1128, %v713
          %v1183 = vmul.f32 %v1132, %v713
          %v1184 = vmul.f32 %v1136, %v713
          %v1185 = vmul.f32 %v1140, %v713
          %v1186 = vmul.f32 %v1144, %v713
          %v1187 = vmul.f32 %v1148, %v713
          %v1188 = vmul.f32 %v1152, %v713
          %v1189 = vmul.f32 %v1156, %v713
          %v1206 = vrot.slane %v1174, 1
          %v1207 = vrot.slane %v1175, 1
          %v1208 = vsel %vm746, %v1206, %v1207
          %v1209 = vrot.slane %v1176, 1
          %v1210 = vsel %vm746, %v1207, %v1209
          %v1211 = vrot.slane %v1177, 1
          %v1212 = vsel %vm746, %v1209, %v1211
          %v1213 = vrot.slane %v1178, 1
          %v1214 = vsel %vm746, %v1211, %v1213
          %v1215 = vrot.slane %v1179, 1
          %v1216 = vsel %vm746, %v1213, %v1215
          %v1217 = vrot.slane %v1180, 1
          %v1218 = vsel %vm746, %v1215, %v1217
          %v1219 = vrot.slane %v1181, 1
          %v1220 = vsel %vm746, %v1217, %v1219
          %v1221 = vrot.slane %v1182, 1
          %v1222 = vsel %vm746, %v1219, %v1221
          %v1223 = vrot.slane %v1183, 1
          %v1224 = vsel %vm746, %v1221, %v1223
          %v1225 = vrot.slane %v1184, 1
          %v1226 = vsel %vm746, %v1223, %v1225
          %v1227 = vrot.slane %v1185, 1
          %v1228 = vsel %vm746, %v1225, %v1227
          %v1229 = vrot.slane %v1186, 1
          %v1230 = vsel %vm746, %v1227, %v1229
          %v1231 = vrot.slane %v1187, 1
          %v1232 = vsel %vm746, %v1229, %v1231
          %v1233 = vrot.slane %v1188, 1
          %v1234 = vsel %vm746, %v1231, %v1233
          %v1235 = vrot.slane %v1189, 1
          %v1236 = vsel %vm746, %v1233, %v1235
          %v1253 = vadd.f32 %v1158, %v1208
          %v1254 = vadd.f32 %v1159, %v1210
          %v1255 = vadd.f32 %v1160, %v1212
          %v1256 = vadd.f32 %v1161, %v1214
          %v1257 = vadd.f32 %v1162, %v1216
          %v1258 = vadd.f32 %v1163, %v1218
          %v1259 = vadd.f32 %v1164, %v1220
          %v1260 = vadd.f32 %v1165, %v1222
          %v1261 = vadd.f32 %v1166, %v1224
          %v1262 = vadd.f32 %v1167, %v1226
          %v1263 = vadd.f32 %v1168, %v1228
          %v1264 = vadd.f32 %v1169, %v1230
          %v1265 = vadd.f32 %v1170, %v1232
          %v1266 = vadd.f32 %v1171, %v1234
          %v1267 = vadd.f32 %v1172, %v1236
          %v1268 = vadd.f32 %v1173, %v1235
          %v1269 = vmul.f32 %v1096, %v814
          %v1270 = vmul.f32 %v1100, %v814
          %v1271 = vmul.f32 %v1104, %v814
          %v1272 = vmul.f32 %v1108, %v814
          %v1273 = vmul.f32 %v1112, %v814
          %v1274 = vmul.f32 %v1116, %v814
          %v1275 = vmul.f32 %v1120, %v814
          %v1276 = vmul.f32 %v1124, %v814
          %v1277 = vmul.f32 %v1128, %v814
          %v1278 = vmul.f32 %v1132, %v814
          %v1279 = vmul.f32 %v1136, %v814
          %v1280 = vmul.f32 %v1140, %v814
          %v1281 = vmul.f32 %v1144, %v814
          %v1282 = vmul.f32 %v1148, %v814
          %v1283 = vmul.f32 %v1152, %v814
          %v1284 = vmul.f32 %v1156, %v814
          %v1301 = vrot.slane %v1269, 2
          %v1302 = vrot.slane %v1270, 2
          %v1303 = vsel %vm847, %v1301, %v1302
          %v1304 = vrot.slane %v1271, 2
          %v1305 = vsel %vm847, %v1302, %v1304
          %v1306 = vrot.slane %v1272, 2
          %v1307 = vsel %vm847, %v1304, %v1306
          %v1308 = vrot.slane %v1273, 2
          %v1309 = vsel %vm847, %v1306, %v1308
          %v1310 = vrot.slane %v1274, 2
          %v1311 = vsel %vm847, %v1308, %v1310
          %v1312 = vrot.slane %v1275, 2
          %v1313 = vsel %vm847, %v1310, %v1312
          %v1314 = vrot.slane %v1276, 2
          %v1315 = vsel %vm847, %v1312, %v1314
          %v1316 = vrot.slane %v1277, 2
          %v1317 = vsel %vm847, %v1314, %v1316
          %v1318 = vrot.slane %v1278, 2
          %v1319 = vsel %vm847, %v1316, %v1318
          %v1320 = vrot.slane %v1279, 2
          %v1321 = vsel %vm847, %v1318, %v1320
          %v1322 = vrot.slane %v1280, 2
          %v1323 = vsel %vm847, %v1320, %v1322
          %v1324 = vrot.slane %v1281, 2
          %v1325 = vsel %vm847, %v1322, %v1324
          %v1326 = vrot.slane %v1282, 2
          %v1327 = vsel %vm847, %v1324, %v1326
          %v1328 = vrot.slane %v1283, 2
          %v1329 = vsel %vm847, %v1326, %v1328
          %v1330 = vrot.slane %v1284, 2
          %v1331 = vsel %vm847, %v1328, %v1330
          %v1348 = vadd.f32 %v1253, %v1303
          %v1349 = vadd.f32 %v1254, %v1305
          %v1350 = vadd.f32 %v1255, %v1307
          %v1351 = vadd.f32 %v1256, %v1309
          %v1352 = vadd.f32 %v1257, %v1311
          %v1353 = vadd.f32 %v1258, %v1313
          %v1354 = vadd.f32 %v1259, %v1315
          %v1355 = vadd.f32 %v1260, %v1317
          %v1356 = vadd.f32 %v1261, %v1319
          %v1357 = vadd.f32 %v1262, %v1321
          %v1358 = vadd.f32 %v1263, %v1323
          %v1359 = vadd.f32 %v1264, %v1325
          %v1360 = vadd.f32 %v1265, %v1327
          %v1361 = vadd.f32 %v1266, %v1329
          %v1362 = vadd.f32 %v1267, %v1331
          %v1363 = vadd.f32 %v1268, %v1330
          %v1364 = vadd.f32 %v1348, %v916
          %v1365 = vadd.f32 %v1349, %v916
          %v1366 = vadd.f32 %v1350, %v916
          %v1367 = vadd.f32 %v1351, %v916
          %v1368 = vadd.f32 %v1352, %v916
          %v1369 = vadd.f32 %v1353, %v916
          %v1370 = vadd.f32 %v1354, %v916
          %v1371 = vadd.f32 %v1355, %v916
          %v1372 = vadd.f32 %v1356, %v916
          %v1373 = vadd.f32 %v1357, %v916
          %v1374 = vadd.f32 %v1358, %v916
          %v1375 = vadd.f32 %v1359, %v916
          %v1376 = vadd.f32 %v1360, %v916
          %v1377 = vadd.f32 %v1361, %v916
          %v1378 = vadd.f32 %v1362, %v916
          %v1379 = vadd.f32 %v1363, %v916
          %v1380 = vmax.f32 %v1364, 0.0
          %v1381 = vmax.f32 %v1365, 0.0
          %v1382 = vmax.f32 %v1366, 0.0
          %v1383 = vmax.f32 %v1367, 0.0
          %v1384 = vmax.f32 %v1368, 0.0
          %v1385 = vmax.f32 %v1369, 0.0
          %v1386 = vmax.f32 %v1370, 0.0
          %v1387 = vmax.f32 %v1371, 0.0
          %v1388 = vmax.f32 %v1372, 0.0
          %v1389 = vmax.f32 %v1373, 0.0
          %v1390 = vmax.f32 %v1374, 0.0
          %v1391 = vmax.f32 %v1375, 0.0
          %v1392 = vmax.f32 %v1376, 0.0
          %v1393 = vmax.f32 %v1377, 0.0
          %v1394 = vmax.f32 %v1378, 0.0
          %v1395 = vmax.f32 %v1379, 0.0
          %v1412 = vrot.slane %v1380, 1
          %v1413 = vrot.slane %v1381, 1
          %v1414 = vsel %vm746, %v1412, %v1413
          %v1415 = vrot.slane %v1382, 1
          %v1416 = vsel %vm746, %v1413, %v1415
          %v1417 = vrot.slane %v1383, 1
          %v1418 = vsel %vm746, %v1415, %v1417
          %v1419 = vrot.slane %v1384, 1
          %v1420 = vsel %vm746, %v1417, %v1419
          %v1421 = vrot.slane %v1385, 1
          %v1422 = vsel %vm746, %v1419, %v1421
          %v1423 = vrot.slane %v1386, 1
          %v1424 = vsel %vm746, %v1421, %v1423
          %v1425 = vrot.slane %v1387, 1
          %v1426 = vsel %vm746, %v1423, %v1425
          %v1427 = vrot.slane %v1388, 1
          %v1428 = vsel %vm746, %v1425, %v1427
          %v1429 = vrot.slane %v1389, 1
          %v1430 = vsel %vm746, %v1427, %v1429
          %v1431 = vrot.slane %v1390, 1
          %v1432 = vsel %vm746, %v1429, %v1431
          %v1433 = vrot.slane %v1391, 1
          %v1434 = vsel %vm746, %v1431, %v1433
          %v1435 = vrot.slane %v1392, 1
          %v1436 = vsel %vm746, %v1433, %v1435
          %v1437 = vrot.slane %v1393, 1
          %v1438 = vsel %vm746, %v1435, %v1437
          %v1439 = vrot.slane %v1394, 1
          %v1440 = vsel %vm746, %v1437, %v1439
          %v1441 = vrot.slane %v1395, 1
          %v1442 = vsel %vm746, %v1439, %v1441
          %1443 = vrot.lane.b32.xlu0 %v1414, 64
          %v1444 = vpop.permute.xlu0 %1443
          %1445 = vrot.lane.b32.xlu0 %v1416, 64
          %v1446 = vpop.permute.xlu0 %1445
          %1447 = vrot.lane.b32.xlu0 %v1418, 64
          %v1448 = vpop.permute.xlu0 %1447
          %1449 = vrot.lane.b32.xlu0 %v1420, 64
          %v1450 = vpop.permute.xlu0 %1449
          %1451 = vrot.lane.b32.xlu0 %v1422, 64
          %v1452 = vpop.permute.xlu0 %1451
          %1453 = vrot.lane.b32.xlu0 %v1424, 64
          %v1454 = vpop.permute.xlu0 %1453
          %1455 = vrot.lane.b32.xlu0 %v1426, 64
          %v1456 = vpop.permute.xlu0 %1455
          %1457 = vrot.lane.b32.xlu0 %v1428, 64
          %v1458 = vpop.permute.xlu0 %1457
          %1459 = vrot.lane.b32.xlu0 %v1430, 64
          %v1460 = vpop.permute.xlu0 %1459
          %1461 = vrot.lane.b32.xlu0 %v1432, 64
          %v1462 = vpop.permute.xlu0 %1461
          %1463 = vrot.lane.b32.xlu0 %v1434, 64
          %v1464 = vpop.permute.xlu0 %1463
          %1465 = vrot.lane.b32.xlu0 %v1436, 64
          %v1466 = vpop.permute.xlu0 %1465
          %1467 = vrot.lane.b32.xlu0 %v1438, 64
          %v1468 = vpop.permute.xlu0 %1467
          %1469 = vrot.lane.b32.xlu0 %v1440, 64
          %v1470 = vpop.permute.xlu0 %1469
          %1471 = vrot.lane.b32.xlu0 %v1442, 64
          %v1472 = vpop.permute.xlu0 %1471
          %1473 = vrot.lane.b32.xlu0 %v1441, 64
          %v1474 = vpop.permute.xlu0 %1473
          %v1491 = vrot.slane %v1380, 2
          %v1492 = vrot.slane %v1381, 2
          %v1493 = vsel %vm847, %v1491, %v1492
          %v1494 = vrot.slane %v1382, 2
          %v1495 = vsel %vm847, %v1492, %v1494
          %v1496 = vrot.slane %v1383, 2
          %v1497 = vsel %vm847, %v1494, %v1496
          %v1498 = vrot.slane %v1384, 2
          %v1499 = vsel %vm847, %v1496, %v1498
          %v1500 = vrot.slane %v1385, 2
          %v1501 = vsel %vm847, %v1498, %v1500
          %v1502 = vrot.slane %v1386, 2
          %v1503 = vsel %vm847, %v1500, %v1502
          %v1504 = vrot.slane %v1387, 2
          %v1505 = vsel %vm847, %v1502, %v1504
          %v1506 = vrot.slane %v1388, 2
          %v1507 = vsel %vm847, %v1504, %v1506
          %v1508 = vrot.slane %v1389, 2
          %v1509 = vsel %vm847, %v1506, %v1508
          %v1510 = vrot.slane %v1390, 2
          %v1511 = vsel %vm847, %v1508, %v1510
          %v1512 = vrot.slane %v1391, 2
          %v1513 = vsel %vm847, %v1510, %v1512
          %v1514 = vrot.slane %v1392, 2
          %v1515 = vsel %vm847, %v1512, %v1514
          %v1516 = vrot.slane %v1393, 2
          %v1517 = vsel %vm847, %v1514, %v1516
          %v1518 = vrot.slane %v1394, 2
          %v1519 = vsel %vm847, %v1516, %v1518
          %v1520 = vrot.slane %v1395, 2
          %v1521 = vsel %vm847, %v1518, %v1520
          %v1522 = vsel %vm1077, %v1380, %v1444
          %v1523 = vsel %vm1077, %v1381, %v1446
          %v1524 = vsel %vm1077, %v1382, %v1448
          %v1525 = vsel %vm1077, %v1383, %v1450
          %v1526 = vsel %vm1077, %v1384, %v1452
          %v1527 = vsel %vm1077, %v1385, %v1454
          %v1528 = vsel %vm1077, %v1386, %v1456
          %v1529 = vsel %vm1077, %v1387, %v1458
          %v1530 = vsel %vm1077, %v1388, %v1460
          %v1531 = vsel %vm1077, %v1389, %v1462
          %v1532 = vsel %vm1077, %v1390, %v1464
          %v1533 = vsel %vm1077, %v1391, %v1466
          %v1534 = vsel %vm1077, %v1392, %v1468
          %v1535 = vsel %vm1077, %v1393, %v1470
          %v1536 = vsel %vm1077, %v1394, %v1472
          %v1537 = vsel %vm1077, %v1395, %v1474
          %1538 = vset.pattern.permute.xlu0 2
          %1539 = vperm.xlu0 %1538, %v592
          %v1540 = vpop.permute.xlu0 %1539
          %1542 = vset.pattern.permute.xlu0 2
          %1543 = vperm.xlu0 %1542, %v593
          %v1544 = vpop.permute.xlu0 %1543
          %1546 = vset.pattern.permute.xlu0 2
          %1547 = vperm.xlu0 %1546, %v594
          %v1548 = vpop.permute.xlu0 %1547
          %1550 = vset.pattern.permute.xlu0 2
          %1551 = vperm.xlu0 %1550, %v595
          %v1552 = vpop.permute.xlu0 %1551
          %1554 = vset.pattern.permute.xlu0 2
          %1555 = vperm.xlu0 %1554, %v596
          %v1556 = vpop.permute.xlu0 %1555
          %1558 = vset.pattern.permute.xlu0 2
          %1559 = vperm.xlu0 %1558, %v597
          %v1560 = vpop.permute.xlu0 %1559
          %1562 = vset.pattern.permute.xlu0 2
          %1563 = vperm.xlu0 %1562, %v598
          %v1564 = vpop.permute.xlu0 %1563
          %1566 = vset.pattern.permute.xlu0 2
          %1567 = vperm.xlu0 %1566, %v599
          %v1568 = vpop.permute.xlu0 %1567
          %1570 = vset.pattern.permute.xlu0 2
          %1571 = vperm.xlu0 %1570, %v600
          %v1572 = vpop.permute.xlu0 %1571
          %1574 = vset.pattern.permute.xlu0 2
          %1575 = vperm.xlu0 %1574, %v601
          %v1576 = vpop.permute.xlu0 %1575
          %1578 = vset.pattern.permute.xlu0 2
          %1579 = vperm.xlu0 %1578, %v602
          %v1580 = vpop.permute.xlu0 %1579
          %1582 = vset.pattern.permute.xlu0 2
          %1583 = vperm.xlu0 %1582, %v603
          %v1584 = vpop.permute.xlu0 %1583
          %1586 = vset.pattern.permute.xlu0 2
          %1587 = vperm.xlu0 %1586, %v604
          %v1588 = vpop.permute.xlu0 %1587
          %1590 = vset.pattern.permute.xlu0 2
          %1591 = vperm.xlu0 %1590, %v605
          %v1592 = vpop.permute.xlu0 %1591
          %1594 = vset.pattern.permute.xlu0 2
          %1595 = vperm.xlu0 %1594, %v606
          %v1596 = vpop.permute.xlu0 %1595
          %1598 = vset.pattern.permute.xlu0 2
          %1599 = vperm.xlu0 %1598, %v607
          %v1600 = vpop.permute.xlu0 %1599
          %v1602 = vmul.f32 %v1540, %v692
          %v1603 = vmul.f32 %v1544, %v692
          %v1604 = vmul.f32 %v1548, %v692
          %v1605 = vmul.f32 %v1552, %v692
          %v1606 = vmul.f32 %v1556, %v692
          %v1607 = vmul.f32 %v1560, %v692
          %v1608 = vmul.f32 %v1564, %v692
          %v1609 = vmul.f32 %v1568, %v692
          %v1610 = vmul.f32 %v1572, %v692
          %v1611 = vmul.f32 %v1576, %v692
          %v1612 = vmul.f32 %v1580, %v692
          %v1613 = vmul.f32 %v1584, %v692
          %v1614 = vmul.f32 %v1588, %v692
          %v1615 = vmul.f32 %v1592, %v692
          %v1616 = vmul.f32 %v1596, %v692
          %v1617 = vmul.f32 %v1600, %v692
          %v1618 = vmul.f32 %v1540, %v713
          %v1619 = vmul.f32 %v1544, %v713
          %v1620 = vmul.f32 %v1548, %v713
          %v1621 = vmul.f32 %v1552, %v713
          %v1622 = vmul.f32 %v1556, %v713
          %v1623 = vmul.f32 %v1560, %v713
          %v1624 = vmul.f32 %v1564, %v713
          %v1625 = vmul.f32 %v1568, %v713
          %v1626 = vmul.f32 %v1572, %v713
          %v1627 = vmul.f32 %v1576, %v713
          %v1628 = vmul.f32 %v1580, %v713
          %v1629 = vmul.f32 %v1584, %v713
          %v1630 = vmul.f32 %v1588, %v713
          %v1631 = vmul.f32 %v1592, %v713
          %v1632 = vmul.f32 %v1596, %v713
          %v1633 = vmul.f32 %v1600, %v713
          %v1650 = vrot.slane %v1618, 1
          %v1651 = vrot.slane %v1619, 1
          %v1652 = vsel %vm746, %v1650, %v1651
          %v1653 = vrot.slane %v1620, 1
          %v1654 = vsel %vm746, %v1651, %v1653
          %v1655 = vrot.slane %v1621, 1
          %v1656 = vsel %vm746, %v1653, %v1655
          %v1657 = vrot.slane %v1622, 1
          %v1658 = vsel %vm746, %v1655, %v1657
          %v1659 = vrot.slane %v1623, 1
          %v1660 = vsel %vm746, %v1657, %v1659
          %v1661 = vrot.slane %v1624, 1
          %v1662 = vsel %vm746, %v1659, %v1661
          %v1663 = vrot.slane %v1625, 1
          %v1664 = vsel %vm746, %v1661, %v1663
          %v1665 = vrot.slane %v1626, 1
          %v1666 = vsel %vm746, %v1663, %v1665
          %v1667 = vrot.slane %v1627, 1
          %v1668 = vsel %vm746, %v1665, %v1667
          %v1669 = vrot.slane %v1628, 1
          %v1670 = vsel %vm746, %v1667, %v1669
          %v1671 = vrot.slane %v1629, 1
          %v1672 = vsel %vm746, %v1669, %v1671
          %v1673 = vrot.slane %v1630, 1
          %v1674 = vsel %vm746, %v1671, %v1673
          %v1675 = vrot.slane %v1631, 1
          %v1676 = vsel %vm746, %v1673, %v1675
          %v1677 = vrot.slane %v1632, 1
          %v1678 = vsel %vm746, %v1675, %v1677
          %v1679 = vrot.slane %v1633, 1
          %v1680 = vsel %vm746, %v1677, %v1679
          %v1697 = vadd.f32 %v1602, %v1652
          %v1698 = vadd.f32 %v1603, %v1654
          %v1699 = vadd.f32 %v1604, %v1656
          %v1700 = vadd.f32 %v1605, %v1658
          %v1701 = vadd.f32 %v1606, %v1660
          %v1702 = vadd.f32 %v1607, %v1662
          %v1703 = vadd.f32 %v1608, %v1664
          %v1704 = vadd.f32 %v1609, %v1666
          %v1705 = vadd.f32 %v1610, %v1668
          %v1706 = vadd.f32 %v1611, %v1670
          %v1707 = vadd.f32 %v1612, %v1672
          %v1708 = vadd.f32 %v1613, %v1674
          %v1709 = vadd.f32 %v1614, %v1676
          %v1710 = vadd.f32 %v1615, %v1678
          %v1711 = vadd.f32 %v1616, %v1680
          %v1712 = vadd.f32 %v1617, %v1679
          %v1713 = vmul.f32 %v1540, %v814
          %v1714 = vmul.f32 %v1544, %v814
          %v1715 = vmul.f32 %v1548, %v814
          %v1716 = vmul.f32 %v1552, %v814
          %v1717 = vmul.f32 %v1556, %v814
          %v1718 = vmul.f32 %v1560, %v814
          %v1719 = vmul.f32 %v1564, %v814
          %v1720 = vmul.f32 %v1568, %v814
          %v1721 = vmul.f32 %v1572, %v814
          %v1722 = vmul.f32 %v1576, %v814
          %v1723 = vmul.f32 %v1580, %v814
          %v1724 = vmul.f32 %v1584, %v814
          %v1725 = vmul.f32 %v1588, %v814
          %v1726 = vmul.f32 %v1592, %v814
          %v1727 = vmul.f32 %v1596, %v814
          %v1728 = vmul.f32 %v1600, %v814
          %v1745 = vrot.slane %v1713, 2
          %v1746 = vrot.slane %v1714, 2
          %v1747 = vsel %vm847, %v1745, %v1746
          %v1748 = vrot.slane %v1715, 2
          %v1749 = vsel %vm847, %v1746, %v1748
          %v1750 = vrot.slane %v1716, 2
          %v1751 = vsel %vm847, %v1748, %v1750
          %v1752 = vrot.slane %v1717, 2
          %v1753 = vsel %vm847, %v1750, %v1752
          %v1754 = vrot.slane %v1718, 2
          %v1755 = vsel %vm847, %v1752, %v1754
          %v1756 = vrot.slane %v1719, 2
          %v1757 = vsel %vm847, %v1754, %v1756
          %v1758 = vrot.slane %v1720, 2
          %v1759 = vsel %vm847, %v1756, %v1758
          %v1760 = vrot.slane %v1721, 2
          %v1761 = vsel %vm847, %v1758, %v1760
          %v1762 = vrot.slane %v1722, 2
          %v1763 = vsel %vm847, %v1760, %v1762
          %v1764 = vrot.slane %v1723, 2
          %v1765 = vsel %vm847, %v1762, %v1764
          %v1766 = vrot.slane %v1724, 2
          %v1767 = vsel %vm847, %v1764, %v1766
          %v1768 = vrot.slane %v1725, 2
          %v1769 = vsel %vm847, %v1766, %v1768
          %v1770 = vrot.slane %v1726, 2
          %v1771 = vsel %vm847, %v1768, %v1770
          %v1772 = vrot.slane %v1727, 2
          %v1773 = vsel %vm847, %v1770, %v1772
          %v1774 = vrot.slane %v1728, 2
          %v1775 = vsel %vm847, %v1772, %v1774
          %v1792 = vadd.f32 %v1697, %v1747
          %v1793 = vadd.f32 %v1698, %v1749
          %v1794 = vadd.f32 %v1699, %v1751
          %v1795 = vadd.f32 %v1700, %v1753
          %v1796 = vadd.f32 %v1701, %v1755
          %v1797 = vadd.f32 %v1702, %v1757
          %v1798 = vadd.f32 %v1703, %v1759
          %v1799 = vadd.f32 %v1704, %v1761
          %v1800 = vadd.f32 %v1705, %v1763
          %v1801 = vadd.f32 %v1706, %v1765
          %v1802 = vadd.f32 %v1707, %v1767
          %v1803 = vadd.f32 %v1708, %v1769
          %v1804 = vadd.f32 %v1709, %v1771
          %v1805 = vadd.f32 %v1710, %v1773
          %v1806 = vadd.f32 %v1711, %v1775
          %v1807 = vadd.f32 %v1712, %v1774
          %v1808 = vadd.f32 %v1792, %v916
          %v1809 = vadd.f32 %v1793, %v916
          %v1810 = vadd.f32 %v1794, %v916
          %v1811 = vadd.f32 %v1795, %v916
          %v1812 = vadd.f32 %v1796, %v916
          %v1813 = vadd.f32 %v1797, %v916
          %v1814 = vadd.f32 %v1798, %v916
          %v1815 = vadd.f32 %v1799, %v916
          %v1816 = vadd.f32 %v1800, %v916
          %v1817 = vadd.f32 %v1801, %v916
          %v1818 = vadd.f32 %v1802, %v916
          %v1819 = vadd.f32 %v1803, %v916
          %v1820 = vadd.f32 %v1804, %v916
          %v1821 = vadd.f32 %v1805, %v916
          %v1822 = vadd.f32 %v1806, %v916
          %v1823 = vadd.f32 %v1807, %v916
          %v1824 = vmax.f32 %v1808, 0.0
          %v1825 = vmax.f32 %v1809, 0.0
          %v1826 = vmax.f32 %v1810, 0.0
          %v1827 = vmax.f32 %v1811, 0.0
          %v1828 = vmax.f32 %v1812, 0.0
          %v1829 = vmax.f32 %v1813, 0.0
          %v1830 = vmax.f32 %v1814, 0.0
          %v1831 = vmax.f32 %v1815, 0.0
          %v1832 = vmax.f32 %v1816, 0.0
          %v1833 = vmax.f32 %v1817, 0.0
          %v1834 = vmax.f32 %v1818, 0.0
          %v1835 = vmax.f32 %v1819, 0.0
          %v1836 = vmax.f32 %v1820, 0.0
          %v1837 = vmax.f32 %v1821, 0.0
          %v1838 = vmax.f32 %v1822, 0.0
          %v1839 = vmax.f32 %v1823, 0.0
          %v1856 = vrot.slane %v1824, 1
          %v1857 = vrot.slane %v1825, 1
          %v1858 = vsel %vm746, %v1856, %v1857
          %v1859 = vrot.slane %v1826, 1
          %v1860 = vsel %vm746, %v1857, %v1859
          %v1861 = vrot.slane %v1827, 1
          %v1862 = vsel %vm746, %v1859, %v1861
          %v1863 = vrot.slane %v1828, 1
          %v1864 = vsel %vm746, %v1861, %v1863
          %v1865 = vrot.slane %v1829, 1
          %v1866 = vsel %vm746, %v1863, %v1865
          %v1867 = vrot.slane %v1830, 1
          %v1868 = vsel %vm746, %v1865, %v1867
          %v1869 = vrot.slane %v1831, 1
          %v1870 = vsel %vm746, %v1867, %v1869
          %v1871 = vrot.slane %v1832, 1
          %v1872 = vsel %vm746, %v1869, %v1871
          %v1873 = vrot.slane %v1833, 1
          %v1874 = vsel %vm746, %v1871, %v1873
          %v1875 = vrot.slane %v1834, 1
          %v1876 = vsel %vm746, %v1873, %v1875
          %v1877 = vrot.slane %v1835, 1
          %v1878 = vsel %vm746, %v1875, %v1877
          %v1879 = vrot.slane %v1836, 1
          %v1880 = vsel %vm746, %v1877, %v1879
          %v1881 = vrot.slane %v1837, 1
          %v1882 = vsel %vm746, %v1879, %v1881
          %v1883 = vrot.slane %v1838, 1
          %v1884 = vsel %vm746, %v1881, %v1883
          %v1885 = vrot.slane %v1839, 1
          %v1886 = vsel %vm746, %v1883, %v1885
          %1887 = vrot.lane.b32.xlu0 %v1858, 64
          %v1888 = vpop.permute.xlu0 %1887
          %1889 = vrot.lane.b32.xlu0 %v1860, 64
          %v1890 = vpop.permute.xlu0 %1889
          %1891 = vrot.lane.b32.xlu0 %v1862, 64
          %v1892 = vpop.permute.xlu0 %1891
          %1893 = vrot.lane.b32.xlu0 %v1864, 64
          %v1894 = vpop.permute.xlu0 %1893
          %1895 = vrot.lane.b32.xlu0 %v1866, 64
          %v1896 = vpop.permute.xlu0 %1895
          %1897 = vrot.lane.b32.xlu0 %v1868, 64
          %v1898 = vpop.permute.xlu0 %1897
          %1899 = vrot.lane.b32.xlu0 %v1870, 64
          %v1900 = vpop.permute.xlu0 %1899
          %1901 = vrot.lane.b32.xlu0 %v1872, 64
          %v1902 = vpop.permute.xlu0 %1901
          %1903 = vrot.lane.b32.xlu0 %v1874, 64
          %v1904 = vpop.permute.xlu0 %1903
          %1905 = vrot.lane.b32.xlu0 %v1876, 64
          %v1906 = vpop.permute.xlu0 %1905
          %1907 = vrot.lane.b32.xlu0 %v1878, 64
          %v1908 = vpop.permute.xlu0 %1907
          %1909 = vrot.lane.b32.xlu0 %v1880, 64
          %v1910 = vpop.permute.xlu0 %1909
          %1911 = vrot.lane.b32.xlu0 %v1882, 64
          %v1912 = vpop.permute.xlu0 %1911
          %1913 = vrot.lane.b32.xlu0 %v1884, 64
          %v1914 = vpop.permute.xlu0 %1913
          %1915 = vrot.lane.b32.xlu0 %v1886, 64
          %v1916 = vpop.permute.xlu0 %1915
          %1917 = vrot.lane.b32.xlu0 %v1885, 64
          %v1918 = vpop.permute.xlu0 %1917
          %v1935 = vrot.slane %v1824, 2
          %v1936 = vrot.slane %v1825, 2
          %v1937 = vsel %vm847, %v1935, %v1936
          %v1938 = vrot.slane %v1826, 2
          %v1939 = vsel %vm847, %v1936, %v1938
          %v1940 = vrot.slane %v1827, 2
          %v1941 = vsel %vm847, %v1938, %v1940
          %v1942 = vrot.slane %v1828, 2
          %v1943 = vsel %vm847, %v1940, %v1942
          %v1944 = vrot.slane %v1829, 2
          %v1945 = vsel %vm847, %v1942, %v1944
          %v1946 = vrot.slane %v1830, 2
          %v1947 = vsel %vm847, %v1944, %v1946
          %v1948 = vrot.slane %v1831, 2
          %v1949 = vsel %vm847, %v1946, %v1948
          %v1950 = vrot.slane %v1832, 2
          %v1951 = vsel %vm847, %v1948, %v1950
          %v1952 = vrot.slane %v1833, 2
          %v1953 = vsel %vm847, %v1950, %v1952
          %v1954 = vrot.slane %v1834, 2
          %v1955 = vsel %vm847, %v1952, %v1954
          %v1956 = vrot.slane %v1835, 2
          %v1957 = vsel %vm847, %v1954, %v1956
          %v1958 = vrot.slane %v1836, 2
          %v1959 = vsel %vm847, %v1956, %v1958
          %v1960 = vrot.slane %v1837, 2
          %v1961 = vsel %vm847, %v1958, %v1960
          %v1962 = vrot.slane %v1838, 2
          %v1963 = vsel %vm847, %v1960, %v1962
          %v1964 = vrot.slane %v1839, 2
          %v1965 = vsel %vm847, %v1962, %v1964
          %v1967 = vsel %vm1077, %v1824, %v1888
          %v1968 = vsel %vm1077, %v1825, %v1890
          %v1969 = vsel %vm1077, %v1826, %v1892
          %v1970 = vsel %vm1077, %v1827, %v1894
          %v1971 = vsel %vm1077, %v1828, %v1896
          %v1972 = vsel %vm1077, %v1829, %v1898
          %v1973 = vsel %vm1077, %v1830, %v1900
          %v1974 = vsel %vm1077, %v1831, %v1902
          %v1975 = vsel %vm1077, %v1832, %v1904
          %v1976 = vsel %vm1077, %v1833, %v1906
          %v1977 = vsel %vm1077, %v1834, %v1908
          %v1978 = vsel %vm1077, %v1835, %v1910
          %v1979 = vsel %vm1077, %v1836, %v1912
          %v1980 = vsel %vm1077, %v1837, %v1914
          %v1981 = vsel %vm1077, %v1838, %v1916
          %v1982 = vsel %vm1077, %v1839, %v1918
          %1983 = vset.pattern.permute.xlu0 3
          %1984 = vperm.xlu0 %1983, %v592
          %v1985 = vpop.permute.xlu0 %1984
          %1987 = vset.pattern.permute.xlu0 3
          %1988 = vperm.xlu0 %1987, %v593
          %v1989 = vpop.permute.xlu0 %1988
          %1991 = vset.pattern.permute.xlu0 3
          %1992 = vperm.xlu0 %1991, %v594
          %v1993 = vpop.permute.xlu0 %1992
          %1995 = vset.pattern.permute.xlu0 3
          %1996 = vperm.xlu0 %1995, %v595
          %v1997 = vpop.permute.xlu0 %1996
          %1999 = vset.pattern.permute.xlu0 3
          %2000 = vperm.xlu0 %1999, %v596
          %v2001 = vpop.permute.xlu0 %2000
          %2003 = vset.pattern.permute.xlu0 3
          %2004 = vperm.xlu0 %2003, %v597
          %v2005 = vpop.permute.xlu0 %2004
          %2007 = vset.pattern.permute.xlu0 3
          %2008 = vperm.xlu0 %2007, %v598
          %v2009 = vpop.permute.xlu0 %2008
          %2011 = vset.pattern.permute.xlu0 3
          %2012 = vperm.xlu0 %2011, %v599
          %v2013 = vpop.permute.xlu0 %2012
          %2015 = vset.pattern.permute.xlu0 3
          %2016 = vperm.xlu0 %2015, %v600
          %v2017 = vpop.permute.xlu0 %2016
          %2019 = vset.pattern.permute.xlu0 3
          %2020 = vperm.xlu0 %2019, %v601
          %v2021 = vpop.permute.xlu0 %2020
          %2023 = vset.pattern.permute.xlu0 3
          %2024 = vperm.xlu0 %2023, %v602
          %v2025 = vpop.permute.xlu0 %2024
          %2027 = vset.pattern.permute.xlu0 3
          %2028 = vperm.xlu0 %2027, %v603
          %v2029 = vpop.permute.xlu0 %2028
          %2031 = vset.pattern.permute.xlu0 3
          %2032 = vperm.xlu0 %2031, %v604
          %v2033 = vpop.permute.xlu0 %2032
          %2035 = vset.pattern.permute.xlu0 3
          %2036 = vperm.xlu0 %2035, %v605
          %v2037 = vpop.permute.xlu0 %2036
          %2039 = vset.pattern.permute.xlu0 3
          %2040 = vperm.xlu0 %2039, %v606
          %v2041 = vpop.permute.xlu0 %2040
          %2043 = vset.pattern.permute.xlu0 3
          %2044 = vperm.xlu0 %2043, %v607
          %v2045 = vpop.permute.xlu0 %2044
          %v2047 = vmul.f32 %v1985, %v692
          %v2048 = vmul.f32 %v1989, %v692
          %v2049 = vmul.f32 %v1993, %v692
          %v2050 = vmul.f32 %v1997, %v692
          %v2051 = vmul.f32 %v2001, %v692
          %v2052 = vmul.f32 %v2005, %v692
          %v2053 = vmul.f32 %v2009, %v692
          %v2054 = vmul.f32 %v2013, %v692
          %v2055 = vmul.f32 %v2017, %v692
          %v2056 = vmul.f32 %v2021, %v692
          %v2057 = vmul.f32 %v2025, %v692
          %v2058 = vmul.f32 %v2029, %v692
          %v2059 = vmul.f32 %v2033, %v692
          %v2060 = vmul.f32 %v2037, %v692
          %v2061 = vmul.f32 %v2041, %v692
          %v2062 = vmul.f32 %v2045, %v692
          %v2063 = vmul.f32 %v1985, %v713
          %v2064 = vmul.f32 %v1989, %v713
          %v2065 = vmul.f32 %v1993, %v713
          %v2066 = vmul.f32 %v1997, %v713
          %v2067 = vmul.f32 %v2001, %v713
          %v2068 = vmul.f32 %v2005, %v713
          %v2069 = vmul.f32 %v2009, %v713
          %v2070 = vmul.f32 %v2013, %v713
          %v2071 = vmul.f32 %v2017, %v713
          %v2072 = vmul.f32 %v2021, %v713
          %v2073 = vmul.f32 %v2025, %v713
          %v2074 = vmul.f32 %v2029, %v713
          %v2075 = vmul.f32 %v2033, %v713
          %v2076 = vmul.f32 %v2037, %v713
          %v2077 = vmul.f32 %v2041, %v713
          %v2078 = vmul.f32 %v2045, %v713
          %v2095 = vrot.slane %v2063, 1
          %v2096 = vrot.slane %v2064, 1
          %v2097 = vsel %vm746, %v2095, %v2096
          %v2098 = vrot.slane %v2065, 1
          %v2099 = vsel %vm746, %v2096, %v2098
          %v2100 = vrot.slane %v2066, 1
          %v2101 = vsel %vm746, %v2098, %v2100
          %v2102 = vrot.slane %v2067, 1
          %v2103 = vsel %vm746, %v2100, %v2102
          %v2104 = vrot.slane %v2068, 1
          %v2105 = vsel %vm746, %v2102, %v2104
          %v2106 = vrot.slane %v2069, 1
          %v2107 = vsel %vm746, %v2104, %v2106
          %v2108 = vrot.slane %v2070, 1
          %v2109 = vsel %vm746, %v2106, %v2108
          %v2110 = vrot.slane %v2071, 1
          %v2111 = vsel %vm746, %v2108, %v2110
          %v2112 = vrot.slane %v2072, 1
          %v2113 = vsel %vm746, %v2110, %v2112
          %v2114 = vrot.slane %v2073, 1
          %v2115 = vsel %vm746, %v2112, %v2114
          %v2116 = vrot.slane %v2074, 1
          %v2117 = vsel %vm746, %v2114, %v2116
          %v2118 = vrot.slane %v2075, 1
          %v2119 = vsel %vm746, %v2116, %v2118
          %v2120 = vrot.slane %v2076, 1
          %v2121 = vsel %vm746, %v2118, %v2120
          %v2122 = vrot.slane %v2077, 1
          %v2123 = vsel %vm746, %v2120, %v2122
          %v2124 = vrot.slane %v2078, 1
          %v2125 = vsel %vm746, %v2122, %v2124
          %v2142 = vadd.f32 %v2047, %v2097
          %v2143 = vadd.f32 %v2048, %v2099
          %v2144 = vadd.f32 %v2049, %v2101
          %v2145 = vadd.f32 %v2050, %v2103
          %v2146 = vadd.f32 %v2051, %v2105
          %v2147 = vadd.f32 %v2052, %v2107
          %v2148 = vadd.f32 %v2053, %v2109
          %v2149 = vadd.f32 %v2054, %v2111
          %v2150 = vadd.f32 %v2055, %v2113
          %v2151 = vadd.f32 %v2056, %v2115
          %v2152 = vadd.f32 %v2057, %v2117
          %v2153 = vadd.f32 %v2058, %v2119
          %v2154 = vadd.f32 %v2059, %v2121
          %v2155 = vadd.f32 %v2060, %v2123
          %v2156 = vadd.f32 %v2061, %v2125
          %v2157 = vadd.f32 %v2062, %v2124
          %v2158 = vmul.f32 %v1985, %v814
          %v2159 = vmul.f32 %v1989, %v814
          %v2160 = vmul.f32 %v1993, %v814
          %v2161 = vmul.f32 %v1997, %v814
          %v2162 = vmul.f32 %v2001, %v814
          %v2163 = vmul.f32 %v2005, %v814
          %v2164 = vmul.f32 %v2009, %v814
          %v2165 = vmul.f32 %v2013, %v814
          %v2166 = vmul.f32 %v2017, %v814
          %v2167 = vmul.f32 %v2021, %v814
          %v2168 = vmul.f32 %v2025, %v814
          %v2169 = vmul.f32 %v2029, %v814
          %v2170 = vmul.f32 %v2033, %v814
          %v2171 = vmul.f32 %v2037, %v814
          %v2172 = vmul.f32 %v2041, %v814
          %v2173 = vmul.f32 %v2045, %v814
          %v2190 = vrot.slane %v2158, 2
          %v2191 = vrot.slane %v2159, 2
          %v2192 = vsel %vm847, %v2190, %v2191
          %v2193 = vrot.slane %v2160, 2
          %v2194 = vsel %vm847, %v2191, %v2193
          %v2195 = vrot.slane %v2161, 2
          %v2196 = vsel %vm847, %v2193, %v2195
          %v2197 = vrot.slane %v2162, 2
          %v2198 = vsel %vm847, %v2195, %v2197
          %v2199 = vrot.slane %v2163, 2
          %v2200 = vsel %vm847, %v2197, %v2199
          %v2201 = vrot.slane %v2164, 2
          %v2202 = vsel %vm847, %v2199, %v2201
          %v2203 = vrot.slane %v2165, 2
          %v2204 = vsel %vm847, %v2201, %v2203
          %v2205 = vrot.slane %v2166, 2
          %v2206 = vsel %vm847, %v2203, %v2205
          %v2207 = vrot.slane %v2167, 2
          %v2208 = vsel %vm847, %v2205, %v2207
          %v2209 = vrot.slane %v2168, 2
          %v2210 = vsel %vm847, %v2207, %v2209
          %v2211 = vrot.slane %v2169, 2
          %v2212 = vsel %vm847, %v2209, %v2211
          %v2213 = vrot.slane %v2170, 2
          %v2214 = vsel %vm847, %v2211, %v2213
          %v2215 = vrot.slane %v2171, 2
          %v2216 = vsel %vm847, %v2213, %v2215
          %v2217 = vrot.slane %v2172, 2
          %v2218 = vsel %vm847, %v2215, %v2217
          %v2219 = vrot.slane %v2173, 2
          %v2220 = vsel %vm847, %v2217, %v2219
          %v2237 = vadd.f32 %v2142, %v2192
          %v2238 = vadd.f32 %v2143, %v2194
          %v2239 = vadd.f32 %v2144, %v2196
          %v2240 = vadd.f32 %v2145, %v2198
          %v2241 = vadd.f32 %v2146, %v2200
          %v2242 = vadd.f32 %v2147, %v2202
          %v2243 = vadd.f32 %v2148, %v2204
          %v2244 = vadd.f32 %v2149, %v2206
          %v2245 = vadd.f32 %v2150, %v2208
          %v2246 = vadd.f32 %v2151, %v2210
          %v2247 = vadd.f32 %v2152, %v2212
          %v2248 = vadd.f32 %v2153, %v2214
          %v2249 = vadd.f32 %v2154, %v2216
          %v2250 = vadd.f32 %v2155, %v2218
          %v2251 = vadd.f32 %v2156, %v2220
          %v2252 = vadd.f32 %v2157, %v2219
          %v2253 = vadd.f32 %v2237, %v916
          %v2254 = vadd.f32 %v2238, %v916
          %v2255 = vadd.f32 %v2239, %v916
          %v2256 = vadd.f32 %v2240, %v916
          %v2257 = vadd.f32 %v2241, %v916
          %v2258 = vadd.f32 %v2242, %v916
          %v2259 = vadd.f32 %v2243, %v916
          %v2260 = vadd.f32 %v2244, %v916
          %v2261 = vadd.f32 %v2245, %v916
          %v2262 = vadd.f32 %v2246, %v916
          %v2263 = vadd.f32 %v2247, %v916
          %v2264 = vadd.f32 %v2248, %v916
          %v2265 = vadd.f32 %v2249, %v916
          %v2266 = vadd.f32 %v2250, %v916
          %v2267 = vadd.f32 %v2251, %v916
          %v2268 = vadd.f32 %v2252, %v916
          %v2269 = vmax.f32 %v2253, 0.0
          %v2270 = vmax.f32 %v2254, 0.0
          %v2271 = vmax.f32 %v2255, 0.0
          %v2272 = vmax.f32 %v2256, 0.0
          %v2273 = vmax.f32 %v2257, 0.0
          %v2274 = vmax.f32 %v2258, 0.0
          %v2275 = vmax.f32 %v2259, 0.0
          %v2276 = vmax.f32 %v2260, 0.0
          %v2277 = vmax.f32 %v2261, 0.0
          %v2278 = vmax.f32 %v2262, 0.0
          %v2279 = vmax.f32 %v2263, 0.0
          %v2280 = vmax.f32 %v2264, 0.0
          %v2281 = vmax.f32 %v2265, 0.0
          %v2282 = vmax.f32 %v2266, 0.0
          %v2283 = vmax.f32 %v2267, 0.0
          %v2284 = vmax.f32 %v2268, 0.0
          %v2301 = vrot.slane %v2269, 1
          %v2302 = vrot.slane %v2270, 1
          %v2303 = vsel %vm746, %v2301, %v2302
          %v2304 = vrot.slane %v2271, 1
          %v2305 = vsel %vm746, %v2302, %v2304
          %v2306 = vrot.slane %v2272, 1
          %v2307 = vsel %vm746, %v2304, %v2306
          %v2308 = vrot.slane %v2273, 1
          %v2309 = vsel %vm746, %v2306, %v2308
          %v2310 = vrot.slane %v2274, 1
          %v2311 = vsel %vm746, %v2308, %v2310
          %v2312 = vrot.slane %v2275, 1
          %v2313 = vsel %vm746, %v2310, %v2312
          %v2314 = vrot.slane %v2276, 1
          %v2315 = vsel %vm746, %v2312, %v2314
          %v2316 = vrot.slane %v2277, 1
          %v2317 = vsel %vm746, %v2314, %v2316
          %v2318 = vrot.slane %v2278, 1
          %v2319 = vsel %vm746, %v2316, %v2318
          %v2320 = vrot.slane %v2279, 1
          %v2321 = vsel %vm746, %v2318, %v2320
          %v2322 = vrot.slane %v2280, 1
          %v2323 = vsel %vm746, %v2320, %v2322
          %v2324 = vrot.slane %v2281, 1
          %v2325 = vsel %vm746, %v2322, %v2324
          %v2326 = vrot.slane %v2282, 1
          %v2327 = vsel %vm746, %v2324, %v2326
          %v2328 = vrot.slane %v2283, 1
          %v2329 = vsel %vm746, %v2326, %v2328
          %v2330 = vrot.slane %v2284, 1
          %v2331 = vsel %vm746, %v2328, %v2330
          %2332 = vrot.lane.b32.xlu0 %v2303, 64
          %v2333 = vpop.permute.xlu0 %2332
          %2334 = vrot.lane.b32.xlu0 %v2305, 64
          %v2335 = vpop.permute.xlu0 %2334
          %2336 = vrot.lane.b32.xlu0 %v2307, 64
          %v2337 = vpop.permute.xlu0 %2336
          %2338 = vrot.lane.b32.xlu0 %v2309, 64
          %v2339 = vpop.permute.xlu0 %2338
          %2340 = vrot.lane.b32.xlu0 %v2311, 64
          %v2341 = vpop.permute.xlu0 %2340
          %2342 = vrot.lane.b32.xlu0 %v2313, 64
          %v2343 = vpop.permute.xlu0 %2342
          %2344 = vrot.lane.b32.xlu0 %v2315, 64
          %v2345 = vpop.permute.xlu0 %2344
          %2346 = vrot.lane.b32.xlu0 %v2317, 64
          %v2347 = vpop.permute.xlu0 %2346
          %2348 = vrot.lane.b32.xlu0 %v2319, 64
          %v2349 = vpop.permute.xlu0 %2348
          %2350 = vrot.lane.b32.xlu0 %v2321, 64
          %v2351 = vpop.permute.xlu0 %2350
          %2352 = vrot.lane.b32.xlu0 %v2323, 64
          %v2353 = vpop.permute.xlu0 %2352
          %2354 = vrot.lane.b32.xlu0 %v2325, 64
          %v2355 = vpop.permute.xlu0 %2354
          %2356 = vrot.lane.b32.xlu0 %v2327, 64
          %v2357 = vpop.permute.xlu0 %2356
          %2358 = vrot.lane.b32.xlu0 %v2329, 64
          %v2359 = vpop.permute.xlu0 %2358
          %2360 = vrot.lane.b32.xlu0 %v2331, 64
          %v2361 = vpop.permute.xlu0 %2360
          %2362 = vrot.lane.b32.xlu0 %v2330, 64
          %v2363 = vpop.permute.xlu0 %2362
          %v2380 = vrot.slane %v2269, 2
          %v2381 = vrot.slane %v2270, 2
          %v2382 = vsel %vm847, %v2380, %v2381
          %v2383 = vrot.slane %v2271, 2
          %v2384 = vsel %vm847, %v2381, %v2383
          %v2385 = vrot.slane %v2272, 2
          %v2386 = vsel %vm847, %v2383, %v2385
          %v2387 = vrot.slane %v2273, 2
          %v2388 = vsel %vm847, %v2385, %v2387
          %v2389 = vrot.slane %v2274, 2
          %v2390 = vsel %vm847, %v2387, %v2389
          %v2391 = vrot.slane %v2275, 2
          %v2392 = vsel %vm847, %v2389, %v2391
          %v2393 = vrot.slane %v2276, 2
          %v2394 = vsel %vm847, %v2391, %v2393
          %v2395 = vrot.slane %v2277, 2
          %v2396 = vsel %vm847, %v2393, %v2395
          %v2397 = vrot.slane %v2278, 2
          %v2398 = vsel %vm847, %v2395, %v2397
          %v2399 = vrot.slane %v2279, 2
          %v2400 = vsel %vm847, %v2397, %v2399
          %v2401 = vrot.slane %v2280, 2
          %v2402 = vsel %vm847, %v2399, %v2401
          %v2403 = vrot.slane %v2281, 2
          %v2404 = vsel %vm847, %v2401, %v2403
          %v2405 = vrot.slane %v2282, 2
          %v2406 = vsel %vm847, %v2403, %v2405
          %v2407 = vrot.slane %v2283, 2
          %v2408 = vsel %vm847, %v2405, %v2407
          %v2409 = vrot.slane %v2284, 2
          %v2410 = vsel %vm847, %v2407, %v2409
          %v2411 = vsel %vm1077, %v2269, %v2333
          %v2412 = vsel %vm1077, %v2270, %v2335
          %v2413 = vsel %vm1077, %v2271, %v2337
          %v2414 = vsel %vm1077, %v2272, %v2339
          %v2415 = vsel %vm1077, %v2273, %v2341
          %v2416 = vsel %vm1077, %v2274, %v2343
          %v2417 = vsel %vm1077, %v2275, %v2345
          %v2418 = vsel %vm1077, %v2276, %v2347
          %v2419 = vsel %vm1077, %v2277, %v2349
          %v2420 = vsel %vm1077, %v2278, %v2351
          %v2421 = vsel %vm1077, %v2279, %v2353
          %v2422 = vsel %vm1077, %v2280, %v2355
          %v2423 = vsel %vm1077, %v2281, %v2357
          %v2424 = vsel %vm1077, %v2282, %v2359
          %v2425 = vsel %vm1077, %v2283, %v2361
          %v2426 = vsel %vm1077, %v2284, %v2363
          %vm2443 = vcmask 1043456
          %v2444 = vrot.slane %v1522, 4
          %v2445 = vrot.slane %v1493, 4
          %v2446 = vrot.slane %v1523, 4
          %v2447 = vsel %vm2443, %v2444, %v2446
          %v2448 = vrot.slane %v1495, 4
          %v2449 = vsel %vm2443, %v2445, %v2448
          %v2450 = vrot.slane %v1524, 4
          %v2451 = vsel %vm2443, %v2446, %v2450
          %v2452 = vrot.slane %v1497, 4
          %v2453 = vsel %vm2443, %v2448, %v2452
          %v2454 = vrot.slane %v1525, 4
          %v2455 = vsel %vm2443, %v2450, %v2454
          %v2456 = vrot.slane %v1499, 4
          %v2457 = vsel %vm2443, %v2452, %v2456
          %v2458 = vrot.slane %v1526, 4
          %v2459 = vsel %vm2443, %v2454, %v2458
          %v2460 = vrot.slane %v1501, 4
          %v2461 = vsel %vm2443, %v2456, %v2460
          %v2462 = vrot.slane %v1527, 4
          %v2463 = vsel %vm2443, %v2458, %v2462
          %v2464 = vrot.slane %v1503, 4
          %v2465 = vsel %vm2443, %v2460, %v2464
          %v2466 = vrot.slane %v1528, 4
          %v2467 = vsel %vm2443, %v2462, %v2466
          %v2468 = vrot.slane %v1505, 4
          %v2469 = vsel %vm2443, %v2464, %v2468
          %v2470 = vrot.slane %v1529, 4
          %v2471 = vsel %vm2443, %v2466, %v2470
          %v2472 = vrot.slane %v1507, 4
          %v2473 = vsel %vm2443, %v2468, %v2472
          %v2474 = vrot.slane %v1530, 4
          %v2475 = vsel %vm2443, %v2470, %v2474
          %v2476 = vrot.slane %v1509, 4
          %v2477 = vsel %vm2443, %v2472, %v2476
          %v2478 = vrot.slane %v1531, 4
          %v2479 = vsel %vm2443, %v2474, %v2478
          %v2480 = vrot.slane %v1511, 4
          %v2481 = vsel %vm2443, %v2476, %v2480
          %v2482 = vrot.slane %v1532, 4
          %v2483 = vsel %vm2443, %v2478, %v2482
          %v2484 = vrot.slane %v1513, 4
          %v2485 = vsel %vm2443, %v2480, %v2484
          %v2486 = vrot.slane %v1533, 4
          %v2487 = vsel %vm2443, %v2482, %v2486
          %v2488 = vrot.slane %v1515, 4
          %v2489 = vsel %vm2443, %v2484, %v2488
          %v2490 = vrot.slane %v1534, 4
          %v2491 = vsel %vm2443, %v2486, %v2490
          %v2492 = vrot.slane %v1517, 4
          %v2493 = vsel %vm2443, %v2488, %v2492
          %v2494 = vrot.slane %v1535, 4
          %v2495 = vsel %vm2443, %v2490, %v2494
          %v2496 = vrot.slane %v1519, 4
          %v2497 = vsel %vm2443, %v2492, %v2496
          %v2498 = vrot.slane %v1536, 4
          %v2499 = vsel %vm2443, %v2494, %v2498
          %v2500 = vrot.slane %v1521, 4
          %v2501 = vsel %vm2443, %v2496, %v2500
          %v2502 = vrot.slane %v1537, 4
          %v2503 = vsel %vm2443, %v2498, %v2502
          %v2504 = vrot.slane %v1520, 4
          %v2505 = vsel %vm2443, %v2500, %v2504
          %v2539 = vrot.slane %v2411, 4
          %v2540 = vrot.slane %v2382, 4
          %v2541 = vrot.slane %v2412, 4
          %v2542 = vsel %vm2443, %v2539, %v2541
          %v2543 = vrot.slane %v2384, 4
          %v2544 = vsel %vm2443, %v2540, %v2543
          %v2545 = vrot.slane %v2413, 4
          %v2546 = vsel %vm2443, %v2541, %v2545
          %v2547 = vrot.slane %v2386, 4
          %v2548 = vsel %vm2443, %v2543, %v2547
          %v2549 = vrot.slane %v2414, 4
          %v2550 = vsel %vm2443, %v2545, %v2549
          %v2551 = vrot.slane %v2388, 4
          %v2552 = vsel %vm2443, %v2547, %v2551
          %v2553 = vrot.slane %v2415, 4
          %v2554 = vsel %vm2443, %v2549, %v2553
          %v2555 = vrot.slane %v2390, 4
          %v2556 = vsel %vm2443, %v2551, %v2555
          %v2557 = vrot.slane %v2416, 4
          %v2558 = vsel %vm2443, %v2553, %v2557
          %v2559 = vrot.slane %v2392, 4
          %v2560 = vsel %vm2443, %v2555, %v2559
          %v2561 = vrot.slane %v2417, 4
          %v2562 = vsel %vm2443, %v2557, %v2561
          %v2563 = vrot.slane %v2394, 4
          %v2564 = vsel %vm2443, %v2559, %v2563
          %v2565 = vrot.slane %v2418, 4
          %v2566 = vsel %vm2443, %v2561, %v2565
          %v2567 = vrot.slane %v2396, 4
          %v2568 = vsel %vm2443, %v2563, %v2567
          %v2569 = vrot.slane %v2419, 4
          %v2570 = vsel %vm2443, %v2565, %v2569
          %v2571 = vrot.slane %v2398, 4
          %v2572 = vsel %vm2443, %v2567, %v2571
          %v2573 = vrot.slane %v2420, 4
          %v2574 = vsel %vm2443, %v2569, %v2573
          %v2575 = vrot.slane %v2400, 4
          %v2576 = vsel %vm2443, %v2571, %v2575
          %v2577 = vrot.slane %v2421, 4
          %v2578 = vsel %vm2443, %v2573, %v2577
          %v2579 = vrot.slane %v2402, 4
          %v2580 = vsel %vm2443, %v2575, %v2579
          %v2581 = vrot.slane %v2422, 4
          %v2582 = vsel %vm2443, %v2577, %v2581
          %v2583 = vrot.slane %v2404, 4
          %v2584 = vsel %vm2443, %v2579, %v2583
          %v2585 = vrot.slane %v2423, 4
          %v2586 = vsel %vm2443, %v2581, %v2585
          %v2587 = vrot.slane %v2406, 4
          %v2588 = vsel %vm2443, %v2583, %v2587
          %v2589 = vrot.slane %v2424, 4
          %v2590 = vsel %vm2443, %v2585, %v2589
          %v2591 = vrot.slane %v2408, 4
          %v2592 = vsel %vm2443, %v2587, %v2591
          %v2593 = vrot.slane %v2425, 4
          %v2594 = vsel %vm2443, %v2589, %v2593
          %v2595 = vrot.slane %v2410, 4
          %v2596 = vsel %vm2443, %v2591, %v2595
          %v2597 = vrot.slane %v2426, 4
          %v2598 = vsel %vm2443, %v2593, %v2597
          %v2599 = vrot.slane %v2409, 4
          %v2600 = vsel %vm2443, %v2595, %v2599
          %v2618 = vsel %vm2443, %v1093, %v2444
          %v2619 = vsel %vm2443, %v1074, %v2445
          %v2620 = vsel %vm2443, %v1982, %v2539
          %v2621 = vsel %vm2443, %v1964, %v2540
          %v2622 = vld [vmem:[%s3] sm:$0xff]
          %v2623 = vld [vmem:[%s3 + $0x8] sm:$0xff]
          %v2624 = vld [vmem:[%s3 + $0x10] sm:$0xff]
          %v2625 = vld [vmem:[%s3 + $0x18] sm:$0xff]
          %v2626 = vld [vmem:[%s3 + $0x20] sm:$0xff]
          %v2627 = vld [vmem:[%s3 + $0x28] sm:$0xff]
          %v2628 = vld [vmem:[%s3 + $0x30] sm:$0xff]
          %v2629 = vld [vmem:[%s3 + $0x38] sm:$0xff]
          %v2630 = vld [vmem:[%s3 + $0x40] sm:$0xff]
          %v2631 = vld [vmem:[%s3 + $0x48] sm:$0xff]
          %v2632 = vld [vmem:[%s3 + $0x50] sm:$0xff]
          %v2633 = vld [vmem:[%s3 + $0x58] sm:$0xff]
          %v2634 = vld [vmem:[%s3 + $0x60] sm:$0xff]
          %v2635 = vld [vmem:[%s3 + $0x68] sm:$0xff]
          %v2636 = vld [vmem:[%s3 + $0x70] sm:$0xff]
          %v2637 = vld [vmem:[%s3 + $0x78] sm:$0xff]
          %v2638 = vld [vmem:[%s3 + $0x80] sm:$0xff]
          %v2639 = vld [vmem:[%s3 + $0x88] sm:$0xff]
          %v2640 = vld [vmem:[%s3 + $0x90] sm:$0xff]
          %v2641 = vld [vmem:[%s3 + $0x98] sm:$0xff]
          %v2642 = vld [vmem:[%s3 + $0xa0] sm:$0xff]
          %v2643 = vld [vmem:[%s3 + $0xa8] sm:$0xff]
          %v2644 = vld [vmem:[%s3 + $0xb0] sm:$0xff]
          %v2645 = vld [vmem:[%s3 + $0xb8] sm:$0xff]
          %v2646 = vld [vmem:[#allocation11] sm:$0x1]
          %v2648 = vlaneseq
          %v2649 = vshrl.u32 %v2648, 7
          %v2650 = vsub.s32 0, %v2649
          %v2651 = vrot.slane %v2646, %v2650
          %v2653 = vsel %vm1077, %v1047, 0
          %v2655 = vsel %vm1077, %v1049, 0
          %v2657 = vsel %vm1077, %v1051, 0
          %v2659 = vsel %vm1077, %v1053, 0
          %v2661 = vsel %vm1077, %v1055, 0
          %v2663 = vsel %vm1077, %v1057, 0
          %v2665 = vsel %vm1077, %v1059, 0
          %v2667 = vsel %vm1077, %v1061, 0
          %v2669 = vsel %vm1077, %v1063, 0
          %v2671 = vsel %vm1077, %v1065, 0
          %v2673 = vsel %vm1077, %v1067, 0
          %v2675 = vsel %vm1077, %v1069, 0
          %v2677 = vsel %vm1077, %v1071, 0
          %v2679 = vsel %vm1077, %v1073, 0
          %v2681 = vsel %vm1077, %v1075, 0
          %v2684 = vsel %vm1077, %v2619, 0
          %v2686 = vsel %vm1077, %v2449, 0
          %v2688 = vsel %vm1077, %v2453, 0
          %v2690 = vsel %vm1077, %v2457, 0
          %v2692 = vsel %vm1077, %v2461, 0
          %v2694 = vsel %vm1077, %v2465, 0
          %v2696 = vsel %vm1077, %v2469, 0
          %v2698 = vsel %vm1077, %v2473, 0
          %v2700 = vsel %vm1077, %v2477, 0
          %v2702 = vsel %vm1077, %v2481, 0
          %v2704 = vsel %vm1077, %v2485, 0
          %v2706 = vsel %vm1077, %v2489, 0
          %v2708 = vsel %vm1077, %v2493, 0
          %v2710 = vsel %vm1077, %v2497, 0
          %v2712 = vsel %vm1077, %v2501, 0
          %v2714 = vsel %vm1077, %v2505, 0
          %v2716 = vsel %vm1077, %v1937, 0
          %v2718 = vsel %vm1077, %v1939, 0
          %v2720 = vsel %vm1077, %v1941, 0
          %v2722 = vsel %vm1077, %v1943, 0
          %v2724 = vsel %vm1077, %v1945, 0
          %v2726 = vsel %vm1077, %v1947, 0
          %v2728 = vsel %vm1077, %v1949, 0
          %v2730 = vsel %vm1077, %v1951, 0
          %v2732 = vsel %vm1077, %v1953, 0
          %v2734 = vsel %vm1077, %v1955, 0
          %v2736 = vsel %vm1077, %v1957, 0
          %v2738 = vsel %vm1077, %v1959, 0
          %v2740 = vsel %vm1077, %v1961, 0
          %v2742 = vsel %vm1077, %v1963, 0
          %v2744 = vsel %vm1077, %v1965, 0
          %v2747 = vsel %vm1077, %v2621, 0
          %v2749 = vsel %vm1077, %v2544, 0
          %v2751 = vsel %vm1077, %v2548, 0
          %v2753 = vsel %vm1077, %v2552, 0
          %v2755 = vsel %vm1077, %v2556, 0
          %v2757 = vsel %vm1077, %v2560, 0
          %v2759 = vsel %vm1077, %v2564, 0
          %v2761 = vsel %vm1077, %v2568, 0
          %v2763 = vsel %vm1077, %v2572, 0
          %v2765 = vsel %vm1077, %v2576, 0
          %v2767 = vsel %vm1077, %v2580, 0
          %v2769 = vsel %vm1077, %v2584, 0
          %v2771 = vsel %vm1077, %v2588, 0
          %v2773 = vsel %vm1077, %v2592, 0
          %v2775 = vsel %vm1077, %v2596, 0
          %v2777 = vsel %vm1077, %v2600, 0
          %2779 = vmatprep.subr.mxu0 0.0
          %2780 = vmatpush1.msra.mxu0 %v2637
          %2781 = vmatprep.subr.mxu0 0.0
          %2782 = vmatpush1.msra.mxu0 %v2636
          %2783 = vmatprep.subr.mxu0 0.0
          %2784 = vmatpush1.msra.mxu0 %v2635
          %2785 = vmatprep.subr.mxu0 0.0
          %2786 = vmatpush1.msra.mxu0 %v2634
          %2787 = vmatprep.subr.mxu0 0.0
          %2788 = vmatpush1.msra.mxu0 %v2633
          %2789 = vmatprep.subr.mxu0 0.0
          %2790 = vmatpush1.msra.mxu0 %v2632
          %2791 = vmatprep.subr.mxu0 0.0
          %2792 = vmatpush1.msra.mxu0 %v2631
          %2793 = vmatprep.subr.mxu0 0.0
          %2794 = vmatpush1.msra.mxu0 %v2630
          %2795 = vmatprep.subr.mxu0 0.0
          %2796 = vmatpush1.msra.mxu0 %v2629
          %2797 = vmatprep.subr.mxu0 0.0
          %2798 = vmatpush1.msra.mxu0 %v2628
          %2799 = vmatprep.subr.mxu0 0.0
          %2800 = vmatpush1.msra.mxu0 %v2627
          %2801 = vmatprep.subr.mxu0 0.0
          %2802 = vmatpush1.msra.mxu0 %v2626
          %2803 = vmatprep.subr.mxu0 0.0
          %2804 = vmatpush1.msra.mxu0 %v2625
          %2805 = vmatprep.subr.mxu0 0.0
          %2806 = vmatpush1.msra.mxu0 %v2624
          %2807 = vmatprep.subr.mxu0 0.0
          %2808 = vmatpush1.msra.mxu0 %v2623
          %2809 = vmatprep.subr.mxu0 0.0
          %2810 = vmatpush1.msra.mxu0 %v2622
          %2811 = vmatprep.subr.mxu0 0.0
          %2812 = vmatpush2.msra.mxu0 0.0
          %2813 = vmatprep.subr.mxu0 0.0
          %2814 = vmatpush2.msra.mxu0 0.0
          %2815 = vmatprep.subr.mxu0 0.0
          %2816 = vmatpush2.msra.mxu0 0.0
          %2817 = vmatprep.subr.mxu0 0.0
          %2818 = vmatpush2.msra.mxu0 0.0
          %2819 = vmatprep.subr.mxu0 0.0
          %2820 = vmatpush2.msra.mxu0 0.0
          %2821 = vmatprep.subr.mxu0 0.0
          %2822 = vmatpush2.msra.mxu0 0.0
          %2823 = vmatprep.subr.mxu0 0.0
          %2824 = vmatpush2.msra.mxu0 0.0
          %2825 = vmatprep.subr.mxu0 0.0
          %2826 = vmatpush2.msra.mxu0 0.0
          %2827 = vmatprep.subr.mxu0 0.0
          %2828 = vmatpush2.msra.mxu0 %v2645
          %2829 = vmatprep.subr.mxu0 0.0
          %2830 = vmatpush2.msra.mxu0 %v2644
          %2831 = vmatprep.subr.mxu0 0.0
          %2832 = vmatpush2.msra.mxu0 %v2643
          %2833 = vmatprep.subr.mxu0 0.0
          %2834 = vmatpush2.msra.mxu0 %v2642
          %2835 = vmatprep.subr.mxu0 0.0
          %2836 = vmatpush2.msra.mxu0 %v2641
          %2837 = vmatprep.subr.mxu0 0.0
          %2838 = vmatpush2.msra.mxu0 %v2640
          %2839 = vmatprep.subr.mxu0 0.0
          %2840 = vmatpush2.msra.mxu0 %v2639
          %2841 = vmatprep.subr.mxu0 0.0
          %2842 = vmatpush2.msra.mxu0 %v2638
          %2843 = vmatprep.mubr.f32.mxu0 %v2653
          %2844 = vmatmul.mubr.f32.gmra.mxu0 %v1078
          %v2845 = vpop.f32.mrf.mxu0
          %v2846 = vadd.f32 %v2651, %v2845
          %v2847 = vpop.f32.mrf.mxu0
          %2848 = vmatprep.mubr.f32.mxu0 %v2655
          %2849 = vmatmul.mubr.f32.gmra.mxu0 %v1079
          %v2850 = vpop.f32.mrf.mxu0
          %v2851 = vadd.f32 %v2651, %v2850
          %v2852 = vpop.f32.mrf.mxu0
          %2853 = vmatprep.mubr.f32.mxu0 %v2657
          %2854 = vmatmul.mubr.f32.gmra.mxu0 %v1080
          %v2855 = vpop.f32.mrf.mxu0
          %v2856 = vadd.f32 %v2651, %v2855
          %v2857 = vpop.f32.mrf.mxu0
          %2858 = vmatprep.mubr.f32.mxu0 %v2659
          %2859 = vmatmul.mubr.f32.gmra.mxu0 %v1081
          %v2860 = vpop.f32.mrf.mxu0
          %v2861 = vadd.f32 %v2651, %v2860
          %v2862 = vpop.f32.mrf.mxu0
          %2863 = vmatprep.mubr.f32.mxu0 %v2661
          %2864 = vmatmul.mubr.f32.gmra.mxu0 %v1082
          %v2865 = vpop.f32.mrf.mxu0
          %v2866 = vadd.f32 %v2651, %v2865
          %v2867 = vpop.f32.mrf.mxu0
          %2868 = vmatprep.mubr.f32.mxu0 %v2663
          %2869 = vmatmul.mubr.f32.gmra.mxu0 %v1083
          %v2870 = vpop.f32.mrf.mxu0
          %v2871 = vadd.f32 %v2651, %v2870
          %v2872 = vpop.f32.mrf.mxu0
          %2873 = vmatprep.mubr.f32.mxu0 %v2665
          %2874 = vmatmul.mubr.f32.gmra.mxu0 %v1084
          %v2875 = vpop.f32.mrf.mxu0
          %v2876 = vadd.f32 %v2651, %v2875
          %v2877 = vpop.f32.mrf.mxu0
          %2878 = vmatprep.mubr.f32.mxu0 %v2667
          %2879 = vmatmul.mubr.f32.gmra.mxu0 %v1085
          %v2880 = vpop.f32.mrf.mxu0
          %v2881 = vadd.f32 %v2651, %v2880
          %v2882 = vpop.f32.mrf.mxu0
          %2883 = vmatprep.mubr.f32.mxu0 %v2669
          %2884 = vmatmul.mubr.f32.gmra.mxu0 %v1086
          %v2885 = vpop.f32.mrf.mxu0
          %v2886 = vadd.f32 %v2651, %v2885
          %v2887 = vpop.f32.mrf.mxu0
          %2888 = vmatprep.mubr.f32.mxu0 %v2671
          %2889 = vmatmul.mubr.f32.gmra.mxu0 %v1087
          %v2890 = vpop.f32.mrf.mxu0
          %v2891 = vadd.f32 %v2651, %v2890
          %v2892 = vpop.f32.mrf.mxu0
          %2893 = vmatprep.mubr.f32.mxu0 %v2673
          %2894 = vmatmul.mubr.f32.gmra.mxu0 %v1088
          %v2895 = vpop.f32.mrf.mxu0
          %v2896 = vadd.f32 %v2651, %v2895
          %v2897 = vpop.f32.mrf.mxu0
          %2898 = vmatprep.mubr.f32.mxu0 %v2675
          %2899 = vmatmul.mubr.f32.gmra.mxu0 %v1089
          %v2900 = vpop.f32.mrf.mxu0
          %v2901 = vadd.f32 %v2651, %v2900
          %v2902 = vpop.f32.mrf.mxu0
          %2903 = vmatprep.mubr.f32.mxu0 %v2677
          %2904 = vmatmul.mubr.f32.gmra.mxu0 %v1090
          %v2905 = vpop.f32.mrf.mxu0
          %v2906 = vadd.f32 %v2651, %v2905
          %v2907 = vpop.f32.mrf.mxu0
          %2908 = vmatprep.mubr.f32.mxu0 %v2679
          %2909 = vmatmul.mubr.f32.gmra.mxu0 %v1091
          %v2910 = vpop.f32.mrf.mxu0
          %v2911 = vadd.f32 %v2651, %v2910
          %v2912 = vpop.f32.mrf.mxu0
          %2913 = vmatprep.mubr.f32.mxu0 %v2681
          %2914 = vmatmul.mubr.f32.gmra.mxu0 %v1092
          %v2915 = vpop.f32.mrf.mxu0
          %v2916 = vadd.f32 %v2651, %v2915
          %v2917 = vpop.f32.mrf.mxu0
          %2918 = vmatprep.mubr.f32.mxu0 %v2684
          %2919 = vmatmul.mubr.f32.gmra.mxu0 %v2618
          %v2920 = vpop.f32.mrf.mxu0
          %v2921 = vadd.f32 %v2651, %v2920
          %v2922 = vpop.f32.mrf.mxu0
          %2923 = vmatprep.mubr.f32.mxu0 %v2686
          %2924 = vmatmul.mubr.f32.gmra.mxu0 %v2447
          %v2925 = vpop.f32.mrf.mxu0
          %v2926 = vadd.f32 %v2651, %v2925
          %v2927 = vpop.f32.mrf.mxu0
          %2928 = vmatprep.mubr.f32.mxu0 %v2688
          %2929 = vmatmul.mubr.f32.gmra.mxu0 %v2451
          %v2930 = vpop.f32.mrf.mxu0
          %v2931 = vadd.f32 %v2651, %v2930
          %v2932 = vpop.f32.mrf.mxu0
          %2933 = vmatprep.mubr.f32.mxu0 %v2690
          %2934 = vmatmul.mubr.f32.gmra.mxu0 %v2455
          %v2935 = vpop.f32.mrf.mxu0
          %v2936 = vadd.f32 %v2651, %v2935
          %v2937 = vpop.f32.mrf.mxu0
          %2938 = vmatprep.mubr.f32.mxu0 %v2692
          %2939 = vmatmul.mubr.f32.gmra.mxu0 %v2459
          %v2940 = vpop.f32.mrf.mxu0
          %v2941 = vadd.f32 %v2651, %v2940
          %v2942 = vpop.f32.mrf.mxu0
          %2943 = vmatprep.mubr.f32.mxu0 %v2694
          %2944 = vmatmul.mubr.f32.gmra.mxu0 %v2463
          %v2945 = vpop.f32.mrf.mxu0
          %v2946 = vadd.f32 %v2651, %v2945
          %v2947 = vpop.f32.mrf.mxu0
          %2948 = vmatprep.mubr.f32.mxu0 %v2696
          %2949 = vmatmul.mubr.f32.gmra.mxu0 %v2467
          %v2950 = vpop.f32.mrf.mxu0
          %v2951 = vadd.f32 %v2651, %v2950
          %v2952 = vpop.f32.mrf.mxu0
          %2953 = vmatprep.mubr.f32.mxu0 %v2698
          %2954 = vmatmul.mubr.f32.gmra.mxu0 %v2471
          %v2955 = vpop.f32.mrf.mxu0
          %v2956 = vadd.f32 %v2651, %v2955
          %v2957 = vpop.f32.mrf.mxu0
          %2958 = vmatprep.mubr.f32.mxu0 %v2700
          %2959 = vmatmul.mubr.f32.gmra.mxu0 %v2475
          %v2960 = vpop.f32.mrf.mxu0
          %v2961 = vadd.f32 %v2651, %v2960
          %v2962 = vpop.f32.mrf.mxu0
          %2963 = vmatprep.mubr.f32.mxu0 %v2702
          %2964 = vmatmul.mubr.f32.gmra.mxu0 %v2479
          %v2965 = vpop.f32.mrf.mxu0
          %v2966 = vadd.f32 %v2651, %v2965
          %v2967 = vpop.f32.mrf.mxu0
          %2968 = vmatprep.mubr.f32.mxu0 %v2704
          %2969 = vmatmul.mubr.f32.gmra.mxu0 %v2483
          %v2970 = vpop.f32.mrf.mxu0
          %v2971 = vadd.f32 %v2651, %v2970
          %v2972 = vpop.f32.mrf.mxu0
          %2973 = vmatprep.mubr.f32.mxu0 %v2706
          %2974 = vmatmul.mubr.f32.gmra.mxu0 %v2487
          %v2975 = vpop.f32.mrf.mxu0
          %v2976 = vadd.f32 %v2651, %v2975
          %v2977 = vpop.f32.mrf.mxu0
          %2978 = vmatprep.mubr.f32.mxu0 %v2708
          %2979 = vmatmul.mubr.f32.gmra.mxu0 %v2491
          %v2980 = vpop.f32.mrf.mxu0
          %v2981 = vadd.f32 %v2651, %v2980
          %v2982 = vpop.f32.mrf.mxu0
          %2983 = vmatprep.mubr.f32.mxu0 %v2710
          %2984 = vmatmul.mubr.f32.gmra.mxu0 %v2495
          %v2985 = vpop.f32.mrf.mxu0
          %v2986 = vadd.f32 %v2651, %v2985
          %v2987 = vpop.f32.mrf.mxu0
          %2988 = vmatprep.mubr.f32.mxu0 %v2712
          %2989 = vmatmul.mubr.f32.gmra.mxu0 %v2499
          %v2990 = vpop.f32.mrf.mxu0
          %v2991 = vadd.f32 %v2651, %v2990
          %v2992 = vpop.f32.mrf.mxu0
          %2993 = vmatprep.mubr.f32.mxu0 %v2714
          %2994 = vmatmul.mubr.f32.gmra.mxu0 %v2503
          %v2995 = vpop.f32.mrf.mxu0
          %v2996 = vadd.f32 %v2651, %v2995
          %v2997 = vpop.f32.mrf.mxu0
          %2998 = vmatprep.mubr.f32.mxu0 %v2716
          %2999 = vmatmul.mubr.f32.gmra.mxu0 %v1967
          %v3000 = vpop.f32.mrf.mxu0
          %v3001 = vadd.f32 %v2651, %v3000
          %v3002 = vpop.f32.mrf.mxu0
          %3003 = vmatprep.mubr.f32.mxu0 %v2718
          %3004 = vmatmul.mubr.f32.gmra.mxu0 %v1968
          %v3005 = vpop.f32.mrf.mxu0
          %v3006 = vadd.f32 %v2651, %v3005
          %v3007 = vpop.f32.mrf.mxu0
          %3008 = vmatprep.mubr.f32.mxu0 %v2720
          %3009 = vmatmul.mubr.f32.gmra.mxu0 %v1969
          %v3010 = vpop.f32.mrf.mxu0
          %v3011 = vadd.f32 %v2651, %v3010
          %v3012 = vpop.f32.mrf.mxu0
          %3013 = vmatprep.mubr.f32.mxu0 %v2722
          %3014 = vmatmul.mubr.f32.gmra.mxu0 %v1970
          %v3015 = vpop.f32.mrf.mxu0
          %v3016 = vadd.f32 %v2651, %v3015
          %v3017 = vpop.f32.mrf.mxu0
          %3018 = vmatprep.mubr.f32.mxu0 %v2724
          %3019 = vmatmul.mubr.f32.gmra.mxu0 %v1971
          %v3020 = vpop.f32.mrf.mxu0
          %v3021 = vadd.f32 %v2651, %v3020
          %v3022 = vpop.f32.mrf.mxu0
          %3023 = vmatprep.mubr.f32.mxu0 %v2726
          %3024 = vmatmul.mubr.f32.gmra.mxu0 %v1972
          %v3025 = vpop.f32.mrf.mxu0
          %v3026 = vadd.f32 %v2651, %v3025
          %v3027 = vpop.f32.mrf.mxu0
          %3028 = vmatprep.mubr.f32.mxu0 %v2728
          %3029 = vmatmul.mubr.f32.gmra.mxu0 %v1973
          %v3030 = vpop.f32.mrf.mxu0
          %v3031 = vadd.f32 %v2651, %v3030
          %v3032 = vpop.f32.mrf.mxu0
          %3033 = vmatprep.mubr.f32.mxu0 %v2730
          %3034 = vmatmul.mubr.f32.gmra.mxu0 %v1974
          %v3035 = vpop.f32.mrf.mxu0
          %v3036 = vadd.f32 %v2651, %v3035
          %v3037 = vpop.f32.mrf.mxu0
          %3038 = vmatprep.mubr.f32.mxu0 %v2732
          %3039 = vmatmul.mubr.f32.gmra.mxu0 %v1975
          %v3040 = vpop.f32.mrf.mxu0
          %v3041 = vadd.f32 %v2651, %v3040
          %v3042 = vpop.f32.mrf.mxu0
          %3043 = vmatprep.mubr.f32.mxu0 %v2734
          %3044 = vmatmul.mubr.f32.gmra.mxu0 %v1976
          %v3045 = vpop.f32.mrf.mxu0
          %v3046 = vadd.f32 %v2651, %v3045
          %v3047 = vpop.f32.mrf.mxu0
          %3048 = vmatprep.mubr.f32.mxu0 %v2736
          %3049 = vmatmul.mubr.f32.gmra.mxu0 %v1977
          %v3050 = vpop.f32.mrf.mxu0
          %v3051 = vadd.f32 %v2651, %v3050
          %v3052 = vpop.f32.mrf.mxu0
          %3053 = vmatprep.mubr.f32.mxu0 %v2738
          %3054 = vmatmul.mubr.f32.gmra.mxu0 %v1978
          %v3055 = vpop.f32.mrf.mxu0
          %v3056 = vadd.f32 %v2651, %v3055
          %v3057 = vpop.f32.mrf.mxu0
          %3058 = vmatprep.mubr.f32.mxu0 %v2740
          %3059 = vmatmul.mubr.f32.gmra.mxu0 %v1979
          %v3060 = vpop.f32.mrf.mxu0
          %v3061 = vadd.f32 %v2651, %v3060
          %v3062 = vpop.f32.mrf.mxu0
          %3063 = vmatprep.mubr.f32.mxu0 %v2742
          %3064 = vmatmul.mubr.f32.gmra.mxu0 %v1980
          %v3065 = vpop.f32.mrf.mxu0
          %v3066 = vadd.f32 %v2651, %v3065
          %v3067 = vpop.f32.mrf.mxu0
          %3068 = vmatprep.mubr.f32.mxu0 %v2744
          %3069 = vmatmul.mubr.f32.gmra.mxu0 %v1981
          %v3070 = vpop.f32.mrf.mxu0
          %v3071 = vadd.f32 %v2651, %v3070
          %v3072 = vpop.f32.mrf.mxu0
          %3073 = vmatprep.mubr.f32.mxu0 %v2747
          %3074 = vmatmul.mubr.f32.gmra.mxu0 %v2620
          %v3075 = vpop.f32.mrf.mxu0
          %v3076 = vadd.f32 %v2651, %v3075
          %v3077 = vpop.f32.mrf.mxu0
          %3078 = vmatprep.mubr.f32.mxu0 %v2749
          %3079 = vmatmul.mubr.f32.gmra.mxu0 %v2542
          %v3080 = vpop.f32.mrf.mxu0
          %v3081 = vadd.f32 %v2651, %v3080
          %v3082 = vpop.f32.mrf.mxu0
          %3083 = vmatprep.mubr.f32.mxu0 %v2751
          %3084 = vmatmul.mubr.f32.gmra.mxu0 %v2546
          %v3085 = vpop.f32.mrf.mxu0
          %v3086 = vadd.f32 %v2651, %v3085
          %v3087 = vpop.f32.mrf.mxu0
          %3088 = vmatprep.mubr.f32.mxu0 %v2753
          %3089 = vmatmul.mubr.f32.gmra.mxu0 %v2550
          %v3090 = vpop.f32.mrf.mxu0
          %v3091 = vadd.f32 %v2651, %v3090
          %v3092 = vpop.f32.mrf.mxu0
          %3093 = vmatprep.mubr.f32.mxu0 %v2755
          %3094 = vmatmul.mubr.f32.gmra.mxu0 %v2554
          %v3095 = vpop.f32.mrf.mxu0
          %v3096 = vadd.f32 %v2651, %v3095
          %v3097 = vpop.f32.mrf.mxu0
          %3098 = vmatprep.mubr.f32.mxu0 %v2757
          %3099 = vmatmul.mubr.f32.gmra.mxu0 %v2558
          %v3100 = vpop.f32.mrf.mxu0
          %v3101 = vadd.f32 %v2651, %v3100
          %v3102 = vpop.f32.mrf.mxu0
          %3103 = vmatprep.mubr.f32.mxu0 %v2759
          %3104 = vmatmul.mubr.f32.gmra.mxu0 %v2562
          %v3105 = vpop.f32.mrf.mxu0
          %v3106 = vadd.f32 %v2651, %v3105
          %v3107 = vpop.f32.mrf.mxu0
          %3108 = vmatprep.mubr.f32.mxu0 %v2761
          %3109 = vmatmul.mubr.f32.gmra.mxu0 %v2566
          %v3110 = vpop.f32.mrf.mxu0
          %v3111 = vadd.f32 %v2651, %v3110
          %v3112 = vpop.f32.mrf.mxu0
          %3113 = vmatprep.mubr.f32.mxu0 %v2763
          %3114 = vmatmul.mubr.f32.gmra.mxu0 %v2570
          %v3115 = vpop.f32.mrf.mxu0
          %v3116 = vadd.f32 %v2651, %v3115
          %v3117 = vpop.f32.mrf.mxu0
          %3118 = vmatprep.mubr.f32.mxu0 %v2765
          %3119 = vmatmul.mubr.f32.gmra.mxu0 %v2574
          %v3120 = vpop.f32.mrf.mxu0
          %v3121 = vadd.f32 %v2651, %v3120
          %v3122 = vpop.f32.mrf.mxu0
          %3123 = vmatprep.mubr.f32.mxu0 %v2767
          %3124 = vmatmul.mubr.f32.gmra.mxu0 %v2578
          %v3125 = vpop.f32.mrf.mxu0
          %v3126 = vadd.f32 %v2651, %v3125
          %v3127 = vpop.f32.mrf.mxu0
          %3128 = vmatprep.mubr.f32.mxu0 %v2769
          %3129 = vmatmul.mubr.f32.gmra.mxu0 %v2582
          %v3130 = vpop.f32.mrf.mxu0
          %v3131 = vadd.f32 %v2651, %v3130
          %v3132 = vpop.f32.mrf.mxu0
          %3133 = vmatprep.mubr.f32.mxu0 %v2771
          %3134 = vmatmul.mubr.f32.gmra.mxu0 %v2586
          %v3135 = vpop.f32.mrf.mxu0
          %v3136 = vadd.f32 %v2651, %v3135
          %v3137 = vpop.f32.mrf.mxu0
          %3138 = vmatprep.mubr.f32.mxu0 %v2773
          %3139 = vmatmul.mubr.f32.gmra.mxu0 %v2590
          %v3140 = vpop.f32.mrf.mxu0
          %v3141 = vadd.f32 %v2651, %v3140
          %v3142 = vpop.f32.mrf.mxu0
          %3143 = vmatprep.mubr.f32.mxu0 %v2775
          %3144 = vmatmul.mubr.f32.gmra.mxu0 %v2594
          %v3145 = vpop.f32.mrf.mxu0
          %v3146 = vadd.f32 %v2651, %v3145
          %v3147 = vpop.f32.mrf.mxu0
          %3148 = vmatprep.mubr.f32.mxu0 %v2777
          %3149 = vmatmul.mubr.f32.gmra.mxu0 %v2598
          %v3150 = vpop.f32.mrf.mxu0
          %v3151 = vadd.f32 %v2651, %v3150
          %v3152 = vpop.f32.mrf.mxu0
          %3153 = vdwg.mxu0
          %v3154 = vmax.f32 %v2846, 0.0
          %v3155 = vmax.f32 %v2851, 0.0
          %v3156 = vmax.f32 %v2856, 0.0
          %v3157 = vmax.f32 %v2861, 0.0
          %v3158 = vmax.f32 %v2866, 0.0
          %v3159 = vmax.f32 %v2871, 0.0
          %v3160 = vmax.f32 %v2876, 0.0
          %v3161 = vmax.f32 %v2881, 0.0
          %v3162 = vmax.f32 %v2886, 0.0
          %v3163 = vmax.f32 %v2891, 0.0
          %v3164 = vmax.f32 %v2896, 0.0
          %v3165 = vmax.f32 %v2901, 0.0
          %v3166 = vmax.f32 %v2906, 0.0
          %v3167 = vmax.f32 %v2911, 0.0
          %v3168 = vmax.f32 %v2916, 0.0
          %v3169 = vmax.f32 %v2921, 0.0
          %v3170 = vmax.f32 %v2926, 0.0
          %v3171 = vmax.f32 %v2931, 0.0
          %v3172 = vmax.f32 %v2936, 0.0
          %v3173 = vmax.f32 %v2941, 0.0
          %v3174 = vmax.f32 %v2946, 0.0
          %v3175 = vmax.f32 %v2951, 0.0
          %v3176 = vmax.f32 %v2956, 0.0
          %v3177 = vmax.f32 %v2961, 0.0
          %v3178 = vmax.f32 %v2966, 0.0
          %v3179 = vmax.f32 %v2971, 0.0
          %v3180 = vmax.f32 %v2976, 0.0
          %v3181 = vmax.f32 %v2981, 0.0
          %v3182 = vmax.f32 %v2986, 0.0
          %v3183 = vmax.f32 %v2991, 0.0
          %v3184 = vmax.f32 %v2996, 0.0
          %v3185 = vmax.f32 %v3001, 0.0
          %v3186 = vmax.f32 %v3006, 0.0
          %v3187 = vmax.f32 %v3011, 0.0
          %v3188 = vmax.f32 %v3016, 0.0
          %v3189 = vmax.f32 %v3021, 0.0
          %v3190 = vmax.f32 %v3026, 0.0
          %v3191 = vmax.f32 %v3031, 0.0
          %v3192 = vmax.f32 %v3036, 0.0
          %v3193 = vmax.f32 %v3041, 0.0
          %v3194 = vmax.f32 %v3046, 0.0
          %v3195 = vmax.f32 %v3051, 0.0
          %v3196 = vmax.f32 %v3056, 0.0
          %v3197 = vmax.f32 %v3061, 0.0
          %v3198 = vmax.f32 %v3066, 0.0
          %v3199 = vmax.f32 %v3071, 0.0
          %v3200 = vmax.f32 %v3076, 0.0
          %v3201 = vmax.f32 %v3081, 0.0
          %v3202 = vmax.f32 %v3086, 0.0
          %v3203 = vmax.f32 %v3091, 0.0
          %v3204 = vmax.f32 %v3096, 0.0
          %v3205 = vmax.f32 %v3101, 0.0
          %v3206 = vmax.f32 %v3106, 0.0
          %v3207 = vmax.f32 %v3111, 0.0
          %v3208 = vmax.f32 %v3116, 0.0
          %v3209 = vmax.f32 %v3121, 0.0
          %v3210 = vmax.f32 %v3126, 0.0
          %v3211 = vmax.f32 %v3131, 0.0
          %v3212 = vmax.f32 %v3136, 0.0
          %v3213 = vmax.f32 %v3141, 0.0
          %v3214 = vmax.f32 %v3146, 0.0
          %v3215 = vmax.f32 %v3151, 0.0
          %3216 = vst.msk [vmem:[#allocation2] sm:$0xff] %vm1077, %v3154
          %3217 = vst.msk [vmem:[#allocation2 + $0x8] sm:$0xff] %vm1077, %v3155
          %3218 = vst.msk [vmem:[#allocation2 + $0x10] sm:$0xff] %vm1077, %v3156
          %3219 = vst.msk [vmem:[#allocation2 + $0x18] sm:$0xff] %vm1077, %v3157
          %3220 = vst.msk [vmem:[#allocation2 + $0x20] sm:$0xff] %vm1077, %v3158
          %3221 = vst.msk [vmem:[#allocation2 + $0x28] sm:$0xff] %vm1077, %v3159
          %3222 = vst.msk [vmem:[#allocation2 + $0x30] sm:$0xff] %vm1077, %v3160
          %3223 = vst.msk [vmem:[#allocation2 + $0x38] sm:$0xff] %vm1077, %v3161
          %3224 = vst.msk [vmem:[#allocation2 + $0x40] sm:$0xff] %vm1077, %v3162
          %3225 = vst.msk [vmem:[#allocation2 + $0x48] sm:$0xff] %vm1077, %v3163
          %3226 = vst.msk [vmem:[#allocation2 + $0x50] sm:$0xff] %vm1077, %v3164
          %3227 = vst.msk [vmem:[#allocation2 + $0x58] sm:$0xff] %vm1077, %v3165
          %3228 = vst.msk [vmem:[#allocation2 + $0x60] sm:$0xff] %vm1077, %v3166
          %3229 = vst.msk [vmem:[#allocation2 + $0x68] sm:$0xff] %vm1077, %v3167
          %3230 = vst.msk [vmem:[#allocation2 + $0x70] sm:$0xff] %vm1077, %v3168
          %3231 = vst.msk [vmem:[#allocation2 + $0x78] sm:$0xff] %vm1077, %v3169
          %3232 = vst.msk [vmem:[#allocation2 + $0x80] sm:$0xff] %vm1077, %v3170
          %3233 = vst.msk [vmem:[#allocation2 + $0x88] sm:$0xff] %vm1077, %v3171
          %3234 = vst.msk [vmem:[#allocation2 + $0x90] sm:$0xff] %vm1077, %v3172
          %3235 = vst.msk [vmem:[#allocation2 + $0x98] sm:$0xff] %vm1077, %v3173
          %3236 = vst.msk [vmem:[#allocation2 + $0xa0] sm:$0xff] %vm1077, %v3174
          %3237 = vst.msk [vmem:[#allocation2 + $0xa8] sm:$0xff] %vm1077, %v3175
          %3238 = vst.msk [vmem:[#allocation2 + $0xb0] sm:$0xff] %vm1077, %v3176
          %3239 = vst.msk [vmem:[#allocation2 + $0xb8] sm:$0xff] %vm1077, %v3177
          %3240 = vst.msk [vmem:[#allocation2 + $0xc0] sm:$0xff] %vm1077, %v3178
          %3241 = vst.msk [vmem:[#allocation2 + $0xc8] sm:$0xff] %vm1077, %v3179
          %3242 = vst.msk [vmem:[#allocation2 + $0xd0] sm:$0xff] %vm1077, %v3180
          %3243 = vst.msk [vmem:[#allocation2 + $0xd8] sm:$0xff] %vm1077, %v3181
          %3244 = vst.msk [vmem:[#allocation2 + $0xe0] sm:$0xff] %vm1077, %v3182
          %3245 = vst.msk [vmem:[#allocation2 + $0xe8] sm:$0xff] %vm1077, %v3183
          %3246 = vst.msk [vmem:[#allocation2 + $0xf0] sm:$0xff] %vm1077, %v3184
          %3247 = vst.msk [vmem:[#allocation2 + $0xf8] sm:$0xff] %vm1077, %v3185
          %3248 = vst.msk [vmem:[#allocation2 + $0x100] sm:$0xff] %vm1077, %v3186
          %3249 = vst.msk [vmem:[#allocation2 + $0x108] sm:$0xff] %vm1077, %v3187
          %3250 = vst.msk [vmem:[#allocation2 + $0x110] sm:$0xff] %vm1077, %v3188
          %3251 = vst.msk [vmem:[#allocation2 + $0x118] sm:$0xff] %vm1077, %v3189
          %3252 = vst.msk [vmem:[#allocation2 + $0x120] sm:$0xff] %vm1077, %v3190
          %3253 = vst.msk [vmem:[#allocation2 + $0x128] sm:$0xff] %vm1077, %v3191
          %3254 = vst.msk [vmem:[#allocation2 + $0x130] sm:$0xff] %vm1077, %v3192
          %3255 = vst.msk [vmem:[#allocation2 + $0x138] sm:$0xff] %vm1077, %v3193
          %3256 = vst.msk [vmem:[#allocation2 + $0x140] sm:$0xff] %vm1077, %v3194
          %3257 = vst.msk [vmem:[#allocation2 + $0x148] sm:$0xff] %vm1077, %v3195
          %3258 = vst.msk [vmem:[#allocation2 + $0x150] sm:$0xff] %vm1077, %v3196
          %3259 = vst.msk [vmem:[#allocation2 + $0x158] sm:$0xff] %vm1077, %v3197
          %3260 = vst.msk [vmem:[#allocation2 + $0x160] sm:$0xff] %vm1077, %v3198
          %3261 = vst.msk [vmem:[#allocation2 + $0x168] sm:$0xff] %vm1077, %v3199
          %3262 = vst.msk [vmem:[#allocation2 + $0x170] sm:$0xff] %vm1077, %v3200
          %3263 = vst.msk [vmem:[#allocation2 + $0x178] sm:$0xff] %vm1077, %v3201
          %3264 = vst.msk [vmem:[#allocation2 + $0x180] sm:$0xff] %vm1077, %v3202
          %3265 = vst.msk [vmem:[#allocation2 + $0x188] sm:$0xff] %vm1077, %v3203
          %3266 = vst.msk [vmem:[#allocation2 + $0x190] sm:$0xff] %vm1077, %v3204
          %3267 = vst.msk [vmem:[#allocation2 + $0x198] sm:$0xff] %vm1077, %v3205
          %3268 = vst.msk [vmem:[#allocation2 + $0x1a0] sm:$0xff] %vm1077, %v3206
          %3269 = vst.msk [vmem:[#allocation2 + $0x1a8] sm:$0xff] %vm1077, %v3207
          %3270 = vst.msk [vmem:[#allocation2 + $0x1b0] sm:$0xff] %vm1077, %v3208
          %3271 = vst.msk [vmem:[#allocation2 + $0x1b8] sm:$0xff] %vm1077, %v3209
          %3272 = vst.msk [vmem:[#allocation2 + $0x1c0] sm:$0xff] %vm1077, %v3210
          %3273 = vst.msk [vmem:[#allocation2 + $0x1c8] sm:$0xff] %vm1077, %v3211
          %3274 = vst.msk [vmem:[#allocation2 + $0x1d0] sm:$0xff] %vm1077, %v3212
          %3275 = vst.msk [vmem:[#allocation2 + $0x1d8] sm:$0xff] %vm1077, %v3213
          %3276 = vst.msk [vmem:[#allocation2 + $0x1e0] sm:$0xff] %vm1077, %v3214
          %3277 = vst.msk [vmem:[#allocation2 + $0x1e8] sm:$0xff] %vm1077, %v3215
          %v3278 = vld [vmem:[#allocation2] ss:$4 sm:$0xff]
          %s3279 = scalar_lea.vmem [#allocation2], 32
          %v3280 = vld [vmem:[%s3279] ss:$4 sm:$0xff]
          %s3281 = scalar_lea.vmem [#allocation2], 64
          %v3282 = vld [vmem:[%s3281] ss:$4 sm:$0xff]
          %s3283 = scalar_lea.vmem [#allocation2], 96
          %v3284 = vld [vmem:[%s3283] ss:$4 sm:$0xff]
          %s3285 = scalar_lea.vmem [#allocation2], 128
          %v3286 = vld [vmem:[%s3285] ss:$4 sm:$0xff]
          %s3287 = scalar_lea.vmem [#allocation2], 160
          %v3288 = vld [vmem:[%s3287] ss:$4 sm:$0xff]
          %s3289 = scalar_lea.vmem [#allocation2], 192
          %v3290 = vld [vmem:[%s3289] ss:$4 sm:$0xff]
          %s3291 = scalar_lea.vmem [#allocation2], 224
          %v3292 = vld [vmem:[%s3291] ss:$4 sm:$0xff]
          %s3293 = scalar_lea.vmem [#allocation2], 256
          %v3294 = vld [vmem:[%s3293] ss:$4 sm:$0xff]
          %s3295 = scalar_lea.vmem [#allocation2], 288
          %v3296 = vld [vmem:[%s3295] ss:$4 sm:$0xff]
          %s3297 = scalar_lea.vmem [#allocation2], 320
          %v3298 = vld [vmem:[%s3297] ss:$4 sm:$0xff]
          %s3299 = scalar_lea.vmem [#allocation2], 352
          %v3300 = vld [vmem:[%s3299] ss:$4 sm:$0xff]
          %s3301 = scalar_lea.vmem [#allocation2], 384
          %v3302 = vld [vmem:[%s3301] ss:$4 sm:$0xff]
          %s3303 = scalar_lea.vmem [#allocation2], 416
          %v3304 = vld [vmem:[%s3303] ss:$4 sm:$0xff]
          %s3305 = scalar_lea.vmem [#allocation2], 448
          %v3306 = vld [vmem:[%s3305] ss:$4 sm:$0xff]
          %s3307 = scalar_lea.vmem [#allocation2], 480
          %v3308 = vld [vmem:[%s3307] ss:$4 sm:$0xf]
          %s3309 = scalar_lea.vmem [#allocation2], 1
          %v3310 = vld [vmem:[%s3309] ss:$4 sm:$0xff]
          %s3311 = scalar_lea.vmem [#allocation2], 33
          %v3312 = vld [vmem:[%s3311] ss:$4 sm:$0xff]
          %s3313 = scalar_lea.vmem [#allocation2], 65
          %v3314 = vld [vmem:[%s3313] ss:$4 sm:$0xff]
          %s3315 = scalar_lea.vmem [#allocation2], 97
          %v3316 = vld [vmem:[%s3315] ss:$4 sm:$0xff]
          %s3317 = scalar_lea.vmem [#allocation2], 129
          %v3318 = vld [vmem:[%s3317] ss:$4 sm:$0xff]
          %s3319 = scalar_lea.vmem [#allocation2], 161
          %v3320 = vld [vmem:[%s3319] ss:$4 sm:$0xff]
          %s3321 = scalar_lea.vmem [#allocation2], 193
          %v3322 = vld [vmem:[%s3321] ss:$4 sm:$0xff]
          %s3323 = scalar_lea.vmem [#allocation2], 225
          %v3324 = vld [vmem:[%s3323] ss:$4 sm:$0xff]
          %s3325 = scalar_lea.vmem [#allocation2], 257
          %v3326 = vld [vmem:[%s3325] ss:$4 sm:$0xff]
          %s3327 = scalar_lea.vmem [#allocation2], 289
          %v3328 = vld [vmem:[%s3327] ss:$4 sm:$0xff]
          %s3329 = scalar_lea.vmem [#allocation2], 321
          %v3330 = vld [vmem:[%s3329] ss:$4 sm:$0xff]
          %s3331 = scalar_lea.vmem [#allocation2], 353
          %v3332 = vld [vmem:[%s3331] ss:$4 sm:$0xff]
          %s3333 = scalar_lea.vmem [#allocation2], 385
          %v3334 = vld [vmem:[%s3333] ss:$4 sm:$0xff]
          %s3335 = scalar_lea.vmem [#allocation2], 417
          %v3336 = vld [vmem:[%s3335] ss:$4 sm:$0xff]
          %s3337 = scalar_lea.vmem [#allocation2], 449
          %v3338 = vld [vmem:[%s3337] ss:$4 sm:$0xff]
          %s3339 = scalar_lea.vmem [#allocation2], 481
          %v3340 = vld [vmem:[%s3339] ss:$4 sm:$0xf]
          %s3341 = scalar_lea.vmem [#allocation2], 2
          %v3342 = vld [vmem:[%s3341] ss:$4 sm:$0xff]
          %s3343 = scalar_lea.vmem [#allocation2], 34
          %v3344 = vld [vmem:[%s3343] ss:$4 sm:$0xff]
          %s3345 = scalar_lea.vmem [#allocation2], 66
          %v3346 = vld [vmem:[%s3345] ss:$4 sm:$0xff]
          %s3347 = scalar_lea.vmem [#allocation2], 98
          %v3348 = vld [vmem:[%s3347] ss:$4 sm:$0xff]
          %s3349 = scalar_lea.vmem [#allocation2], 130
          %v3350 = vld [vmem:[%s3349] ss:$4 sm:$0xff]
          %s3351 = scalar_lea.vmem [#allocation2], 162
          %v3352 = vld [vmem:[%s3351] ss:$4 sm:$0xff]
          %s3353 = scalar_lea.vmem [#allocation2], 194
          %v3354 = vld [vmem:[%s3353] ss:$4 sm:$0xff]
          %s3355 = scalar_lea.vmem [#allocation2], 226
          %v3356 = vld [vmem:[%s3355] ss:$4 sm:$0xff]
          %s3357 = scalar_lea.vmem [#allocation2], 258
          %v3358 = vld [vmem:[%s3357] ss:$4 sm:$0xff]
          %s3359 = scalar_lea.vmem [#allocation2], 290
          %v3360 = vld [vmem:[%s3359] ss:$4 sm:$0xff]
          %s3361 = scalar_lea.vmem [#allocation2], 322
          %v3362 = vld [vmem:[%s3361] ss:$4 sm:$0xff]
          %s3363 = scalar_lea.vmem [#allocation2], 354
          %v3364 = vld [vmem:[%s3363] ss:$4 sm:$0xff]
          %s3365 = scalar_lea.vmem [#allocation2], 386
          %v3366 = vld [vmem:[%s3365] ss:$4 sm:$0xff]
          %s3367 = scalar_lea.vmem [#allocation2], 418
          %v3368 = vld [vmem:[%s3367] ss:$4 sm:$0xff]
          %s3369 = scalar_lea.vmem [#allocation2], 450
          %v3370 = vld [vmem:[%s3369] ss:$4 sm:$0xff]
          %s3371 = scalar_lea.vmem [#allocation2], 482
          %v3372 = vld [vmem:[%s3371] ss:$4 sm:$0xf]
          %s3373 = scalar_lea.vmem [#allocation2], 3
          %v3374 = vld [vmem:[%s3373] ss:$4 sm:$0xff]
          %s3375 = scalar_lea.vmem [#allocation2], 35
          %v3376 = vld [vmem:[%s3375] ss:$4 sm:$0xff]
          %s3377 = scalar_lea.vmem [#allocation2], 67
          %v3378 = vld [vmem:[%s3377] ss:$4 sm:$0xff]
          %s3379 = scalar_lea.vmem [#allocation2], 99
          %v3380 = vld [vmem:[%s3379] ss:$4 sm:$0xff]
          %s3381 = scalar_lea.vmem [#allocation2], 131
          %v3382 = vld [vmem:[%s3381] ss:$4 sm:$0xff]
          %s3383 = scalar_lea.vmem [#allocation2], 163
          %v3384 = vld [vmem:[%s3383] ss:$4 sm:$0xff]
          %s3385 = scalar_lea.vmem [#allocation2], 195
          %v3386 = vld [vmem:[%s3385] ss:$4 sm:$0xff]
          %s3387 = scalar_lea.vmem [#allocation2], 227
          %v3388 = vld [vmem:[%s3387] ss:$4 sm:$0xff]
          %s3389 = scalar_lea.vmem [#allocation2], 259
          %v3390 = vld [vmem:[%s3389] ss:$4 sm:$0xff]
          %s3391 = scalar_lea.vmem [#allocation2], 291
          %v3392 = vld [vmem:[%s3391] ss:$4 sm:$0xff]
          %s3393 = scalar_lea.vmem [#allocation2], 323
          %v3394 = vld [vmem:[%s3393] ss:$4 sm:$0xff]
          %s3395 = scalar_lea.vmem [#allocation2], 355
          %v3396 = vld [vmem:[%s3395] ss:$4 sm:$0xff]
          %s3397 = scalar_lea.vmem [#allocation2], 387
          %v3398 = vld [vmem:[%s3397] ss:$4 sm:$0xff]
          %s3399 = scalar_lea.vmem [#allocation2], 419
          %v3400 = vld [vmem:[%s3399] ss:$4 sm:$0xff]
          %s3401 = scalar_lea.vmem [#allocation2], 451
          %v3402 = vld [vmem:[%s3401] ss:$4 sm:$0xff]
          %s3403 = scalar_lea.vmem [#allocation2], 483
          %v3404 = vld [vmem:[%s3403] ss:$4 sm:$0xf]
          %v3405 = vmax.f32 %v3278, %v3310
          %v3406 = vmax.f32 %v3280, %v3312
          %v3407 = vmax.f32 %v3282, %v3314
          %v3408 = vmax.f32 %v3284, %v3316
          %v3409 = vmax.f32 %v3286, %v3318
          %v3410 = vmax.f32 %v3288, %v3320
          %v3411 = vmax.f32 %v3290, %v3322
          %v3412 = vmax.f32 %v3292, %v3324
          %v3413 = vmax.f32 %v3294, %v3326
          %v3414 = vmax.f32 %v3296, %v3328
          %v3415 = vmax.f32 %v3298, %v3330
          %v3416 = vmax.f32 %v3300, %v3332
          %v3417 = vmax.f32 %v3302, %v3334
          %v3418 = vmax.f32 %v3304, %v3336
          %v3419 = vmax.f32 %v3306, %v3338
          %v3420 = vmax.f32 %v3308, %v3340
          %v3421 = vmax.f32 %v3342, %v3374
          %v3422 = vmax.f32 %v3344, %v3376
          %v3423 = vmax.f32 %v3346, %v3378
          %v3424 = vmax.f32 %v3348, %v3380
          %v3425 = vmax.f32 %v3350, %v3382
          %v3426 = vmax.f32 %v3352, %v3384
          %v3427 = vmax.f32 %v3354, %v3386
          %v3428 = vmax.f32 %v3356, %v3388
          %v3429 = vmax.f32 %v3358, %v3390
          %v3430 = vmax.f32 %v3360, %v3392
          %v3431 = vmax.f32 %v3362, %v3394
          %v3432 = vmax.f32 %v3364, %v3396
          %v3433 = vmax.f32 %v3366, %v3398
          %v3434 = vmax.f32 %v3368, %v3400
          %v3435 = vmax.f32 %v3370, %v3402
          %v3436 = vmax.f32 %v3372, %v3404
          %3453 = vrot.lane.b32.xlu0 %v3421, 64
          %v3454 = vpop.permute.xlu0 %3453
          %3455 = vrot.lane.b32.xlu0 %v3422, 64
          %v3456 = vpop.permute.xlu0 %3455
          %3457 = vrot.lane.b32.xlu0 %v3423, 64
          %v3458 = vpop.permute.xlu0 %3457
          %3459 = vrot.lane.b32.xlu0 %v3424, 64
          %v3460 = vpop.permute.xlu0 %3459
          %3461 = vrot.lane.b32.xlu0 %v3425, 64
          %v3462 = vpop.permute.xlu0 %3461
          %3463 = vrot.lane.b32.xlu0 %v3426, 64
          %v3464 = vpop.permute.xlu0 %3463
          %3465 = vrot.lane.b32.xlu0 %v3427, 64
          %v3466 = vpop.permute.xlu0 %3465
          %3467 = vrot.lane.b32.xlu0 %v3428, 64
          %v3468 = vpop.permute.xlu0 %3467
          %3469 = vrot.lane.b32.xlu0 %v3429, 64
          %v3470 = vpop.permute.xlu0 %3469
          %3471 = vrot.lane.b32.xlu0 %v3430, 64
          %v3472 = vpop.permute.xlu0 %3471
          %3473 = vrot.lane.b32.xlu0 %v3431, 64
          %v3474 = vpop.permute.xlu0 %3473
          %3475 = vrot.lane.b32.xlu0 %v3432, 64
          %v3476 = vpop.permute.xlu0 %3475
          %3477 = vrot.lane.b32.xlu0 %v3433, 64
          %v3478 = vpop.permute.xlu0 %3477
          %3479 = vrot.lane.b32.xlu0 %v3434, 64
          %v3480 = vpop.permute.xlu0 %3479
          %3481 = vrot.lane.b32.xlu0 %v3435, 64
          %v3482 = vpop.permute.xlu0 %3481
          %3483 = vrot.lane.b32.xlu0 %v3436, 64
          %v3484 = vpop.permute.xlu0 %3483
          %v3501 = vsel %vm1077, %v3405, %v3454
          %v3502 = vsel %vm1077, %v3406, %v3456
          %v3503 = vsel %vm1077, %v3407, %v3458
          %v3504 = vsel %vm1077, %v3408, %v3460
          %v3505 = vsel %vm1077, %v3409, %v3462
          %v3506 = vsel %vm1077, %v3410, %v3464
          %v3507 = vsel %vm1077, %v3411, %v3466
          %v3508 = vsel %vm1077, %v3412, %v3468
          %v3509 = vsel %vm1077, %v3413, %v3470
          %v3510 = vsel %vm1077, %v3414, %v3472
          %v3511 = vsel %vm1077, %v3415, %v3474
          %v3512 = vsel %vm1077, %v3416, %v3476
          %v3513 = vsel %vm1077, %v3417, %v3478
          %v3514 = vsel %vm1077, %v3418, %v3480
          %v3515 = vsel %vm1077, %v3419, %v3482
          %v3516 = vsel %vm1077, %v3420, %v3484
          %3517 = vst [vmem:[#allocation3] sm:$0xff] %v3501
          %3518 = vst [vmem:[#allocation3 + $0x8] sm:$0xff] %v3502
          %3519 = vst [vmem:[#allocation3 + $0x10] sm:$0xff] %v3503
          %3520 = vst [vmem:[#allocation3 + $0x18] sm:$0xff] %v3504
          %3521 = vst [vmem:[#allocation3 + $0x20] sm:$0xff] %v3505
          %3522 = vst [vmem:[#allocation3 + $0x28] sm:$0xff] %v3506
          %3523 = vst [vmem:[#allocation3 + $0x30] sm:$0xff] %v3507
          %3524 = vst [vmem:[#allocation3 + $0x38] sm:$0xff] %v3508
          %3525 = vst [vmem:[#allocation3 + $0x40] sm:$0xff] %v3509
          %3526 = vst [vmem:[#allocation3 + $0x48] sm:$0xff] %v3510
          %3527 = vst [vmem:[#allocation3 + $0x50] sm:$0xff] %v3511
          %3528 = vst [vmem:[#allocation3 + $0x58] sm:$0xff] %v3512
          %3529 = vst [vmem:[#allocation3 + $0x60] sm:$0xff] %v3513
          %3530 = vst [vmem:[#allocation3 + $0x68] sm:$0xff] %v3514
          %3531 = vst [vmem:[#allocation3 + $0x70] sm:$0xff] %v3515
          %3532 = vst [vmem:[#allocation3 + $0x78] sm:$0xf] %v3516
          %v3533 = vld [vmem:[#allocation3] ss:$31 sm:$0xf]
          %v3534 = vpack.c.bf16 %v3533, %v3533
          %3535 = vst [vmem:[#allocation4] sm:$0x3] %v3534
          %s3536 = scalar_lea.vmem [#allocation3], 1
          %v3537 = vld [vmem:[%s3536] ss:$31 sm:$0xf]
          %v3538 = vpack.c.bf16 %v3537, %v3537
          %3539 = vst [vmem:[#allocation4 + $0x2] sm:$0x3] %v3538
          %s3540 = scalar_lea.vmem [#allocation3], 2
          %v3541 = vld [vmem:[%s3540] ss:$31 sm:$0xf]
          %v3542 = vpack.c.bf16 %v3541, %v3541
          %3543 = vst [vmem:[#allocation4 + $0x4] sm:$0x3] %v3542
          %s3544 = scalar_lea.vmem [#allocation3], 3
          %v3545 = vld [vmem:[%s3544] ss:$31 sm:$0xf]
          %v3546 = vpack.c.bf16 %v3545, %v3545
          %3547 = vst [vmem:[#allocation4 + $0x6] sm:$0x3] %v3546
          %s3548 = scalar_lea.vmem [#allocation3], 4
          %v3549 = vld [vmem:[%s3548] ss:$31 sm:$0xf]
          %v3550 = vpack.c.bf16 %v3549, %v3549
          %3551 = vst [vmem:[#allocation4 + $0x8] sm:$0x3] %v3550
          %s3552 = scalar_lea.vmem [#allocation3], 5
          %v3553 = vld [vmem:[%s3552] ss:$31 sm:$0xf]
          %v3554 = vpack.c.bf16 %v3553, %v3553
          %3555 = vst [vmem:[#allocation4 + $0xa] sm:$0x3] %v3554
          %s3556 = scalar_lea.vmem [#allocation3], 6
          %v3557 = vld [vmem:[%s3556] ss:$31 sm:$0xf]
          %v3558 = vpack.c.bf16 %v3557, %v3557
          %3559 = vst [vmem:[#allocation4 + $0xc] sm:$0x3] %v3558
          %s3560 = scalar_lea.vmem [#allocation3], 7
          %v3561 = vld [vmem:[%s3560] ss:$31 sm:$0xf]
          %v3562 = vpack.c.bf16 %v3561, %v3561
          %3563 = vst [vmem:[#allocation4 + $0xe] sm:$0x3] %v3562
          %s3564 = scalar_lea.vmem [#allocation3], 8
          %v3565 = vld [vmem:[%s3564] ss:$31 sm:$0xf]
          %v3566 = vpack.c.bf16 %v3565, %v3565
          %3567 = vst [vmem:[#allocation4 + $0x10] sm:$0x3] %v3566
          %s3568 = scalar_lea.vmem [#allocation3], 9
          %v3569 = vld [vmem:[%s3568] ss:$31 sm:$0xf]
          %v3570 = vpack.c.bf16 %v3569, %v3569
          %3571 = vst [vmem:[#allocation4 + $0x12] sm:$0x3] %v3570
          %s3572 = scalar_lea.vmem [#allocation3], 10
          %v3573 = vld [vmem:[%s3572] ss:$31 sm:$0xf]
          %v3574 = vpack.c.bf16 %v3573, %v3573
          %3575 = vst [vmem:[#allocation4 + $0x14] sm:$0x3] %v3574
          %s3576 = scalar_lea.vmem [#allocation3], 11
          %v3577 = vld [vmem:[%s3576] ss:$31 sm:$0xf]
          %v3578 = vpack.c.bf16 %v3577, %v3577
          %3579 = vst [vmem:[#allocation4 + $0x16] sm:$0x3] %v3578
          %s3580 = scalar_lea.vmem [#allocation3], 12
          %v3581 = vld [vmem:[%s3580] ss:$31 sm:$0xf]
          %v3582 = vpack.c.bf16 %v3581, %v3581
          %3583 = vst [vmem:[#allocation4 + $0x18] sm:$0x3] %v3582
          %s3584 = scalar_lea.vmem [#allocation3], 13
          %v3585 = vld [vmem:[%s3584] ss:$31 sm:$0xf]
          %v3586 = vpack.c.bf16 %v3585, %v3585
          %3587 = vst [vmem:[#allocation4 + $0x1a] sm:$0x3] %v3586
          %s3588 = scalar_lea.vmem [#allocation3], 14
          %v3589 = vld [vmem:[%s3588] ss:$31 sm:$0xf]
          %v3590 = vpack.c.bf16 %v3589, %v3589
          %3591 = vst [vmem:[#allocation4 + $0x1c] sm:$0x3] %v3590
          %s3592 = scalar_lea.vmem [#allocation3], 15
          %v3593 = vld [vmem:[%s3592] ss:$31 sm:$0xf]
          %v3594 = vpack.c.bf16 %v3593, %v3593
          %3595 = vst [vmem:[#allocation4 + $0x1e] sm:$0x3] %v3594
          %s3596 = scalar_lea.vmem [#allocation3], 16
          %v3597 = vld [vmem:[%s3596] ss:$31 sm:$0xf]
          %v3598 = vpack.c.bf16 %v3597, %v3597
          %s3599 = scalar_lea.vmem [#allocation4], 32
          %3600 = vst [vmem:[%s3599] sm:$0x3] %v3598
          %s3601 = scalar_lea.vmem [#allocation3], 17
          %v3602 = vld [vmem:[%s3601] ss:$31 sm:$0xf]
          %v3603 = vpack.c.bf16 %v3602, %v3602
          %3604 = vst [vmem:[%s3599 + $0x2] sm:$0x3] %v3603
          %s3605 = scalar_lea.vmem [#allocation3], 18
          %v3606 = vld [vmem:[%s3605] ss:$31 sm:$0xf]
          %v3607 = vpack.c.bf16 %v3606, %v3606
          %3608 = vst [vmem:[%s3599 + $0x4] sm:$0x3] %v3607
          %s3609 = scalar_lea.vmem [#allocation3], 19
          %v3610 = vld [vmem:[%s3609] ss:$31 sm:$0xf]
          %v3611 = vpack.c.bf16 %v3610, %v3610
          %3612 = vst [vmem:[%s3599 + $0x6] sm:$0x3] %v3611
          %s3613 = scalar_lea.vmem [#allocation3], 20
          %v3614 = vld [vmem:[%s3613] ss:$31 sm:$0xf]
          %v3615 = vpack.c.bf16 %v3614, %v3614
          %3616 = vst [vmem:[%s3599 + $0x8] sm:$0x3] %v3615
          %s3617 = scalar_lea.vmem [#allocation3], 21
          %v3618 = vld [vmem:[%s3617] ss:$31 sm:$0xf]
          %v3619 = vpack.c.bf16 %v3618, %v3618
          %3620 = vst [vmem:[%s3599 + $0xa] sm:$0x3] %v3619
          %s3621 = scalar_lea.vmem [#allocation3], 22
          %v3622 = vld [vmem:[%s3621] ss:$31 sm:$0xf]
          %v3623 = vpack.c.bf16 %v3622, %v3622
          %3624 = vst [vmem:[%s3599 + $0xc] sm:$0x3] %v3623
          %s3625 = scalar_lea.vmem [#allocation3], 23
          %v3626 = vld [vmem:[%s3625] ss:$31 sm:$0xf]
          %v3627 = vpack.c.bf16 %v3626, %v3626
          %3628 = vst [vmem:[%s3599 + $0xe] sm:$0x3] %v3627
          %s3629 = scalar_lea.vmem [#allocation3], 24
          %v3630 = vld [vmem:[%s3629] ss:$31 sm:$0xf]
          %v3631 = vpack.c.bf16 %v3630, %v3630
          %3632 = vst [vmem:[%s3599 + $0x10] sm:$0x3] %v3631
          %s3633 = scalar_lea.vmem [#allocation3], 25
          %v3634 = vld [vmem:[%s3633] ss:$31 sm:$0xf]
          %v3635 = vpack.c.bf16 %v3634, %v3634
          %3636 = vst [vmem:[%s3599 + $0x12] sm:$0x3] %v3635
          %s3637 = scalar_lea.vmem [#allocation3], 26
          %v3638 = vld [vmem:[%s3637] ss:$31 sm:$0xf]
          %v3639 = vpack.c.bf16 %v3638, %v3638
          %3640 = vst [vmem:[%s3599 + $0x14] sm:$0x3] %v3639
          %s3641 = scalar_lea.vmem [#allocation3], 27
          %v3642 = vld [vmem:[%s3641] ss:$31 sm:$0xf]
          %v3643 = vpack.c.bf16 %v3642, %v3642
          %3644 = vst [vmem:[%s3599 + $0x16] sm:$0x3] %v3643
          %s3645 = scalar_lea.vmem [#allocation3], 28
          %v3646 = vld [vmem:[%s3645] ss:$31 sm:$0xf]
          %v3647 = vpack.c.bf16 %v3646, %v3646
          %3648 = vst [vmem:[%s3599 + $0x18] sm:$0x3] %v3647
          %s3649 = scalar_lea.vmem [#allocation3], 29
          %v3650 = vld [vmem:[%s3649] ss:$31 sm:$0xf]
          %v3651 = vpack.c.bf16 %v3650, %v3650
          %3652 = vst [vmem:[%s3599 + $0x1a] sm:$0x3] %v3651
          %s3653 = scalar_lea.vmem [#allocation3], 30
          %v3654 = vld [vmem:[%s3653] ss:$31 sm:$0xf]
          %v3655 = vpack.c.bf16 %v3654, %v3654
          %3656 = vst [vmem:[%s3599 + $0x1c] sm:$0x3] %v3655
        $region112: #{cnn_forward.1} parent=71 // pred_fallthru
          _
        %v3657 = vld [vmem:[#allocation5] sm:$0xff]
        %v3658 = vld [vmem:[#allocation5 + $0x8] sm:$0xff]
        %s3659 = smul.u32 %s35, 16
        %s3660 = smul.addr %s3659, 2
        %s3661 = scalar_lea.vmem [#allocation4], %s3660
        %v3662 = vld [vmem:[%s3661] sm:$0xff]
        %v3663 = vld [vmem:[%s3661 + $0x8] sm:$0xff]
        %v3664 = vld [vmem:[%s3661 + $0x10] sm:$0xff]
        %v3665 = vld [vmem:[%s3661 + $0x18] sm:$0xff]
        %v3666 = vld [vmem:[%s516] sm:$0xff]
        %v3667 = vld [vmem:[%s516 + $0x8] sm:$0xff]
        %v3668 = vld [vmem:[%s516 + $0x10] sm:$0xff]
        %v3669 = vld [vmem:[%s516 + $0x18] sm:$0xff]
        %v3670 = vld [vmem:[%s516 + $0x20] sm:$0xff]
        %v3671 = vld [vmem:[%s516 + $0x28] sm:$0xff]
        %v3672 = vld [vmem:[%s516 + $0x30] sm:$0xff]
        %v3673 = vld [vmem:[%s516 + $0x38] sm:$0xff]
        %v3674 = vld [vmem:[%s516 + $0x40] sm:$0xff]
        %v3675 = vld [vmem:[%s516 + $0x48] sm:$0xff]
        %v3676 = vld [vmem:[%s516 + $0x50] sm:$0xff]
        %v3677 = vld [vmem:[%s516 + $0x58] sm:$0xff]
        %v3678 = vld [vmem:[%s516 + $0x60] sm:$0xff]
        %v3679 = vld [vmem:[%s516 + $0x68] sm:$0xff]
        %v3680 = vld [vmem:[%s516 + $0x70] sm:$0xff]
        %v3681 = vld [vmem:[%s516 + $0x78] sm:$0xff]
        %v3682 = vld [vmem:[%s516 + $0x80] sm:$0xff]
        %v3683 = vld [vmem:[%s516 + $0x88] sm:$0xff]
        %v3684 = vld [vmem:[%s516 + $0x90] sm:$0xff]
        %v3685 = vld [vmem:[%s516 + $0x98] sm:$0xff]
        %v3686 = vld [vmem:[%s516 + $0xa0] sm:$0xff]
        %v3687 = vld [vmem:[%s516 + $0xa8] sm:$0xff]
        %v3688 = vld [vmem:[%s516 + $0xb0] sm:$0xff]
        %v3689 = vld [vmem:[%s516 + $0xb8] sm:$0xff]
        %v3690 = vld [vmem:[%s516 + $0xc0] sm:$0xff]
        %v3691 = vld [vmem:[%s516 + $0xc8] sm:$0xff]
        %v3692 = vld [vmem:[%s516 + $0xd0] sm:$0xff]
        %v3693 = vld [vmem:[%s516 + $0xd8] sm:$0xff]
        %v3694 = vld [vmem:[%s516 + $0xe0] sm:$0xff]
        %v3695 = vld [vmem:[%s516 + $0xe8] sm:$0xff]
        %v3696 = vld [vmem:[%s516 + $0xf0] sm:$0xff]
        %v3697 = vld [vmem:[%s516 + $0xf8] sm:$0xff]
        %v3698 = vld [vmem:[%s516 + $0x100] sm:$0xff]
        %v3699 = vld [vmem:[%s516 + $0x108] sm:$0xff]
        %v3700 = vld [vmem:[%s516 + $0x110] sm:$0xff]
        %v3701 = vld [vmem:[%s516 + $0x118] sm:$0xff]
        %v3702 = vld [vmem:[%s516 + $0x120] sm:$0xff]
        %v3703 = vld [vmem:[%s516 + $0x128] sm:$0xff]
        %v3704 = vld [vmem:[%s516 + $0x130] sm:$0xff]
        %v3705 = vld [vmem:[%s516 + $0x138] sm:$0xff]
        %v3706 = vld [vmem:[%s516 + $0x140] sm:$0xff]
        %v3707 = vld [vmem:[%s516 + $0x148] sm:$0xff]
        %v3708 = vld [vmem:[%s516 + $0x150] sm:$0xff]
        %v3709 = vld [vmem:[%s516 + $0x158] sm:$0xff]
        %v3710 = vld [vmem:[%s516 + $0x160] sm:$0xff]
        %v3711 = vld [vmem:[%s516 + $0x168] sm:$0xff]
        %v3712 = vld [vmem:[%s516 + $0x170] sm:$0xff]
        %v3713 = vld [vmem:[%s516 + $0x178] sm:$0xff]
        %v3714 = vld [vmem:[%s516 + $0x180] sm:$0xff]
        %v3715 = vld [vmem:[%s516 + $0x188] sm:$0xff]
        %v3716 = vld [vmem:[%s516 + $0x190] sm:$0xff]
        %v3717 = vld [vmem:[%s516 + $0x198] sm:$0xff]
        %v3718 = vld [vmem:[%s516 + $0x1a0] sm:$0xff]
        %v3719 = vld [vmem:[%s516 + $0x1a8] sm:$0xff]
        %v3720 = vld [vmem:[%s516 + $0x1b0] sm:$0xff]
        %v3721 = vld [vmem:[%s516 + $0x1b8] sm:$0xff]
        %v3722 = vld [vmem:[%s516 + $0x1c0] sm:$0xff]
        %v3723 = vld [vmem:[%s516 + $0x1c8] sm:$0xff]
        %v3724 = vld [vmem:[%s516 + $0x1d0] sm:$0xff]
        %v3725 = vld [vmem:[%s516 + $0x1d8] sm:$0xff]
        %v3726 = vld [vmem:[%s516 + $0x1e0] sm:$0xff]
        %v3727 = vld [vmem:[%s516 + $0x1e8] sm:$0xff]
        %v3728 = vld [vmem:[%s516 + $0x1f0] sm:$0xff]
        %v3729 = vld [vmem:[%s516 + $0x1f8] sm:$0xff]
        %v3730 = vld [vmem:[%s516 + $0x200] sm:$0xff]
        %v3731 = vld [vmem:[%s516 + $0x208] sm:$0xff]
        %v3732 = vld [vmem:[%s516 + $0x210] sm:$0xff]
        %v3733 = vld [vmem:[%s516 + $0x218] sm:$0xff]
        %v3734 = vld [vmem:[%s516 + $0x220] sm:$0xff]
        %v3735 = vld [vmem:[%s516 + $0x228] sm:$0xff]
        %v3736 = vld [vmem:[%s516 + $0x230] sm:$0xff]
        %v3737 = vld [vmem:[%s516 + $0x238] sm:$0xff]
        %v3738 = vld [vmem:[%s516 + $0x240] sm:$0xff]
        %v3739 = vld [vmem:[%s516 + $0x248] sm:$0xff]
        %v3740 = vld [vmem:[%s516 + $0x250] sm:$0xff]
        %v3741 = vld [vmem:[%s516 + $0x258] sm:$0xff]
        %v3742 = vld [vmem:[%s516 + $0x260] sm:$0xff]
        %v3743 = vld [vmem:[%s516 + $0x268] sm:$0xff]
        %v3744 = vld [vmem:[%s516 + $0x270] sm:$0xff]
        %v3745 = vld [vmem:[%s516 + $0x278] sm:$0xff]
        %v3746 = vld [vmem:[%s516 + $0x280] sm:$0xff]
        %v3747 = vld [vmem:[%s516 + $0x288] sm:$0xff]
        %v3748 = vld [vmem:[%s516 + $0x290] sm:$0xff]
        %v3749 = vld [vmem:[%s516 + $0x298] sm:$0xff]
        %v3750 = vld [vmem:[%s516 + $0x2a0] sm:$0xff]
        %v3751 = vld [vmem:[%s516 + $0x2a8] sm:$0xff]
        %v3752 = vld [vmem:[%s516 + $0x2b0] sm:$0xff]
        %v3753 = vld [vmem:[%s516 + $0x2b8] sm:$0xff]
        %v3754 = vld [vmem:[%s516 + $0x2c0] sm:$0xff]
        %v3755 = vld [vmem:[%s516 + $0x2c8] sm:$0xff]
        %v3756 = vld [vmem:[%s516 + $0x2d0] sm:$0xff]
        %v3757 = vld [vmem:[%s516 + $0x2d8] sm:$0xff]
        %v3758 = vld [vmem:[%s516 + $0x2e0] sm:$0xff]
        %v3759 = vld [vmem:[%s516 + $0x2e8] sm:$0xff]
        %v3760 = vld [vmem:[%s516 + $0x2f0] sm:$0xff]
        %v3761 = vld [vmem:[%s516 + $0x2f8] sm:$0xff]
        %v3762 = vld [vmem:[%s516 + $0x300] sm:$0xff]
        %v3763 = vld [vmem:[%s516 + $0x308] sm:$0xff]
        %v3764 = vld [vmem:[%s516 + $0x310] sm:$0xff]
        %v3765 = vld [vmem:[%s516 + $0x318] sm:$0xff]
        %v3766 = vld [vmem:[%s516 + $0x320] sm:$0xff]
        %v3767 = vld [vmem:[%s516 + $0x328] sm:$0xff]
        %v3768 = vld [vmem:[%s516 + $0x330] sm:$0xff]
        %v3769 = vld [vmem:[%s516 + $0x338] sm:$0xff]
        %v3770 = vld [vmem:[%s516 + $0x340] sm:$0xff]
        %v3771 = vld [vmem:[%s516 + $0x348] sm:$0xff]
        %v3772 = vld [vmem:[%s516 + $0x350] sm:$0xff]
        %v3773 = vld [vmem:[%s516 + $0x358] sm:$0xff]
        %v3774 = vld [vmem:[%s516 + $0x360] sm:$0xff]
        %v3775 = vld [vmem:[%s516 + $0x368] sm:$0xff]
        %v3776 = vld [vmem:[%s516 + $0x370] sm:$0xff]
        %v3777 = vld [vmem:[%s516 + $0x378] sm:$0xff]
        %v3778 = vld [vmem:[%s516 + $0x380] sm:$0xff]
        %v3779 = vld [vmem:[%s516 + $0x388] sm:$0xff]
        %v3780 = vld [vmem:[%s516 + $0x390] sm:$0xff]
        %v3781 = vld [vmem:[%s516 + $0x398] sm:$0xff]
        %v3782 = vld [vmem:[%s516 + $0x3a0] sm:$0xff]
        %v3783 = vld [vmem:[%s516 + $0x3a8] sm:$0xff]
        %v3784 = vld [vmem:[%s516 + $0x3b0] sm:$0xff]
        %v3785 = vld [vmem:[%s516 + $0x3b8] sm:$0xff]
        %v3786 = vld [vmem:[%s516 + $0x3c0] sm:$0xff]
        %v3787 = vld [vmem:[%s516 + $0x3c8] sm:$0xff]
        %v3788 = vld [vmem:[%s516 + $0x3d0] sm:$0xff]
        %v3789 = vld [vmem:[%s516 + $0x3d8] sm:$0xff]
        %v3790 = vld [vmem:[%s516 + $0x3e0] sm:$0xff]
        %v3791 = vld [vmem:[%s516 + $0x3e8] sm:$0xff]
        %v3792 = vld [vmem:[%s516 + $0x3f0] sm:$0xff]
        %v3793 = vld [vmem:[%s516 + $0x3f8] sm:$0xff]
        %v3794 = vld [vmem:[%s516 + $0x400] sm:$0xff]
        %v3795 = vld [vmem:[%s516 + $0x408] sm:$0xff]
        %v3796 = vld [vmem:[%s516 + $0x410] sm:$0xff]
        %v3797 = vld [vmem:[%s516 + $0x418] sm:$0xff]
        %v3798 = vld [vmem:[%s516 + $0x420] sm:$0xff]
        %v3799 = vld [vmem:[%s516 + $0x428] sm:$0xff]
        %v3800 = vld [vmem:[%s516 + $0x430] sm:$0xff]
        %v3801 = vld [vmem:[%s516 + $0x438] sm:$0xff]
        %v3802 = vld [vmem:[%s516 + $0x440] sm:$0xff]
        %v3803 = vld [vmem:[%s516 + $0x448] sm:$0xff]
        %v3804 = vld [vmem:[%s516 + $0x450] sm:$0xff]
        %v3805 = vld [vmem:[%s516 + $0x458] sm:$0xff]
        %v3806 = vld [vmem:[%s516 + $0x460] sm:$0xff]
        %v3807 = vld [vmem:[%s516 + $0x468] sm:$0xff]
        %v3808 = vld [vmem:[%s516 + $0x470] sm:$0xff]
        %v3809 = vld [vmem:[%s516 + $0x478] sm:$0xff]
        %v3810 = vld [vmem:[%s516 + $0x480] sm:$0xff]
        %v3811 = vld [vmem:[%s516 + $0x488] sm:$0xff]
        %v3812 = vld [vmem:[%s516 + $0x490] sm:$0xff]
        %v3813 = vld [vmem:[%s516 + $0x498] sm:$0xff]
        %v3814 = vld [vmem:[%s516 + $0x4a0] sm:$0xff]
        %v3815 = vld [vmem:[%s516 + $0x4a8] sm:$0xff]
        %v3816 = vld [vmem:[%s516 + $0x4b0] sm:$0xff]
        %v3817 = vld [vmem:[%s516 + $0x4b8] sm:$0xff]
        %v3818 = vld [vmem:[%s516 + $0x4c0] sm:$0xff]
        %v3819 = vld [vmem:[%s516 + $0x4c8] sm:$0xff]
        %v3820 = vld [vmem:[%s516 + $0x4d0] sm:$0xff]
        %v3821 = vld [vmem:[%s516 + $0x4d8] sm:$0xff]
        %v3822 = vld [vmem:[%s516 + $0x4e0] sm:$0xff]
        %v3823 = vld [vmem:[%s516 + $0x4e8] sm:$0xff]
        %v3824 = vld [vmem:[%s516 + $0x4f0] sm:$0xff]
        %v3825 = vld [vmem:[%s516 + $0x4f8] sm:$0xff]
        %v3826 = vld [vmem:[%s516 + $0x500] sm:$0xff]
        %v3827 = vld [vmem:[%s516 + $0x508] sm:$0xff]
        %v3828 = vld [vmem:[%s516 + $0x510] sm:$0xff]
        %v3829 = vld [vmem:[%s516 + $0x518] sm:$0xff]
        %v3830 = vld [vmem:[%s516 + $0x520] sm:$0xff]
        %v3831 = vld [vmem:[%s516 + $0x528] sm:$0xff]
        %v3832 = vld [vmem:[%s516 + $0x530] sm:$0xff]
        %v3833 = vld [vmem:[%s516 + $0x538] sm:$0xff]
        %v3834 = vld [vmem:[%s516 + $0x540] sm:$0xff]
        %v3835 = vld [vmem:[%s516 + $0x548] sm:$0xff]
        %v3836 = vld [vmem:[%s516 + $0x550] sm:$0xff]
        %v3837 = vld [vmem:[%s516 + $0x558] sm:$0xff]
        %v3838 = vld [vmem:[%s516 + $0x560] sm:$0xff]
        %v3839 = vld [vmem:[%s516 + $0x568] sm:$0xff]
        %v3840 = vld [vmem:[%s516 + $0x570] sm:$0xff]
        %v3841 = vld [vmem:[%s516 + $0x578] sm:$0xff]
        %v3842 = vld [vmem:[%s516 + $0x580] sm:$0xff]
        %v3843 = vld [vmem:[%s516 + $0x588] sm:$0xff]
        %v3844 = vld [vmem:[%s516 + $0x590] sm:$0xff]
        %v3845 = vld [vmem:[%s516 + $0x598] sm:$0xff]
        %v3846 = vld [vmem:[%s516 + $0x5a0] sm:$0xff]
        %v3847 = vld [vmem:[%s516 + $0x5a8] sm:$0xff]
        %v3848 = vld [vmem:[%s516 + $0x5b0] sm:$0xff]
        %v3849 = vld [vmem:[%s516 + $0x5b8] sm:$0xff]
        %v3850 = vld [vmem:[%s516 + $0x5c0] sm:$0xff]
        %v3851 = vld [vmem:[%s516 + $0x5c8] sm:$0xff]
        %v3852 = vld [vmem:[%s516 + $0x5d0] sm:$0xff]
        %v3853 = vld [vmem:[%s516 + $0x5d8] sm:$0xff]
        %v3854 = vld [vmem:[%s516 + $0x5e0] sm:$0xff]
        %v3855 = vld [vmem:[%s516 + $0x5e8] sm:$0xff]
        %v3856 = vld [vmem:[%s516 + $0x5f0] sm:$0xff]
        %v3857 = vld [vmem:[%s516 + $0x5f8] sm:$0xff]
        %v3858 = vld [vmem:[%s516 + $0x600] sm:$0xff]
        %v3859 = vld [vmem:[%s516 + $0x608] sm:$0xff]
        %v3860 = vld [vmem:[%s516 + $0x610] sm:$0xff]
        %v3861 = vld [vmem:[%s516 + $0x618] sm:$0xff]
        %v3862 = vld [vmem:[%s516 + $0x620] sm:$0xff]
        %v3863 = vld [vmem:[%s516 + $0x628] sm:$0xff]
        %v3864 = vld [vmem:[%s516 + $0x630] sm:$0xff]
        %v3865 = vld [vmem:[%s516 + $0x638] sm:$0xff]
        %v3866 = vld [vmem:[%s516 + $0x640] sm:$0xff]
        %v3867 = vld [vmem:[%s516 + $0x648] sm:$0xff]
        %v3868 = vld [vmem:[%s516 + $0x650] sm:$0xff]
        %v3869 = vld [vmem:[%s516 + $0x658] sm:$0xff]
        %v3870 = vld [vmem:[%s516 + $0x660] sm:$0xff]
        %v3871 = vld [vmem:[%s516 + $0x668] sm:$0xff]
        %v3872 = vld [vmem:[%s516 + $0x670] sm:$0xff]
        %v3873 = vld [vmem:[%s516 + $0x678] sm:$0xff]
        %v3874 = vld [vmem:[%s516 + $0x680] sm:$0xff]
        %v3875 = vld [vmem:[%s516 + $0x688] sm:$0xff]
        %v3876 = vld [vmem:[%s516 + $0x690] sm:$0xff]
        %v3877 = vld [vmem:[%s516 + $0x698] sm:$0xff]
        %v3878 = vld [vmem:[%s516 + $0x6a0] sm:$0xff]
        %v3879 = vld [vmem:[%s516 + $0x6a8] sm:$0xff]
        %v3880 = vld [vmem:[%s516 + $0x6b0] sm:$0xff]
        %v3881 = vld [vmem:[%s516 + $0x6b8] sm:$0xff]
        %v3882 = vld [vmem:[%s516 + $0x6c0] sm:$0xff]
        %v3883 = vld [vmem:[%s516 + $0x6c8] sm:$0xff]
        %v3884 = vld [vmem:[%s516 + $0x6d0] sm:$0xff]
        %v3885 = vld [vmem:[%s516 + $0x6d8] sm:$0xff]
        %v3886 = vld [vmem:[%s516 + $0x6e0] sm:$0xff]
        %v3887 = vld [vmem:[%s516 + $0x6e8] sm:$0xff]
        %v3888 = vld [vmem:[%s516 + $0x6f0] sm:$0xff]
        %v3889 = vld [vmem:[%s516 + $0x6f8] sm:$0xff]
        %v3890 = vld [vmem:[%s516 + $0x700] sm:$0xff]
        %v3891 = vld [vmem:[%s516 + $0x708] sm:$0xff]
        %v3892 = vld [vmem:[%s516 + $0x710] sm:$0xff]
        %v3893 = vld [vmem:[%s516 + $0x718] sm:$0xff]
        %v3894 = vld [vmem:[%s516 + $0x720] sm:$0xff]
        %v3895 = vld [vmem:[%s516 + $0x728] sm:$0xff]
        %v3896 = vld [vmem:[%s516 + $0x730] sm:$0xff]
        %v3897 = vld [vmem:[%s516 + $0x738] sm:$0xff]
        %v3898 = vld [vmem:[%s516 + $0x740] sm:$0xff]
        %v3899 = vld [vmem:[%s516 + $0x748] sm:$0xff]
        %v3900 = vld [vmem:[%s516 + $0x750] sm:$0xff]
        %v3901 = vld [vmem:[%s516 + $0x758] sm:$0xff]
        %v3902 = vld [vmem:[%s516 + $0x760] sm:$0xff]
        %v3903 = vld [vmem:[%s516 + $0x768] sm:$0xff]
        %v3904 = vld [vmem:[%s516 + $0x770] sm:$0xff]
        %v3905 = vld [vmem:[%s516 + $0x778] sm:$0xff]
        %v3906 = vld [vmem:[%s516 + $0x780] sm:$0xff]
        %v3907 = vld [vmem:[%s516 + $0x788] sm:$0xff]
        %v3908 = vld [vmem:[%s516 + $0x790] sm:$0xff]
        %v3909 = vld [vmem:[%s516 + $0x798] sm:$0xff]
        %v3910 = vld [vmem:[%s516 + $0x7a0] sm:$0xff]
        %v3911 = vld [vmem:[%s516 + $0x7a8] sm:$0xff]
        %v3912 = vld [vmem:[%s516 + $0x7b0] sm:$0xff]
        %v3913 = vld [vmem:[%s516 + $0x7b8] sm:$0xff]
        %v3914 = vld [vmem:[%s516 + $0x7c0] sm:$0xff]
        %v3915 = vld [vmem:[%s516 + $0x7c8] sm:$0xff]
        %v3916 = vld [vmem:[%s516 + $0x7d0] sm:$0xff]
        %v3917 = vld [vmem:[%s516 + $0x7d8] sm:$0xff]
        %v3918 = vld [vmem:[%s516 + $0x7e0] sm:$0xff]
        %v3919 = vld [vmem:[%s516 + $0x7e8] sm:$0xff]
        %v3920 = vld [vmem:[%s516 + $0x7f0] sm:$0xff]
        %v3921 = vld [vmem:[%s516 + $0x7f8] sm:$0xff]
        %v3922 = vld [vmem:[%s516 + $0x800] sm:$0xff]
        %v3923 = vld [vmem:[%s516 + $0x808] sm:$0xff]
        %v3924 = vld [vmem:[%s516 + $0x810] sm:$0xff]
        %v3925 = vld [vmem:[%s516 + $0x818] sm:$0xff]
        %v3926 = vld [vmem:[%s516 + $0x820] sm:$0xff]
        %v3927 = vld [vmem:[%s516 + $0x828] sm:$0xff]
        %v3928 = vld [vmem:[%s516 + $0x830] sm:$0xff]
        %v3929 = vld [vmem:[%s516 + $0x838] sm:$0xff]
        %v3930 = vld [vmem:[%s516 + $0x840] sm:$0xff]
        %v3931 = vld [vmem:[%s516 + $0x848] sm:$0xff]
        %v3932 = vld [vmem:[%s516 + $0x850] sm:$0xff]
        %v3933 = vld [vmem:[%s516 + $0x858] sm:$0xff]
        %v3934 = vld [vmem:[%s516 + $0x860] sm:$0xff]
        %v3935 = vld [vmem:[%s516 + $0x868] sm:$0xff]
        %v3936 = vld [vmem:[%s516 + $0x870] sm:$0xff]
        %v3937 = vld [vmem:[%s516 + $0x878] sm:$0xff]
        %v3938 = vld [vmem:[%s516 + $0x880] sm:$0xff]
        %v3939 = vld [vmem:[%s516 + $0x888] sm:$0xff]
        %v3940 = vld [vmem:[%s516 + $0x890] sm:$0xff]
        %v3941 = vld [vmem:[%s516 + $0x898] sm:$0xff]
        %v3942 = vld [vmem:[%s516 + $0x8a0] sm:$0xff]
        %v3943 = vld [vmem:[%s516 + $0x8a8] sm:$0xff]
        %v3944 = vld [vmem:[%s516 + $0x8b0] sm:$0xff]
        %v3945 = vld [vmem:[%s516 + $0x8b8] sm:$0xff]
        %v3946 = vld [vmem:[%s516 + $0x8c0] sm:$0xff]
        %v3947 = vld [vmem:[%s516 + $0x8c8] sm:$0xff]
        %v3948 = vld [vmem:[%s516 + $0x8d0] sm:$0xff]
        %v3949 = vld [vmem:[%s516 + $0x8d8] sm:$0xff]
        %v3950 = vld [vmem:[%s516 + $0x8e0] sm:$0xff]
        %v3951 = vld [vmem:[%s516 + $0x8e8] sm:$0xff]
        %v3952 = vld [vmem:[%s516 + $0x8f0] sm:$0xff]
        %v3953 = vld [vmem:[%s516 + $0x8f8] sm:$0xff]
        %v3954 = vld [vmem:[%s516 + $0x900] sm:$0xff]
        %v3955 = vld [vmem:[%s516 + $0x908] sm:$0xff]
        %v3956 = vld [vmem:[%s516 + $0x910] sm:$0xff]
        %v3957 = vld [vmem:[%s516 + $0x918] sm:$0xff]
        %v3958 = vld [vmem:[%s516 + $0x920] sm:$0xff]
        %v3959 = vld [vmem:[%s516 + $0x928] sm:$0xff]
        %v3960 = vld [vmem:[%s516 + $0x930] sm:$0xff]
        %v3961 = vld [vmem:[%s516 + $0x938] sm:$0xff]
        %v3962 = vld [vmem:[%s516 + $0x940] sm:$0xff]
        %v3963 = vld [vmem:[%s516 + $0x948] sm:$0xff]
        %v3964 = vld [vmem:[%s516 + $0x950] sm:$0xff]
        %v3965 = vld [vmem:[%s516 + $0x958] sm:$0xff]
        %v3966 = vld [vmem:[%s516 + $0x960] sm:$0xff]
        %v3967 = vld [vmem:[%s516 + $0x968] sm:$0xff]
        %v3968 = vld [vmem:[%s516 + $0x970] sm:$0xff]
        %v3969 = vld [vmem:[%s516 + $0x978] sm:$0xff]
        %v3970 = vld [vmem:[%s516 + $0x980] sm:$0xff]
        %v3971 = vld [vmem:[%s516 + $0x988] sm:$0xff]
        %v3972 = vld [vmem:[%s516 + $0x990] sm:$0xff]
        %v3973 = vld [vmem:[%s516 + $0x998] sm:$0xff]
        %v3974 = vld [vmem:[%s516 + $0x9a0] sm:$0xff]
        %v3975 = vld [vmem:[%s516 + $0x9a8] sm:$0xff]
        %v3976 = vld [vmem:[%s516 + $0x9b0] sm:$0xff]
        %v3977 = vld [vmem:[%s516 + $0x9b8] sm:$0xff]
        %v3978 = vld [vmem:[%s516 + $0x9c0] sm:$0xff]
        %v3979 = vld [vmem:[%s516 + $0x9c8] sm:$0xff]
        %v3980 = vld [vmem:[%s516 + $0x9d0] sm:$0xff]
        %v3981 = vld [vmem:[%s516 + $0x9d8] sm:$0xff]
        %v3982 = vld [vmem:[%s516 + $0x9e0] sm:$0xff]
        %v3983 = vld [vmem:[%s516 + $0x9e8] sm:$0xff]
        %v3984 = vld [vmem:[%s516 + $0x9f0] sm:$0xff]
        %v3985 = vld [vmem:[%s516 + $0x9f8] sm:$0xff]
        %v3986 = vld [vmem:[%s516 + $0xa00] sm:$0xff]
        %v3987 = vld [vmem:[%s516 + $0xa08] sm:$0xff]
        %v3988 = vld [vmem:[%s516 + $0xa10] sm:$0xff]
        %v3989 = vld [vmem:[%s516 + $0xa18] sm:$0xff]
        %v3990 = vld [vmem:[%s516 + $0xa20] sm:$0xff]
        %v3991 = vld [vmem:[%s516 + $0xa28] sm:$0xff]
        %v3992 = vld [vmem:[%s516 + $0xa30] sm:$0xff]
        %v3993 = vld [vmem:[%s516 + $0xa38] sm:$0xff]
        %v3994 = vld [vmem:[%s516 + $0xa40] sm:$0xff]
        %v3995 = vld [vmem:[%s516 + $0xa48] sm:$0xff]
        %v3996 = vld [vmem:[%s516 + $0xa50] sm:$0xff]
        %v3997 = vld [vmem:[%s516 + $0xa58] sm:$0xff]
        %v3998 = vld [vmem:[%s516 + $0xa60] sm:$0xff]
        %v3999 = vld [vmem:[%s516 + $0xa68] sm:$0xff]
        %v4000 = vld [vmem:[%s516 + $0xa70] sm:$0xff]
        %v4001 = vld [vmem:[%s516 + $0xa78] sm:$0xff]
        %v4002 = vld [vmem:[%s516 + $0xa80] sm:$0xff]
        %v4003 = vld [vmem:[%s516 + $0xa88] sm:$0xff]
        %v4004 = vld [vmem:[%s516 + $0xa90] sm:$0xff]
        %v4005 = vld [vmem:[%s516 + $0xa98] sm:$0xff]
        %v4006 = vld [vmem:[%s516 + $0xaa0] sm:$0xff]
        %v4007 = vld [vmem:[%s516 + $0xaa8] sm:$0xff]
        %v4008 = vld [vmem:[%s516 + $0xab0] sm:$0xff]
        %v4009 = vld [vmem:[%s516 + $0xab8] sm:$0xff]
        %v4010 = vld [vmem:[%s516 + $0xac0] sm:$0xff]
        %v4011 = vld [vmem:[%s516 + $0xac8] sm:$0xff]
        %v4012 = vld [vmem:[%s516 + $0xad0] sm:$0xff]
        %v4013 = vld [vmem:[%s516 + $0xad8] sm:$0xff]
        %v4014 = vld [vmem:[%s516 + $0xae0] sm:$0xff]
        %v4015 = vld [vmem:[%s516 + $0xae8] sm:$0xff]
        %v4016 = vld [vmem:[%s516 + $0xaf0] sm:$0xff]
        %v4017 = vld [vmem:[%s516 + $0xaf8] sm:$0xff]
        %v4018 = vld [vmem:[%s516 + $0xb00] sm:$0xff]
        %v4019 = vld [vmem:[%s516 + $0xb08] sm:$0xff]
        %v4020 = vld [vmem:[%s516 + $0xb10] sm:$0xff]
        %v4021 = vld [vmem:[%s516 + $0xb18] sm:$0xff]
        %v4022 = vld [vmem:[%s516 + $0xb20] sm:$0xff]
        %v4023 = vld [vmem:[%s516 + $0xb28] sm:$0xff]
        %v4024 = vld [vmem:[%s516 + $0xb30] sm:$0xff]
        %v4025 = vld [vmem:[%s516 + $0xb38] sm:$0xff]
        %v4026 = vld [vmem:[%s516 + $0xb40] sm:$0xff]
        %v4027 = vld [vmem:[%s516 + $0xb48] sm:$0xff]
        %v4028 = vld [vmem:[%s516 + $0xb50] sm:$0xff]
        %v4029 = vld [vmem:[%s516 + $0xb58] sm:$0xff]
        %v4030 = vld [vmem:[%s516 + $0xb60] sm:$0xff]
        %v4031 = vld [vmem:[%s516 + $0xb68] sm:$0xff]
        %v4032 = vld [vmem:[%s516 + $0xb70] sm:$0xff]
        %v4033 = vld [vmem:[%s516 + $0xb78] sm:$0xff]
        %v4034 = vld [vmem:[%s516 + $0xb80] sm:$0xff]
        %v4035 = vld [vmem:[%s516 + $0xb88] sm:$0xff]
        %v4036 = vld [vmem:[%s516 + $0xb90] sm:$0xff]
        %v4037 = vld [vmem:[%s516 + $0xb98] sm:$0xff]
        %v4038 = vld [vmem:[%s516 + $0xba0] sm:$0xff]
        %v4039 = vld [vmem:[%s516 + $0xba8] sm:$0xff]
        %v4040 = vld [vmem:[%s516 + $0xbb0] sm:$0xff]
        %v4041 = vld [vmem:[%s516 + $0xbb8] sm:$0xff]
        %v4042 = vld [vmem:[%s516 + $0xbc0] sm:$0xff]
        %v4043 = vld [vmem:[%s516 + $0xbc8] sm:$0xff]
        %v4044 = vld [vmem:[%s516 + $0xbd0] sm:$0xff]
        %v4045 = vld [vmem:[%s516 + $0xbd8] sm:$0xff]
        %v4046 = vld [vmem:[%s516 + $0xbe0] sm:$0xff]
        %v4047 = vld [vmem:[%s516 + $0xbe8] sm:$0xff]
        %v4048 = vld [vmem:[%s516 + $0xbf0] sm:$0xff]
        %v4049 = vld [vmem:[%s516 + $0xbf8] sm:$0xff]
        %v4050 = vld [vmem:[%s516 + $0xc00] sm:$0xff]
        %v4051 = vld [vmem:[%s516 + $0xc08] sm:$0xff]
        %v4052 = vld [vmem:[%s516 + $0xc10] sm:$0xff]
        %v4053 = vld [vmem:[%s516 + $0xc18] sm:$0xff]
        %v4054 = vld [vmem:[%s516 + $0xc20] sm:$0xff]
        %v4055 = vld [vmem:[%s516 + $0xc28] sm:$0xff]
        %v4056 = vld [vmem:[%s516 + $0xc30] sm:$0xff]
        %v4057 = vld [vmem:[%s516 + $0xc38] sm:$0xff]
        %v4058 = vld [vmem:[%s516 + $0xc40] sm:$0xff]
        %v4059 = vld [vmem:[%s516 + $0xc48] sm:$0xff]
        %v4060 = vld [vmem:[%s516 + $0xc50] sm:$0xff]
        %v4061 = vld [vmem:[%s516 + $0xc58] sm:$0xff]
        %v4062 = vld [vmem:[%s516 + $0xc60] sm:$0xff]
        %v4063 = vld [vmem:[%s516 + $0xc68] sm:$0xff]
        %v4064 = vld [vmem:[%s516 + $0xc70] sm:$0xff]
        %v4065 = vld [vmem:[%s516 + $0xc78] sm:$0xff]
        %v4066 = vld [vmem:[%s516 + $0xc80] sm:$0xff]
        %v4067 = vld [vmem:[%s516 + $0xc88] sm:$0xff]
        %v4068 = vld [vmem:[%s516 + $0xc90] sm:$0xff]
        %v4069 = vld [vmem:[%s516 + $0xc98] sm:$0xff]
        %v4070 = vld [vmem:[%s516 + $0xca0] sm:$0xff]
        %v4071 = vld [vmem:[%s516 + $0xca8] sm:$0xff]
        %v4072 = vld [vmem:[%s516 + $0xcb0] sm:$0xff]
        %v4073 = vld [vmem:[%s516 + $0xcb8] sm:$0xff]
        %v4074 = vld [vmem:[%s516 + $0xcc0] sm:$0xff]
        %v4075 = vld [vmem:[%s516 + $0xcc8] sm:$0xff]
        %v4076 = vld [vmem:[%s516 + $0xcd0] sm:$0xff]
        %v4077 = vld [vmem:[%s516 + $0xcd8] sm:$0xff]
        %v4078 = vld [vmem:[%s516 + $0xce0] sm:$0xff]
        %v4079 = vld [vmem:[%s516 + $0xce8] sm:$0xff]
        %v4080 = vld [vmem:[%s516 + $0xcf0] sm:$0xff]
        %v4081 = vld [vmem:[%s516 + $0xcf8] sm:$0xff]
        %v4082 = vld [vmem:[%s516 + $0xd00] sm:$0xff]
        %v4083 = vld [vmem:[%s516 + $0xd08] sm:$0xff]
        %v4084 = vld [vmem:[%s516 + $0xd10] sm:$0xff]
        %v4085 = vld [vmem:[%s516 + $0xd18] sm:$0xff]
        %v4086 = vld [vmem:[%s516 + $0xd20] sm:$0xff]
        %v4087 = vld [vmem:[%s516 + $0xd28] sm:$0xff]
        %v4088 = vld [vmem:[%s516 + $0xd30] sm:$0xff]
        %v4089 = vld [vmem:[%s516 + $0xd38] sm:$0xff]
        %v4090 = vld [vmem:[%s516 + $0xd40] sm:$0xff]
        %v4091 = vld [vmem:[%s516 + $0xd48] sm:$0xff]
        %v4092 = vld [vmem:[%s516 + $0xd50] sm:$0xff]
        %v4093 = vld [vmem:[%s516 + $0xd58] sm:$0xff]
        %v4094 = vld [vmem:[%s516 + $0xd60] sm:$0xff]
        %v4095 = vld [vmem:[%s516 + $0xd68] sm:$0xff]
        %v4096 = vld [vmem:[%s516 + $0xd70] sm:$0xff]
        %v4097 = vld [vmem:[%s516 + $0xd78] sm:$0xff]
        %v4098 = vld [vmem:[%s516 + $0xd80] sm:$0xff]
        %v4099 = vld [vmem:[%s516 + $0xd88] sm:$0xff]
        %v4100 = vld [vmem:[%s516 + $0xd90] sm:$0xff]
        %v4101 = vld [vmem:[%s516 + $0xd98] sm:$0xff]
        %v4102 = vld [vmem:[%s516 + $0xda0] sm:$0xff]
        %v4103 = vld [vmem:[%s516 + $0xda8] sm:$0xff]
        %v4104 = vld [vmem:[%s516 + $0xdb0] sm:$0xff]
        %v4105 = vld [vmem:[%s516 + $0xdb8] sm:$0xff]
        %v4106 = vld [vmem:[%s516 + $0xdc0] sm:$0xff]
        %v4107 = vld [vmem:[%s516 + $0xdc8] sm:$0xff]
        %v4108 = vld [vmem:[%s516 + $0xdd0] sm:$0xff]
        %v4109 = vld [vmem:[%s516 + $0xdd8] sm:$0xff]
        %v4110 = vld [vmem:[%s516 + $0xde0] sm:$0xff]
        %v4111 = vld [vmem:[%s516 + $0xde8] sm:$0xff]
        %v4112 = vld [vmem:[%s516 + $0xdf0] sm:$0xff]
        %v4113 = vld [vmem:[%s516 + $0xdf8] sm:$0xff]
        %v4114 = vld [vmem:[%s516 + $0xe00] sm:$0xff]
        %v4115 = vld [vmem:[%s516 + $0xe08] sm:$0xff]
        %v4116 = vld [vmem:[%s516 + $0xe10] sm:$0xff]
        %v4117 = vld [vmem:[%s516 + $0xe18] sm:$0xff]
        %v4118 = vld [vmem:[%s516 + $0xe20] sm:$0xff]
        %v4119 = vld [vmem:[%s516 + $0xe28] sm:$0xff]
        %v4120 = vld [vmem:[%s516 + $0xe30] sm:$0xff]
        %v4121 = vld [vmem:[%s516 + $0xe38] sm:$0xff]
        %v4122 = vld [vmem:[%s516 + $0xe40] sm:$0xff]
        %v4123 = vld [vmem:[%s516 + $0xe48] sm:$0xff]
        %v4124 = vld [vmem:[%s516 + $0xe50] sm:$0xff]
        %v4125 = vld [vmem:[%s516 + $0xe58] sm:$0xff]
        %v4126 = vld [vmem:[%s516 + $0xe60] sm:$0xff]
        %v4127 = vld [vmem:[%s516 + $0xe68] sm:$0xff]
        %v4128 = vld [vmem:[%s516 + $0xe70] sm:$0xff]
        %v4129 = vld [vmem:[%s516 + $0xe78] sm:$0xff]
        %v4130 = vld [vmem:[%s516 + $0xe80] sm:$0xff]
        %v4131 = vld [vmem:[%s516 + $0xe88] sm:$0xff]
        %v4132 = vld [vmem:[%s516 + $0xe90] sm:$0xff]
        %v4133 = vld [vmem:[%s516 + $0xe98] sm:$0xff]
        %v4134 = vld [vmem:[%s516 + $0xea0] sm:$0xff]
        %v4135 = vld [vmem:[%s516 + $0xea8] sm:$0xff]
        %v4136 = vld [vmem:[%s516 + $0xeb0] sm:$0xff]
        %v4137 = vld [vmem:[%s516 + $0xeb8] sm:$0xff]
        %v4138 = vld [vmem:[%s516 + $0xec0] sm:$0xff]
        %v4139 = vld [vmem:[%s516 + $0xec8] sm:$0xff]
        %v4140 = vld [vmem:[%s516 + $0xed0] sm:$0xff]
        %v4141 = vld [vmem:[%s516 + $0xed8] sm:$0xff]
        %v4142 = vld [vmem:[%s516 + $0xee0] sm:$0xff]
        %v4143 = vld [vmem:[%s516 + $0xee8] sm:$0xff]
        %v4144 = vld [vmem:[%s516 + $0xef0] sm:$0xff]
        %v4145 = vld [vmem:[%s516 + $0xef8] sm:$0xff]
        %v4146 = vld [vmem:[%s516 + $0xf00] sm:$0xff]
        %v4147 = vld [vmem:[%s516 + $0xf08] sm:$0xff]
        %v4148 = vld [vmem:[%s516 + $0xf10] sm:$0xff]
        %v4149 = vld [vmem:[%s516 + $0xf18] sm:$0xff]
        %v4150 = vld [vmem:[%s516 + $0xf20] sm:$0xff]
        %v4151 = vld [vmem:[%s516 + $0xf28] sm:$0xff]
        %v4152 = vld [vmem:[%s516 + $0xf30] sm:$0xff]
        %v4153 = vld [vmem:[%s516 + $0xf38] sm:$0xff]
        %v4154 = vld [vmem:[%s516 + $0xf40] sm:$0xff]
        %v4155 = vld [vmem:[%s516 + $0xf48] sm:$0xff]
        %v4156 = vld [vmem:[%s516 + $0xf50] sm:$0xff]
        %v4157 = vld [vmem:[%s516 + $0xf58] sm:$0xff]
        %v4158 = vld [vmem:[%s516 + $0xf60] sm:$0xff]
        %v4159 = vld [vmem:[%s516 + $0xf68] sm:$0xff]
        %v4160 = vld [vmem:[%s516 + $0xf70] sm:$0xff]
        %v4161 = vld [vmem:[%s516 + $0xf78] sm:$0xff]
        %v4162 = vld [vmem:[%s516 + $0xf80] sm:$0xff]
        %v4163 = vld [vmem:[%s516 + $0xf88] sm:$0xff]
        %v4164 = vld [vmem:[%s516 + $0xf90] sm:$0xff]
        %v4165 = vld [vmem:[%s516 + $0xf98] sm:$0xff]
        %v4166 = vld [vmem:[%s516 + $0xfa0] sm:$0xff]
        %v4167 = vld [vmem:[%s516 + $0xfa8] sm:$0xff]
        %v4168 = vld [vmem:[%s516 + $0xfb0] sm:$0xff]
        %v4169 = vld [vmem:[%s516 + $0xfb8] sm:$0xff]
        %v4170 = vld [vmem:[%s516 + $0xfc0] sm:$0xff]
        %v4171 = vld [vmem:[%s516 + $0xfc8] sm:$0xff]
        %v4172 = vld [vmem:[%s516 + $0xfd0] sm:$0xff]
        %v4173 = vld [vmem:[%s516 + $0xfd8] sm:$0xff]
        %v4174 = vld [vmem:[%s516 + $0xfe0] sm:$0xff]
        %v4175 = vld [vmem:[%s516 + $0xfe8] sm:$0xff]
        %v4176 = vld [vmem:[%s516 + $0xff0] sm:$0xff]
        %v4177 = vld [vmem:[%s516 + $0xff8] sm:$0xff]
        %v4182 = vcombine.high %v3662, %v3662
        %v4184 = vunpack.c.l.s4 1983009808
        %v4185 = vunpack.c.0.s8 %v4184
        %v4186 = vlaneseq
        %v4187 = vshrl.u32 %v4186, 7
        %v4188 = vsub.s32 %v4185, %v4187
        %v4189 = vrot.slane %v3662, %v4188
        %v4191 = vunpack.c.l.s4 1983009808
        %v4192 = vunpack.c.0.s8 %v4191
        %v4193 = vlaneseq
        %v4194 = vshrl.u32 %v4193, 7
        %v4195 = vsub.s32 %v4192, %v4194
        %v4196 = vrot.slane %v4182, %v4195
        %v4197 = vcombine.high %v4189, %v4189
        %v4198 = vcombine.high %v4196, %v4196
        %v4199 = vcombine.high %v3663, %v3663
        %v4201 = vunpack.c.l.s4 1983009808
        %v4202 = vunpack.c.0.s8 %v4201
        %v4203 = vlaneseq
        %v4204 = vshrl.u32 %v4203, 7
        %v4205 = vsub.s32 %v4202, %v4204
        %v4206 = vrot.slane %v3663, %v4205
        %v4208 = vunpack.c.l.s4 1983009808
        %v4209 = vunpack.c.0.s8 %v4208
        %v4210 = vlaneseq
        %v4211 = vshrl.u32 %v4210, 7
        %v4212 = vsub.s32 %v4209, %v4211
        %v4213 = vrot.slane %v4199, %v4212
        %v4214 = vcombine.high %v4206, %v4206
        %v4215 = vcombine.high %v4213, %v4213
        %v4216 = vcombine.high %v3664, %v3664
        %v4218 = vunpack.c.l.s4 1983009808
        %v4219 = vunpack.c.0.s8 %v4218
        %v4220 = vlaneseq
        %v4221 = vshrl.u32 %v4220, 7
        %v4222 = vsub.s32 %v4219, %v4221
        %v4223 = vrot.slane %v3664, %v4222
        %v4225 = vunpack.c.l.s4 1983009808
        %v4226 = vunpack.c.0.s8 %v4225
        %v4227 = vlaneseq
        %v4228 = vshrl.u32 %v4227, 7
        %v4229 = vsub.s32 %v4226, %v4228
        %v4230 = vrot.slane %v4216, %v4229
        %v4231 = vcombine.high %v4223, %v4223
        %v4232 = vcombine.high %v4230, %v4230
        %v4233 = vcombine.high %v3665, %v3665
        %v4235 = vunpack.c.l.s4 1983009808
        %v4236 = vunpack.c.0.s8 %v4235
        %v4237 = vlaneseq
        %v4238 = vshrl.u32 %v4237, 7
        %v4239 = vsub.s32 %v4236, %v4238
        %v4240 = vrot.slane %v3665, %v4239
        %v4242 = vunpack.c.l.s4 1983009808
        %v4243 = vunpack.c.0.s8 %v4242
        %v4244 = vlaneseq
        %v4245 = vshrl.u32 %v4244, 7
        %v4246 = vsub.s32 %v4243, %v4245
        %v4247 = vrot.slane %v4233, %v4246
        %v4248 = vcombine.high %v4240, %v4240
        %v4249 = vcombine.high %v4247, %v4247
        %v4778 = vunpack.c.l.b16 %v3666
        %v4779 = vunpack.c.h.b16 %v3666
        %v4780 = vunpack.c.l.b16 %v3667
        %v4781 = vunpack.c.h.b16 %v3667
        %v4782 = vunpack.c.l.b16 %v3668
        %v4783 = vunpack.c.h.b16 %v3668
        %v4784 = vunpack.c.l.b16 %v3669
        %v4785 = vunpack.c.h.b16 %v3669
        %v4786 = vunpack.c.l.b16 %v3670
        %v4787 = vunpack.c.h.b16 %v3670
        %v4788 = vunpack.c.l.b16 %v3671
        %v4789 = vunpack.c.h.b16 %v3671
        %v4790 = vunpack.c.l.b16 %v3672
        %v4791 = vunpack.c.h.b16 %v3672
        %v4792 = vunpack.c.l.b16 %v3673
        %v4793 = vunpack.c.h.b16 %v3673
        %v4794 = vunpack.c.l.b16 %v3674
        %v4795 = vunpack.c.h.b16 %v3674
        %v4796 = vunpack.c.l.b16 %v3675
        %v4797 = vunpack.c.h.b16 %v3675
        %v4798 = vunpack.c.l.b16 %v3676
        %v4799 = vunpack.c.h.b16 %v3676
        %v4800 = vunpack.c.l.b16 %v3677
        %v4801 = vunpack.c.h.b16 %v3677
        %v4802 = vunpack.c.l.b16 %v3678
        %v4803 = vunpack.c.h.b16 %v3678
        %v4804 = vunpack.c.l.b16 %v3679
        %v4805 = vunpack.c.h.b16 %v3679
        %v4806 = vunpack.c.l.b16 %v3680
        %v4807 = vunpack.c.h.b16 %v3680
        %v4808 = vunpack.c.l.b16 %v3681
        %v4809 = vunpack.c.h.b16 %v3681
        %v4810 = vunpack.c.l.b16 %v3682
        %v4811 = vunpack.c.h.b16 %v3682
        %v4812 = vunpack.c.l.b16 %v3683
        %v4813 = vunpack.c.h.b16 %v3683
        %v4814 = vunpack.c.l.b16 %v3684
        %v4815 = vunpack.c.h.b16 %v3684
        %v4816 = vunpack.c.l.b16 %v3685
        %v4817 = vunpack.c.h.b16 %v3685
        %v4818 = vunpack.c.l.b16 %v3686
        %v4819 = vunpack.c.h.b16 %v3686
        %v4820 = vunpack.c.l.b16 %v3687
        %v4821 = vunpack.c.h.b16 %v3687
        %v4822 = vunpack.c.l.b16 %v3688
        %v4823 = vunpack.c.h.b16 %v3688
        %v4824 = vunpack.c.l.b16 %v3689
        %v4825 = vunpack.c.h.b16 %v3689
        %v4826 = vunpack.c.l.b16 %v3690
        %v4827 = vunpack.c.h.b16 %v3690
        %v4828 = vunpack.c.l.b16 %v3691
        %v4829 = vunpack.c.h.b16 %v3691
        %v4830 = vunpack.c.l.b16 %v3692
        %v4831 = vunpack.c.h.b16 %v3692
        %v4832 = vunpack.c.l.b16 %v3693
        %v4833 = vunpack.c.h.b16 %v3693
        %v4834 = vunpack.c.l.b16 %v3694
        %v4835 = vunpack.c.h.b16 %v3694
        %v4836 = vunpack.c.l.b16 %v3695
        %v4837 = vunpack.c.h.b16 %v3695
        %v4838 = vunpack.c.l.b16 %v3696
        %v4839 = vunpack.c.h.b16 %v3696
        %v4840 = vunpack.c.l.b16 %v3697
        %v4841 = vunpack.c.h.b16 %v3697
        %v4842 = vunpack.c.l.b16 %v3698
        %v4843 = vunpack.c.h.b16 %v3698
        %v4844 = vunpack.c.l.b16 %v3699
        %v4845 = vunpack.c.h.b16 %v3699
        %v4846 = vunpack.c.l.b16 %v3700
        %v4847 = vunpack.c.h.b16 %v3700
        %v4848 = vunpack.c.l.b16 %v3701
        %v4849 = vunpack.c.h.b16 %v3701
        %v4850 = vunpack.c.l.b16 %v3702
        %v4851 = vunpack.c.h.b16 %v3702
        %v4852 = vunpack.c.l.b16 %v3703
        %v4853 = vunpack.c.h.b16 %v3703
        %v4854 = vunpack.c.l.b16 %v3704
        %v4855 = vunpack.c.h.b16 %v3704
        %v4856 = vunpack.c.l.b16 %v3705
        %v4857 = vunpack.c.h.b16 %v3705
        %v4858 = vunpack.c.l.b16 %v3706
        %v4859 = vunpack.c.h.b16 %v3706
        %v4860 = vunpack.c.l.b16 %v3707
        %v4861 = vunpack.c.h.b16 %v3707
        %v4862 = vunpack.c.l.b16 %v3708
        %v4863 = vunpack.c.h.b16 %v3708
        %v4864 = vunpack.c.l.b16 %v3709
        %v4865 = vunpack.c.h.b16 %v3709
        %v4866 = vunpack.c.l.b16 %v3710
        %v4867 = vunpack.c.h.b16 %v3710
        %v4868 = vunpack.c.l.b16 %v3711
        %v4869 = vunpack.c.h.b16 %v3711
        %v4870 = vunpack.c.l.b16 %v3712
        %v4871 = vunpack.c.h.b16 %v3712
        %v4872 = vunpack.c.l.b16 %v3713
        %v4873 = vunpack.c.h.b16 %v3713
        %v4874 = vunpack.c.l.b16 %v3714
        %v4875 = vunpack.c.h.b16 %v3714
        %v4876 = vunpack.c.l.b16 %v3715
        %v4877 = vunpack.c.h.b16 %v3715
        %v4878 = vunpack.c.l.b16 %v3716
        %v4879 = vunpack.c.h.b16 %v3716
        %v4880 = vunpack.c.l.b16 %v3717
        %v4881 = vunpack.c.h.b16 %v3717
        %v4882 = vunpack.c.l.b16 %v3718
        %v4883 = vunpack.c.h.b16 %v3718
        %v4884 = vunpack.c.l.b16 %v3719
        %v4885 = vunpack.c.h.b16 %v3719
        %v4886 = vunpack.c.l.b16 %v3720
        %v4887 = vunpack.c.h.b16 %v3720
        %v4888 = vunpack.c.l.b16 %v3721
        %v4889 = vunpack.c.h.b16 %v3721
        %v4890 = vunpack.c.l.b16 %v3722
        %v4891 = vunpack.c.h.b16 %v3722
        %v4892 = vunpack.c.l.b16 %v3723
        %v4893 = vunpack.c.h.b16 %v3723
        %v4894 = vunpack.c.l.b16 %v3724
        %v4895 = vunpack.c.h.b16 %v3724
        %v4896 = vunpack.c.l.b16 %v3725
        %v4897 = vunpack.c.h.b16 %v3725
        %v4898 = vunpack.c.l.b16 %v3726
        %v4899 = vunpack.c.h.b16 %v3726
        %v4900 = vunpack.c.l.b16 %v3727
        %v4901 = vunpack.c.h.b16 %v3727
        %v4902 = vunpack.c.l.b16 %v3728
        %v4903 = vunpack.c.h.b16 %v3728
        %v4904 = vunpack.c.l.b16 %v3729
        %v4905 = vunpack.c.h.b16 %v3729
        %v4906 = vunpack.c.l.b16 %v3730
        %v4907 = vunpack.c.h.b16 %v3730
        %v4908 = vunpack.c.l.b16 %v3731
        %v4909 = vunpack.c.h.b16 %v3731
        %v4910 = vunpack.c.l.b16 %v3732
        %v4911 = vunpack.c.h.b16 %v3732
        %v4912 = vunpack.c.l.b16 %v3733
        %v4913 = vunpack.c.h.b16 %v3733
        %v4914 = vunpack.c.l.b16 %v3734
        %v4915 = vunpack.c.h.b16 %v3734
        %v4916 = vunpack.c.l.b16 %v3735
        %v4917 = vunpack.c.h.b16 %v3735
        %v4918 = vunpack.c.l.b16 %v3736
        %v4919 = vunpack.c.h.b16 %v3736
        %v4920 = vunpack.c.l.b16 %v3737
        %v4921 = vunpack.c.h.b16 %v3737
        %v4922 = vunpack.c.l.b16 %v3738
        %v4923 = vunpack.c.h.b16 %v3738
        %v4924 = vunpack.c.l.b16 %v3739
        %v4925 = vunpack.c.h.b16 %v3739
        %v4926 = vunpack.c.l.b16 %v3740
        %v4927 = vunpack.c.h.b16 %v3740
        %v4928 = vunpack.c.l.b16 %v3741
        %v4929 = vunpack.c.h.b16 %v3741
        %v4930 = vunpack.c.l.b16 %v3742
        %v4931 = vunpack.c.h.b16 %v3742
        %v4932 = vunpack.c.l.b16 %v3743
        %v4933 = vunpack.c.h.b16 %v3743
        %v4934 = vunpack.c.l.b16 %v3744
        %v4935 = vunpack.c.h.b16 %v3744
        %v4936 = vunpack.c.l.b16 %v3745
        %v4937 = vunpack.c.h.b16 %v3745
        %v4938 = vunpack.c.l.b16 %v3746
        %v4939 = vunpack.c.h.b16 %v3746
        %v4940 = vunpack.c.l.b16 %v3747
        %v4941 = vunpack.c.h.b16 %v3747
        %v4942 = vunpack.c.l.b16 %v3748
        %v4943 = vunpack.c.h.b16 %v3748
        %v4944 = vunpack.c.l.b16 %v3749
        %v4945 = vunpack.c.h.b16 %v3749
        %v4946 = vunpack.c.l.b16 %v3750
        %v4947 = vunpack.c.h.b16 %v3750
        %v4948 = vunpack.c.l.b16 %v3751
        %v4949 = vunpack.c.h.b16 %v3751
        %v4950 = vunpack.c.l.b16 %v3752
        %v4951 = vunpack.c.h.b16 %v3752
        %v4952 = vunpack.c.l.b16 %v3753
        %v4953 = vunpack.c.h.b16 %v3753
        %v4954 = vunpack.c.l.b16 %v3754
        %v4955 = vunpack.c.h.b16 %v3754
        %v4956 = vunpack.c.l.b16 %v3755
        %v4957 = vunpack.c.h.b16 %v3755
        %v4958 = vunpack.c.l.b16 %v3756
        %v4959 = vunpack.c.h.b16 %v3756
        %v4960 = vunpack.c.l.b16 %v3757
        %v4961 = vunpack.c.h.b16 %v3757
        %v4962 = vunpack.c.l.b16 %v3758
        %v4963 = vunpack.c.h.b16 %v3758
        %v4964 = vunpack.c.l.b16 %v3759
        %v4965 = vunpack.c.h.b16 %v3759
        %v4966 = vunpack.c.l.b16 %v3760
        %v4967 = vunpack.c.h.b16 %v3760
        %v4968 = vunpack.c.l.b16 %v3761
        %v4969 = vunpack.c.h.b16 %v3761
        %v4970 = vunpack.c.l.b16 %v3762
        %v4971 = vunpack.c.h.b16 %v3762
        %v4972 = vunpack.c.l.b16 %v3763
        %v4973 = vunpack.c.h.b16 %v3763
        %v4974 = vunpack.c.l.b16 %v3764
        %v4975 = vunpack.c.h.b16 %v3764
        %v4976 = vunpack.c.l.b16 %v3765
        %v4977 = vunpack.c.h.b16 %v3765
        %v4978 = vunpack.c.l.b16 %v3766
        %v4979 = vunpack.c.h.b16 %v3766
        %v4980 = vunpack.c.l.b16 %v3767
        %v4981 = vunpack.c.h.b16 %v3767
        %v4982 = vunpack.c.l.b16 %v3768
        %v4983 = vunpack.c.h.b16 %v3768
        %v4984 = vunpack.c.l.b16 %v3769
        %v4985 = vunpack.c.h.b16 %v3769
        %v4986 = vunpack.c.l.b16 %v3770
        %v4987 = vunpack.c.h.b16 %v3770
        %v4988 = vunpack.c.l.b16 %v3771
        %v4989 = vunpack.c.h.b16 %v3771
        %v4990 = vunpack.c.l.b16 %v3772
        %v4991 = vunpack.c.h.b16 %v3772
        %v4992 = vunpack.c.l.b16 %v3773
        %v4993 = vunpack.c.h.b16 %v3773
        %v4994 = vunpack.c.l.b16 %v3774
        %v4995 = vunpack.c.h.b16 %v3774
        %v4996 = vunpack.c.l.b16 %v3775
        %v4997 = vunpack.c.h.b16 %v3775
        %v4998 = vunpack.c.l.b16 %v3776
        %v4999 = vunpack.c.h.b16 %v3776
        %v5000 = vunpack.c.l.b16 %v3777
        %v5001 = vunpack.c.h.b16 %v3777
        %v5002 = vunpack.c.l.b16 %v3778
        %v5003 = vunpack.c.h.b16 %v3778
        %v5004 = vunpack.c.l.b16 %v3779
        %v5005 = vunpack.c.h.b16 %v3779
        %v5006 = vunpack.c.l.b16 %v3780
        %v5007 = vunpack.c.h.b16 %v3780
        %v5008 = vunpack.c.l.b16 %v3781
        %v5009 = vunpack.c.h.b16 %v3781
        %v5010 = vunpack.c.l.b16 %v3782
        %v5011 = vunpack.c.h.b16 %v3782
        %v5012 = vunpack.c.l.b16 %v3783
        %v5013 = vunpack.c.h.b16 %v3783
        %v5014 = vunpack.c.l.b16 %v3784
        %v5015 = vunpack.c.h.b16 %v3784
        %v5016 = vunpack.c.l.b16 %v3785
        %v5017 = vunpack.c.h.b16 %v3785
        %v5018 = vunpack.c.l.b16 %v3786
        %v5019 = vunpack.c.h.b16 %v3786
        %v5020 = vunpack.c.l.b16 %v3787
        %v5021 = vunpack.c.h.b16 %v3787
        %v5022 = vunpack.c.l.b16 %v3788
        %v5023 = vunpack.c.h.b16 %v3788
        %v5024 = vunpack.c.l.b16 %v3789
        %v5025 = vunpack.c.h.b16 %v3789
        %v5026 = vunpack.c.l.b16 %v3790
        %v5027 = vunpack.c.h.b16 %v3790
        %v5028 = vunpack.c.l.b16 %v3791
        %v5029 = vunpack.c.h.b16 %v3791
        %v5030 = vunpack.c.l.b16 %v3792
        %v5031 = vunpack.c.h.b16 %v3792
        %v5032 = vunpack.c.l.b16 %v3793
        %v5033 = vunpack.c.h.b16 %v3793
        %v5034 = vunpack.c.l.b16 %v3794
        %v5035 = vunpack.c.h.b16 %v3794
        %v5036 = vunpack.c.l.b16 %v3795
        %v5037 = vunpack.c.h.b16 %v3795
        %v5038 = vunpack.c.l.b16 %v3796
        %v5039 = vunpack.c.h.b16 %v3796
        %v5040 = vunpack.c.l.b16 %v3797
        %v5041 = vunpack.c.h.b16 %v3797
        %v5042 = vunpack.c.l.b16 %v3798
        %v5043 = vunpack.c.h.b16 %v3798
        %v5044 = vunpack.c.l.b16 %v3799
        %v5045 = vunpack.c.h.b16 %v3799
        %v5046 = vunpack.c.l.b16 %v3800
        %v5047 = vunpack.c.h.b16 %v3800
        %v5048 = vunpack.c.l.b16 %v3801
        %v5049 = vunpack.c.h.b16 %v3801
        %v5050 = vunpack.c.l.b16 %v3802
        %v5051 = vunpack.c.h.b16 %v3802
        %v5052 = vunpack.c.l.b16 %v3803
        %v5053 = vunpack.c.h.b16 %v3803
        %v5054 = vunpack.c.l.b16 %v3804
        %v5055 = vunpack.c.h.b16 %v3804
        %v5056 = vunpack.c.l.b16 %v3805
        %v5057 = vunpack.c.h.b16 %v3805
        %v5058 = vunpack.c.l.b16 %v3806
        %v5059 = vunpack.c.h.b16 %v3806
        %v5060 = vunpack.c.l.b16 %v3807
        %v5061 = vunpack.c.h.b16 %v3807
        %v5062 = vunpack.c.l.b16 %v3808
        %v5063 = vunpack.c.h.b16 %v3808
        %v5064 = vunpack.c.l.b16 %v3809
        %v5065 = vunpack.c.h.b16 %v3809
        %v5066 = vunpack.c.l.b16 %v3810
        %v5067 = vunpack.c.h.b16 %v3810
        %v5068 = vunpack.c.l.b16 %v3811
        %v5069 = vunpack.c.h.b16 %v3811
        %v5070 = vunpack.c.l.b16 %v3812
        %v5071 = vunpack.c.h.b16 %v3812
        %v5072 = vunpack.c.l.b16 %v3813
        %v5073 = vunpack.c.h.b16 %v3813
        %v5074 = vunpack.c.l.b16 %v3814
        %v5075 = vunpack.c.h.b16 %v3814
        %v5076 = vunpack.c.l.b16 %v3815
        %v5077 = vunpack.c.h.b16 %v3815
        %v5078 = vunpack.c.l.b16 %v3816
        %v5079 = vunpack.c.h.b16 %v3816
        %v5080 = vunpack.c.l.b16 %v3817
        %v5081 = vunpack.c.h.b16 %v3817
        %v5082 = vunpack.c.l.b16 %v3818
        %v5083 = vunpack.c.h.b16 %v3818
        %v5084 = vunpack.c.l.b16 %v3819
        %v5085 = vunpack.c.h.b16 %v3819
        %v5086 = vunpack.c.l.b16 %v3820
        %v5087 = vunpack.c.h.b16 %v3820
        %v5088 = vunpack.c.l.b16 %v3821
        %v5089 = vunpack.c.h.b16 %v3821
        %v5090 = vunpack.c.l.b16 %v3822
        %v5091 = vunpack.c.h.b16 %v3822
        %v5092 = vunpack.c.l.b16 %v3823
        %v5093 = vunpack.c.h.b16 %v3823
        %v5094 = vunpack.c.l.b16 %v3824
        %v5095 = vunpack.c.h.b16 %v3824
        %v5096 = vunpack.c.l.b16 %v3825
        %v5097 = vunpack.c.h.b16 %v3825
        %v5098 = vunpack.c.l.b16 %v3826
        %v5099 = vunpack.c.h.b16 %v3826
        %v5100 = vunpack.c.l.b16 %v3827
        %v5101 = vunpack.c.h.b16 %v3827
        %v5102 = vunpack.c.l.b16 %v3828
        %v5103 = vunpack.c.h.b16 %v3828
        %v5104 = vunpack.c.l.b16 %v3829
        %v5105 = vunpack.c.h.b16 %v3829
        %v5106 = vunpack.c.l.b16 %v3830
        %v5107 = vunpack.c.h.b16 %v3830
        %v5108 = vunpack.c.l.b16 %v3831
        %v5109 = vunpack.c.h.b16 %v3831
        %v5110 = vunpack.c.l.b16 %v3832
        %v5111 = vunpack.c.h.b16 %v3832
        %v5112 = vunpack.c.l.b16 %v3833
        %v5113 = vunpack.c.h.b16 %v3833
        %v5114 = vunpack.c.l.b16 %v3834
        %v5115 = vunpack.c.h.b16 %v3834
        %v5116 = vunpack.c.l.b16 %v3835
        %v5117 = vunpack.c.h.b16 %v3835
        %v5118 = vunpack.c.l.b16 %v3836
        %v5119 = vunpack.c.h.b16 %v3836
        %v5120 = vunpack.c.l.b16 %v3837
        %v5121 = vunpack.c.h.b16 %v3837
        %v5122 = vunpack.c.l.b16 %v3838
        %v5123 = vunpack.c.h.b16 %v3838
        %v5124 = vunpack.c.l.b16 %v3839
        %v5125 = vunpack.c.h.b16 %v3839
        %v5126 = vunpack.c.l.b16 %v3840
        %v5127 = vunpack.c.h.b16 %v3840
        %v5128 = vunpack.c.l.b16 %v3841
        %v5129 = vunpack.c.h.b16 %v3841
        %v5130 = vunpack.c.l.b16 %v3842
        %v5131 = vunpack.c.h.b16 %v3842
        %v5132 = vunpack.c.l.b16 %v3843
        %v5133 = vunpack.c.h.b16 %v3843
        %v5134 = vunpack.c.l.b16 %v3844
        %v5135 = vunpack.c.h.b16 %v3844
        %v5136 = vunpack.c.l.b16 %v3845
        %v5137 = vunpack.c.h.b16 %v3845
        %v5138 = vunpack.c.l.b16 %v3846
        %v5139 = vunpack.c.h.b16 %v3846
        %v5140 = vunpack.c.l.b16 %v3847
        %v5141 = vunpack.c.h.b16 %v3847
        %v5142 = vunpack.c.l.b16 %v3848
        %v5143 = vunpack.c.h.b16 %v3848
        %v5144 = vunpack.c.l.b16 %v3849
        %v5145 = vunpack.c.h.b16 %v3849
        %v5146 = vunpack.c.l.b16 %v3850
        %v5147 = vunpack.c.h.b16 %v3850
        %v5148 = vunpack.c.l.b16 %v3851
        %v5149 = vunpack.c.h.b16 %v3851
        %v5150 = vunpack.c.l.b16 %v3852
        %v5151 = vunpack.c.h.b16 %v3852
        %v5152 = vunpack.c.l.b16 %v3853
        %v5153 = vunpack.c.h.b16 %v3853
        %v5154 = vunpack.c.l.b16 %v3854
        %v5155 = vunpack.c.h.b16 %v3854
        %v5156 = vunpack.c.l.b16 %v3855
        %v5157 = vunpack.c.h.b16 %v3855
        %v5158 = vunpack.c.l.b16 %v3856
        %v5159 = vunpack.c.h.b16 %v3856
        %v5160 = vunpack.c.l.b16 %v3857
        %v5161 = vunpack.c.h.b16 %v3857
        %v5162 = vunpack.c.l.b16 %v3858
        %v5163 = vunpack.c.h.b16 %v3858
        %v5164 = vunpack.c.l.b16 %v3859
        %v5165 = vunpack.c.h.b16 %v3859
        %v5166 = vunpack.c.l.b16 %v3860
        %v5167 = vunpack.c.h.b16 %v3860
        %v5168 = vunpack.c.l.b16 %v3861
        %v5169 = vunpack.c.h.b16 %v3861
        %v5170 = vunpack.c.l.b16 %v3862
        %v5171 = vunpack.c.h.b16 %v3862
        %v5172 = vunpack.c.l.b16 %v3863
        %v5173 = vunpack.c.h.b16 %v3863
        %v5174 = vunpack.c.l.b16 %v3864
        %v5175 = vunpack.c.h.b16 %v3864
        %v5176 = vunpack.c.l.b16 %v3865
        %v5177 = vunpack.c.h.b16 %v3865
        %v5178 = vunpack.c.l.b16 %v3866
        %v5179 = vunpack.c.h.b16 %v3866
        %v5180 = vunpack.c.l.b16 %v3867
        %v5181 = vunpack.c.h.b16 %v3867
        %v5182 = vunpack.c.l.b16 %v3868
        %v5183 = vunpack.c.h.b16 %v3868
        %v5184 = vunpack.c.l.b16 %v3869
        %v5185 = vunpack.c.h.b16 %v3869
        %v5186 = vunpack.c.l.b16 %v3870
        %v5187 = vunpack.c.h.b16 %v3870
        %v5188 = vunpack.c.l.b16 %v3871
        %v5189 = vunpack.c.h.b16 %v3871
        %v5190 = vunpack.c.l.b16 %v3872
        %v5191 = vunpack.c.h.b16 %v3872
        %v5192 = vunpack.c.l.b16 %v3873
        %v5193 = vunpack.c.h.b16 %v3873
        %v5194 = vunpack.c.l.b16 %v3874
        %v5195 = vunpack.c.h.b16 %v3874
        %v5196 = vunpack.c.l.b16 %v3875
        %v5197 = vunpack.c.h.b16 %v3875
        %v5198 = vunpack.c.l.b16 %v3876
        %v5199 = vunpack.c.h.b16 %v3876
        %v5200 = vunpack.c.l.b16 %v3877
        %v5201 = vunpack.c.h.b16 %v3877
        %v5202 = vunpack.c.l.b16 %v3878
        %v5203 = vunpack.c.h.b16 %v3878
        %v5204 = vunpack.c.l.b16 %v3879
        %v5205 = vunpack.c.h.b16 %v3879
        %v5206 = vunpack.c.l.b16 %v3880
        %v5207 = vunpack.c.h.b16 %v3880
        %v5208 = vunpack.c.l.b16 %v3881
        %v5209 = vunpack.c.h.b16 %v3881
        %v5210 = vunpack.c.l.b16 %v3882
        %v5211 = vunpack.c.h.b16 %v3882
        %v5212 = vunpack.c.l.b16 %v3883
        %v5213 = vunpack.c.h.b16 %v3883
        %v5214 = vunpack.c.l.b16 %v3884
        %v5215 = vunpack.c.h.b16 %v3884
        %v5216 = vunpack.c.l.b16 %v3885
        %v5217 = vunpack.c.h.b16 %v3885
        %v5218 = vunpack.c.l.b16 %v3886
        %v5219 = vunpack.c.h.b16 %v3886
        %v5220 = vunpack.c.l.b16 %v3887
        %v5221 = vunpack.c.h.b16 %v3887
        %v5222 = vunpack.c.l.b16 %v3888
        %v5223 = vunpack.c.h.b16 %v3888
        %v5224 = vunpack.c.l.b16 %v3889
        %v5225 = vunpack.c.h.b16 %v3889
        %v5226 = vunpack.c.l.b16 %v3890
        %v5227 = vunpack.c.h.b16 %v3890
        %v5228 = vunpack.c.l.b16 %v3891
        %v5229 = vunpack.c.h.b16 %v3891
        %v5230 = vunpack.c.l.b16 %v3892
        %v5231 = vunpack.c.h.b16 %v3892
        %v5232 = vunpack.c.l.b16 %v3893
        %v5233 = vunpack.c.h.b16 %v3893
        %v5234 = vunpack.c.l.b16 %v3894
        %v5235 = vunpack.c.h.b16 %v3894
        %v5236 = vunpack.c.l.b16 %v3895
        %v5237 = vunpack.c.h.b16 %v3895
        %v5238 = vunpack.c.l.b16 %v3896
        %v5239 = vunpack.c.h.b16 %v3896
        %v5240 = vunpack.c.l.b16 %v3897
        %v5241 = vunpack.c.h.b16 %v3897
        %v5242 = vunpack.c.l.b16 %v3898
        %v5243 = vunpack.c.h.b16 %v3898
        %v5244 = vunpack.c.l.b16 %v3899
        %v5245 = vunpack.c.h.b16 %v3899
        %v5246 = vunpack.c.l.b16 %v3900
        %v5247 = vunpack.c.h.b16 %v3900
        %v5248 = vunpack.c.l.b16 %v3901
        %v5249 = vunpack.c.h.b16 %v3901
        %v5250 = vunpack.c.l.b16 %v3902
        %v5251 = vunpack.c.h.b16 %v3902
        %v5252 = vunpack.c.l.b16 %v3903
        %v5253 = vunpack.c.h.b16 %v3903
        %v5254 = vunpack.c.l.b16 %v3904
        %v5255 = vunpack.c.h.b16 %v3904
        %v5256 = vunpack.c.l.b16 %v3905
        %v5257 = vunpack.c.h.b16 %v3905
        %v5258 = vunpack.c.l.b16 %v3906
        %v5259 = vunpack.c.h.b16 %v3906
        %v5260 = vunpack.c.l.b16 %v3907
        %v5261 = vunpack.c.h.b16 %v3907
        %v5262 = vunpack.c.l.b16 %v3908
        %v5263 = vunpack.c.h.b16 %v3908
        %v5264 = vunpack.c.l.b16 %v3909
        %v5265 = vunpack.c.h.b16 %v3909
        %v5266 = vunpack.c.l.b16 %v3910
        %v5267 = vunpack.c.h.b16 %v3910
        %v5268 = vunpack.c.l.b16 %v3911
        %v5269 = vunpack.c.h.b16 %v3911
        %v5270 = vunpack.c.l.b16 %v3912
        %v5271 = vunpack.c.h.b16 %v3912
        %v5272 = vunpack.c.l.b16 %v3913
        %v5273 = vunpack.c.h.b16 %v3913
        %v5274 = vunpack.c.l.b16 %v3914
        %v5275 = vunpack.c.h.b16 %v3914
        %v5276 = vunpack.c.l.b16 %v3915
        %v5277 = vunpack.c.h.b16 %v3915
        %v5278 = vunpack.c.l.b16 %v3916
        %v5279 = vunpack.c.h.b16 %v3916
        %v5280 = vunpack.c.l.b16 %v3917
        %v5281 = vunpack.c.h.b16 %v3917
        %v5282 = vunpack.c.l.b16 %v3918
        %v5283 = vunpack.c.h.b16 %v3918
        %v5284 = vunpack.c.l.b16 %v3919
        %v5285 = vunpack.c.h.b16 %v3919
        %v5286 = vunpack.c.l.b16 %v3920
        %v5287 = vunpack.c.h.b16 %v3920
        %v5288 = vunpack.c.l.b16 %v3921
        %v5289 = vunpack.c.h.b16 %v3921
        %v5290 = vunpack.c.l.b16 %v3922
        %v5291 = vunpack.c.h.b16 %v3922
        %v5292 = vunpack.c.l.b16 %v3923
        %v5293 = vunpack.c.h.b16 %v3923
        %v5294 = vunpack.c.l.b16 %v3924
        %v5295 = vunpack.c.h.b16 %v3924
        %v5296 = vunpack.c.l.b16 %v3925
        %v5297 = vunpack.c.h.b16 %v3925
        %v5298 = vunpack.c.l.b16 %v3926
        %v5299 = vunpack.c.h.b16 %v3926
        %v5300 = vunpack.c.l.b16 %v3927
        %v5301 = vunpack.c.h.b16 %v3927
        %v5302 = vunpack.c.l.b16 %v3928
        %v5303 = vunpack.c.h.b16 %v3928
        %v5304 = vunpack.c.l.b16 %v3929
        %v5305 = vunpack.c.h.b16 %v3929
        %v5306 = vunpack.c.l.b16 %v3930
        %v5307 = vunpack.c.h.b16 %v3930
        %v5308 = vunpack.c.l.b16 %v3931
        %v5309 = vunpack.c.h.b16 %v3931
        %v5310 = vunpack.c.l.b16 %v3932
        %v5311 = vunpack.c.h.b16 %v3932
        %v5312 = vunpack.c.l.b16 %v3933
        %v5313 = vunpack.c.h.b16 %v3933
        %v5314 = vunpack.c.l.b16 %v3934
        %v5315 = vunpack.c.h.b16 %v3934
        %v5316 = vunpack.c.l.b16 %v3935
        %v5317 = vunpack.c.h.b16 %v3935
        %v5318 = vunpack.c.l.b16 %v3936
        %v5319 = vunpack.c.h.b16 %v3936
        %v5320 = vunpack.c.l.b16 %v3937
        %v5321 = vunpack.c.h.b16 %v3937
        %v5322 = vunpack.c.l.b16 %v3938
        %v5323 = vunpack.c.h.b16 %v3938
        %v5324 = vunpack.c.l.b16 %v3939
        %v5325 = vunpack.c.h.b16 %v3939
        %v5326 = vunpack.c.l.b16 %v3940
        %v5327 = vunpack.c.h.b16 %v3940
        %v5328 = vunpack.c.l.b16 %v3941
        %v5329 = vunpack.c.h.b16 %v3941
        %v5330 = vunpack.c.l.b16 %v3942
        %v5331 = vunpack.c.h.b16 %v3942
        %v5332 = vunpack.c.l.b16 %v3943
        %v5333 = vunpack.c.h.b16 %v3943
        %v5334 = vunpack.c.l.b16 %v3944
        %v5335 = vunpack.c.h.b16 %v3944
        %v5336 = vunpack.c.l.b16 %v3945
        %v5337 = vunpack.c.h.b16 %v3945
        %v5338 = vunpack.c.l.b16 %v3946
        %v5339 = vunpack.c.h.b16 %v3946
        %v5340 = vunpack.c.l.b16 %v3947
        %v5341 = vunpack.c.h.b16 %v3947
        %v5342 = vunpack.c.l.b16 %v3948
        %v5343 = vunpack.c.h.b16 %v3948
        %v5344 = vunpack.c.l.b16 %v3949
        %v5345 = vunpack.c.h.b16 %v3949
        %v5346 = vunpack.c.l.b16 %v3950
        %v5347 = vunpack.c.h.b16 %v3950
        %v5348 = vunpack.c.l.b16 %v3951
        %v5349 = vunpack.c.h.b16 %v3951
        %v5350 = vunpack.c.l.b16 %v3952
        %v5351 = vunpack.c.h.b16 %v3952
        %v5352 = vunpack.c.l.b16 %v3953
        %v5353 = vunpack.c.h.b16 %v3953
        %v5354 = vunpack.c.l.b16 %v3954
        %v5355 = vunpack.c.h.b16 %v3954
        %v5356 = vunpack.c.l.b16 %v3955
        %v5357 = vunpack.c.h.b16 %v3955
        %v5358 = vunpack.c.l.b16 %v3956
        %v5359 = vunpack.c.h.b16 %v3956
        %v5360 = vunpack.c.l.b16 %v3957
        %v5361 = vunpack.c.h.b16 %v3957
        %v5362 = vunpack.c.l.b16 %v3958
        %v5363 = vunpack.c.h.b16 %v3958
        %v5364 = vunpack.c.l.b16 %v3959
        %v5365 = vunpack.c.h.b16 %v3959
        %v5366 = vunpack.c.l.b16 %v3960
        %v5367 = vunpack.c.h.b16 %v3960
        %v5368 = vunpack.c.l.b16 %v3961
        %v5369 = vunpack.c.h.b16 %v3961
        %v5370 = vunpack.c.l.b16 %v3962
        %v5371 = vunpack.c.h.b16 %v3962
        %v5372 = vunpack.c.l.b16 %v3963
        %v5373 = vunpack.c.h.b16 %v3963
        %v5374 = vunpack.c.l.b16 %v3964
        %v5375 = vunpack.c.h.b16 %v3964
        %v5376 = vunpack.c.l.b16 %v3965
        %v5377 = vunpack.c.h.b16 %v3965
        %v5378 = vunpack.c.l.b16 %v3966
        %v5379 = vunpack.c.h.b16 %v3966
        %v5380 = vunpack.c.l.b16 %v3967
        %v5381 = vunpack.c.h.b16 %v3967
        %v5382 = vunpack.c.l.b16 %v3968
        %v5383 = vunpack.c.h.b16 %v3968
        %v5384 = vunpack.c.l.b16 %v3969
        %v5385 = vunpack.c.h.b16 %v3969
        %v5386 = vunpack.c.l.b16 %v3970
        %v5387 = vunpack.c.h.b16 %v3970
        %v5388 = vunpack.c.l.b16 %v3971
        %v5389 = vunpack.c.h.b16 %v3971
        %v5390 = vunpack.c.l.b16 %v3972
        %v5391 = vunpack.c.h.b16 %v3972
        %v5392 = vunpack.c.l.b16 %v3973
        %v5393 = vunpack.c.h.b16 %v3973
        %v5394 = vunpack.c.l.b16 %v3974
        %v5395 = vunpack.c.h.b16 %v3974
        %v5396 = vunpack.c.l.b16 %v3975
        %v5397 = vunpack.c.h.b16 %v3975
        %v5398 = vunpack.c.l.b16 %v3976
        %v5399 = vunpack.c.h.b16 %v3976
        %v5400 = vunpack.c.l.b16 %v3977
        %v5401 = vunpack.c.h.b16 %v3977
        %v5402 = vunpack.c.l.b16 %v3978
        %v5403 = vunpack.c.h.b16 %v3978
        %v5404 = vunpack.c.l.b16 %v3979
        %v5405 = vunpack.c.h.b16 %v3979
        %v5406 = vunpack.c.l.b16 %v3980
        %v5407 = vunpack.c.h.b16 %v3980
        %v5408 = vunpack.c.l.b16 %v3981
        %v5409 = vunpack.c.h.b16 %v3981
        %v5410 = vunpack.c.l.b16 %v3982
        %v5411 = vunpack.c.h.b16 %v3982
        %v5412 = vunpack.c.l.b16 %v3983
        %v5413 = vunpack.c.h.b16 %v3983
        %v5414 = vunpack.c.l.b16 %v3984
        %v5415 = vunpack.c.h.b16 %v3984
        %v5416 = vunpack.c.l.b16 %v3985
        %v5417 = vunpack.c.h.b16 %v3985
        %v5418 = vunpack.c.l.b16 %v3986
        %v5419 = vunpack.c.h.b16 %v3986
        %v5420 = vunpack.c.l.b16 %v3987
        %v5421 = vunpack.c.h.b16 %v3987
        %v5422 = vunpack.c.l.b16 %v3988
        %v5423 = vunpack.c.h.b16 %v3988
        %v5424 = vunpack.c.l.b16 %v3989
        %v5425 = vunpack.c.h.b16 %v3989
        %v5426 = vunpack.c.l.b16 %v3990
        %v5427 = vunpack.c.h.b16 %v3990
        %v5428 = vunpack.c.l.b16 %v3991
        %v5429 = vunpack.c.h.b16 %v3991
        %v5430 = vunpack.c.l.b16 %v3992
        %v5431 = vunpack.c.h.b16 %v3992
        %v5432 = vunpack.c.l.b16 %v3993
        %v5433 = vunpack.c.h.b16 %v3993
        %v5434 = vunpack.c.l.b16 %v3994
        %v5435 = vunpack.c.h.b16 %v3994
        %v5436 = vunpack.c.l.b16 %v3995
        %v5437 = vunpack.c.h.b16 %v3995
        %v5438 = vunpack.c.l.b16 %v3996
        %v5439 = vunpack.c.h.b16 %v3996
        %v5440 = vunpack.c.l.b16 %v3997
        %v5441 = vunpack.c.h.b16 %v3997
        %v5442 = vunpack.c.l.b16 %v3998
        %v5443 = vunpack.c.h.b16 %v3998
        %v5444 = vunpack.c.l.b16 %v3999
        %v5445 = vunpack.c.h.b16 %v3999
        %v5446 = vunpack.c.l.b16 %v4000
        %v5447 = vunpack.c.h.b16 %v4000
        %v5448 = vunpack.c.l.b16 %v4001
        %v5449 = vunpack.c.h.b16 %v4001
        %v5450 = vunpack.c.l.b16 %v4002
        %v5451 = vunpack.c.h.b16 %v4002
        %v5452 = vunpack.c.l.b16 %v4003
        %v5453 = vunpack.c.h.b16 %v4003
        %v5454 = vunpack.c.l.b16 %v4004
        %v5455 = vunpack.c.h.b16 %v4004
        %v5456 = vunpack.c.l.b16 %v4005
        %v5457 = vunpack.c.h.b16 %v4005
        %v5458 = vunpack.c.l.b16 %v4006
        %v5459 = vunpack.c.h.b16 %v4006
        %v5460 = vunpack.c.l.b16 %v4007
        %v5461 = vunpack.c.h.b16 %v4007
        %v5462 = vunpack.c.l.b16 %v4008
        %v5463 = vunpack.c.h.b16 %v4008
        %v5464 = vunpack.c.l.b16 %v4009
        %v5465 = vunpack.c.h.b16 %v4009
        %v5466 = vunpack.c.l.b16 %v4010
        %v5467 = vunpack.c.h.b16 %v4010
        %v5468 = vunpack.c.l.b16 %v4011
        %v5469 = vunpack.c.h.b16 %v4011
        %v5470 = vunpack.c.l.b16 %v4012
        %v5471 = vunpack.c.h.b16 %v4012
        %v5472 = vunpack.c.l.b16 %v4013
        %v5473 = vunpack.c.h.b16 %v4013
        %v5474 = vunpack.c.l.b16 %v4014
        %v5475 = vunpack.c.h.b16 %v4014
        %v5476 = vunpack.c.l.b16 %v4015
        %v5477 = vunpack.c.h.b16 %v4015
        %v5478 = vunpack.c.l.b16 %v4016
        %v5479 = vunpack.c.h.b16 %v4016
        %v5480 = vunpack.c.l.b16 %v4017
        %v5481 = vunpack.c.h.b16 %v4017
        %v5482 = vunpack.c.l.b16 %v4018
        %v5483 = vunpack.c.h.b16 %v4018
        %v5484 = vunpack.c.l.b16 %v4019
        %v5485 = vunpack.c.h.b16 %v4019
        %v5486 = vunpack.c.l.b16 %v4020
        %v5487 = vunpack.c.h.b16 %v4020
        %v5488 = vunpack.c.l.b16 %v4021
        %v5489 = vunpack.c.h.b16 %v4021
        %v5490 = vunpack.c.l.b16 %v4022
        %v5491 = vunpack.c.h.b16 %v4022
        %v5492 = vunpack.c.l.b16 %v4023
        %v5493 = vunpack.c.h.b16 %v4023
        %v5494 = vunpack.c.l.b16 %v4024
        %v5495 = vunpack.c.h.b16 %v4024
        %v5496 = vunpack.c.l.b16 %v4025
        %v5497 = vunpack.c.h.b16 %v4025
        %v5498 = vunpack.c.l.b16 %v4026
        %v5499 = vunpack.c.h.b16 %v4026
        %v5500 = vunpack.c.l.b16 %v4027
        %v5501 = vunpack.c.h.b16 %v4027
        %v5502 = vunpack.c.l.b16 %v4028
        %v5503 = vunpack.c.h.b16 %v4028
        %v5504 = vunpack.c.l.b16 %v4029
        %v5505 = vunpack.c.h.b16 %v4029
        %v5506 = vunpack.c.l.b16 %v4030
        %v5507 = vunpack.c.h.b16 %v4030
        %v5508 = vunpack.c.l.b16 %v4031
        %v5509 = vunpack.c.h.b16 %v4031
        %v5510 = vunpack.c.l.b16 %v4032
        %v5511 = vunpack.c.h.b16 %v4032
        %v5512 = vunpack.c.l.b16 %v4033
        %v5513 = vunpack.c.h.b16 %v4033
        %v5514 = vunpack.c.l.b16 %v4034
        %v5515 = vunpack.c.h.b16 %v4034
        %v5516 = vunpack.c.l.b16 %v4035
        %v5517 = vunpack.c.h.b16 %v4035
        %v5518 = vunpack.c.l.b16 %v4036
        %v5519 = vunpack.c.h.b16 %v4036
        %v5520 = vunpack.c.l.b16 %v4037
        %v5521 = vunpack.c.h.b16 %v4037
        %v5522 = vunpack.c.l.b16 %v4038
        %v5523 = vunpack.c.h.b16 %v4038
        %v5524 = vunpack.c.l.b16 %v4039
        %v5525 = vunpack.c.h.b16 %v4039
        %v5526 = vunpack.c.l.b16 %v4040
        %v5527 = vunpack.c.h.b16 %v4040
        %v5528 = vunpack.c.l.b16 %v4041
        %v5529 = vunpack.c.h.b16 %v4041
        %v5530 = vunpack.c.l.b16 %v4042
        %v5531 = vunpack.c.h.b16 %v4042
        %v5532 = vunpack.c.l.b16 %v4043
        %v5533 = vunpack.c.h.b16 %v4043
        %v5534 = vunpack.c.l.b16 %v4044
        %v5535 = vunpack.c.h.b16 %v4044
        %v5536 = vunpack.c.l.b16 %v4045
        %v5537 = vunpack.c.h.b16 %v4045
        %v5538 = vunpack.c.l.b16 %v4046
        %v5539 = vunpack.c.h.b16 %v4046
        %v5540 = vunpack.c.l.b16 %v4047
        %v5541 = vunpack.c.h.b16 %v4047
        %v5542 = vunpack.c.l.b16 %v4048
        %v5543 = vunpack.c.h.b16 %v4048
        %v5544 = vunpack.c.l.b16 %v4049
        %v5545 = vunpack.c.h.b16 %v4049
        %v5546 = vunpack.c.l.b16 %v4050
        %v5547 = vunpack.c.h.b16 %v4050
        %v5548 = vunpack.c.l.b16 %v4051
        %v5549 = vunpack.c.h.b16 %v4051
        %v5550 = vunpack.c.l.b16 %v4052
        %v5551 = vunpack.c.h.b16 %v4052
        %v5552 = vunpack.c.l.b16 %v4053
        %v5553 = vunpack.c.h.b16 %v4053
        %v5554 = vunpack.c.l.b16 %v4054
        %v5555 = vunpack.c.h.b16 %v4054
        %v5556 = vunpack.c.l.b16 %v4055
        %v5557 = vunpack.c.h.b16 %v4055
        %v5558 = vunpack.c.l.b16 %v4056
        %v5559 = vunpack.c.h.b16 %v4056
        %v5560 = vunpack.c.l.b16 %v4057
        %v5561 = vunpack.c.h.b16 %v4057
        %v5562 = vunpack.c.l.b16 %v4058
        %v5563 = vunpack.c.h.b16 %v4058
        %v5564 = vunpack.c.l.b16 %v4059
        %v5565 = vunpack.c.h.b16 %v4059
        %v5566 = vunpack.c.l.b16 %v4060
        %v5567 = vunpack.c.h.b16 %v4060
        %v5568 = vunpack.c.l.b16 %v4061
        %v5569 = vunpack.c.h.b16 %v4061
        %v5570 = vunpack.c.l.b16 %v4062
        %v5571 = vunpack.c.h.b16 %v4062
        %v5572 = vunpack.c.l.b16 %v4063
        %v5573 = vunpack.c.h.b16 %v4063
        %v5574 = vunpack.c.l.b16 %v4064
        %v5575 = vunpack.c.h.b16 %v4064
        %v5576 = vunpack.c.l.b16 %v4065
        %v5577 = vunpack.c.h.b16 %v4065
        %v5578 = vunpack.c.l.b16 %v4066
        %v5579 = vunpack.c.h.b16 %v4066
        %v5580 = vunpack.c.l.b16 %v4067
        %v5581 = vunpack.c.h.b16 %v4067
        %v5582 = vunpack.c.l.b16 %v4068
        %v5583 = vunpack.c.h.b16 %v4068
        %v5584 = vunpack.c.l.b16 %v4069
        %v5585 = vunpack.c.h.b16 %v4069
        %v5586 = vunpack.c.l.b16 %v4070
        %v5587 = vunpack.c.h.b16 %v4070
        %v5588 = vunpack.c.l.b16 %v4071
        %v5589 = vunpack.c.h.b16 %v4071
        %v5590 = vunpack.c.l.b16 %v4072
        %v5591 = vunpack.c.h.b16 %v4072
        %v5592 = vunpack.c.l.b16 %v4073
        %v5593 = vunpack.c.h.b16 %v4073
        %v5594 = vunpack.c.l.b16 %v4074
        %v5595 = vunpack.c.h.b16 %v4074
        %v5596 = vunpack.c.l.b16 %v4075
        %v5597 = vunpack.c.h.b16 %v4075
        %v5598 = vunpack.c.l.b16 %v4076
        %v5599 = vunpack.c.h.b16 %v4076
        %v5600 = vunpack.c.l.b16 %v4077
        %v5601 = vunpack.c.h.b16 %v4077
        %v5602 = vunpack.c.l.b16 %v4078
        %v5603 = vunpack.c.h.b16 %v4078
        %v5604 = vunpack.c.l.b16 %v4079
        %v5605 = vunpack.c.h.b16 %v4079
        %v5606 = vunpack.c.l.b16 %v4080
        %v5607 = vunpack.c.h.b16 %v4080
        %v5608 = vunpack.c.l.b16 %v4081
        %v5609 = vunpack.c.h.b16 %v4081
        %v5610 = vunpack.c.l.b16 %v4082
        %v5611 = vunpack.c.h.b16 %v4082
        %v5612 = vunpack.c.l.b16 %v4083
        %v5613 = vunpack.c.h.b16 %v4083
        %v5614 = vunpack.c.l.b16 %v4084
        %v5615 = vunpack.c.h.b16 %v4084
        %v5616 = vunpack.c.l.b16 %v4085
        %v5617 = vunpack.c.h.b16 %v4085
        %v5618 = vunpack.c.l.b16 %v4086
        %v5619 = vunpack.c.h.b16 %v4086
        %v5620 = vunpack.c.l.b16 %v4087
        %v5621 = vunpack.c.h.b16 %v4087
        %v5622 = vunpack.c.l.b16 %v4088
        %v5623 = vunpack.c.h.b16 %v4088
        %v5624 = vunpack.c.l.b16 %v4089
        %v5625 = vunpack.c.h.b16 %v4089
        %v5626 = vunpack.c.l.b16 %v4090
        %v5627 = vunpack.c.h.b16 %v4090
        %v5628 = vunpack.c.l.b16 %v4091
        %v5629 = vunpack.c.h.b16 %v4091
        %v5630 = vunpack.c.l.b16 %v4092
        %v5631 = vunpack.c.h.b16 %v4092
        %v5632 = vunpack.c.l.b16 %v4093
        %v5633 = vunpack.c.h.b16 %v4093
        %v5634 = vunpack.c.l.b16 %v4094
        %v5635 = vunpack.c.h.b16 %v4094
        %v5636 = vunpack.c.l.b16 %v4095
        %v5637 = vunpack.c.h.b16 %v4095
        %v5638 = vunpack.c.l.b16 %v4096
        %v5639 = vunpack.c.h.b16 %v4096
        %v5640 = vunpack.c.l.b16 %v4097
        %v5641 = vunpack.c.h.b16 %v4097
        %v5642 = vunpack.c.l.b16 %v4098
        %v5643 = vunpack.c.h.b16 %v4098
        %v5644 = vunpack.c.l.b16 %v4099
        %v5645 = vunpack.c.h.b16 %v4099
        %v5646 = vunpack.c.l.b16 %v4100
        %v5647 = vunpack.c.h.b16 %v4100
        %v5648 = vunpack.c.l.b16 %v4101
        %v5649 = vunpack.c.h.b16 %v4101
        %v5650 = vunpack.c.l.b16 %v4102
        %v5651 = vunpack.c.h.b16 %v4102
        %v5652 = vunpack.c.l.b16 %v4103
        %v5653 = vunpack.c.h.b16 %v4103
        %v5654 = vunpack.c.l.b16 %v4104
        %v5655 = vunpack.c.h.b16 %v4104
        %v5656 = vunpack.c.l.b16 %v4105
        %v5657 = vunpack.c.h.b16 %v4105
        %v5658 = vunpack.c.l.b16 %v4106
        %v5659 = vunpack.c.h.b16 %v4106
        %v5660 = vunpack.c.l.b16 %v4107
        %v5661 = vunpack.c.h.b16 %v4107
        %v5662 = vunpack.c.l.b16 %v4108
        %v5663 = vunpack.c.h.b16 %v4108
        %v5664 = vunpack.c.l.b16 %v4109
        %v5665 = vunpack.c.h.b16 %v4109
        %v5666 = vunpack.c.l.b16 %v4110
        %v5667 = vunpack.c.h.b16 %v4110
        %v5668 = vunpack.c.l.b16 %v4111
        %v5669 = vunpack.c.h.b16 %v4111
        %v5670 = vunpack.c.l.b16 %v4112
        %v5671 = vunpack.c.h.b16 %v4112
        %v5672 = vunpack.c.l.b16 %v4113
        %v5673 = vunpack.c.h.b16 %v4113
        %v5674 = vunpack.c.l.b16 %v4114
        %v5675 = vunpack.c.h.b16 %v4114
        %v5676 = vunpack.c.l.b16 %v4115
        %v5677 = vunpack.c.h.b16 %v4115
        %v5678 = vunpack.c.l.b16 %v4116
        %v5679 = vunpack.c.h.b16 %v4116
        %v5680 = vunpack.c.l.b16 %v4117
        %v5681 = vunpack.c.h.b16 %v4117
        %v5682 = vunpack.c.l.b16 %v4118
        %v5683 = vunpack.c.h.b16 %v4118
        %v5684 = vunpack.c.l.b16 %v4119
        %v5685 = vunpack.c.h.b16 %v4119
        %v5686 = vunpack.c.l.b16 %v4120
        %v5687 = vunpack.c.h.b16 %v4120
        %v5688 = vunpack.c.l.b16 %v4121
        %v5689 = vunpack.c.h.b16 %v4121
        %v5690 = vunpack.c.l.b16 %v4122
        %v5691 = vunpack.c.h.b16 %v4122
        %v5692 = vunpack.c.l.b16 %v4123
        %v5693 = vunpack.c.h.b16 %v4123
        %v5694 = vunpack.c.l.b16 %v4124
        %v5695 = vunpack.c.h.b16 %v4124
        %v5696 = vunpack.c.l.b16 %v4125
        %v5697 = vunpack.c.h.b16 %v4125
        %v5698 = vunpack.c.l.b16 %v4126
        %v5699 = vunpack.c.h.b16 %v4126
        %v5700 = vunpack.c.l.b16 %v4127
        %v5701 = vunpack.c.h.b16 %v4127
        %v5702 = vunpack.c.l.b16 %v4128
        %v5703 = vunpack.c.h.b16 %v4128
        %v5704 = vunpack.c.l.b16 %v4129
        %v5705 = vunpack.c.h.b16 %v4129
        %v5706 = vunpack.c.l.b16 %v4130
        %v5707 = vunpack.c.h.b16 %v4130
        %v5708 = vunpack.c.l.b16 %v4131
        %v5709 = vunpack.c.h.b16 %v4131
        %v5710 = vunpack.c.l.b16 %v4132
        %v5711 = vunpack.c.h.b16 %v4132
        %v5712 = vunpack.c.l.b16 %v4133
        %v5713 = vunpack.c.h.b16 %v4133
        %v5714 = vunpack.c.l.b16 %v4134
        %v5715 = vunpack.c.h.b16 %v4134
        %v5716 = vunpack.c.l.b16 %v4135
        %v5717 = vunpack.c.h.b16 %v4135
        %v5718 = vunpack.c.l.b16 %v4136
        %v5719 = vunpack.c.h.b16 %v4136
        %v5720 = vunpack.c.l.b16 %v4137
        %v5721 = vunpack.c.h.b16 %v4137
        %v5722 = vunpack.c.l.b16 %v4138
        %v5723 = vunpack.c.h.b16 %v4138
        %v5724 = vunpack.c.l.b16 %v4139
        %v5725 = vunpack.c.h.b16 %v4139
        %v5726 = vunpack.c.l.b16 %v4140
        %v5727 = vunpack.c.h.b16 %v4140
        %v5728 = vunpack.c.l.b16 %v4141
        %v5729 = vunpack.c.h.b16 %v4141
        %v5730 = vunpack.c.l.b16 %v4142
        %v5731 = vunpack.c.h.b16 %v4142
        %v5732 = vunpack.c.l.b16 %v4143
        %v5733 = vunpack.c.h.b16 %v4143
        %v5734 = vunpack.c.l.b16 %v4144
        %v5735 = vunpack.c.h.b16 %v4144
        %v5736 = vunpack.c.l.b16 %v4145
        %v5737 = vunpack.c.h.b16 %v4145
        %v5738 = vunpack.c.l.b16 %v4146
        %v5739 = vunpack.c.h.b16 %v4146
        %v5740 = vunpack.c.l.b16 %v4147
        %v5741 = vunpack.c.h.b16 %v4147
        %v5742 = vunpack.c.l.b16 %v4148
        %v5743 = vunpack.c.h.b16 %v4148
        %v5744 = vunpack.c.l.b16 %v4149
        %v5745 = vunpack.c.h.b16 %v4149
        %v5746 = vunpack.c.l.b16 %v4150
        %v5747 = vunpack.c.h.b16 %v4150
        %v5748 = vunpack.c.l.b16 %v4151
        %v5749 = vunpack.c.h.b16 %v4151
        %v5750 = vunpack.c.l.b16 %v4152
        %v5751 = vunpack.c.h.b16 %v4152
        %v5752 = vunpack.c.l.b16 %v4153
        %v5753 = vunpack.c.h.b16 %v4153
        %v5754 = vunpack.c.l.b16 %v4154
        %v5755 = vunpack.c.h.b16 %v4154
        %v5756 = vunpack.c.l.b16 %v4155
        %v5757 = vunpack.c.h.b16 %v4155
        %v5758 = vunpack.c.l.b16 %v4156
        %v5759 = vunpack.c.h.b16 %v4156
        %v5760 = vunpack.c.l.b16 %v4157
        %v5761 = vunpack.c.h.b16 %v4157
        %v5762 = vunpack.c.l.b16 %v4158
        %v5763 = vunpack.c.h.b16 %v4158
        %v5764 = vunpack.c.l.b16 %v4159
        %v5765 = vunpack.c.h.b16 %v4159
        %v5766 = vunpack.c.l.b16 %v4160
        %v5767 = vunpack.c.h.b16 %v4160
        %v5768 = vunpack.c.l.b16 %v4161
        %v5769 = vunpack.c.h.b16 %v4161
        %v5770 = vunpack.c.l.b16 %v4162
        %v5771 = vunpack.c.h.b16 %v4162
        %v5772 = vunpack.c.l.b16 %v4163
        %v5773 = vunpack.c.h.b16 %v4163
        %v5774 = vunpack.c.l.b16 %v4164
        %v5775 = vunpack.c.h.b16 %v4164
        %v5776 = vunpack.c.l.b16 %v4165
        %v5777 = vunpack.c.h.b16 %v4165
        %v5778 = vunpack.c.l.b16 %v4166
        %v5779 = vunpack.c.h.b16 %v4166
        %v5780 = vunpack.c.l.b16 %v4167
        %v5781 = vunpack.c.h.b16 %v4167
        %v5782 = vunpack.c.l.b16 %v4168
        %v5783 = vunpack.c.h.b16 %v4168
        %v5784 = vunpack.c.l.b16 %v4169
        %v5785 = vunpack.c.h.b16 %v4169
        %v5786 = vunpack.c.l.b16 %v4170
        %v5787 = vunpack.c.h.b16 %v4170
        %v5788 = vunpack.c.l.b16 %v4171
        %v5789 = vunpack.c.h.b16 %v4171
        %v5790 = vunpack.c.l.b16 %v4172
        %v5791 = vunpack.c.h.b16 %v4172
        %v5792 = vunpack.c.l.b16 %v4173
        %v5793 = vunpack.c.h.b16 %v4173
        %v5794 = vunpack.c.l.b16 %v4174
        %v5795 = vunpack.c.h.b16 %v4174
        %v5796 = vunpack.c.l.b16 %v4175
        %v5797 = vunpack.c.h.b16 %v4175
        %v5798 = vunpack.c.l.b16 %v4176
        %v5799 = vunpack.c.h.b16 %v4176
        %v5800 = vunpack.c.l.b16 %v4177
        %v5801 = vunpack.c.h.b16 %v4177
        %v5802 = vpack.c.b16 %v4782, %v4778
        %v5803 = vpack.c.b16 %v4783, %v4779
        %v5804 = vpack.c.b16 %v4784, %v4780
        %v5805 = vpack.c.b16 %v4785, %v4781
        %v5806 = vpack.c.b16 %v4790, %v4786
        %v5807 = vpack.c.b16 %v4791, %v4787
        %v5808 = vpack.c.b16 %v4792, %v4788
        %v5809 = vpack.c.b16 %v4793, %v4789
        %v5810 = vpack.c.b16 %v4798, %v4794
        %v5811 = vpack.c.b16 %v4799, %v4795
        %v5812 = vpack.c.b16 %v4800, %v4796
        %v5813 = vpack.c.b16 %v4801, %v4797
        %v5814 = vpack.c.b16 %v4806, %v4802
        %v5815 = vpack.c.b16 %v4807, %v4803
        %v5816 = vpack.c.b16 %v4808, %v4804
        %v5817 = vpack.c.b16 %v4809, %v4805
        %v5818 = vpack.c.b16 %v4814, %v4810
        %v5819 = vpack.c.b16 %v4815, %v4811
        %v5820 = vpack.c.b16 %v4816, %v4812
        %v5821 = vpack.c.b16 %v4817, %v4813
        %v5822 = vpack.c.b16 %v4822, %v4818
        %v5823 = vpack.c.b16 %v4823, %v4819
        %v5824 = vpack.c.b16 %v4824, %v4820
        %v5825 = vpack.c.b16 %v4825, %v4821
        %v5826 = vpack.c.b16 %v4830, %v4826
        %v5827 = vpack.c.b16 %v4831, %v4827
        %v5828 = vpack.c.b16 %v4832, %v4828
        %v5829 = vpack.c.b16 %v4833, %v4829
        %v5830 = vpack.c.b16 %v4838, %v4834
        %v5831 = vpack.c.b16 %v4839, %v4835
        %v5832 = vpack.c.b16 %v4840, %v4836
        %v5833 = vpack.c.b16 %v4841, %v4837
        %v5834 = vpack.c.b16 %v4846, %v4842
        %v5835 = vpack.c.b16 %v4847, %v4843
        %v5836 = vpack.c.b16 %v4848, %v4844
        %v5837 = vpack.c.b16 %v4849, %v4845
        %v5838 = vpack.c.b16 %v4854, %v4850
        %v5839 = vpack.c.b16 %v4855, %v4851
        %v5840 = vpack.c.b16 %v4856, %v4852
        %v5841 = vpack.c.b16 %v4857, %v4853
        %v5842 = vpack.c.b16 %v4862, %v4858
        %v5843 = vpack.c.b16 %v4863, %v4859
        %v5844 = vpack.c.b16 %v4864, %v4860
        %v5845 = vpack.c.b16 %v4865, %v4861
        %v5846 = vpack.c.b16 %v4870, %v4866
        %v5847 = vpack.c.b16 %v4871, %v4867
        %v5848 = vpack.c.b16 %v4872, %v4868
        %v5849 = vpack.c.b16 %v4873, %v4869
        %v5850 = vpack.c.b16 %v4878, %v4874
        %v5851 = vpack.c.b16 %v4879, %v4875
        %v5852 = vpack.c.b16 %v4880, %v4876
        %v5853 = vpack.c.b16 %v4881, %v4877
        %v5854 = vpack.c.b16 %v4886, %v4882
        %v5855 = vpack.c.b16 %v4887, %v4883
        %v5856 = vpack.c.b16 %v4888, %v4884
        %v5857 = vpack.c.b16 %v4889, %v4885
        %v5858 = vpack.c.b16 %v4894, %v4890
        %v5859 = vpack.c.b16 %v4895, %v4891
        %v5860 = vpack.c.b16 %v4896, %v4892
        %v5861 = vpack.c.b16 %v4897, %v4893
        %v5862 = vpack.c.b16 %v4902, %v4898
        %v5863 = vpack.c.b16 %v4903, %v4899
        %v5864 = vpack.c.b16 %v4904, %v4900
        %v5865 = vpack.c.b16 %v4905, %v4901
        %v5866 = vpack.c.b16 %v4910, %v4906
        %v5867 = vpack.c.b16 %v4911, %v4907
        %v5868 = vpack.c.b16 %v4912, %v4908
        %v5869 = vpack.c.b16 %v4913, %v4909
        %v5870 = vpack.c.b16 %v4918, %v4914
        %v5871 = vpack.c.b16 %v4919, %v4915
        %v5872 = vpack.c.b16 %v4920, %v4916
        %v5873 = vpack.c.b16 %v4921, %v4917
        %v5874 = vpack.c.b16 %v4926, %v4922
        %v5875 = vpack.c.b16 %v4927, %v4923
        %v5876 = vpack.c.b16 %v4928, %v4924
        %v5877 = vpack.c.b16 %v4929, %v4925
        %v5878 = vpack.c.b16 %v4934, %v4930
        %v5879 = vpack.c.b16 %v4935, %v4931
        %v5880 = vpack.c.b16 %v4936, %v4932
        %v5881 = vpack.c.b16 %v4937, %v4933
        %v5882 = vpack.c.b16 %v4942, %v4938
        %v5883 = vpack.c.b16 %v4943, %v4939
        %v5884 = vpack.c.b16 %v4944, %v4940
        %v5885 = vpack.c.b16 %v4945, %v4941
        %v5886 = vpack.c.b16 %v4950, %v4946
        %v5887 = vpack.c.b16 %v4951, %v4947
        %v5888 = vpack.c.b16 %v4952, %v4948
        %v5889 = vpack.c.b16 %v4953, %v4949
        %v5890 = vpack.c.b16 %v4958, %v4954
        %v5891 = vpack.c.b16 %v4959, %v4955
        %v5892 = vpack.c.b16 %v4960, %v4956
        %v5893 = vpack.c.b16 %v4961, %v4957
        %v5894 = vpack.c.b16 %v4966, %v4962
        %v5895 = vpack.c.b16 %v4967, %v4963
        %v5896 = vpack.c.b16 %v4968, %v4964
        %v5897 = vpack.c.b16 %v4969, %v4965
        %v5898 = vpack.c.b16 %v4974, %v4970
        %v5899 = vpack.c.b16 %v4975, %v4971
        %v5900 = vpack.c.b16 %v4976, %v4972
        %v5901 = vpack.c.b16 %v4977, %v4973
        %v5902 = vpack.c.b16 %v4982, %v4978
        %v5903 = vpack.c.b16 %v4983, %v4979
        %v5904 = vpack.c.b16 %v4984, %v4980
        %v5905 = vpack.c.b16 %v4985, %v4981
        %v5906 = vpack.c.b16 %v4990, %v4986
        %v5907 = vpack.c.b16 %v4991, %v4987
        %v5908 = vpack.c.b16 %v4992, %v4988
        %v5909 = vpack.c.b16 %v4993, %v4989
        %v5910 = vpack.c.b16 %v4998, %v4994
        %v5911 = vpack.c.b16 %v4999, %v4995
        %v5912 = vpack.c.b16 %v5000, %v4996
        %v5913 = vpack.c.b16 %v5001, %v4997
        %v5914 = vpack.c.b16 %v5006, %v5002
        %v5915 = vpack.c.b16 %v5007, %v5003
        %v5916 = vpack.c.b16 %v5008, %v5004
        %v5917 = vpack.c.b16 %v5009, %v5005
        %v5918 = vpack.c.b16 %v5014, %v5010
        %v5919 = vpack.c.b16 %v5015, %v5011
        %v5920 = vpack.c.b16 %v5016, %v5012
        %v5921 = vpack.c.b16 %v5017, %v5013
        %v5922 = vpack.c.b16 %v5022, %v5018
        %v5923 = vpack.c.b16 %v5023, %v5019
        %v5924 = vpack.c.b16 %v5024, %v5020
        %v5925 = vpack.c.b16 %v5025, %v5021
        %v5926 = vpack.c.b16 %v5030, %v5026
        %v5927 = vpack.c.b16 %v5031, %v5027
        %v5928 = vpack.c.b16 %v5032, %v5028
        %v5929 = vpack.c.b16 %v5033, %v5029
        %v5930 = vpack.c.b16 %v5038, %v5034
        %v5931 = vpack.c.b16 %v5039, %v5035
        %v5932 = vpack.c.b16 %v5040, %v5036
        %v5933 = vpack.c.b16 %v5041, %v5037
        %v5934 = vpack.c.b16 %v5046, %v5042
        %v5935 = vpack.c.b16 %v5047, %v5043
        %v5936 = vpack.c.b16 %v5048, %v5044
        %v5937 = vpack.c.b16 %v5049, %v5045
        %v5938 = vpack.c.b16 %v5054, %v5050
        %v5939 = vpack.c.b16 %v5055, %v5051
        %v5940 = vpack.c.b16 %v5056, %v5052
        %v5941 = vpack.c.b16 %v5057, %v5053
        %v5942 = vpack.c.b16 %v5062, %v5058
        %v5943 = vpack.c.b16 %v5063, %v5059
        %v5944 = vpack.c.b16 %v5064, %v5060
        %v5945 = vpack.c.b16 %v5065, %v5061
        %v5946 = vpack.c.b16 %v5070, %v5066
        %v5947 = vpack.c.b16 %v5071, %v5067
        %v5948 = vpack.c.b16 %v5072, %v5068
        %v5949 = vpack.c.b16 %v5073, %v5069
        %v5950 = vpack.c.b16 %v5078, %v5074
        %v5951 = vpack.c.b16 %v5079, %v5075
        %v5952 = vpack.c.b16 %v5080, %v5076
        %v5953 = vpack.c.b16 %v5081, %v5077
        %v5954 = vpack.c.b16 %v5086, %v5082
        %v5955 = vpack.c.b16 %v5087, %v5083
        %v5956 = vpack.c.b16 %v5088, %v5084
        %v5957 = vpack.c.b16 %v5089, %v5085
        %v5958 = vpack.c.b16 %v5094, %v5090
        %v5959 = vpack.c.b16 %v5095, %v5091
        %v5960 = vpack.c.b16 %v5096, %v5092
        %v5961 = vpack.c.b16 %v5097, %v5093
        %v5962 = vpack.c.b16 %v5102, %v5098
        %v5963 = vpack.c.b16 %v5103, %v5099
        %v5964 = vpack.c.b16 %v5104, %v5100
        %v5965 = vpack.c.b16 %v5105, %v5101
        %v5966 = vpack.c.b16 %v5110, %v5106
        %v5967 = vpack.c.b16 %v5111, %v5107
        %v5968 = vpack.c.b16 %v5112, %v5108
        %v5969 = vpack.c.b16 %v5113, %v5109
        %v5970 = vpack.c.b16 %v5118, %v5114
        %v5971 = vpack.c.b16 %v5119, %v5115
        %v5972 = vpack.c.b16 %v5120, %v5116
        %v5973 = vpack.c.b16 %v5121, %v5117
        %v5974 = vpack.c.b16 %v5126, %v5122
        %v5975 = vpack.c.b16 %v5127, %v5123
        %v5976 = vpack.c.b16 %v5128, %v5124
        %v5977 = vpack.c.b16 %v5129, %v5125
        %v5978 = vpack.c.b16 %v5134, %v5130
        %v5979 = vpack.c.b16 %v5135, %v5131
        %v5980 = vpack.c.b16 %v5136, %v5132
        %v5981 = vpack.c.b16 %v5137, %v5133
        %v5982 = vpack.c.b16 %v5142, %v5138
        %v5983 = vpack.c.b16 %v5143, %v5139
        %v5984 = vpack.c.b16 %v5144, %v5140
        %v5985 = vpack.c.b16 %v5145, %v5141
        %v5986 = vpack.c.b16 %v5150, %v5146
        %v5987 = vpack.c.b16 %v5151, %v5147
        %v5988 = vpack.c.b16 %v5152, %v5148
        %v5989 = vpack.c.b16 %v5153, %v5149
        %v5990 = vpack.c.b16 %v5158, %v5154
        %v5991 = vpack.c.b16 %v5159, %v5155
        %v5992 = vpack.c.b16 %v5160, %v5156
        %v5993 = vpack.c.b16 %v5161, %v5157
        %v5994 = vpack.c.b16 %v5166, %v5162
        %v5995 = vpack.c.b16 %v5167, %v5163
        %v5996 = vpack.c.b16 %v5168, %v5164
        %v5997 = vpack.c.b16 %v5169, %v5165
        %v5998 = vpack.c.b16 %v5174, %v5170
        %v5999 = vpack.c.b16 %v5175, %v5171
        %v6000 = vpack.c.b16 %v5176, %v5172
        %v6001 = vpack.c.b16 %v5177, %v5173
        %v6002 = vpack.c.b16 %v5182, %v5178
        %v6003 = vpack.c.b16 %v5183, %v5179
        %v6004 = vpack.c.b16 %v5184, %v5180
        %v6005 = vpack.c.b16 %v5185, %v5181
        %v6006 = vpack.c.b16 %v5190, %v5186
        %v6007 = vpack.c.b16 %v5191, %v5187
        %v6008 = vpack.c.b16 %v5192, %v5188
        %v6009 = vpack.c.b16 %v5193, %v5189
        %v6010 = vpack.c.b16 %v5198, %v5194
        %v6011 = vpack.c.b16 %v5199, %v5195
        %v6012 = vpack.c.b16 %v5200, %v5196
        %v6013 = vpack.c.b16 %v5201, %v5197
        %v6014 = vpack.c.b16 %v5206, %v5202
        %v6015 = vpack.c.b16 %v5207, %v5203
        %v6016 = vpack.c.b16 %v5208, %v5204
        %v6017 = vpack.c.b16 %v5209, %v5205
        %v6018 = vpack.c.b16 %v5214, %v5210
        %v6019 = vpack.c.b16 %v5215, %v5211
        %v6020 = vpack.c.b16 %v5216, %v5212
        %v6021 = vpack.c.b16 %v5217, %v5213
        %v6022 = vpack.c.b16 %v5222, %v5218
        %v6023 = vpack.c.b16 %v5223, %v5219
        %v6024 = vpack.c.b16 %v5224, %v5220
        %v6025 = vpack.c.b16 %v5225, %v5221
        %v6026 = vpack.c.b16 %v5230, %v5226
        %v6027 = vpack.c.b16 %v5231, %v5227
        %v6028 = vpack.c.b16 %v5232, %v5228
        %v6029 = vpack.c.b16 %v5233, %v5229
        %v6030 = vpack.c.b16 %v5238, %v5234
        %v6031 = vpack.c.b16 %v5239, %v5235
        %v6032 = vpack.c.b16 %v5240, %v5236
        %v6033 = vpack.c.b16 %v5241, %v5237
        %v6034 = vpack.c.b16 %v5246, %v5242
        %v6035 = vpack.c.b16 %v5247, %v5243
        %v6036 = vpack.c.b16 %v5248, %v5244
        %v6037 = vpack.c.b16 %v5249, %v5245
        %v6038 = vpack.c.b16 %v5254, %v5250
        %v6039 = vpack.c.b16 %v5255, %v5251
        %v6040 = vpack.c.b16 %v5256, %v5252
        %v6041 = vpack.c.b16 %v5257, %v5253
        %v6042 = vpack.c.b16 %v5262, %v5258
        %v6043 = vpack.c.b16 %v5263, %v5259
        %v6044 = vpack.c.b16 %v5264, %v5260
        %v6045 = vpack.c.b16 %v5265, %v5261
        %v6046 = vpack.c.b16 %v5270, %v5266
        %v6047 = vpack.c.b16 %v5271, %v5267
        %v6048 = vpack.c.b16 %v5272, %v5268
        %v6049 = vpack.c.b16 %v5273, %v5269
        %v6050 = vpack.c.b16 %v5278, %v5274
        %v6051 = vpack.c.b16 %v5279, %v5275
        %v6052 = vpack.c.b16 %v5280, %v5276
        %v6053 = vpack.c.b16 %v5281, %v5277
        %v6054 = vpack.c.b16 %v5286, %v5282
        %v6055 = vpack.c.b16 %v5287, %v5283
        %v6056 = vpack.c.b16 %v5288, %v5284
        %v6057 = vpack.c.b16 %v5289, %v5285
        %v6058 = vpack.c.b16 %v5294, %v5290
        %v6059 = vpack.c.b16 %v5295, %v5291
        %v6060 = vpack.c.b16 %v5296, %v5292
        %v6061 = vpack.c.b16 %v5297, %v5293
        %v6062 = vpack.c.b16 %v5302, %v5298
        %v6063 = vpack.c.b16 %v5303, %v5299
        %v6064 = vpack.c.b16 %v5304, %v5300
        %v6065 = vpack.c.b16 %v5305, %v5301
        %v6066 = vpack.c.b16 %v5310, %v5306
        %v6067 = vpack.c.b16 %v5311, %v5307
        %v6068 = vpack.c.b16 %v5312, %v5308
        %v6069 = vpack.c.b16 %v5313, %v5309
        %v6070 = vpack.c.b16 %v5318, %v5314
        %v6071 = vpack.c.b16 %v5319, %v5315
        %v6072 = vpack.c.b16 %v5320, %v5316
        %v6073 = vpack.c.b16 %v5321, %v5317
        %v6074 = vpack.c.b16 %v5326, %v5322
        %v6075 = vpack.c.b16 %v5327, %v5323
        %v6076 = vpack.c.b16 %v5328, %v5324
        %v6077 = vpack.c.b16 %v5329, %v5325
        %v6078 = vpack.c.b16 %v5334, %v5330
        %v6079 = vpack.c.b16 %v5335, %v5331
        %v6080 = vpack.c.b16 %v5336, %v5332
        %v6081 = vpack.c.b16 %v5337, %v5333
        %v6082 = vpack.c.b16 %v5342, %v5338
        %v6083 = vpack.c.b16 %v5343, %v5339
        %v6084 = vpack.c.b16 %v5344, %v5340
        %v6085 = vpack.c.b16 %v5345, %v5341
        %v6086 = vpack.c.b16 %v5350, %v5346
        %v6087 = vpack.c.b16 %v5351, %v5347
        %v6088 = vpack.c.b16 %v5352, %v5348
        %v6089 = vpack.c.b16 %v5353, %v5349
        %v6090 = vpack.c.b16 %v5358, %v5354
        %v6091 = vpack.c.b16 %v5359, %v5355
        %v6092 = vpack.c.b16 %v5360, %v5356
        %v6093 = vpack.c.b16 %v5361, %v5357
        %v6094 = vpack.c.b16 %v5366, %v5362
        %v6095 = vpack.c.b16 %v5367, %v5363
        %v6096 = vpack.c.b16 %v5368, %v5364
        %v6097 = vpack.c.b16 %v5369, %v5365
        %v6098 = vpack.c.b16 %v5374, %v5370
        %v6099 = vpack.c.b16 %v5375, %v5371
        %v6100 = vpack.c.b16 %v5376, %v5372
        %v6101 = vpack.c.b16 %v5377, %v5373
        %v6102 = vpack.c.b16 %v5382, %v5378
        %v6103 = vpack.c.b16 %v5383, %v5379
        %v6104 = vpack.c.b16 %v5384, %v5380
        %v6105 = vpack.c.b16 %v5385, %v5381
        %v6106 = vpack.c.b16 %v5390, %v5386
        %v6107 = vpack.c.b16 %v5391, %v5387
        %v6108 = vpack.c.b16 %v5392, %v5388
        %v6109 = vpack.c.b16 %v5393, %v5389
        %v6110 = vpack.c.b16 %v5398, %v5394
        %v6111 = vpack.c.b16 %v5399, %v5395
        %v6112 = vpack.c.b16 %v5400, %v5396
        %v6113 = vpack.c.b16 %v5401, %v5397
        %v6114 = vpack.c.b16 %v5406, %v5402
        %v6115 = vpack.c.b16 %v5407, %v5403
        %v6116 = vpack.c.b16 %v5408, %v5404
        %v6117 = vpack.c.b16 %v5409, %v5405
        %v6118 = vpack.c.b16 %v5414, %v5410
        %v6119 = vpack.c.b16 %v5415, %v5411
        %v6120 = vpack.c.b16 %v5416, %v5412
        %v6121 = vpack.c.b16 %v5417, %v5413
        %v6122 = vpack.c.b16 %v5422, %v5418
        %v6123 = vpack.c.b16 %v5423, %v5419
        %v6124 = vpack.c.b16 %v5424, %v5420
        %v6125 = vpack.c.b16 %v5425, %v5421
        %v6126 = vpack.c.b16 %v5430, %v5426
        %v6127 = vpack.c.b16 %v5431, %v5427
        %v6128 = vpack.c.b16 %v5432, %v5428
        %v6129 = vpack.c.b16 %v5433, %v5429
        %v6130 = vpack.c.b16 %v5438, %v5434
        %v6131 = vpack.c.b16 %v5439, %v5435
        %v6132 = vpack.c.b16 %v5440, %v5436
        %v6133 = vpack.c.b16 %v5441, %v5437
        %v6134 = vpack.c.b16 %v5446, %v5442
        %v6135 = vpack.c.b16 %v5447, %v5443
        %v6136 = vpack.c.b16 %v5448, %v5444
        %v6137 = vpack.c.b16 %v5449, %v5445
        %v6138 = vpack.c.b16 %v5454, %v5450
        %v6139 = vpack.c.b16 %v5455, %v5451
        %v6140 = vpack.c.b16 %v5456, %v5452
        %v6141 = vpack.c.b16 %v5457, %v5453
        %v6142 = vpack.c.b16 %v5462, %v5458
        %v6143 = vpack.c.b16 %v5463, %v5459
        %v6144 = vpack.c.b16 %v5464, %v5460
        %v6145 = vpack.c.b16 %v5465, %v5461
        %v6146 = vpack.c.b16 %v5470, %v5466
        %v6147 = vpack.c.b16 %v5471, %v5467
        %v6148 = vpack.c.b16 %v5472, %v5468
        %v6149 = vpack.c.b16 %v5473, %v5469
        %v6150 = vpack.c.b16 %v5478, %v5474
        %v6151 = vpack.c.b16 %v5479, %v5475
        %v6152 = vpack.c.b16 %v5480, %v5476
        %v6153 = vpack.c.b16 %v5481, %v5477
        %v6154 = vpack.c.b16 %v5486, %v5482
        %v6155 = vpack.c.b16 %v5487, %v5483
        %v6156 = vpack.c.b16 %v5488, %v5484
        %v6157 = vpack.c.b16 %v5489, %v5485
        %v6158 = vpack.c.b16 %v5494, %v5490
        %v6159 = vpack.c.b16 %v5495, %v5491
        %v6160 = vpack.c.b16 %v5496, %v5492
        %v6161 = vpack.c.b16 %v5497, %v5493
        %v6162 = vpack.c.b16 %v5502, %v5498
        %v6163 = vpack.c.b16 %v5503, %v5499
        %v6164 = vpack.c.b16 %v5504, %v5500
        %v6165 = vpack.c.b16 %v5505, %v5501
        %v6166 = vpack.c.b16 %v5510, %v5506
        %v6167 = vpack.c.b16 %v5511, %v5507
        %v6168 = vpack.c.b16 %v5512, %v5508
        %v6169 = vpack.c.b16 %v5513, %v5509
        %v6170 = vpack.c.b16 %v5518, %v5514
        %v6171 = vpack.c.b16 %v5519, %v5515
        %v6172 = vpack.c.b16 %v5520, %v5516
        %v6173 = vpack.c.b16 %v5521, %v5517
        %v6174 = vpack.c.b16 %v5526, %v5522
        %v6175 = vpack.c.b16 %v5527, %v5523
        %v6176 = vpack.c.b16 %v5528, %v5524
        %v6177 = vpack.c.b16 %v5529, %v5525
        %v6178 = vpack.c.b16 %v5534, %v5530
        %v6179 = vpack.c.b16 %v5535, %v5531
        %v6180 = vpack.c.b16 %v5536, %v5532
        %v6181 = vpack.c.b16 %v5537, %v5533
        %v6182 = vpack.c.b16 %v5542, %v5538
        %v6183 = vpack.c.b16 %v5543, %v5539
        %v6184 = vpack.c.b16 %v5544, %v5540
        %v6185 = vpack.c.b16 %v5545, %v5541
        %v6186 = vpack.c.b16 %v5550, %v5546
        %v6187 = vpack.c.b16 %v5551, %v5547
        %v6188 = vpack.c.b16 %v5552, %v5548
        %v6189 = vpack.c.b16 %v5553, %v5549
        %v6190 = vpack.c.b16 %v5558, %v5554
        %v6191 = vpack.c.b16 %v5559, %v5555
        %v6192 = vpack.c.b16 %v5560, %v5556
        %v6193 = vpack.c.b16 %v5561, %v5557
        %v6194 = vpack.c.b16 %v5566, %v5562
        %v6195 = vpack.c.b16 %v5567, %v5563
        %v6196 = vpack.c.b16 %v5568, %v5564
        %v6197 = vpack.c.b16 %v5569, %v5565
        %v6198 = vpack.c.b16 %v5574, %v5570
        %v6199 = vpack.c.b16 %v5575, %v5571
        %v6200 = vpack.c.b16 %v5576, %v5572
        %v6201 = vpack.c.b16 %v5577, %v5573
        %v6202 = vpack.c.b16 %v5582, %v5578
        %v6203 = vpack.c.b16 %v5583, %v5579
        %v6204 = vpack.c.b16 %v5584, %v5580
        %v6205 = vpack.c.b16 %v5585, %v5581
        %v6206 = vpack.c.b16 %v5590, %v5586
        %v6207 = vpack.c.b16 %v5591, %v5587
        %v6208 = vpack.c.b16 %v5592, %v5588
        %v6209 = vpack.c.b16 %v5593, %v5589
        %v6210 = vpack.c.b16 %v5598, %v5594
        %v6211 = vpack.c.b16 %v5599, %v5595
        %v6212 = vpack.c.b16 %v5600, %v5596
        %v6213 = vpack.c.b16 %v5601, %v5597
        %v6214 = vpack.c.b16 %v5606, %v5602
        %v6215 = vpack.c.b16 %v5607, %v5603
        %v6216 = vpack.c.b16 %v5608, %v5604
        %v6217 = vpack.c.b16 %v5609, %v5605
        %v6218 = vpack.c.b16 %v5614, %v5610
        %v6219 = vpack.c.b16 %v5615, %v5611
        %v6220 = vpack.c.b16 %v5616, %v5612
        %v6221 = vpack.c.b16 %v5617, %v5613
        %v6222 = vpack.c.b16 %v5622, %v5618
        %v6223 = vpack.c.b16 %v5623, %v5619
        %v6224 = vpack.c.b16 %v5624, %v5620
        %v6225 = vpack.c.b16 %v5625, %v5621
        %v6226 = vpack.c.b16 %v5630, %v5626
        %v6227 = vpack.c.b16 %v5631, %v5627
        %v6228 = vpack.c.b16 %v5632, %v5628
        %v6229 = vpack.c.b16 %v5633, %v5629
        %v6230 = vpack.c.b16 %v5638, %v5634
        %v6231 = vpack.c.b16 %v5639, %v5635
        %v6232 = vpack.c.b16 %v5640, %v5636
        %v6233 = vpack.c.b16 %v5641, %v5637
        %v6234 = vpack.c.b16 %v5646, %v5642
        %v6235 = vpack.c.b16 %v5647, %v5643
        %v6236 = vpack.c.b16 %v5648, %v5644
        %v6237 = vpack.c.b16 %v5649, %v5645
        %v6238 = vpack.c.b16 %v5654, %v5650
        %v6239 = vpack.c.b16 %v5655, %v5651
        %v6240 = vpack.c.b16 %v5656, %v5652
        %v6241 = vpack.c.b16 %v5657, %v5653
        %v6242 = vpack.c.b16 %v5662, %v5658
        %v6243 = vpack.c.b16 %v5663, %v5659
        %v6244 = vpack.c.b16 %v5664, %v5660
        %v6245 = vpack.c.b16 %v5665, %v5661
        %v6246 = vpack.c.b16 %v5670, %v5666
        %v6247 = vpack.c.b16 %v5671, %v5667
        %v6248 = vpack.c.b16 %v5672, %v5668
        %v6249 = vpack.c.b16 %v5673, %v5669
        %v6250 = vpack.c.b16 %v5678, %v5674
        %v6251 = vpack.c.b16 %v5679, %v5675
        %v6252 = vpack.c.b16 %v5680, %v5676
        %v6253 = vpack.c.b16 %v5681, %v5677
        %v6254 = vpack.c.b16 %v5686, %v5682
        %v6255 = vpack.c.b16 %v5687, %v5683
        %v6256 = vpack.c.b16 %v5688, %v5684
        %v6257 = vpack.c.b16 %v5689, %v5685
        %v6258 = vpack.c.b16 %v5694, %v5690
        %v6259 = vpack.c.b16 %v5695, %v5691
        %v6260 = vpack.c.b16 %v5696, %v5692
        %v6261 = vpack.c.b16 %v5697, %v5693
        %v6262 = vpack.c.b16 %v5702, %v5698
        %v6263 = vpack.c.b16 %v5703, %v5699
        %v6264 = vpack.c.b16 %v5704, %v5700
        %v6265 = vpack.c.b16 %v5705, %v5701
        %v6266 = vpack.c.b16 %v5710, %v5706
        %v6267 = vpack.c.b16 %v5711, %v5707
        %v6268 = vpack.c.b16 %v5712, %v5708
        %v6269 = vpack.c.b16 %v5713, %v5709
        %v6270 = vpack.c.b16 %v5718, %v5714
        %v6271 = vpack.c.b16 %v5719, %v5715
        %v6272 = vpack.c.b16 %v5720, %v5716
        %v6273 = vpack.c.b16 %v5721, %v5717
        %v6274 = vpack.c.b16 %v5726, %v5722
        %v6275 = vpack.c.b16 %v5727, %v5723
        %v6276 = vpack.c.b16 %v5728, %v5724
        %v6277 = vpack.c.b16 %v5729, %v5725
        %v6278 = vpack.c.b16 %v5734, %v5730
        %v6279 = vpack.c.b16 %v5735, %v5731
        %v6280 = vpack.c.b16 %v5736, %v5732
        %v6281 = vpack.c.b16 %v5737, %v5733
        %v6282 = vpack.c.b16 %v5742, %v5738
        %v6283 = vpack.c.b16 %v5743, %v5739
        %v6284 = vpack.c.b16 %v5744, %v5740
        %v6285 = vpack.c.b16 %v5745, %v5741
        %v6286 = vpack.c.b16 %v5750, %v5746
        %v6287 = vpack.c.b16 %v5751, %v5747
        %v6288 = vpack.c.b16 %v5752, %v5748
        %v6289 = vpack.c.b16 %v5753, %v5749
        %v6290 = vpack.c.b16 %v5758, %v5754
        %v6291 = vpack.c.b16 %v5759, %v5755
        %v6292 = vpack.c.b16 %v5760, %v5756
        %v6293 = vpack.c.b16 %v5761, %v5757
        %v6294 = vpack.c.b16 %v5766, %v5762
        %v6295 = vpack.c.b16 %v5767, %v5763
        %v6296 = vpack.c.b16 %v5768, %v5764
        %v6297 = vpack.c.b16 %v5769, %v5765
        %v6298 = vpack.c.b16 %v5774, %v5770
        %v6299 = vpack.c.b16 %v5775, %v5771
        %v6300 = vpack.c.b16 %v5776, %v5772
        %v6301 = vpack.c.b16 %v5777, %v5773
        %v6302 = vpack.c.b16 %v5782, %v5778
        %v6303 = vpack.c.b16 %v5783, %v5779
        %v6304 = vpack.c.b16 %v5784, %v5780
        %v6305 = vpack.c.b16 %v5785, %v5781
        %v6306 = vpack.c.b16 %v5790, %v5786
        %v6307 = vpack.c.b16 %v5791, %v5787
        %v6308 = vpack.c.b16 %v5792, %v5788
        %v6309 = vpack.c.b16 %v5793, %v5789
        %v6310 = vpack.c.b16 %v5798, %v5794
        %v6311 = vpack.c.b16 %v5799, %v5795
        %v6312 = vpack.c.b16 %v5800, %v5796
        %v6313 = vpack.c.b16 %v5801, %v5797
        %6826 = vmatprep.subr.bf16.mxu0 %v5831
        %6827 = vmatpush1.bf16.msra.mxu0 %v5830
        %6828 = vmatprep.subr.bf16.mxu0 %v5827
        %6829 = vmatpush1.bf16.msra.mxu0 %v5826
        %6830 = vmatprep.subr.bf16.mxu0 %v5823
        %6831 = vmatpush1.bf16.msra.mxu0 %v5822
        %6832 = vmatprep.subr.bf16.mxu0 %v5819
        %6833 = vmatpush1.bf16.msra.mxu0 %v5818
        %6834 = vmatprep.subr.bf16.mxu0 %v5815
        %6835 = vmatpush1.bf16.msra.mxu0 %v5814
        %6836 = vmatprep.subr.bf16.mxu0 %v5811
        %6837 = vmatpush1.bf16.msra.mxu0 %v5810
        %6838 = vmatprep.subr.bf16.mxu0 %v5807
        %6839 = vmatpush1.bf16.msra.mxu0 %v5806
        %6840 = vmatprep.subr.bf16.mxu0 %v5803
        %6841 = vmatpush1.bf16.msra.mxu0 %v5802
        %6842 = vmatprep.subr.bf16.mxu0 %v5863
        %6843 = vmatpush2.bf16.msra.mxu0 %v5862
        %6844 = vmatprep.subr.bf16.mxu0 %v5859
        %6845 = vmatpush2.bf16.msra.mxu0 %v5858
        %6846 = vmatprep.subr.bf16.mxu0 %v5855
        %6847 = vmatpush2.bf16.msra.mxu0 %v5854
        %6848 = vmatprep.subr.bf16.mxu0 %v5851
        %6849 = vmatpush2.bf16.msra.mxu0 %v5850
        %6850 = vmatprep.subr.bf16.mxu0 %v5847
        %6851 = vmatpush2.bf16.msra.mxu0 %v5846
        %6852 = vmatprep.subr.bf16.mxu0 %v5843
        %6853 = vmatpush2.bf16.msra.mxu0 %v5842
        %6854 = vmatprep.subr.bf16.mxu0 %v5839
        %6855 = vmatpush2.bf16.msra.mxu0 %v5838
        %6856 = vmatprep.subr.bf16.mxu0 %v5835
        %6857 = vmatpush2.bf16.msra.mxu0 %v5834
        %6858 = vmatprep.mubr.bf16.mxu0 %v4197
        %6859 = vmatmul.mubr.bf16.gmra.mxu0 %v4189
        %v6860 = vpop.f32.mrf.mxu0
        %v6861 = vadd.f32 0.0, %v6860
        %v6862 = vpop.f32.mrf.mxu0
        %v6863 = vadd.f32 0.0, %v6862
        %v6864 = vpop.f32.mrf.mxu0
        %v6865 = vpop.f32.mrf.mxu0
        %6866 = vdwg.mxu0
        %6867 = vmatprep.subr.bf16.mxu0 %v5895
        %6868 = vmatpush1.bf16.msra.mxu0 %v5894
        %6869 = vmatprep.subr.bf16.mxu0 %v5891
        %6870 = vmatpush1.bf16.msra.mxu0 %v5890
        %6871 = vmatprep.subr.bf16.mxu0 %v5887
        %6872 = vmatpush1.bf16.msra.mxu0 %v5886
        %6873 = vmatprep.subr.bf16.mxu0 %v5883
        %6874 = vmatpush1.bf16.msra.mxu0 %v5882
        %6875 = vmatprep.subr.bf16.mxu0 %v5879
        %6876 = vmatpush1.bf16.msra.mxu0 %v5878
        %6877 = vmatprep.subr.bf16.mxu0 %v5875
        %6878 = vmatpush1.bf16.msra.mxu0 %v5874
        %6879 = vmatprep.subr.bf16.mxu0 %v5871
        %6880 = vmatpush1.bf16.msra.mxu0 %v5870
        %6881 = vmatprep.subr.bf16.mxu0 %v5867
        %6882 = vmatpush1.bf16.msra.mxu0 %v5866
        %6883 = vmatprep.subr.bf16.mxu0 %v5927
        %6884 = vmatpush2.bf16.msra.mxu0 %v5926
        %6885 = vmatprep.subr.bf16.mxu0 %v5923
        %6886 = vmatpush2.bf16.msra.mxu0 %v5922
        %6887 = vmatprep.subr.bf16.mxu0 %v5919
        %6888 = vmatpush2.bf16.msra.mxu0 %v5918
        %6889 = vmatprep.subr.bf16.mxu0 %v5915
        %6890 = vmatpush2.bf16.msra.mxu0 %v5914
        %6891 = vmatprep.subr.bf16.mxu0 %v5911
        %6892 = vmatpush2.bf16.msra.mxu0 %v5910
        %6893 = vmatprep.subr.bf16.mxu0 %v5907
        %6894 = vmatpush2.bf16.msra.mxu0 %v5906
        %6895 = vmatprep.subr.bf16.mxu0 %v5903
        %6896 = vmatpush2.bf16.msra.mxu0 %v5902
        %6897 = vmatprep.subr.bf16.mxu0 %v5899
        %6898 = vmatpush2.bf16.msra.mxu0 %v5898
        %6899 = vmatprep.mubr.bf16.mxu0 %v4198
        %6900 = vmatmul.mubr.bf16.gmra.mxu0 %v4196
        %v6901 = vpop.f32.mrf.mxu0
        %v6902 = vadd.f32 %v6861, %v6901
        %v6903 = vpop.f32.mrf.mxu0
        %v6904 = vadd.f32 %v6863, %v6903
        %v6905 = vpop.f32.mrf.mxu0
        %v6906 = vpop.f32.mrf.mxu0
        %6907 = vdwg.mxu0
        %6908 = vmatprep.subr.bf16.mxu0 %v5959
        %6909 = vmatpush1.bf16.msra.mxu0 %v5958
        %6910 = vmatprep.subr.bf16.mxu0 %v5955
        %6911 = vmatpush1.bf16.msra.mxu0 %v5954
        %6912 = vmatprep.subr.bf16.mxu0 %v5951
        %6913 = vmatpush1.bf16.msra.mxu0 %v5950
        %6914 = vmatprep.subr.bf16.mxu0 %v5947
        %6915 = vmatpush1.bf16.msra.mxu0 %v5946
        %6916 = vmatprep.subr.bf16.mxu0 %v5943
        %6917 = vmatpush1.bf16.msra.mxu0 %v5942
        %6918 = vmatprep.subr.bf16.mxu0 %v5939
        %6919 = vmatpush1.bf16.msra.mxu0 %v5938
        %6920 = vmatprep.subr.bf16.mxu0 %v5935
        %6921 = vmatpush1.bf16.msra.mxu0 %v5934
        %6922 = vmatprep.subr.bf16.mxu0 %v5931
        %6923 = vmatpush1.bf16.msra.mxu0 %v5930
        %6924 = vmatprep.subr.bf16.mxu0 %v5991
        %6925 = vmatpush2.bf16.msra.mxu0 %v5990
        %6926 = vmatprep.subr.bf16.mxu0 %v5987
        %6927 = vmatpush2.bf16.msra.mxu0 %v5986
        %6928 = vmatprep.subr.bf16.mxu0 %v5983
        %6929 = vmatpush2.bf16.msra.mxu0 %v5982
        %6930 = vmatprep.subr.bf16.mxu0 %v5979
        %6931 = vmatpush2.bf16.msra.mxu0 %v5978
        %6932 = vmatprep.subr.bf16.mxu0 %v5975
        %6933 = vmatpush2.bf16.msra.mxu0 %v5974
        %6934 = vmatprep.subr.bf16.mxu0 %v5971
        %6935 = vmatpush2.bf16.msra.mxu0 %v5970
        %6936 = vmatprep.subr.bf16.mxu0 %v5967
        %6937 = vmatpush2.bf16.msra.mxu0 %v5966
        %6938 = vmatprep.subr.bf16.mxu0 %v5963
        %6939 = vmatpush2.bf16.msra.mxu0 %v5962
        %6940 = vmatprep.mubr.bf16.mxu0 %v4214
        %6941 = vmatmul.mubr.bf16.gmra.mxu0 %v4206
        %v6942 = vpop.f32.mrf.mxu0
        %v6943 = vadd.f32 %v6902, %v6942
        %v6944 = vpop.f32.mrf.mxu0
        %v6945 = vadd.f32 %v6904, %v6944
        %v6946 = vpop.f32.mrf.mxu0
        %v6947 = vpop.f32.mrf.mxu0
        %6948 = vdwg.mxu0
        %6949 = vmatprep.subr.bf16.mxu0 %v6023
        %6950 = vmatpush1.bf16.msra.mxu0 %v6022
        %6951 = vmatprep.subr.bf16.mxu0 %v6019
        %6952 = vmatpush1.bf16.msra.mxu0 %v6018
        %6953 = vmatprep.subr.bf16.mxu0 %v6015
        %6954 = vmatpush1.bf16.msra.mxu0 %v6014
        %6955 = vmatprep.subr.bf16.mxu0 %v6011
        %6956 = vmatpush1.bf16.msra.mxu0 %v6010
        %6957 = vmatprep.subr.bf16.mxu0 %v6007
        %6958 = vmatpush1.bf16.msra.mxu0 %v6006
        %6959 = vmatprep.subr.bf16.mxu0 %v6003
        %6960 = vmatpush1.bf16.msra.mxu0 %v6002
        %6961 = vmatprep.subr.bf16.mxu0 %v5999
        %6962 = vmatpush1.bf16.msra.mxu0 %v5998
        %6963 = vmatprep.subr.bf16.mxu0 %v5995
        %6964 = vmatpush1.bf16.msra.mxu0 %v5994
        %6965 = vmatprep.subr.bf16.mxu0 %v6055
        %6966 = vmatpush2.bf16.msra.mxu0 %v6054
        %6967 = vmatprep.subr.bf16.mxu0 %v6051
        %6968 = vmatpush2.bf16.msra.mxu0 %v6050
        %6969 = vmatprep.subr.bf16.mxu0 %v6047
        %6970 = vmatpush2.bf16.msra.mxu0 %v6046
        %6971 = vmatprep.subr.bf16.mxu0 %v6043
        %6972 = vmatpush2.bf16.msra.mxu0 %v6042
        %6973 = vmatprep.subr.bf16.mxu0 %v6039
        %6974 = vmatpush2.bf16.msra.mxu0 %v6038
        %6975 = vmatprep.subr.bf16.mxu0 %v6035
        %6976 = vmatpush2.bf16.msra.mxu0 %v6034
        %6977 = vmatprep.subr.bf16.mxu0 %v6031
        %6978 = vmatpush2.bf16.msra.mxu0 %v6030
        %6979 = vmatprep.subr.bf16.mxu0 %v6027
        %6980 = vmatpush2.bf16.msra.mxu0 %v6026
        %6981 = vmatprep.mubr.bf16.mxu0 %v4215
        %6982 = vmatmul.mubr.bf16.gmra.mxu0 %v4213
        %v6983 = vpop.f32.mrf.mxu0
        %v6984 = vadd.f32 %v6943, %v6983
        %v6985 = vpop.f32.mrf.mxu0
        %v6986 = vadd.f32 %v6945, %v6985
        %v6987 = vpop.f32.mrf.mxu0
        %v6988 = vpop.f32.mrf.mxu0
        %6989 = vdwg.mxu0
        %6990 = vmatprep.subr.bf16.mxu0 %v6087
        %6991 = vmatpush1.bf16.msra.mxu0 %v6086
        %6992 = vmatprep.subr.bf16.mxu0 %v6083
        %6993 = vmatpush1.bf16.msra.mxu0 %v6082
        %6994 = vmatprep.subr.bf16.mxu0 %v6079
        %6995 = vmatpush1.bf16.msra.mxu0 %v6078
        %6996 = vmatprep.subr.bf16.mxu0 %v6075
        %6997 = vmatpush1.bf16.msra.mxu0 %v6074
        %6998 = vmatprep.subr.bf16.mxu0 %v6071
        %6999 = vmatpush1.bf16.msra.mxu0 %v6070
        %7000 = vmatprep.subr.bf16.mxu0 %v6067
        %7001 = vmatpush1.bf16.msra.mxu0 %v6066
        %7002 = vmatprep.subr.bf16.mxu0 %v6063
        %7003 = vmatpush1.bf16.msra.mxu0 %v6062
        %7004 = vmatprep.subr.bf16.mxu0 %v6059
        %7005 = vmatpush1.bf16.msra.mxu0 %v6058
        %7006 = vmatprep.subr.bf16.mxu0 %v6119
        %7007 = vmatpush2.bf16.msra.mxu0 %v6118
        %7008 = vmatprep.subr.bf16.mxu0 %v6115
        %7009 = vmatpush2.bf16.msra.mxu0 %v6114
        %7010 = vmatprep.subr.bf16.mxu0 %v6111
        %7011 = vmatpush2.bf16.msra.mxu0 %v6110
        %7012 = vmatprep.subr.bf16.mxu0 %v6107
        %7013 = vmatpush2.bf16.msra.mxu0 %v6106
        %7014 = vmatprep.subr.bf16.mxu0 %v6103
        %7015 = vmatpush2.bf16.msra.mxu0 %v6102
        %7016 = vmatprep.subr.bf16.mxu0 %v6099
        %7017 = vmatpush2.bf16.msra.mxu0 %v6098
        %7018 = vmatprep.subr.bf16.mxu0 %v6095
        %7019 = vmatpush2.bf16.msra.mxu0 %v6094
        %7020 = vmatprep.subr.bf16.mxu0 %v6091
        %7021 = vmatpush2.bf16.msra.mxu0 %v6090
        %7022 = vmatprep.mubr.bf16.mxu0 %v4231
        %7023 = vmatmul.mubr.bf16.gmra.mxu0 %v4223
        %v7024 = vpop.f32.mrf.mxu0
        %v7025 = vadd.f32 %v6984, %v7024
        %v7026 = vpop.f32.mrf.mxu0
        %v7027 = vadd.f32 %v6986, %v7026
        %v7028 = vpop.f32.mrf.mxu0
        %v7029 = vpop.f32.mrf.mxu0
        %7030 = vdwg.mxu0
        %7031 = vmatprep.subr.bf16.mxu0 %v6151
        %7032 = vmatpush1.bf16.msra.mxu0 %v6150
        %7033 = vmatprep.subr.bf16.mxu0 %v6147
        %7034 = vmatpush1.bf16.msra.mxu0 %v6146
        %7035 = vmatprep.subr.bf16.mxu0 %v6143
        %7036 = vmatpush1.bf16.msra.mxu0 %v6142
        %7037 = vmatprep.subr.bf16.mxu0 %v6139
        %7038 = vmatpush1.bf16.msra.mxu0 %v6138
        %7039 = vmatprep.subr.bf16.mxu0 %v6135
        %7040 = vmatpush1.bf16.msra.mxu0 %v6134
        %7041 = vmatprep.subr.bf16.mxu0 %v6131
        %7042 = vmatpush1.bf16.msra.mxu0 %v6130
        %7043 = vmatprep.subr.bf16.mxu0 %v6127
        %7044 = vmatpush1.bf16.msra.mxu0 %v6126
        %7045 = vmatprep.subr.bf16.mxu0 %v6123
        %7046 = vmatpush1.bf16.msra.mxu0 %v6122
        %7047 = vmatprep.subr.bf16.mxu0 %v6183
        %7048 = vmatpush2.bf16.msra.mxu0 %v6182
        %7049 = vmatprep.subr.bf16.mxu0 %v6179
        %7050 = vmatpush2.bf16.msra.mxu0 %v6178
        %7051 = vmatprep.subr.bf16.mxu0 %v6175
        %7052 = vmatpush2.bf16.msra.mxu0 %v6174
        %7053 = vmatprep.subr.bf16.mxu0 %v6171
        %7054 = vmatpush2.bf16.msra.mxu0 %v6170
        %7055 = vmatprep.subr.bf16.mxu0 %v6167
        %7056 = vmatpush2.bf16.msra.mxu0 %v6166
        %7057 = vmatprep.subr.bf16.mxu0 %v6163
        %7058 = vmatpush2.bf16.msra.mxu0 %v6162
        %7059 = vmatprep.subr.bf16.mxu0 %v6159
        %7060 = vmatpush2.bf16.msra.mxu0 %v6158
        %7061 = vmatprep.subr.bf16.mxu0 %v6155
        %7062 = vmatpush2.bf16.msra.mxu0 %v6154
        %7063 = vmatprep.mubr.bf16.mxu0 %v4232
        %7064 = vmatmul.mubr.bf16.gmra.mxu0 %v4230
        %v7065 = vpop.f32.mrf.mxu0
        %v7066 = vadd.f32 %v7025, %v7065
        %v7067 = vpop.f32.mrf.mxu0
        %v7068 = vadd.f32 %v7027, %v7067
        %v7069 = vpop.f32.mrf.mxu0
        %v7070 = vpop.f32.mrf.mxu0
        %7071 = vdwg.mxu0
        %7072 = vmatprep.subr.bf16.mxu0 %v6215
        %7073 = vmatpush1.bf16.msra.mxu0 %v6214
        %7074 = vmatprep.subr.bf16.mxu0 %v6211
        %7075 = vmatpush1.bf16.msra.mxu0 %v6210
        %7076 = vmatprep.subr.bf16.mxu0 %v6207
        %7077 = vmatpush1.bf16.msra.mxu0 %v6206
        %7078 = vmatprep.subr.bf16.mxu0 %v6203
        %7079 = vmatpush1.bf16.msra.mxu0 %v6202
        %7080 = vmatprep.subr.bf16.mxu0 %v6199
        %7081 = vmatpush1.bf16.msra.mxu0 %v6198
        %7082 = vmatprep.subr.bf16.mxu0 %v6195
        %7083 = vmatpush1.bf16.msra.mxu0 %v6194
        %7084 = vmatprep.subr.bf16.mxu0 %v6191
        %7085 = vmatpush1.bf16.msra.mxu0 %v6190
        %7086 = vmatprep.subr.bf16.mxu0 %v6187
        %7087 = vmatpush1.bf16.msra.mxu0 %v6186
        %7088 = vmatprep.subr.bf16.mxu0 %v6247
        %7089 = vmatpush2.bf16.msra.mxu0 %v6246
        %7090 = vmatprep.subr.bf16.mxu0 %v6243
        %7091 = vmatpush2.bf16.msra.mxu0 %v6242
        %7092 = vmatprep.subr.bf16.mxu0 %v6239
        %7093 = vmatpush2.bf16.msra.mxu0 %v6238
        %7094 = vmatprep.subr.bf16.mxu0 %v6235
        %7095 = vmatpush2.bf16.msra.mxu0 %v6234
        %7096 = vmatprep.subr.bf16.mxu0 %v6231
        %7097 = vmatpush2.bf16.msra.mxu0 %v6230
        %7098 = vmatprep.subr.bf16.mxu0 %v6227
        %7099 = vmatpush2.bf16.msra.mxu0 %v6226
        %7100 = vmatprep.subr.bf16.mxu0 %v6223
        %7101 = vmatpush2.bf16.msra.mxu0 %v6222
        %7102 = vmatprep.subr.bf16.mxu0 %v6219
        %7103 = vmatpush2.bf16.msra.mxu0 %v6218
        %7104 = vmatprep.mubr.bf16.mxu0 %v4248
        %7105 = vmatmul.mubr.bf16.gmra.mxu0 %v4240
        %v7106 = vpop.f32.mrf.mxu0
        %v7107 = vadd.f32 %v7066, %v7106
        %v7108 = vpop.f32.mrf.mxu0
        %v7109 = vadd.f32 %v7068, %v7108
        %v7110 = vpop.f32.mrf.mxu0
        %v7111 = vpop.f32.mrf.mxu0
        %7112 = vdwg.mxu0
        %7113 = vmatprep.subr.bf16.mxu0 %v6279
        %7114 = vmatpush1.bf16.msra.mxu0 %v6278
        %7115 = vmatprep.subr.bf16.mxu0 %v6275
        %7116 = vmatpush1.bf16.msra.mxu0 %v6274
        %7117 = vmatprep.subr.bf16.mxu0 %v6271
        %7118 = vmatpush1.bf16.msra.mxu0 %v6270
        %7119 = vmatprep.subr.bf16.mxu0 %v6267
        %7120 = vmatpush1.bf16.msra.mxu0 %v6266
        %7121 = vmatprep.subr.bf16.mxu0 %v6263
        %7122 = vmatpush1.bf16.msra.mxu0 %v6262
        %7123 = vmatprep.subr.bf16.mxu0 %v6259
        %7124 = vmatpush1.bf16.msra.mxu0 %v6258
        %7125 = vmatprep.subr.bf16.mxu0 %v6255
        %7126 = vmatpush1.bf16.msra.mxu0 %v6254
        %7127 = vmatprep.subr.bf16.mxu0 %v6251
        %7128 = vmatpush1.bf16.msra.mxu0 %v6250
        %7129 = vmatprep.subr.bf16.mxu0 %v6311
        %7130 = vmatpush2.bf16.msra.mxu0 %v6310
        %7131 = vmatprep.subr.bf16.mxu0 %v6307
        %7132 = vmatpush2.bf16.msra.mxu0 %v6306
        %7133 = vmatprep.subr.bf16.mxu0 %v6303
        %7134 = vmatpush2.bf16.msra.mxu0 %v6302
        %7135 = vmatprep.subr.bf16.mxu0 %v6299
        %7136 = vmatpush2.bf16.msra.mxu0 %v6298
        %7137 = vmatprep.subr.bf16.mxu0 %v6295
        %7138 = vmatpush2.bf16.msra.mxu0 %v6294
        %7139 = vmatprep.subr.bf16.mxu0 %v6291
        %7140 = vmatpush2.bf16.msra.mxu0 %v6290
        %7141 = vmatprep.subr.bf16.mxu0 %v6287
        %7142 = vmatpush2.bf16.msra.mxu0 %v6286
        %7143 = vmatprep.subr.bf16.mxu0 %v6283
        %7144 = vmatpush2.bf16.msra.mxu0 %v6282
        %7145 = vmatprep.mubr.bf16.mxu0 %v4249
        %7146 = vmatmul.mubr.bf16.gmra.mxu0 %v4247
        %v7147 = vpop.f32.mrf.mxu0
        %v7148 = vadd.f32 %v7107, %v7147
        %v7149 = vpop.f32.mrf.mxu0
        %v7150 = vadd.f32 %v7109, %v7149
        %v7151 = vpop.f32.mrf.mxu0
        %v7152 = vpop.f32.mrf.mxu0
        %7153 = vdwg.mxu0
        %7154 = vmatprep.subr.bf16.mxu0 %v5833
        %7155 = vmatpush1.bf16.msra.mxu0 %v5832
        %7156 = vmatprep.subr.bf16.mxu0 %v5829
        %7157 = vmatpush1.bf16.msra.mxu0 %v5828
        %7158 = vmatprep.subr.bf16.mxu0 %v5825
        %7159 = vmatpush1.bf16.msra.mxu0 %v5824
        %7160 = vmatprep.subr.bf16.mxu0 %v5821
        %7161 = vmatpush1.bf16.msra.mxu0 %v5820
        %7162 = vmatprep.subr.bf16.mxu0 %v5817
        %7163 = vmatpush1.bf16.msra.mxu0 %v5816
        %7164 = vmatprep.subr.bf16.mxu0 %v5813
        %7165 = vmatpush1.bf16.msra.mxu0 %v5812
        %7166 = vmatprep.subr.bf16.mxu0 %v5809
        %7167 = vmatpush1.bf16.msra.mxu0 %v5808
        %7168 = vmatprep.subr.bf16.mxu0 %v5805
        %7169 = vmatpush1.bf16.msra.mxu0 %v5804
        %7170 = vmatprep.subr.bf16.mxu0 %v5865
        %7171 = vmatpush2.bf16.msra.mxu0 %v5864
        %7172 = vmatprep.subr.bf16.mxu0 %v5861
        %7173 = vmatpush2.bf16.msra.mxu0 %v5860
        %7174 = vmatprep.subr.bf16.mxu0 %v5857
        %7175 = vmatpush2.bf16.msra.mxu0 %v5856
        %7176 = vmatprep.subr.bf16.mxu0 %v5853
        %7177 = vmatpush2.bf16.msra.mxu0 %v5852
        %7178 = vmatprep.subr.bf16.mxu0 %v5849
        %7179 = vmatpush2.bf16.msra.mxu0 %v5848
        %7180 = vmatprep.subr.bf16.mxu0 %v5845
        %7181 = vmatpush2.bf16.msra.mxu0 %v5844
        %7182 = vmatprep.subr.bf16.mxu0 %v5841
        %7183 = vmatpush2.bf16.msra.mxu0 %v5840
        %7184 = vmatprep.subr.bf16.mxu0 %v5837
        %7185 = vmatpush2.bf16.msra.mxu0 %v5836
        %7186 = vmatprep.mubr.bf16.mxu0 %v4197
        %7187 = vmatmul.mubr.bf16.gmra.mxu0 %v4189
        %v7188 = vpop.f32.mrf.mxu0
        %v7189 = vadd.f32 0.0, %v7188
        %v7190 = vpop.f32.mrf.mxu0
        %v7191 = vadd.f32 0.0, %v7190
        %v7192 = vpop.f32.mrf.mxu0
        %v7193 = vpop.f32.mrf.mxu0
        %7194 = vdwg.mxu0
        %7195 = vmatprep.subr.bf16.mxu0 %v5897
        %7196 = vmatpush1.bf16.msra.mxu0 %v5896
        %7197 = vmatprep.subr.bf16.mxu0 %v5893
        %7198 = vmatpush1.bf16.msra.mxu0 %v5892
        %7199 = vmatprep.subr.bf16.mxu0 %v5889
        %7200 = vmatpush1.bf16.msra.mxu0 %v5888
        %7201 = vmatprep.subr.bf16.mxu0 %v5885
        %7202 = vmatpush1.bf16.msra.mxu0 %v5884
        %7203 = vmatprep.subr.bf16.mxu0 %v5881
        %7204 = vmatpush1.bf16.msra.mxu0 %v5880
        %7205 = vmatprep.subr.bf16.mxu0 %v5877
        %7206 = vmatpush1.bf16.msra.mxu0 %v5876
        %7207 = vmatprep.subr.bf16.mxu0 %v5873
        %7208 = vmatpush1.bf16.msra.mxu0 %v5872
        %7209 = vmatprep.subr.bf16.mxu0 %v5869
        %7210 = vmatpush1.bf16.msra.mxu0 %v5868
        %7211 = vmatprep.subr.bf16.mxu0 %v5929
        %7212 = vmatpush2.bf16.msra.mxu0 %v5928
        %7213 = vmatprep.subr.bf16.mxu0 %v5925
        %7214 = vmatpush2.bf16.msra.mxu0 %v5924
        %7215 = vmatprep.subr.bf16.mxu0 %v5921
        %7216 = vmatpush2.bf16.msra.mxu0 %v5920
        %7217 = vmatprep.subr.bf16.mxu0 %v5917
        %7218 = vmatpush2.bf16.msra.mxu0 %v5916
        %7219 = vmatprep.subr.bf16.mxu0 %v5913
        %7220 = vmatpush2.bf16.msra.mxu0 %v5912
        %7221 = vmatprep.subr.bf16.mxu0 %v5909
        %7222 = vmatpush2.bf16.msra.mxu0 %v5908
        %7223 = vmatprep.subr.bf16.mxu0 %v5905
        %7224 = vmatpush2.bf16.msra.mxu0 %v5904
        %7225 = vmatprep.subr.bf16.mxu0 %v5901
        %7226 = vmatpush2.bf16.msra.mxu0 %v5900
        %7227 = vmatprep.mubr.bf16.mxu0 %v4198
        %7228 = vmatmul.mubr.bf16.gmra.mxu0 %v4196
        %v7229 = vpop.f32.mrf.mxu0
        %v7230 = vadd.f32 %v7189, %v7229
        %v7231 = vpop.f32.mrf.mxu0
        %v7232 = vadd.f32 %v7191, %v7231
        %v7233 = vpop.f32.mrf.mxu0
        %v7234 = vpop.f32.mrf.mxu0
        %7235 = vdwg.mxu0
        %7236 = vmatprep.subr.bf16.mxu0 %v5961
        %7237 = vmatpush1.bf16.msra.mxu0 %v5960
        %7238 = vmatprep.subr.bf16.mxu0 %v5957
        %7239 = vmatpush1.bf16.msra.mxu0 %v5956
        %7240 = vmatprep.subr.bf16.mxu0 %v5953
        %7241 = vmatpush1.bf16.msra.mxu0 %v5952
        %7242 = vmatprep.subr.bf16.mxu0 %v5949
        %7243 = vmatpush1.bf16.msra.mxu0 %v5948
        %7244 = vmatprep.subr.bf16.mxu0 %v5945
        %7245 = vmatpush1.bf16.msra.mxu0 %v5944
        %7246 = vmatprep.subr.bf16.mxu0 %v5941
        %7247 = vmatpush1.bf16.msra.mxu0 %v5940
        %7248 = vmatprep.subr.bf16.mxu0 %v5937
        %7249 = vmatpush1.bf16.msra.mxu0 %v5936
        %7250 = vmatprep.subr.bf16.mxu0 %v5933
        %7251 = vmatpush1.bf16.msra.mxu0 %v5932
        %7252 = vmatprep.subr.bf16.mxu0 %v5993
        %7253 = vmatpush2.bf16.msra.mxu0 %v5992
        %7254 = vmatprep.subr.bf16.mxu0 %v5989
        %7255 = vmatpush2.bf16.msra.mxu0 %v5988
        %7256 = vmatprep.subr.bf16.mxu0 %v5985
        %7257 = vmatpush2.bf16.msra.mxu0 %v5984
        %7258 = vmatprep.subr.bf16.mxu0 %v5981
        %7259 = vmatpush2.bf16.msra.mxu0 %v5980
        %7260 = vmatprep.subr.bf16.mxu0 %v5977
        %7261 = vmatpush2.bf16.msra.mxu0 %v5976
        %7262 = vmatprep.subr.bf16.mxu0 %v5973
        %7263 = vmatpush2.bf16.msra.mxu0 %v5972
        %7264 = vmatprep.subr.bf16.mxu0 %v5969
        %7265 = vmatpush2.bf16.msra.mxu0 %v5968
        %7266 = vmatprep.subr.bf16.mxu0 %v5965
        %7267 = vmatpush2.bf16.msra.mxu0 %v5964
        %7268 = vmatprep.mubr.bf16.mxu0 %v4214
        %7269 = vmatmul.mubr.bf16.gmra.mxu0 %v4206
        %v7270 = vpop.f32.mrf.mxu0
        %v7271 = vadd.f32 %v7230, %v7270
        %v7272 = vpop.f32.mrf.mxu0
        %v7273 = vadd.f32 %v7232, %v7272
        %v7274 = vpop.f32.mrf.mxu0
        %v7275 = vpop.f32.mrf.mxu0
        %7276 = vdwg.mxu0
        %7277 = vmatprep.subr.bf16.mxu0 %v6025
        %7278 = vmatpush1.bf16.msra.mxu0 %v6024
        %7279 = vmatprep.subr.bf16.mxu0 %v6021
        %7280 = vmatpush1.bf16.msra.mxu0 %v6020
        %7281 = vmatprep.subr.bf16.mxu0 %v6017
        %7282 = vmatpush1.bf16.msra.mxu0 %v6016
        %7283 = vmatprep.subr.bf16.mxu0 %v6013
        %7284 = vmatpush1.bf16.msra.mxu0 %v6012
        %7285 = vmatprep.subr.bf16.mxu0 %v6009
        %7286 = vmatpush1.bf16.msra.mxu0 %v6008
        %7287 = vmatprep.subr.bf16.mxu0 %v6005
        %7288 = vmatpush1.bf16.msra.mxu0 %v6004
        %7289 = vmatprep.subr.bf16.mxu0 %v6001
        %7290 = vmatpush1.bf16.msra.mxu0 %v6000
        %7291 = vmatprep.subr.bf16.mxu0 %v5997
        %7292 = vmatpush1.bf16.msra.mxu0 %v5996
        %7293 = vmatprep.subr.bf16.mxu0 %v6057
        %7294 = vmatpush2.bf16.msra.mxu0 %v6056
        %7295 = vmatprep.subr.bf16.mxu0 %v6053
        %7296 = vmatpush2.bf16.msra.mxu0 %v6052
        %7297 = vmatprep.subr.bf16.mxu0 %v6049
        %7298 = vmatpush2.bf16.msra.mxu0 %v6048
        %7299 = vmatprep.subr.bf16.mxu0 %v6045
        %7300 = vmatpush2.bf16.msra.mxu0 %v6044
        %7301 = vmatprep.subr.bf16.mxu0 %v6041
        %7302 = vmatpush2.bf16.msra.mxu0 %v6040
        %7303 = vmatprep.subr.bf16.mxu0 %v6037
        %7304 = vmatpush2.bf16.msra.mxu0 %v6036
        %7305 = vmatprep.subr.bf16.mxu0 %v6033
        %7306 = vmatpush2.bf16.msra.mxu0 %v6032
        %7307 = vmatprep.subr.bf16.mxu0 %v6029
        %7308 = vmatpush2.bf16.msra.mxu0 %v6028
        %7309 = vmatprep.mubr.bf16.mxu0 %v4215
        %7310 = vmatmul.mubr.bf16.gmra.mxu0 %v4213
        %v7311 = vpop.f32.mrf.mxu0
        %v7312 = vadd.f32 %v7271, %v7311
        %v7313 = vpop.f32.mrf.mxu0
        %v7314 = vadd.f32 %v7273, %v7313
        %v7315 = vpop.f32.mrf.mxu0
        %v7316 = vpop.f32.mrf.mxu0
        %7317 = vdwg.mxu0
        %7318 = vmatprep.subr.bf16.mxu0 %v6089
        %7319 = vmatpush1.bf16.msra.mxu0 %v6088
        %7320 = vmatprep.subr.bf16.mxu0 %v6085
        %7321 = vmatpush1.bf16.msra.mxu0 %v6084
        %7322 = vmatprep.subr.bf16.mxu0 %v6081
        %7323 = vmatpush1.bf16.msra.mxu0 %v6080
        %7324 = vmatprep.subr.bf16.mxu0 %v6077
        %7325 = vmatpush1.bf16.msra.mxu0 %v6076
        %7326 = vmatprep.subr.bf16.mxu0 %v6073
        %7327 = vmatpush1.bf16.msra.mxu0 %v6072
        %7328 = vmatprep.subr.bf16.mxu0 %v6069
        %7329 = vmatpush1.bf16.msra.mxu0 %v6068
        %7330 = vmatprep.subr.bf16.mxu0 %v6065
        %7331 = vmatpush1.bf16.msra.mxu0 %v6064
        %7332 = vmatprep.subr.bf16.mxu0 %v6061
        %7333 = vmatpush1.bf16.msra.mxu0 %v6060
        %7334 = vmatprep.subr.bf16.mxu0 %v6121
        %7335 = vmatpush2.bf16.msra.mxu0 %v6120
        %7336 = vmatprep.subr.bf16.mxu0 %v6117
        %7337 = vmatpush2.bf16.msra.mxu0 %v6116
        %7338 = vmatprep.subr.bf16.mxu0 %v6113
        %7339 = vmatpush2.bf16.msra.mxu0 %v6112
        %7340 = vmatprep.subr.bf16.mxu0 %v6109
        %7341 = vmatpush2.bf16.msra.mxu0 %v6108
        %7342 = vmatprep.subr.bf16.mxu0 %v6105
        %7343 = vmatpush2.bf16.msra.mxu0 %v6104
        %7344 = vmatprep.subr.bf16.mxu0 %v6101
        %7345 = vmatpush2.bf16.msra.mxu0 %v6100
        %7346 = vmatprep.subr.bf16.mxu0 %v6097
        %7347 = vmatpush2.bf16.msra.mxu0 %v6096
        %7348 = vmatprep.subr.bf16.mxu0 %v6093
        %7349 = vmatpush2.bf16.msra.mxu0 %v6092
        %7350 = vmatprep.mubr.bf16.mxu0 %v4231
        %7351 = vmatmul.mubr.bf16.gmra.mxu0 %v4223
        %v7352 = vpop.f32.mrf.mxu0
        %v7353 = vadd.f32 %v7312, %v7352
        %v7354 = vpop.f32.mrf.mxu0
        %v7355 = vadd.f32 %v7314, %v7354
        %v7356 = vpop.f32.mrf.mxu0
        %v7357 = vpop.f32.mrf.mxu0
        %7358 = vdwg.mxu0
        %7359 = vmatprep.subr.bf16.mxu0 %v6153
        %7360 = vmatpush1.bf16.msra.mxu0 %v6152
        %7361 = vmatprep.subr.bf16.mxu0 %v6149
        %7362 = vmatpush1.bf16.msra.mxu0 %v6148
        %7363 = vmatprep.subr.bf16.mxu0 %v6145
        %7364 = vmatpush1.bf16.msra.mxu0 %v6144
        %7365 = vmatprep.subr.bf16.mxu0 %v6141
        %7366 = vmatpush1.bf16.msra.mxu0 %v6140
        %7367 = vmatprep.subr.bf16.mxu0 %v6137
        %7368 = vmatpush1.bf16.msra.mxu0 %v6136
        %7369 = vmatprep.subr.bf16.mxu0 %v6133
        %7370 = vmatpush1.bf16.msra.mxu0 %v6132
        %7371 = vmatprep.subr.bf16.mxu0 %v6129
        %7372 = vmatpush1.bf16.msra.mxu0 %v6128
        %7373 = vmatprep.subr.bf16.mxu0 %v6125
        %7374 = vmatpush1.bf16.msra.mxu0 %v6124
        %7375 = vmatprep.subr.bf16.mxu0 %v6185
        %7376 = vmatpush2.bf16.msra.mxu0 %v6184
        %7377 = vmatprep.subr.bf16.mxu0 %v6181
        %7378 = vmatpush2.bf16.msra.mxu0 %v6180
        %7379 = vmatprep.subr.bf16.mxu0 %v6177
        %7380 = vmatpush2.bf16.msra.mxu0 %v6176
        %7381 = vmatprep.subr.bf16.mxu0 %v6173
        %7382 = vmatpush2.bf16.msra.mxu0 %v6172
        %7383 = vmatprep.subr.bf16.mxu0 %v6169
        %7384 = vmatpush2.bf16.msra.mxu0 %v6168
        %7385 = vmatprep.subr.bf16.mxu0 %v6165
        %7386 = vmatpush2.bf16.msra.mxu0 %v6164
        %7387 = vmatprep.subr.bf16.mxu0 %v6161
        %7388 = vmatpush2.bf16.msra.mxu0 %v6160
        %7389 = vmatprep.subr.bf16.mxu0 %v6157
        %7390 = vmatpush2.bf16.msra.mxu0 %v6156
        %7391 = vmatprep.mubr.bf16.mxu0 %v4232
        %7392 = vmatmul.mubr.bf16.gmra.mxu0 %v4230
        %v7393 = vpop.f32.mrf.mxu0
        %v7394 = vadd.f32 %v7353, %v7393
        %v7395 = vpop.f32.mrf.mxu0
        %v7396 = vadd.f32 %v7355, %v7395
        %v7397 = vpop.f32.mrf.mxu0
        %v7398 = vpop.f32.mrf.mxu0
        %7399 = vdwg.mxu0
        %7400 = vmatprep.subr.bf16.mxu0 %v6217
        %7401 = vmatpush1.bf16.msra.mxu0 %v6216
        %7402 = vmatprep.subr.bf16.mxu0 %v6213
        %7403 = vmatpush1.bf16.msra.mxu0 %v6212
        %7404 = vmatprep.subr.bf16.mxu0 %v6209
        %7405 = vmatpush1.bf16.msra.mxu0 %v6208
        %7406 = vmatprep.subr.bf16.mxu0 %v6205
        %7407 = vmatpush1.bf16.msra.mxu0 %v6204
        %7408 = vmatprep.subr.bf16.mxu0 %v6201
        %7409 = vmatpush1.bf16.msra.mxu0 %v6200
        %7410 = vmatprep.subr.bf16.mxu0 %v6197
        %7411 = vmatpush1.bf16.msra.mxu0 %v6196
        %7412 = vmatprep.subr.bf16.mxu0 %v6193
        %7413 = vmatpush1.bf16.msra.mxu0 %v6192
        %7414 = vmatprep.subr.bf16.mxu0 %v6189
        %7415 = vmatpush1.bf16.msra.mxu0 %v6188
        %7416 = vmatprep.subr.bf16.mxu0 %v6249
        %7417 = vmatpush2.bf16.msra.mxu0 %v6248
        %7418 = vmatprep.subr.bf16.mxu0 %v6245
        %7419 = vmatpush2.bf16.msra.mxu0 %v6244
        %7420 = vmatprep.subr.bf16.mxu0 %v6241
        %7421 = vmatpush2.bf16.msra.mxu0 %v6240
        %7422 = vmatprep.subr.bf16.mxu0 %v6237
        %7423 = vmatpush2.bf16.msra.mxu0 %v6236
        %7424 = vmatprep.subr.bf16.mxu0 %v6233
        %7425 = vmatpush2.bf16.msra.mxu0 %v6232
        %7426 = vmatprep.subr.bf16.mxu0 %v6229
        %7427 = vmatpush2.bf16.msra.mxu0 %v6228
        %7428 = vmatprep.subr.bf16.mxu0 %v6225
        %7429 = vmatpush2.bf16.msra.mxu0 %v6224
        %7430 = vmatprep.subr.bf16.mxu0 %v6221
        %7431 = vmatpush2.bf16.msra.mxu0 %v6220
        %7432 = vmatprep.mubr.bf16.mxu0 %v4248
        %7433 = vmatmul.mubr.bf16.gmra.mxu0 %v4240
        %v7434 = vpop.f32.mrf.mxu0
        %v7435 = vadd.f32 %v7394, %v7434
        %v7436 = vpop.f32.mrf.mxu0
        %v7437 = vadd.f32 %v7396, %v7436
        %v7438 = vpop.f32.mrf.mxu0
        %v7439 = vpop.f32.mrf.mxu0
        %7440 = vdwg.mxu0
        %7441 = vmatprep.subr.bf16.mxu0 %v6281
        %7442 = vmatpush1.bf16.msra.mxu0 %v6280
        %7443 = vmatprep.subr.bf16.mxu0 %v6277
        %7444 = vmatpush1.bf16.msra.mxu0 %v6276
        %7445 = vmatprep.subr.bf16.mxu0 %v6273
        %7446 = vmatpush1.bf16.msra.mxu0 %v6272
        %7447 = vmatprep.subr.bf16.mxu0 %v6269
        %7448 = vmatpush1.bf16.msra.mxu0 %v6268
        %7449 = vmatprep.subr.bf16.mxu0 %v6265
        %7450 = vmatpush1.bf16.msra.mxu0 %v6264
        %7451 = vmatprep.subr.bf16.mxu0 %v6261
        %7452 = vmatpush1.bf16.msra.mxu0 %v6260
        %7453 = vmatprep.subr.bf16.mxu0 %v6257
        %7454 = vmatpush1.bf16.msra.mxu0 %v6256
        %7455 = vmatprep.subr.bf16.mxu0 %v6253
        %7456 = vmatpush1.bf16.msra.mxu0 %v6252
        %7457 = vmatprep.subr.bf16.mxu0 %v6313
        %7458 = vmatpush2.bf16.msra.mxu0 %v6312
        %7459 = vmatprep.subr.bf16.mxu0 %v6309
        %7460 = vmatpush2.bf16.msra.mxu0 %v6308
        %7461 = vmatprep.subr.bf16.mxu0 %v6305
        %7462 = vmatpush2.bf16.msra.mxu0 %v6304
        %7463 = vmatprep.subr.bf16.mxu0 %v6301
        %7464 = vmatpush2.bf16.msra.mxu0 %v6300
        %7465 = vmatprep.subr.bf16.mxu0 %v6297
        %7466 = vmatpush2.bf16.msra.mxu0 %v6296
        %7467 = vmatprep.subr.bf16.mxu0 %v6293
        %7468 = vmatpush2.bf16.msra.mxu0 %v6292
        %7469 = vmatprep.subr.bf16.mxu0 %v6289
        %7470 = vmatpush2.bf16.msra.mxu0 %v6288
        %7471 = vmatprep.subr.bf16.mxu0 %v6285
        %7472 = vmatpush2.bf16.msra.mxu0 %v6284
        %7473 = vmatprep.mubr.bf16.mxu0 %v4249
        %7474 = vmatmul.mubr.bf16.gmra.mxu0 %v4247
        %v7475 = vpop.f32.mrf.mxu0
        %v7476 = vadd.f32 %v7435, %v7475
        %v7477 = vpop.f32.mrf.mxu0
        %v7478 = vadd.f32 %v7437, %v7477
        %v7479 = vpop.f32.mrf.mxu0
        %v7480 = vpop.f32.mrf.mxu0
        %7481 = vdwg.mxu0
        %v7486 = vcombine.low %v7148, %v7150
        %v7487 = vcombine.low %v7476, %v7478
        %v7490 = vadd.f32 %v3657, %v7486
        %v7491 = vadd.f32 %v3658, %v7487
        %7492 = vst [vmem:[#allocation5] sm:$0xff] %v7490
        %7493 = vst [vmem:[#allocation5 + $0x8] sm:$0xff] %v7491
        %p7494 = scmp.eq.s32.totalorder %s35, 1
        // Predicated region
        $region113: #{cnn_forward.1} parent=71 // pred_check
          %p7495 = pneg %p7494
        $region114: #{cnn_forward.1} parent=71 // pred_check_branch
          %7497 = sbr.rel (%p7495) target = $region116
        $region115: #{cnn_forward.1} parent=71 // pred_region
          %v7498 = vld [vmem:[#allocation5] sm:$0xff]
          %v7499 = vld [vmem:[#allocation5 + $0x8] sm:$0xff]
          %v7500 = vld [vmem:[#allocation14] sm:$0xf]
          %v7502 = vlaneseq
          %v7503 = vshrl.u32 %v7502, 7
          %v7504 = vsub.s32 0, %v7503
          %v7505 = vrot.slane %v7500, %v7504
          %v7506 = vlaneseq
          %v7507 = vshrl.u32 %v7506, 7
          %v7508 = vsub.s32 1, %v7507
          %v7509 = vrot.slane %v7500, %v7508
          %v7510 = vlaneseq
          %v7511 = vshrl.u32 %v7510, 7
          %v7512 = vsub.s32 2, %v7511
          %v7513 = vrot.slane %v7500, %v7512
          %v7514 = vlaneseq
          %v7515 = vshrl.u32 %v7514, 7
          %v7516 = vsub.s32 3, %v7515
          %v7517 = vrot.slane %v7500, %v7516
          %v7518 = vcombine.low %v7505, %v7509
          %v7519 = vcombine.low %v7513, %v7517
          %v7522 = vadd.f32 %v7498, %v7518
          %v7523 = vadd.f32 %v7499, %v7519
          %v7524 = vmax.f32 %v7522, 0.0
          %v7525 = vmax.f32 %v7523, 0.0
          %v7528 = vcombine.high %v7524, %v7524
          %v7529 = vcombine.high %v7525, %v7525
          %v7532 = vpack.c.bf16 %v7524, %v7524
          %v7533 = vpack.c.bf16 %v7528, %v7528
          %v7534 = vpack.c.bf16 %v7525, %v7525
          %v7535 = vpack.c.bf16 %v7529, %v7529
          %v7536 = vld [vmem:[#allocation15] sm:$0xf]
          %v7537 = vld [vmem:[#allocation15 + $0x4] sm:$0xf]
          %v7538 = vld [vmem:[#allocation15 + $0x8] sm:$0xf]
          %v7539 = vld [vmem:[#allocation15 + $0xc] sm:$0xf]
          %v7540 = vld [vmem:[#allocation15 + $0x10] sm:$0xf]
          %v7541 = vld [vmem:[#allocation15 + $0x14] sm:$0xf]
          %v7542 = vld [vmem:[#allocation15 + $0x18] sm:$0xf]
          %v7543 = vld [vmem:[#allocation15 + $0x1c] sm:$0xf]
          %v7544 = vld [vmem:[#allocation15 + $0x20] sm:$0xf]
          %v7545 = vld [vmem:[#allocation15 + $0x24] sm:$0xf]
          %v7546 = vld [vmem:[#allocation15 + $0x28] sm:$0xf]
          %v7547 = vld [vmem:[#allocation15 + $0x2c] sm:$0xf]
          %v7548 = vld [vmem:[#allocation15 + $0x30] sm:$0xf]
          %v7549 = vld [vmem:[#allocation15 + $0x34] sm:$0xf]
          %v7550 = vld [vmem:[#allocation15 + $0x38] sm:$0xf]
          %v7551 = vld [vmem:[#allocation15 + $0x3c] sm:$0xf]
          %v7552 = vld [vmem:[#allocation15 + $0x40] sm:$0xf]
          %v7553 = vld [vmem:[#allocation15 + $0x44] sm:$0xf]
          %v7554 = vld [vmem:[#allocation15 + $0x48] sm:$0xf]
          %v7555 = vld [vmem:[#allocation15 + $0x4c] sm:$0xf]
          %v7556 = vld [vmem:[#allocation15 + $0x50] sm:$0xf]
          %v7557 = vld [vmem:[#allocation15 + $0x54] sm:$0xf]
          %v7558 = vld [vmem:[#allocation15 + $0x58] sm:$0xf]
          %v7559 = vld [vmem:[#allocation15 + $0x5c] sm:$0xf]
          %v7560 = vld [vmem:[#allocation15 + $0x60] sm:$0xf]
          %v7561 = vld [vmem:[#allocation15 + $0x64] sm:$0xf]
          %v7562 = vld [vmem:[#allocation15 + $0x68] sm:$0xf]
          %v7563 = vld [vmem:[#allocation15 + $0x6c] sm:$0xf]
          %v7564 = vld [vmem:[#allocation15 + $0x70] sm:$0xf]
          %v7565 = vld [vmem:[#allocation15 + $0x74] sm:$0xf]
          %v7566 = vld [vmem:[#allocation15 + $0x78] sm:$0xf]
          %v7567 = vld [vmem:[#allocation15 + $0x7c] sm:$0xf]
          %v7568 = vld [vmem:[#allocation15 + $0x80] sm:$0xf]
          %v7569 = vld [vmem:[#allocation15 + $0x84] sm:$0xf]
          %v7570 = vld [vmem:[#allocation15 + $0x88] sm:$0xf]
          %v7571 = vld [vmem:[#allocation15 + $0x8c] sm:$0xf]
          %v7572 = vld [vmem:[#allocation15 + $0x90] sm:$0xf]
          %v7573 = vld [vmem:[#allocation15 + $0x94] sm:$0xf]
          %v7574 = vld [vmem:[#allocation15 + $0x98] sm:$0xf]
          %v7575 = vld [vmem:[#allocation15 + $0x9c] sm:$0xf]
          %v7576 = vld [vmem:[#allocation15 + $0xa0] sm:$0xf]
          %v7577 = vld [vmem:[#allocation15 + $0xa4] sm:$0xf]
          %v7578 = vld [vmem:[#allocation15 + $0xa8] sm:$0xf]
          %v7579 = vld [vmem:[#allocation15 + $0xac] sm:$0xf]
          %v7580 = vld [vmem:[#allocation15 + $0xb0] sm:$0xf]
          %v7581 = vld [vmem:[#allocation15 + $0xb4] sm:$0xf]
          %v7582 = vld [vmem:[#allocation15 + $0xb8] sm:$0xf]
          %v7583 = vld [vmem:[#allocation15 + $0xbc] sm:$0xf]
          %v7584 = vld [vmem:[#allocation15 + $0xc0] sm:$0xf]
          %v7585 = vld [vmem:[#allocation15 + $0xc4] sm:$0xf]
          %v7586 = vld [vmem:[#allocation15 + $0xc8] sm:$0xf]
          %v7587 = vld [vmem:[#allocation15 + $0xcc] sm:$0xf]
          %v7588 = vld [vmem:[#allocation15 + $0xd0] sm:$0xf]
          %v7589 = vld [vmem:[#allocation15 + $0xd4] sm:$0xf]
          %v7590 = vld [vmem:[#allocation15 + $0xd8] sm:$0xf]
          %v7591 = vld [vmem:[#allocation15 + $0xdc] sm:$0xf]
          %v7592 = vld [vmem:[#allocation15 + $0xe0] sm:$0xf]
          %v7593 = vld [vmem:[#allocation15 + $0xe4] sm:$0xf]
          %v7594 = vld [vmem:[#allocation15 + $0xe8] sm:$0xf]
          %v7595 = vld [vmem:[#allocation15 + $0xec] sm:$0xf]
          %v7596 = vld [vmem:[#allocation15 + $0xf0] sm:$0xf]
          %v7597 = vld [vmem:[#allocation15 + $0xf4] sm:$0xf]
          %v7598 = vld [vmem:[#allocation15 + $0xf8] sm:$0xf]
          %v7599 = vld [vmem:[#allocation15 + $0xfc] sm:$0xf]
          %v7600 = vld [vmem:[#allocation17] sm:$0x1]
          %v7602 = vlaneseq
          %v7603 = vshrl.u32 %v7602, 7
          %v7604 = vsub.s32 0, %v7603
          %v7605 = vrot.slane %v7600, %v7604
          %v7671 = vunpack.c.l.b16 %v7536
          %v7672 = vunpack.c.l.b16 %v7537
          %v7673 = vunpack.c.l.b16 %v7538
          %v7674 = vunpack.c.l.b16 %v7539
          %v7675 = vunpack.c.l.b16 %v7540
          %v7676 = vunpack.c.l.b16 %v7541
          %v7677 = vunpack.c.l.b16 %v7542
          %v7678 = vunpack.c.l.b16 %v7543
          %v7679 = vunpack.c.l.b16 %v7544
          %v7680 = vunpack.c.l.b16 %v7545
          %v7681 = vunpack.c.l.b16 %v7546
          %v7682 = vunpack.c.l.b16 %v7547
          %v7683 = vunpack.c.l.b16 %v7548
          %v7684 = vunpack.c.l.b16 %v7549
          %v7685 = vunpack.c.l.b16 %v7550
          %v7686 = vunpack.c.l.b16 %v7551
          %v7687 = vunpack.c.l.b16 %v7552
          %v7688 = vunpack.c.l.b16 %v7553
          %v7689 = vunpack.c.l.b16 %v7554
          %v7690 = vunpack.c.l.b16 %v7555
          %v7691 = vunpack.c.l.b16 %v7556
          %v7692 = vunpack.c.l.b16 %v7557
          %v7693 = vunpack.c.l.b16 %v7558
          %v7694 = vunpack.c.l.b16 %v7559
          %v7695 = vunpack.c.l.b16 %v7560
          %v7696 = vunpack.c.l.b16 %v7561
          %v7697 = vunpack.c.l.b16 %v7562
          %v7698 = vunpack.c.l.b16 %v7563
          %v7699 = vunpack.c.l.b16 %v7564
          %v7700 = vunpack.c.l.b16 %v7565
          %v7701 = vunpack.c.l.b16 %v7566
          %v7702 = vunpack.c.l.b16 %v7567
          %v7703 = vunpack.c.l.b16 %v7568
          %v7704 = vunpack.c.l.b16 %v7569
          %v7705 = vunpack.c.l.b16 %v7570
          %v7706 = vunpack.c.l.b16 %v7571
          %v7707 = vunpack.c.l.b16 %v7572
          %v7708 = vunpack.c.l.b16 %v7573
          %v7709 = vunpack.c.l.b16 %v7574
          %v7710 = vunpack.c.l.b16 %v7575
          %v7711 = vunpack.c.l.b16 %v7576
          %v7712 = vunpack.c.l.b16 %v7577
          %v7713 = vunpack.c.l.b16 %v7578
          %v7714 = vunpack.c.l.b16 %v7579
          %v7715 = vunpack.c.l.b16 %v7580
          %v7716 = vunpack.c.l.b16 %v7581
          %v7717 = vunpack.c.l.b16 %v7582
          %v7718 = vunpack.c.l.b16 %v7583
          %v7719 = vunpack.c.l.b16 %v7584
          %v7720 = vunpack.c.l.b16 %v7585
          %v7721 = vunpack.c.l.b16 %v7586
          %v7722 = vunpack.c.l.b16 %v7587
          %v7723 = vunpack.c.l.b16 %v7588
          %v7724 = vunpack.c.l.b16 %v7589
          %v7725 = vunpack.c.l.b16 %v7590
          %v7726 = vunpack.c.l.b16 %v7591
          %v7727 = vunpack.c.l.b16 %v7592
          %v7728 = vunpack.c.l.b16 %v7593
          %v7729 = vunpack.c.l.b16 %v7594
          %v7730 = vunpack.c.l.b16 %v7595
          %v7731 = vunpack.c.l.b16 %v7596
          %v7732 = vunpack.c.l.b16 %v7597
          %v7733 = vunpack.c.l.b16 %v7598
          %v7734 = vunpack.c.l.b16 %v7599
          %v7735 = vpack.c.b16 %v7672, %v7671
          %v7736 = vpack.c.b16 %v7674, %v7673
          %v7737 = vpack.c.b16 %v7676, %v7675
          %v7738 = vpack.c.b16 %v7678, %v7677
          %v7739 = vpack.c.b16 %v7680, %v7679
          %v7740 = vpack.c.b16 %v7682, %v7681
          %v7741 = vpack.c.b16 %v7684, %v7683
          %v7742 = vpack.c.b16 %v7686, %v7685
          %v7743 = vpack.c.b16 %v7688, %v7687
          %v7744 = vpack.c.b16 %v7690, %v7689
          %v7745 = vpack.c.b16 %v7692, %v7691
          %v7746 = vpack.c.b16 %v7694, %v7693
          %v7747 = vpack.c.b16 %v7696, %v7695
          %v7748 = vpack.c.b16 %v7698, %v7697
          %v7749 = vpack.c.b16 %v7700, %v7699
          %v7750 = vpack.c.b16 %v7702, %v7701
          %v7751 = vpack.c.b16 %v7704, %v7703
          %v7752 = vpack.c.b16 %v7706, %v7705
          %v7753 = vpack.c.b16 %v7708, %v7707
          %v7754 = vpack.c.b16 %v7710, %v7709
          %v7755 = vpack.c.b16 %v7712, %v7711
          %v7756 = vpack.c.b16 %v7714, %v7713
          %v7757 = vpack.c.b16 %v7716, %v7715
          %v7758 = vpack.c.b16 %v7718, %v7717
          %v7759 = vpack.c.b16 %v7720, %v7719
          %v7760 = vpack.c.b16 %v7722, %v7721
          %v7761 = vpack.c.b16 %v7724, %v7723
          %v7762 = vpack.c.b16 %v7726, %v7725
          %v7763 = vpack.c.b16 %v7728, %v7727
          %v7764 = vpack.c.b16 %v7730, %v7729
          %v7765 = vpack.c.b16 %v7732, %v7731
          %v7766 = vpack.c.b16 %v7734, %v7733
          %7799 = vmatprep.subr.bf16.mxu0 0
          %7800 = vmatpush1.bf16.msra.mxu0 %v7742
          %7801 = vmatprep.subr.bf16.mxu0 0
          %7802 = vmatpush1.bf16.msra.mxu0 %v7741
          %7803 = vmatprep.subr.bf16.mxu0 0
          %7804 = vmatpush1.bf16.msra.mxu0 %v7740
          %7805 = vmatprep.subr.bf16.mxu0 0
          %7806 = vmatpush1.bf16.msra.mxu0 %v7739
          %7807 = vmatprep.subr.bf16.mxu0 0
          %7808 = vmatpush1.bf16.msra.mxu0 %v7738
          %7809 = vmatprep.subr.bf16.mxu0 0
          %7810 = vmatpush1.bf16.msra.mxu0 %v7737
          %7811 = vmatprep.subr.bf16.mxu0 0
          %7812 = vmatpush1.bf16.msra.mxu0 %v7736
          %7813 = vmatprep.subr.bf16.mxu0 0
          %7814 = vmatpush1.bf16.msra.mxu0 %v7735
          %7815 = vmatprep.subr.bf16.mxu0 0
          %7816 = vmatpush2.bf16.msra.mxu0 %v7750
          %7817 = vmatprep.subr.bf16.mxu0 0
          %7818 = vmatpush2.bf16.msra.mxu0 %v7749
          %7819 = vmatprep.subr.bf16.mxu0 0
          %7820 = vmatpush2.bf16.msra.mxu0 %v7748
          %7821 = vmatprep.subr.bf16.mxu0 0
          %7822 = vmatpush2.bf16.msra.mxu0 %v7747
          %7823 = vmatprep.subr.bf16.mxu0 0
          %7824 = vmatpush2.bf16.msra.mxu0 %v7746
          %7825 = vmatprep.subr.bf16.mxu0 0
          %7826 = vmatpush2.bf16.msra.mxu0 %v7745
          %7827 = vmatprep.subr.bf16.mxu0 0
          %7828 = vmatpush2.bf16.msra.mxu0 %v7744
          %7829 = vmatprep.subr.bf16.mxu0 0
          %7830 = vmatpush2.bf16.msra.mxu0 %v7743
          %7831 = vmatprep.mubr.bf16.mxu0 %v7533
          %7832 = vmatmul.mubr.bf16.gmra.mxu0 %v7532
          %v7833 = vpop.f32.mrf.mxu0
          %v7834 = vadd.f32 %v7605, %v7833
          %v7835 = vpop.f32.mrf.mxu0
          %v7836 = vpop.f32.mrf.mxu0
          %v7837 = vpop.f32.mrf.mxu0
          %7838 = vdwg.mxu0
          %7839 = vmatprep.subr.bf16.mxu0 0
          %7840 = vmatpush1.bf16.msra.mxu0 %v7758
          %7841 = vmatprep.subr.bf16.mxu0 0
          %7842 = vmatpush1.bf16.msra.mxu0 %v7757
          %7843 = vmatprep.subr.bf16.mxu0 0
          %7844 = vmatpush1.bf16.msra.mxu0 %v7756
          %7845 = vmatprep.subr.bf16.mxu0 0
          %7846 = vmatpush1.bf16.msra.mxu0 %v7755
          %7847 = vmatprep.subr.bf16.mxu0 0
          %7848 = vmatpush1.bf16.msra.mxu0 %v7754
          %7849 = vmatprep.subr.bf16.mxu0 0
          %7850 = vmatpush1.bf16.msra.mxu0 %v7753
          %7851 = vmatprep.subr.bf16.mxu0 0
          %7852 = vmatpush1.bf16.msra.mxu0 %v7752
          %7853 = vmatprep.subr.bf16.mxu0 0
          %7854 = vmatpush1.bf16.msra.mxu0 %v7751
          %7855 = vmatprep.subr.bf16.mxu0 0
          %7856 = vmatpush2.bf16.msra.mxu0 %v7766
          %7857 = vmatprep.subr.bf16.mxu0 0
          %7858 = vmatpush2.bf16.msra.mxu0 %v7765
          %7859 = vmatprep.subr.bf16.mxu0 0
          %7860 = vmatpush2.bf16.msra.mxu0 %v7764
          %7861 = vmatprep.subr.bf16.mxu0 0
          %7862 = vmatpush2.bf16.msra.mxu0 %v7763
          %7863 = vmatprep.subr.bf16.mxu0 0
          %7864 = vmatpush2.bf16.msra.mxu0 %v7762
          %7865 = vmatprep.subr.bf16.mxu0 0
          %7866 = vmatpush2.bf16.msra.mxu0 %v7761
          %7867 = vmatprep.subr.bf16.mxu0 0
          %7868 = vmatpush2.bf16.msra.mxu0 %v7760
          %7869 = vmatprep.subr.bf16.mxu0 0
          %7870 = vmatpush2.bf16.msra.mxu0 %v7759
          %7871 = vmatprep.mubr.bf16.mxu0 %v7535
          %7872 = vmatmul.mubr.bf16.gmra.mxu0 %v7534
          %v7873 = vpop.f32.mrf.mxu0
          %v7874 = vadd.f32 %v7834, %v7873
          %v7875 = vpop.f32.mrf.mxu0
          %v7876 = vpop.f32.mrf.mxu0
          %v7877 = vpop.f32.mrf.mxu0
          %7878 = vdwg.mxu0
          %v7879 = vmax.f32 %v7874, 0.0
          %v7880 = vld [vmem:[%s9] sm:$0xff]
          %v7881 = vld [vmem:[%s9 + $0x8] sm:$0xff]
          %v7882 = vld [vmem:[%s9 + $0x10] sm:$0xff]
          %v7883 = vld [vmem:[%s9 + $0x18] sm:$0xff]
          %v7884 = vld [vmem:[%s9 + $0x20] sm:$0xff]
          %v7885 = vld [vmem:[%s9 + $0x28] sm:$0xff]
          %v7886 = vld [vmem:[%s9 + $0x30] sm:$0xff]
          %v7887 = vld [vmem:[%s9 + $0x38] sm:$0xff]
          %v7888 = vld [vmem:[%s9 + $0x40] sm:$0xff]
          %v7889 = vld [vmem:[%s9 + $0x48] sm:$0xff]
          %v7890 = vld [vmem:[%s9 + $0x50] sm:$0xff]
          %v7891 = vld [vmem:[%s9 + $0x58] sm:$0xff]
          %v7892 = vld [vmem:[%s9 + $0x60] sm:$0xff]
          %v7893 = vld [vmem:[%s9 + $0x68] sm:$0xff]
          %v7894 = vld [vmem:[%s9 + $0x70] sm:$0xff]
          %v7895 = vld [vmem:[%s9 + $0x78] sm:$0xff]
          %v7896 = vld [vmem:[#allocation18] sm:$0x1]
          %v7898 = vlaneseq
          %v7899 = vshrl.u32 %v7898, 7
          %v7900 = vsub.s32 0, %v7899
          %v7901 = vrot.slane %v7896, %v7900
          %7903 = vmatprep.subr.mxu0 0.0
          %7904 = vmatpush1.msra.mxu0 %v7895
          %7905 = vmatprep.subr.mxu0 0.0
          %7906 = vmatpush1.msra.mxu0 %v7894
          %7907 = vmatprep.subr.mxu0 0.0
          %7908 = vmatpush1.msra.mxu0 %v7893
          %7909 = vmatprep.subr.mxu0 0.0
          %7910 = vmatpush1.msra.mxu0 %v7892
          %7911 = vmatprep.subr.mxu0 0.0
          %7912 = vmatpush1.msra.mxu0 %v7891
          %7913 = vmatprep.subr.mxu0 0.0
          %7914 = vmatpush1.msra.mxu0 %v7890
          %7915 = vmatprep.subr.mxu0 0.0
          %7916 = vmatpush1.msra.mxu0 %v7889
          %7917 = vmatprep.subr.mxu0 0.0
          %7918 = vmatpush1.msra.mxu0 %v7888
          %7919 = vmatprep.subr.mxu0 0.0
          %7920 = vmatpush1.msra.mxu0 %v7887
          %7921 = vmatprep.subr.mxu0 0.0
          %7922 = vmatpush1.msra.mxu0 %v7886
          %7923 = vmatprep.subr.mxu0 0.0
          %7924 = vmatpush1.msra.mxu0 %v7885
          %7925 = vmatprep.subr.mxu0 0.0
          %7926 = vmatpush1.msra.mxu0 %v7884
          %7927 = vmatprep.subr.mxu0 0.0
          %7928 = vmatpush1.msra.mxu0 %v7883
          %7929 = vmatprep.subr.mxu0 0.0
          %7930 = vmatpush1.msra.mxu0 %v7882
          %7931 = vmatprep.subr.mxu0 0.0
          %7932 = vmatpush1.msra.mxu0 %v7881
          %7933 = vmatprep.subr.mxu0 0.0
          %7934 = vmatpush1.msra.mxu0 %v7880
          %7935 = vmatprep.subr.mxu0 0.0
          %7936 = vmatpush2.msra.mxu0 0.0
          %7937 = vmatprep.subr.mxu0 0.0
          %7938 = vmatpush2.msra.mxu0 0.0
          %7939 = vmatprep.subr.mxu0 0.0
          %7940 = vmatpush2.msra.mxu0 0.0
          %7941 = vmatprep.subr.mxu0 0.0
          %7942 = vmatpush2.msra.mxu0 0.0
          %7943 = vmatprep.subr.mxu0 0.0
          %7944 = vmatpush2.msra.mxu0 0.0
          %7945 = vmatprep.subr.mxu0 0.0
          %7946 = vmatpush2.msra.mxu0 0.0
          %7947 = vmatprep.subr.mxu0 0.0
          %7948 = vmatpush2.msra.mxu0 0.0
          %7949 = vmatprep.subr.mxu0 0.0
          %7950 = vmatpush2.msra.mxu0 0.0
          %7951 = vmatprep.subr.mxu0 0.0
          %7952 = vmatpush2.msra.mxu0 0.0
          %7953 = vmatprep.subr.mxu0 0.0
          %7954 = vmatpush2.msra.mxu0 0.0
          %7955 = vmatprep.subr.mxu0 0.0
          %7956 = vmatpush2.msra.mxu0 0.0
          %7957 = vmatprep.subr.mxu0 0.0
          %7958 = vmatpush2.msra.mxu0 0.0
          %7959 = vmatprep.subr.mxu0 0.0
          %7960 = vmatpush2.msra.mxu0 0.0
          %7961 = vmatprep.subr.mxu0 0.0
          %7962 = vmatpush2.msra.mxu0 0.0
          %7963 = vmatprep.subr.mxu0 0.0
          %7964 = vmatpush2.msra.mxu0 0.0
          %7965 = vmatprep.subr.mxu0 0.0
          %7966 = vmatpush2.msra.mxu0 0.0
          %7967 = vmatprep.mubr.f32.mxu0 0.0
          %7968 = vmatmul.mubr.f32.gmra.mxu0 %v7879
          %v7969 = vpop.f32.mrf.mxu0
          %v7970 = vadd.f32 %v7901, %v7969
          %v7971 = vpop.f32.mrf.mxu0
          %7972 = vdwg.mxu0
          %v7973 = vld [vmem:[%s11] sm:$0xff]
          %v7974 = vld [vmem:[%s11 + $0x8] sm:$0xff]
          %v7975 = vld [vmem:[%s11 + $0x10] sm:$0xff]
          %v7976 = vld [vmem:[%s11 + $0x18] sm:$0xff]
          %v7977 = vld [vmem:[%s11 + $0x20] sm:$0xff]
          %v7978 = vld [vmem:[%s11 + $0x28] sm:$0xff]
          %v7979 = vld [vmem:[%s11 + $0x30] sm:$0xff]
          %v7980 = vld [vmem:[%s11 + $0x38] sm:$0xff]
          %v7981 = vld [vmem:[%s11 + $0x40] sm:$0xff]
          %v7982 = vld [vmem:[%s11 + $0x48] sm:$0xff]
          %v7983 = vld [vmem:[%s11 + $0x50] sm:$0xff]
          %v7984 = vld [vmem:[%s11 + $0x58] sm:$0xff]
          %v7985 = vld [vmem:[%s11 + $0x60] sm:$0xff]
          %v7986 = vld [vmem:[%s11 + $0x68] sm:$0xff]
          %v7987 = vld [vmem:[%s11 + $0x70] sm:$0xff]
          %v7988 = vld [vmem:[%s11 + $0x78] sm:$0xff]
          %v7989 = vld [vmem:[#allocation20] sm:$0x1]
          %v7991 = vlaneseq
          %v7992 = vshrl.u32 %v7991, 7
          %v7993 = vsub.s32 0, %v7992
          %v7994 = vrot.slane %v7989, %v7993
          %7996 = vmatprep.subr.mxu0 0.0
          %7997 = vmatpush1.msra.mxu0 %v7988
          %7998 = vmatprep.subr.mxu0 0.0
          %7999 = vmatpush1.msra.mxu0 %v7987
          %8000 = vmatprep.subr.mxu0 0.0
          %8001 = vmatpush1.msra.mxu0 %v7986
          %8002 = vmatprep.subr.mxu0 0.0
          %8003 = vmatpush1.msra.mxu0 %v7985
          %8004 = vmatprep.subr.mxu0 0.0
          %8005 = vmatpush1.msra.mxu0 %v7984
          %8006 = vmatprep.subr.mxu0 0.0
          %8007 = vmatpush1.msra.mxu0 %v7983
          %8008 = vmatprep.subr.mxu0 0.0
          %8009 = vmatpush1.msra.mxu0 %v7982
          %8010 = vmatprep.subr.mxu0 0.0
          %8011 = vmatpush1.msra.mxu0 %v7981
          %8012 = vmatprep.subr.mxu0 0.0
          %8013 = vmatpush1.msra.mxu0 %v7980
          %8014 = vmatprep.subr.mxu0 0.0
          %8015 = vmatpush1.msra.mxu0 %v7979
          %8016 = vmatprep.subr.mxu0 0.0
          %8017 = vmatpush1.msra.mxu0 %v7978
          %8018 = vmatprep.subr.mxu0 0.0
          %8019 = vmatpush1.msra.mxu0 %v7977
          %8020 = vmatprep.subr.mxu0 0.0
          %8021 = vmatpush1.msra.mxu0 %v7976
          %8022 = vmatprep.subr.mxu0 0.0
          %8023 = vmatpush1.msra.mxu0 %v7975
          %8024 = vmatprep.subr.mxu0 0.0
          %8025 = vmatpush1.msra.mxu0 %v7974
          %8026 = vmatprep.subr.mxu0 0.0
          %8027 = vmatpush1.msra.mxu0 %v7973
          %8028 = vmatprep.subr.mxu0 0.0
          %8029 = vmatpush2.msra.mxu0 0.0
          %8030 = vmatprep.subr.mxu0 0.0
          %8031 = vmatpush2.msra.mxu0 0.0
          %8032 = vmatprep.subr.mxu0 0.0
          %8033 = vmatpush2.msra.mxu0 0.0
          %8034 = vmatprep.subr.mxu0 0.0
          %8035 = vmatpush2.msra.mxu0 0.0
          %8036 = vmatprep.subr.mxu0 0.0
          %8037 = vmatpush2.msra.mxu0 0.0
          %8038 = vmatprep.subr.mxu0 0.0
          %8039 = vmatpush2.msra.mxu0 0.0
          %8040 = vmatprep.subr.mxu0 0.0
          %8041 = vmatpush2.msra.mxu0 0.0
          %8042 = vmatprep.subr.mxu0 0.0
          %8043 = vmatpush2.msra.mxu0 0.0
          %8044 = vmatprep.subr.mxu0 0.0
          %8045 = vmatpush2.msra.mxu0 0.0
          %8046 = vmatprep.subr.mxu0 0.0
          %8047 = vmatpush2.msra.mxu0 0.0
          %8048 = vmatprep.subr.mxu0 0.0
          %8049 = vmatpush2.msra.mxu0 0.0
          %8050 = vmatprep.subr.mxu0 0.0
          %8051 = vmatpush2.msra.mxu0 0.0
          %8052 = vmatprep.subr.mxu0 0.0
          %8053 = vmatpush2.msra.mxu0 0.0
          %8054 = vmatprep.subr.mxu0 0.0
          %8055 = vmatpush2.msra.mxu0 0.0
          %8056 = vmatprep.subr.mxu0 0.0
          %8057 = vmatpush2.msra.mxu0 0.0
          %8058 = vmatprep.subr.mxu0 0.0
          %8059 = vmatpush2.msra.mxu0 0.0
          %8060 = vmatprep.mubr.f32.mxu0 0.0
          %8061 = vmatmul.mubr.f32.gmra.mxu0 %v7879
          %v8062 = vpop.f32.mrf.mxu0
          %v8063 = vadd.f32 %v7994, %v8062
          %v8064 = vpop.f32.mrf.mxu0
          %8065 = vdwg.mxu0
          %vm8066 = vcmask 44032
          %v8067 = vsel %vm8066, %v7970, -inf
          %8068 = vmax.xlane.f32.xlu0 %v8067
          %v8069 = vpop.xlane.xlu0 %8068
          %v8070 = vsub.f32 %v7970, %v8069
          %v8071 = vmul.f32 %v8070, 1.442695
          %v8072 = vpow.pop %v8071
          %v8073 = vsel %vm8066, %v8072, 0.0
          %8074 = vadd.xlane.f32.xlu0 %v8073
          %v8075 = vpop.xlane.xlu0 %8074
          %v8076 = vrcp.pop %v8075
          %v8077 = vmul.f32 %v8072, %v8076
          %8078 = vst.msk [vmem:[#allocation21] sm:$0xf] %vm8066, %v8077
          %v8079 = vsel %vm8066, %v8063, -inf
          %8080 = vmax.xlane.f32.xlu0 %v8079
          %v8081 = vpop.xlane.xlu0 %8080
          %v8082 = vsub.f32 %v8063, %v8081
          %v8083 = vmul.f32 %v8082, 1.442695
          %v8084 = vpow.pop %v8083
          %v8085 = vsel %vm8066, %v8084, 0.0
          %8086 = vadd.xlane.f32.xlu0 %v8085
          %v8087 = vpop.xlane.xlu0 %8086
          %v8088 = vrcp.pop %v8087
          %v8089 = vmul.f32 %v8084, %v8088
          %8090 = vst.msk [vmem:[#allocation22] sm:$0xf] %vm8066, %v8089
        $region116: #{cnn_forward.1} parent=71 // pred_fallthru
          _
        // Predicated region
        $region117: #{cnn_forward.1} parent=71 // pred_check
          %p8091 = pneg %p326
        $region118: #{cnn_forward.1} parent=71 // pred_check_branch
          %8093 = sbr.rel (%p8091) target = $region120
        $region119: #{cnn_forward.1} parent=71 // pred_region
          %s8095 = ssub.s32 64, 64
          %8096 = vsyncadd [#allocation8], %s8095
          %s8098 = sshll.u32 [#allocation21], 4
          %s8099 = int_to_ptr.vmem [resolvable:$true] %s8098
          %8101 = dma.vmem_to_hbm [thread:$0]  %s8099, 64, %s13, [#allocation8]
        $region120: #{cnn_forward.1} parent=71 // pred_fallthru
          _
        // Predicated region
        $region121: #{cnn_forward.1} parent=71 // pred_check
          %p8102 = pneg %p347
        $region122: #{cnn_forward.1} parent=71 // pred_check_branch
          %8104 = sbr.rel (%p8102) target = $region124
        $region123: #{cnn_forward.1} parent=71 // pred_region
          %s8106 = ssub.s32 64, 64
          %8107 = vsyncadd [#allocation23], %s8106
          %s8109 = sshll.u32 [#allocation22], 4
          %s8110 = int_to_ptr.vmem [resolvable:$true] %s8109
          %8112 = dma.vmem_to_hbm [thread:$0]  %s8110, 64, %s14, [#allocation23]
        $region124: #{cnn_forward.1} parent=71 // pred_fallthru
          _
        // Predicated region
        $region125: #{cnn_forward.1} parent=71 // pred_check
          %p8113 = pneg %p326
        $region126: #{cnn_forward.1} parent=71 // pred_check_branch
          %8115 = sbr.rel (%p8113) target = $region128
        $region127: #{cnn_forward.1} parent=71 // pred_region
          %8116 = dma.done [#allocation8], 64
        $region128: #{cnn_forward.1} parent=71 // pred_fallthru
          _
        // Predicated region
        $region129: #{cnn_forward.1} parent=71 // pred_check
          %p8117 = pneg %p347
        $region130: #{cnn_forward.1} parent=71 // pred_check_branch
          %8119 = sbr.rel (%p8117) target = $region132
        $region131: #{cnn_forward.1} parent=71 // pred_region
          %8120 = dma.done [#allocation23], 64
        $region132: #{cnn_forward.1} parent=71 // pred_fallthru
          _
      $region72: #{cnn_forward.1} parent=5 // pred_fallthru
        _
      %p8121 = scmp.le.s32.totalorder 2, %s30
      // Predicated region
      $region133: #{cnn_forward.1} parent=5 // pred_check
        %p8122 = pneg %p8121
      $region134: #{cnn_forward.1} parent=5 // pred_check_branch
        %8124 = sbr.rel (%p8122) target = $region136
      $region135: #{cnn_forward.1} parent=5 // pred_region
        %s8125 = ssub.s32 %s30, 2
      $region136: #{cnn_forward.1} parent=5 // pred_fallthru
        _
    $region6: #{cnn_forward.1} parent=1 // loop_footer
      %s34 = sadd.s32 1, %s30
    $region7: #{cnn_forward.1} parent=1 // loop_footer_branch
      %29 = sbr.rel target = $region3
    $region8: #{cnn_forward.1} parent=1 // loop_exit
      _
    %8126 = vsyncpa [#allocation7], 1
    %s8127 = scalar_lea.sflag [#allocation7], 1
    %8128 = vsyncpa %s8127, 1
    %8129 = vsyncpa [#allocation10], 1
    %8130 = vsyncpa [#allocation13], 1
    %s8131 = scalar_lea.sflag [#allocation13], 1
    %8132 = vsyncpa %s8131, 1
    %8133 = vsyncpa [#allocation16], 1
    %8134 = vsyncpa [#allocation19], 1
    %8135 = vsyncpa [#allocation8], 1
    %s8136 = scalar_lea.sflag [#allocation8], 1
    %8137 = vsyncpa %s8136, 1
    %8138 = vsyncpa [#allocation23], 1

</llo_original>
